<compile_context>
chip_gen: v7x
topology: tpu7x:2x2x1
jax: 0.10.0
libtpu: 0.0.40
codegen_flags: <defaults>
</compile_context>

<pallas_src>
import math

import jax
import jax.numpy as jnp
from jax import lax
from jax.experimental import pallas as pl
from jax.experimental.pallas import tpu as pltpu

_SQRT_2_OVER_PI = 0.7978845608028654


def _make_kernel(H, W, C, B_TILE):
    """Per-grid-step kernel processing B_TILE images, each as a (C, H*W) map."""
    HW = H * W

    def kernel(x_ref, mask_ref, w1_ref, b1_ref, w3_ref, w5_ref, wp_ref, bp_ref,
               f1w_ref, f1b_ref, f2wt_ref, f2b_ref, bns_ref, bnb_ref, out_ref):

        def shift_px(a, dy, dx):
            # result[:, pixel(h, w)] = a[:, pixel(h+dy, w+dx)], zero outside image.
            off = dy * W + dx
            s = a if off == 0 else pltpu.roll(a, (-off) % HW, axis=1)
            if dy == 0 and dx == 0:
                return s
            t = (dy + 2) * 5 + (dx + 2)
            return s * mask_ref[t:t + 1, :]            # (1,HW) row broadcast over C

        def one_image(i, carry):
            xb = x_ref[i]                              # (C, HW)

            # ---- conv1 (3x3, pad1, spectral-normalized): 9 accumulating dots,
            #      no im2col scratch (roll/mask/matmul-push overlap).
            y1 = b1_ref[...]                           # (C, 1) broadcast start
            for ky in range(3):
                for kx in range(3):
                    t = ky * 3 + kx
                    y1 = y1 + jnp.dot(w1_ref[t], shift_px(xb, ky - 1, kx - 1),
                                      preferred_element_type=jnp.float32)

            # ---- depthwise 3x3 (pad1) & 5x5 (pad2): shared shifted operands,
            #      per-channel weight columns broadcast over lanes (VPU).
            w3c = w3_ref[...]                          # (C, 9)
            w5c = w5_ref[...]                          # (C, 25)
            y3 = None
            y5 = None
            for dy in range(-2, 3):
                for dx in range(-2, 3):
                    s = shift_px(y1, dy, dx)
                    t5 = (dy + 2) * 5 + (dx + 2)
                    c5 = s * w5c[:, t5:t5 + 1]
                    y5 = c5 if y5 is None else y5 + c5
                    if -1 <= dy <= 1 and -1 <= dx <= 1:
                        t3 = (dy + 1) * 3 + (dx + 1)
                        c3 = s * w3c[:, t3:t3 + 1]
                        y3 = c3 if y3 is None else y3 + c3
            # (depthwise biases b3/b5 are folded into the pointwise bias on host)

            # ---- pointwise 1x1 over concat([y3, y5]): two accumulating dots,
            #      no concat scratch round-trip.
            z = (jnp.dot(wp_ref[0], y3, preferred_element_type=jnp.float32)
                 + jnp.dot(wp_ref[1], y5, preferred_element_type=jnp.float32)
                 + bp_ref[...])                        # (C, HW)

            # ---- SE block: GAP -> FC -> ReLU -> FC -> sigmoid -> scale.
            s_avg = jnp.sum(z, axis=1, keepdims=True) * (1.0 / HW)        # (C, 1)
            h = jnp.maximum(jnp.sum(f1w_ref[...] * s_avg, axis=0, keepdims=True)
                            + f1b_ref[...], 0.0)                          # (1, Cr)
            gate = jax.nn.sigmoid(jnp.sum(f2wt_ref[...] * h, axis=1, keepdims=True)
                                  + f2b_ref[...])                         # (C, 1)
            zg = z * gate

            # ---- tanh-GELU (0.5 folded into bns), Dropout2d(eval) == identity,
            #      BatchNorm2d (folded running stats) + residual (x reloaded so it
            #      is not live across the depthwise loops).
            # TODO(synk): training-mode Dropout2d / batch-statistics BatchNorm
            #             are not implemented (inference only).
            inner = _SQRT_2_OVER_PI * (zg + 0.044715 * (zg * zg * zg))
            act = zg * (1.0 + jnp.tanh(inner))
            out_ref[i] = act * bns_ref[...] + bnb_ref[...] + x_ref[i]
            return carry

        lax.fori_loop(0, B_TILE, one_image, 0, unroll=True)

    return kernel


def _pick_batch_tile(B, max_tile=4):
    # Largest tile <= max_tile that divides B; amortizes per-grid-step overhead.
    # (On v7x keeping >=2 grid steps lets the two TensorCores split the batch.)
    return math.gcd(B, max_tile)


def mixcfn_forward(x_nchw, p, *, batch_tile=None):
    """x_nchw: (B, C, H, W) float32 with in_channels == out_channels."""
    B, C, H, W = x_nchw.shape
    HW = H * W
    B_TILE = _pick_batch_tile(B) if batch_tile is None else batch_tile
    assert B % B_TILE == 0
    # NCHW -> (B, C, H*W): pure reshape (no transpose); pixels on the lane axis.
    x2 = x_nchw.reshape(B, C, HW).astype(jnp.float32)

    # ---- host-side weight packing / constant folding (one-time layout work).
    w1p = jnp.transpose(p["w1"], (0, 2, 1))                    # (9, Cout, Cin)
    b1 = p["b1"].reshape(C, 1)
    w3c = p["w3"].T                                            # (C, 9)
    w5c = p["w5"].T                                            # (C, 25)
    wpp = jnp.stack([p["wp"][:C, :].T, p["wp"][C:, :].T])      # (2, Cout, C)
    # depthwise biases are spatially constant -> fold through the pointwise conv
    bp = (p["bp"] + p["b3"] @ p["wp"][:C, :] + p["b5"] @ p["wp"][C:, :]).reshape(C, 1)
    f1w = p["f1w"]                                             # (C, Cr)
    f1b = p["f1b"]                                             # (1, Cr)
    f2wt = p["f2w"].T                                          # (C, Cr)
    f2b = p["f2b"].reshape(C, 1)
    bns = (0.5 * p["bns"]).reshape(C, 1)   # GELU's 0.5 folded into the BN scale
    bnb = p["bnb"].reshape(C, 1)

    # Per-tap zero-padding masks depend only on (H, W): precompute on the host
    # and pass as a tiny (25, HW) constant (no iota/compare work in the kernel).
    hh = jnp.arange(H)[:, None]
    ww = jnp.arange(W)[None, :]
    rows = []
    for dy in range(-2, 3):
        for dx in range(-2, 3):
            m = (hh + dy >= 0) & (hh + dy < H) & (ww + dx >= 0) & (ww + dx < W)
            rows.append(m.reshape(HW))
    mask25 = jnp.stack(rows).astype(jnp.float32)               # (25, HW)

    weights = (mask25, w1p, b1, w3c, w5c, wpp, bp, f1w, f1b, f2wt, f2b, bns, bnb)

    # Grid-invariant operands use full-array blocks (constant index_map).  They
    # total <100 KiB here; for large C they could be single-buffered
    # (pipeline_mode=pl.Buffered(1)) to free VMEM headroom on v7x.
    def const_spec(a):
        nd = a.ndim
        return pl.BlockSpec(a.shape, lambda b, _nd=nd: (0,) * _nd)

    in_specs = [pl.BlockSpec((B_TILE, C, HW), lambda b: (b, 0, 0))]
    in_specs += [const_spec(a) for a in weights]

    out2 = pl.pallas_call(
        _make_kernel(H, W, C, B_TILE),
        out_shape=jax.ShapeDtypeStruct((B, C, HW), jnp.float32),
        grid_spec=pltpu.PrefetchScalarGridSpec(
            num_scalar_prefetch=0,
            grid=(B // B_TILE,),                     # B_TILE images per grid step
            in_specs=in_specs,
            out_specs=pl.BlockSpec((B_TILE, C, HW), lambda b: (b, 0, 0)),
        ),
        compiler_params=pltpu.CompilerParams(
            dimension_semantics=("parallel",),       # batch steps are independent
            vmem_limit_bytes=32 * 1024 * 1024,
        ),
    )(x2, *weights)
    return out2.reshape(B, C, H, W)


def _power_iter_sigma(mat, iters=64):
    v = jnp.ones((mat.shape[1],), mat.dtype) / jnp.sqrt(jnp.float32(mat.shape[1]))
    u = mat @ v
    for _ in range(iters):
        u = mat @ v
        u = u / (jnp.linalg.norm(u) + 1e-12)
        v = mat.T @ u
        v = v / (jnp.linalg.norm(v) + 1e-12)
    return jnp.dot(u, mat @ v)


def init_params(key, C, reduction=16):
    Cr = max(1, C // reduction)
    ks = jax.random.split(key, 14)
    w1 = 0.1 * jax.random.normal(ks[0], (9, C, C), jnp.float32)   # (ky*3+kx, Cin, Cout)
    # spectral_norm: divide by the largest singular value of the flattened weight.
    sigma = _power_iter_sigma(w1.reshape(9 * C, C))
    w1 = w1 / sigma
    b1 = 0.1 * jax.random.normal(ks[1], (1, C), jnp.float32)
    w3 = 0.1 * jax.random.normal(ks[2], (9, C), jnp.float32)       # depthwise 3x3
    b3 = 0.1 * jax.random.normal(ks[3], (1, C), jnp.float32)
    w5 = 0.1 * jax.random.normal(ks[4], (25, C), jnp.float32)      # depthwise 5x5
    b5 = 0.1 * jax.random.normal(ks[5], (1, C), jnp.float32)
    wp = 0.1 * jax.random.normal(ks[6], (2 * C, C), jnp.float32)   # pointwise (in, out)
    bp = 0.1 * jax.random.normal(ks[7], (1, C), jnp.float32)
    f1w = 0.1 * jax.random.normal(ks[8], (C, Cr), jnp.float32)
    f1b = 0.1 * jax.random.normal(ks[9], (1, Cr), jnp.float32)
    f2w = 0.1 * jax.random.normal(ks[10], (Cr, C), jnp.float32)
    f2b = 0.1 * jax.random.normal(ks[11], (1, C), jnp.float32)
    gamma = 1.0 + 0.1 * jax.random.normal(ks[12], (1, C), jnp.float32)
    beta = 0.1 * jax.random.normal(ks[13], (1, C), jnp.float32)
    running_mean = jnp.full((1, C), 0.05, jnp.float32)
    running_var = jnp.ones((1, C), jnp.float32)
    eps = 1e-5
    bns = gamma / jnp.sqrt(running_var + eps)          # folded BN scale
    bnb = beta - running_mean * bns                    # folded BN bias
    return dict(w1=w1, b1=b1, w3=w3, b3=b3, w5=w5, b5=b5, wp=wp, bp=bp,
                f1w=f1w, f1b=f1b, f2w=f2w, f2b=f2b, bns=bns, bnb=bnb)


def reference(x_nchw, p):
    # Pure-JAX (XLA) reference for validation (exact-erf GELU, like nn.GELU()).
    from jax.scipy.special import erf
    x = jnp.transpose(x_nchw, (0, 2, 3, 1)).astype(jnp.float32)
    B, H, W, C = x.shape
    dn = ('NHWC', 'HWIO', 'NHWC')
    y1 = lax.conv_general_dilated(x, p["w1"].reshape(3, 3, C, C), (1, 1), 'SAME',
                                  dimension_numbers=dn) + p["b1"]
    y3 = lax.conv_general_dilated(y1, p["w3"].reshape(3, 3, 1, C), (1, 1), 'SAME',
                                  dimension_numbers=dn, feature_group_count=C) + p["b3"]
    y5 = lax.conv_general_dilated(y1, p["w5"].reshape(5, 5, 1, C), (1, 1), 'SAME',
                                  dimension_numbers=dn, feature_group_count=C) + p["b5"]
    cat = jnp.concatenate([y3, y5], axis=-1)
    z = lax.conv_general_dilated(cat, p["wp"].reshape(1, 1, 2 * C, C), (1, 1), 'SAME',
                                 dimension_numbers=dn) + p["bp"]
    s = jnp.mean(z, axis=(1, 2))
    h = jax.nn.relu(s @ p["f1w"] + p["f1b"])
    gate = jax.nn.sigmoid(h @ p["f2w"] + p["f2b"])
    z = z * gate[:, None, None, :]
    g = 0.5 * z * (1.0 + erf(z / jnp.sqrt(2.0)))
    y = g * p["bns"] + p["bnb"]
    return jnp.transpose(y + x, (0, 3, 1, 2))


if __name__ == "__main__":
    B, C, H, W = 2, 32, 16, 16            # in_channels == out_channels (residual add)
    key = jax.random.PRNGKey(0)
    kx, kp = jax.random.split(key)
    x = jax.random.normal(kx, (B, C, H, W), jnp.float32)   # NCHW, like PyTorch
    params = init_params(kp, C)

    out = mixcfn_forward(x, params)
    out = jax.block_until_ready(out)
    assert out.shape == (B, C, H, W)

    ref = reference(x, params)
    max_err = float(jnp.max(jnp.abs(out - ref)))
    if max_err < 2e-3:
        print("KERNEL_OK")
    else:
        print(f"MISMATCH max_abs_err={max_err}")
</pallas_src>

<mosaic_0001>
module attributes {stable_mosaic.version = 11 : i64} {
  func.func @kernel(%arg0: i32, %arg1: memref<2x32x256xf32, #tpu.memory_space<vmem>>, %arg2: memref<25x256xf32, #tpu.memory_space<vmem>>, %arg3: memref<9x32x32xf32, #tpu.memory_space<vmem>>, %arg4: memref<32x1xf32, #tpu.memory_space<vmem>>, %arg5: memref<32x9xf32, #tpu.memory_space<vmem>>, %arg6: memref<32x25xf32, #tpu.memory_space<vmem>>, %arg7: memref<2x32x32xf32, #tpu.memory_space<vmem>>, %arg8: memref<32x1xf32, #tpu.memory_space<vmem>>, %arg9: memref<32x2xf32, #tpu.memory_space<vmem>>, %arg10: memref<1x2xf32, #tpu.memory_space<vmem>>, %arg11: memref<32x2xf32, #tpu.memory_space<vmem>>, %arg12: memref<32x1xf32, #tpu.memory_space<vmem>>, %arg13: memref<32x1xf32, #tpu.memory_space<vmem>>, %arg14: memref<32x1xf32, #tpu.memory_space<vmem>>, %arg15: memref<2x32x256xf32, #tpu.memory_space<vmem>>) attributes {dimension_semantics = [#tpu.dimension_semantics<parallel>], iteration_bounds = array<i64: 1>, scalar_prefetch = 0 : i64, scratch_operands = 0 : i64, tpu.core_type = #tpu.core_type<tc>, window_params = [{transform_indices = @transform_0, window_bounds = array<i64: 2, 32, 256>}, {pipeline_mode = #tpu.pipeline_mode<synchronous>, transform_indices = @transform_1, window_bounds = array<i64: 25, 256>}, {pipeline_mode = #tpu.pipeline_mode<synchronous>, transform_indices = @transform_2, window_bounds = array<i64: 9, 32, 32>}, {pipeline_mode = #tpu.pipeline_mode<synchronous>, transform_indices = @transform_3, window_bounds = array<i64: 32, 1>}, {pipeline_mode = #tpu.pipeline_mode<synchronous>, transform_indices = @transform_4, window_bounds = array<i64: 32, 9>}, {pipeline_mode = #tpu.pipeline_mode<synchronous>, transform_indices = @transform_5, window_bounds = array<i64: 32, 25>}, {pipeline_mode = #tpu.pipeline_mode<synchronous>, transform_indices = @transform_6, window_bounds = array<i64: 2, 32, 32>}, {pipeline_mode = #tpu.pipeline_mode<synchronous>, transform_indices = @transform_7, window_bounds = array<i64: 32, 1>}, {pipeline_mode = #tpu.pipeline_mode<synchronous>, transform_indices = @transform_8, window_bounds = array<i64: 32, 2>}, {pipeline_mode = #tpu.pipeline_mode<synchronous>, transform_indices = @transform_9, window_bounds = array<i64: 1, 2>}, {pipeline_mode = #tpu.pipeline_mode<synchronous>, transform_indices = @transform_10, window_bounds = array<i64: 32, 2>}, {pipeline_mode = #tpu.pipeline_mode<synchronous>, transform_indices = @transform_11, window_bounds = array<i64: 32, 1>}, {pipeline_mode = #tpu.pipeline_mode<synchronous>, transform_indices = @transform_12, window_bounds = array<i64: 32, 1>}, {pipeline_mode = #tpu.pipeline_mode<synchronous>, transform_indices = @transform_13, window_bounds = array<i64: 32, 1>}, {transform_indices = @transform_14, window_bounds = array<i64: 2, 32, 256>}]} {
    %c0_i32 = arith.constant 0 : i32
    %0 = arith.index_cast %c0_i32 : i32 to index
    %c0 = arith.constant 0 : index
    %c0_0 = arith.constant 0 : index
    %1 = vector.load %arg1[%0, %c0, %c0_0] : memref<2x32x256xf32, #tpu.memory_space<vmem>>, vector<1x32x256xf32>
    %2 = vector.shape_cast %1 : vector<1x32x256xf32> to vector<32x256xf32>
    %c0_1 = arith.constant 0 : index
    %c0_2 = arith.constant 0 : index
    %3 = vector.load %arg4[%c0_1, %c0_2] : memref<32x1xf32, #tpu.memory_space<vmem>>, vector<32x1xf32>
    %c0_3 = arith.constant 0 : index
    %c0_4 = arith.constant 0 : index
    %c0_5 = arith.constant 0 : index
    %4 = vector.load %arg3[%c0_3, %c0_4, %c0_5] : memref<9x32x32xf32, #tpu.memory_space<vmem>>, vector<1x32x32xf32>
    %5 = vector.shape_cast %4 : vector<1x32x32xf32> to vector<32x32xf32>
    %c17_i32 = arith.constant 17 : i32
    %6 = tpu.dynamic_rotate %2 by %c17_i32 dim 1 : vector<32x256xf32>, i32 -> vector<32x256xf32>
    %c6 = arith.constant 6 : index
    %c0_6 = arith.constant 0 : index
    %7 = vector.load %arg2[%c6, %c0_6] : memref<25x256xf32, #tpu.memory_space<vmem>>, vector<1x256xf32>
    %8 = vector.broadcast %7 : vector<1x256xf32> to vector<32x256xf32>
    %9 = arith.mulf %6, %8 : vector<32x256xf32>
    %cst = arith.constant dense<0.000000e+00> : vector<32x256xf32>
    %10 = tpu.matmul %5, %9, %cst {dimension_numbers = #tpu.dot_dimension_numbers<[1], [0], [0], [1], [0, 0, 1, 1], [], []>} : vector<32x32xf32>, vector<32x256xf32>, vector<32x256xf32> -> vector<32x256xf32>
    %11 = vector.broadcast %3 : vector<32x1xf32> to vector<32x256xf32>
    %12 = arith.addf %11, %10 : vector<32x256xf32>
    %c1 = arith.constant 1 : index
    %c0_7 = arith.constant 0 : index
    %c0_8 = arith.constant 0 : index
    %13 = vector.load %arg3[%c1, %c0_7, %c0_8] : memref<9x32x32xf32, #tpu.memory_space<vmem>>, vector<1x32x32xf32>
    %14 = vector.shape_cast %13 : vector<1x32x32xf32> to vector<32x32xf32>
    %c16_i32 = arith.constant 16 : i32
    %15 = tpu.dynamic_rotate %2 by %c16_i32 dim 1 : vector<32x256xf32>, i32 -> vector<32x256xf32>
    %c7 = arith.constant 7 : index
    %c0_9 = arith.constant 0 : index
    %16 = vector.load %arg2[%c7, %c0_9] : memref<25x256xf32, #tpu.memory_space<vmem>>, vector<1x256xf32>
    %17 = vector.broadcast %16 : vector<1x256xf32> to vector<32x256xf32>
    %18 = arith.mulf %15, %17 : vector<32x256xf32>
    %cst_10 = arith.constant dense<0.000000e+00> : vector<32x256xf32>
    %19 = tpu.matmul %14, %18, %cst_10 {dimension_numbers = #tpu.dot_dimension_numbers<[1], [0], [0], [1], [0, 0, 1, 1], [], []>} : vector<32x32xf32>, vector<32x256xf32>, vector<32x256xf32> -> vector<32x256xf32>
    %20 = arith.addf %12, %19 : vector<32x256xf32>
    %c2 = arith.constant 2 : index
    %c0_11 = arith.constant 0 : index
    %c0_12 = arith.constant 0 : index
    %21 = vector.load %arg3[%c2, %c0_11, %c0_12] : memref<9x32x32xf32, #tpu.memory_space<vmem>>, vector<1x32x32xf32>
    %22 = vector.shape_cast %21 : vector<1x32x32xf32> to vector<32x32xf32>
    %c15_i32 = arith.constant 15 : i32
    %23 = tpu.dynamic_rotate %2 by %c15_i32 dim 1 : vector<32x256xf32>, i32 -> vector<32x256xf32>
    %c8 = arith.constant 8 : index
    %c0_13 = arith.constant 0 : index
    %24 = vector.load %arg2[%c8, %c0_13] : memref<25x256xf32, #tpu.memory_space<vmem>>, vector<1x256xf32>
    %25 = vector.broadcast %24 : vector<1x256xf32> to vector<32x256xf32>
    %26 = arith.mulf %23, %25 : vector<32x256xf32>
    %cst_14 = arith.constant dense<0.000000e+00> : vector<32x256xf32>
    %27 = tpu.matmul %22, %26, %cst_14 {dimension_numbers = #tpu.dot_dimension_numbers<[1], [0], [0], [1], [0, 0, 1, 1], [], []>} : vector<32x32xf32>, vector<32x256xf32>, vector<32x256xf32> -> vector<32x256xf32>
    %28 = arith.addf %20, %27 : vector<32x256xf32>
    %c3 = arith.constant 3 : index
    %c0_15 = arith.constant 0 : index
    %c0_16 = arith.constant 0 : index
    %29 = vector.load %arg3[%c3, %c0_15, %c0_16] : memref<9x32x32xf32, #tpu.memory_space<vmem>>, vector<1x32x32xf32>
    %30 = vector.shape_cast %29 : vector<1x32x32xf32> to vector<32x32xf32>
    %c1_i32 = arith.constant 1 : i32
    %31 = tpu.dynamic_rotate %2 by %c1_i32 dim 1 : vector<32x256xf32>, i32 -> vector<32x256xf32>
    %c11 = arith.constant 11 : index
    %c0_17 = arith.constant 0 : index
    %32 = vector.load %arg2[%c11, %c0_17] : memref<25x256xf32, #tpu.memory_space<vmem>>, vector<1x256xf32>
    %33 = vector.broadcast %32 : vector<1x256xf32> to vector<32x256xf32>
    %34 = arith.mulf %31, %33 : vector<32x256xf32>
    %cst_18 = arith.constant dense<0.000000e+00> : vector<32x256xf32>
    %35 = tpu.matmul %30, %34, %cst_18 {dimension_numbers = #tpu.dot_dimension_numbers<[1], [0], [0], [1], [0, 0, 1, 1], [], []>} : vector<32x32xf32>, vector<32x256xf32>, vector<32x256xf32> -> vector<32x256xf32>
    %36 = arith.addf %28, %35 : vector<32x256xf32>
    %c4 = arith.constant 4 : index
    %c0_19 = arith.constant 0 : index
    %c0_20 = arith.constant 0 : index
    %37 = vector.load %arg3[%c4, %c0_19, %c0_20] : memref<9x32x32xf32, #tpu.memory_space<vmem>>, vector<1x32x32xf32>
    %38 = vector.shape_cast %37 : vector<1x32x32xf32> to vector<32x32xf32>
    %cst_21 = arith.constant dense<0.000000e+00> : vector<32x256xf32>
    %39 = tpu.matmul %38, %2, %cst_21 {dimension_numbers = #tpu.dot_dimension_numbers<[1], [0], [0], [1], [0, 0, 1, 1], [], []>} : vector<32x32xf32>, vector<32x256xf32>, vector<32x256xf32> -> vector<32x256xf32>
    %40 = arith.addf %36, %39 : vector<32x256xf32>
    %c5 = arith.constant 5 : index
    %c0_22 = arith.constant 0 : index
    %c0_23 = arith.constant 0 : index
    %41 = vector.load %arg3[%c5, %c0_22, %c0_23] : memref<9x32x32xf32, #tpu.memory_space<vmem>>, vector<1x32x32xf32>
    %42 = vector.shape_cast %41 : vector<1x32x32xf32> to vector<32x32xf32>
    %c255_i32 = arith.constant 255 : i32
    %43 = tpu.dynamic_rotate %2 by %c255_i32 dim 1 : vector<32x256xf32>, i32 -> vector<32x256xf32>
    %c13 = arith.constant 13 : index
    %c0_24 = arith.constant 0 : index
    %44 = vector.load %arg2[%c13, %c0_24] : memref<25x256xf32, #tpu.memory_space<vmem>>, vector<1x256xf32>
    %45 = vector.broadcast %44 : vector<1x256xf32> to vector<32x256xf32>
    %46 = arith.mulf %43, %45 : vector<32x256xf32>
    %cst_25 = arith.constant dense<0.000000e+00> : vector<32x256xf32>
    %47 = tpu.matmul %42, %46, %cst_25 {dimension_numbers = #tpu.dot_dimension_numbers<[1], [0], [0], [1], [0, 0, 1, 1], [], []>} : vector<32x32xf32>, vector<32x256xf32>, vector<32x256xf32> -> vector<32x256xf32>
    %48 = arith.addf %40, %47 : vector<32x256xf32>
    %c6_26 = arith.constant 6 : index
    %c0_27 = arith.constant 0 : index
    %c0_28 = arith.constant 0 : index
    %49 = vector.load %arg3[%c6_26, %c0_27, %c0_28] : memref<9x32x32xf32, #tpu.memory_space<vmem>>, vector<1x32x32xf32>
    %50 = vector.shape_cast %49 : vector<1x32x32xf32> to vector<32x32xf32>
    %c241_i32 = arith.constant 241 : i32
    %51 = tpu.dynamic_rotate %2 by %c241_i32 dim 1 : vector<32x256xf32>, i32 -> vector<32x256xf32>
    %c16 = arith.constant 16 : index
    %c0_29 = arith.constant 0 : index
    %52 = vector.load %arg2[%c16, %c0_29] : memref<25x256xf32, #tpu.memory_space<vmem>>, vector<1x256xf32>
    %53 = vector.broadcast %52 : vector<1x256xf32> to vector<32x256xf32>
    %54 = arith.mulf %51, %53 : vector<32x256xf32>
    %cst_30 = arith.constant dense<0.000000e+00> : vector<32x256xf32>
    %55 = tpu.matmul %50, %54, %cst_30 {dimension_numbers = #tpu.dot_dimension_numbers<[1], [0], [0], [1], [0, 0, 1, 1], [], []>} : vector<32x32xf32>, vector<32x256xf32>, vector<32x256xf32> -> vector<32x256xf32>
    %56 = arith.addf %48, %55 : vector<32x256xf32>
    %c7_31 = arith.constant 7 : index
    %c0_32 = arith.constant 0 : index
    %c0_33 = arith.constant 0 : index
    %57 = vector.load %arg3[%c7_31, %c0_32, %c0_33] : memref<9x32x32xf32, #tpu.memory_space<vmem>>, vector<1x32x32xf32>
    %58 = vector.shape_cast %57 : vector<1x32x32xf32> to vector<32x32xf32>
    %c240_i32 = arith.constant 240 : i32
    %59 = tpu.dynamic_rotate %2 by %c240_i32 dim 1 : vector<32x256xf32>, i32 -> vector<32x256xf32>
    %c17 = arith.constant 17 : index
    %c0_34 = arith.constant 0 : index
    %60 = vector.load %arg2[%c17, %c0_34] : memref<25x256xf32, #tpu.memory_space<vmem>>, vector<1x256xf32>
    %61 = vector.broadcast %60 : vector<1x256xf32> to vector<32x256xf32>
    %62 = arith.mulf %59, %61 : vector<32x256xf32>
    %cst_35 = arith.constant dense<0.000000e+00> : vector<32x256xf32>
    %63 = tpu.matmul %58, %62, %cst_35 {dimension_numbers = #tpu.dot_dimension_numbers<[1], [0], [0], [1], [0, 0, 1, 1], [], []>} : vector<32x32xf32>, vector<32x256xf32>, vector<32x256xf32> -> vector<32x256xf32>
    %64 = arith.addf %56, %63 : vector<32x256xf32>
    %c8_36 = arith.constant 8 : index
    %c0_37 = arith.constant 0 : index
    %c0_38 = arith.constant 0 : index
    %65 = vector.load %arg3[%c8_36, %c0_37, %c0_38] : memref<9x32x32xf32, #tpu.memory_space<vmem>>, vector<1x32x32xf32>
    %66 = vector.shape_cast %65 : vector<1x32x32xf32> to vector<32x32xf32>
    %c239_i32 = arith.constant 239 : i32
    %67 = tpu.dynamic_rotate %2 by %c239_i32 dim 1 : vector<32x256xf32>, i32 -> vector<32x256xf32>
    %c18 = arith.constant 18 : index
    %c0_39 = arith.constant 0 : index
    %68 = vector.load %arg2[%c18, %c0_39] : memref<25x256xf32, #tpu.memory_space<vmem>>, vector<1x256xf32>
    %69 = vector.broadcast %68 : vector<1x256xf32> to vector<32x256xf32>
    %70 = arith.mulf %67, %69 : vector<32x256xf32>
    %cst_40 = arith.constant dense<0.000000e+00> : vector<32x256xf32>
    %71 = tpu.matmul %66, %70, %cst_40 {dimension_numbers = #tpu.dot_dimension_numbers<[1], [0], [0], [1], [0, 0, 1, 1], [], []>} : vector<32x32xf32>, vector<32x256xf32>, vector<32x256xf32> -> vector<32x256xf32>
    %72 = arith.addf %64, %71 : vector<32x256xf32>
    %c0_41 = arith.constant 0 : index
    %c0_42 = arith.constant 0 : index
    %73 = vector.load %arg5[%c0_41, %c0_42] : memref<32x9xf32, #tpu.memory_space<vmem>>, vector<32x9xf32>
    %c0_43 = arith.constant 0 : index
    %c0_44 = arith.constant 0 : index
    %74 = vector.load %arg6[%c0_43, %c0_44] : memref<32x25xf32, #tpu.memory_space<vmem>>, vector<32x25xf32>
    %c34_i32 = arith.constant 34 : i32
    %75 = tpu.dynamic_rotate %72 by %c34_i32 dim 1 : vector<32x256xf32>, i32 -> vector<32x256xf32>
    %c0_45 = arith.constant 0 : index
    %c0_46 = arith.constant 0 : index
    %76 = vector.load %arg2[%c0_45, %c0_46] : memref<25x256xf32, #tpu.memory_space<vmem>>, vector<1x256xf32>
    %77 = vector.broadcast %76 : vector<1x256xf32> to vector<32x256xf32>
    %78 = arith.mulf %75, %77 : vector<32x256xf32>
    %79 = vector.extract_strided_slice %74 {offsets = [0, 0], sizes = [32, 1], strides = [1, 1]} : vector<32x25xf32> to vector<32x1xf32>
    %80 = vector.broadcast %79 : vector<32x1xf32> to vector<32x256xf32>
    %81 = arith.mulf %78, %80 : vector<32x256xf32>
    %c33_i32 = arith.constant 33 : i32
    %82 = tpu.dynamic_rotate %72 by %c33_i32 dim 1 : vector<32x256xf32>, i32 -> vector<32x256xf32>
    %c1_47 = arith.constant 1 : index
    %c0_48 = arith.constant 0 : index
    %83 = vector.load %arg2[%c1_47, %c0_48] : memref<25x256xf32, #tpu.memory_space<vmem>>, vector<1x256xf32>
    %84 = vector.broadcast %83 : vector<1x256xf32> to vector<32x256xf32>
    %85 = arith.mulf %82, %84 : vector<32x256xf32>
    %86 = vector.extract_strided_slice %74 {offsets = [0, 1], sizes = [32, 1], strides = [1, 1]} : vector<32x25xf32> to vector<32x1xf32>
    %87 = vector.broadcast %86 : vector<32x1xf32> to vector<32x256xf32>
    %88 = arith.mulf %85, %87 : vector<32x256xf32>
    %89 = arith.addf %81, %88 : vector<32x256xf32>
    %c32_i32 = arith.constant 32 : i32
    %90 = tpu.dynamic_rotate %72 by %c32_i32 dim 1 : vector<32x256xf32>, i32 -> vector<32x256xf32>
    %c2_49 = arith.constant 2 : index
    %c0_50 = arith.constant 0 : index
    %91 = vector.load %arg2[%c2_49, %c0_50] : memref<25x256xf32, #tpu.memory_space<vmem>>, vector<1x256xf32>
    %92 = vector.broadcast %91 : vector<1x256xf32> to vector<32x256xf32>
    %93 = arith.mulf %90, %92 : vector<32x256xf32>
    %94 = vector.extract_strided_slice %74 {offsets = [0, 2], sizes = [32, 1], strides = [1, 1]} : vector<32x25xf32> to vector<32x1xf32>
    %95 = vector.broadcast %94 : vector<32x1xf32> to vector<32x256xf32>
    %96 = arith.mulf %93, %95 : vector<32x256xf32>
    %97 = arith.addf %89, %96 : vector<32x256xf32>
    %c31_i32 = arith.constant 31 : i32
    %98 = tpu.dynamic_rotate %72 by %c31_i32 dim 1 : vector<32x256xf32>, i32 -> vector<32x256xf32>
    %c3_51 = arith.constant 3 : index
    %c0_52 = arith.constant 0 : index
    %99 = vector.load %arg2[%c3_51, %c0_52] : memref<25x256xf32, #tpu.memory_space<vmem>>, vector<1x256xf32>
    %100 = vector.broadcast %99 : vector<1x256xf32> to vector<32x256xf32>
    %101 = arith.mulf %98, %100 : vector<32x256xf32>
    %102 = vector.extract_strided_slice %74 {offsets = [0, 3], sizes = [32, 1], strides = [1, 1]} : vector<32x25xf32> to vector<32x1xf32>
    %103 = vector.broadcast %102 : vector<32x1xf32> to vector<32x256xf32>
    %104 = arith.mulf %101, %103 : vector<32x256xf32>
    %105 = arith.addf %97, %104 : vector<32x256xf32>
    %c30_i32 = arith.constant 30 : i32
    %106 = tpu.dynamic_rotate %72 by %c30_i32 dim 1 : vector<32x256xf32>, i32 -> vector<32x256xf32>
    %c4_53 = arith.constant 4 : index
    %c0_54 = arith.constant 0 : index
    %107 = vector.load %arg2[%c4_53, %c0_54] : memref<25x256xf32, #tpu.memory_space<vmem>>, vector<1x256xf32>
    %108 = vector.broadcast %107 : vector<1x256xf32> to vector<32x256xf32>
    %109 = arith.mulf %106, %108 : vector<32x256xf32>
    %110 = vector.extract_strided_slice %74 {offsets = [0, 4], sizes = [32, 1], strides = [1, 1]} : vector<32x25xf32> to vector<32x1xf32>
    %111 = vector.broadcast %110 : vector<32x1xf32> to vector<32x256xf32>
    %112 = arith.mulf %109, %111 : vector<32x256xf32>
    %113 = arith.addf %105, %112 : vector<32x256xf32>
    %c18_i32 = arith.constant 18 : i32
    %114 = tpu.dynamic_rotate %72 by %c18_i32 dim 1 : vector<32x256xf32>, i32 -> vector<32x256xf32>
    %c5_55 = arith.constant 5 : index
    %c0_56 = arith.constant 0 : index
    %115 = vector.load %arg2[%c5_55, %c0_56] : memref<25x256xf32, #tpu.memory_space<vmem>>, vector<1x256xf32>
    %116 = vector.broadcast %115 : vector<1x256xf32> to vector<32x256xf32>
    %117 = arith.mulf %114, %116 : vector<32x256xf32>
    %118 = vector.extract_strided_slice %74 {offsets = [0, 5], sizes = [32, 1], strides = [1, 1]} : vector<32x25xf32> to vector<32x1xf32>
    %119 = vector.broadcast %118 : vector<32x1xf32> to vector<32x256xf32>
    %120 = arith.mulf %117, %119 : vector<32x256xf32>
    %121 = arith.addf %113, %120 : vector<32x256xf32>
    %c17_i32_57 = arith.constant 17 : i32
    %122 = tpu.dynamic_rotate %72 by %c17_i32_57 dim 1 : vector<32x256xf32>, i32 -> vector<32x256xf32>
    %c6_58 = arith.constant 6 : index
    %c0_59 = arith.constant 0 : index
    %123 = vector.load %arg2[%c6_58, %c0_59] : memref<25x256xf32, #tpu.memory_space<vmem>>, vector<1x256xf32>
    %124 = vector.broadcast %123 : vector<1x256xf32> to vector<32x256xf32>
    %125 = arith.mulf %122, %124 : vector<32x256xf32>
    %126 = vector.extract_strided_slice %74 {offsets = [0, 6], sizes = [32, 1], strides = [1, 1]} : vector<32x25xf32> to vector<32x1xf32>
    %127 = vector.broadcast %126 : vector<32x1xf32> to vector<32x256xf32>
    %128 = arith.mulf %125, %127 : vector<32x256xf32>
    %129 = arith.addf %121, %128 : vector<32x256xf32>
    %130 = vector.extract_strided_slice %73 {offsets = [0, 0], sizes = [32, 1], strides = [1, 1]} : vector<32x9xf32> to vector<32x1xf32>
    %131 = vector.broadcast %130 : vector<32x1xf32> to vector<32x256xf32>
    %132 = arith.mulf %125, %131 : vector<32x256xf32>
    %c16_i32_60 = arith.constant 16 : i32
    %133 = tpu.dynamic_rotate %72 by %c16_i32_60 dim 1 : vector<32x256xf32>, i32 -> vector<32x256xf32>
    %c7_61 = arith.constant 7 : index
    %c0_62 = arith.constant 0 : index
    %134 = vector.load %arg2[%c7_61, %c0_62] : memref<25x256xf32, #tpu.memory_space<vmem>>, vector<1x256xf32>
    %135 = vector.broadcast %134 : vector<1x256xf32> to vector<32x256xf32>
    %136 = arith.mulf %133, %135 : vector<32x256xf32>
    %137 = vector.extract_strided_slice %74 {offsets = [0, 7], sizes = [32, 1], strides = [1, 1]} : vector<32x25xf32> to vector<32x1xf32>
    %138 = vector.broadcast %137 : vector<32x1xf32> to vector<32x256xf32>
    %139 = arith.mulf %136, %138 : vector<32x256xf32>
    %140 = arith.addf %129, %139 : vector<32x256xf32>
    %141 = vector.extract_strided_slice %73 {offsets = [0, 1], sizes = [32, 1], strides = [1, 1]} : vector<32x9xf32> to vector<32x1xf32>
    %142 = vector.broadcast %141 : vector<32x1xf32> to vector<32x256xf32>
    %143 = arith.mulf %136, %142 : vector<32x256xf32>
    %144 = arith.addf %132, %143 : vector<32x256xf32>
    %c15_i32_63 = arith.constant 15 : i32
    %145 = tpu.dynamic_rotate %72 by %c15_i32_63 dim 1 : vector<32x256xf32>, i32 -> vector<32x256xf32>
    %c8_64 = arith.constant 8 : index
    %c0_65 = arith.constant 0 : index
    %146 = vector.load %arg2[%c8_64, %c0_65] : memref<25x256xf32, #tpu.memory_space<vmem>>, vector<1x256xf32>
    %147 = vector.broadcast %146 : vector<1x256xf32> to vector<32x256xf32>
    %148 = arith.mulf %145, %147 : vector<32x256xf32>
    %149 = vector.extract_strided_slice %74 {offsets = [0, 8], sizes = [32, 1], strides = [1, 1]} : vector<32x25xf32> to vector<32x1xf32>
    %150 = vector.broadcast %149 : vector<32x1xf32> to vector<32x256xf32>
    %151 = arith.mulf %148, %150 : vector<32x256xf32>
    %152 = arith.addf %140, %151 : vector<32x256xf32>
    %153 = vector.extract_strided_slice %73 {offsets = [0, 2], sizes = [32, 1], strides = [1, 1]} : vector<32x9xf32> to vector<32x1xf32>
    %154 = vector.broadcast %153 : vector<32x1xf32> to vector<32x256xf32>
    %155 = arith.mulf %148, %154 : vector<32x256xf32>
    %156 = arith.addf %144, %155 : vector<32x256xf32>
    %c14_i32 = arith.constant 14 : i32
    %157 = tpu.dynamic_rotate %72 by %c14_i32 dim 1 : vector<32x256xf32>, i32 -> vector<32x256xf32>
    %c9 = arith.constant 9 : index
    %c0_66 = arith.constant 0 : index
    %158 = vector.load %arg2[%c9, %c0_66] : memref<25x256xf32, #tpu.memory_space<vmem>>, vector<1x256xf32>
    %159 = vector.broadcast %158 : vector<1x256xf32> to vector<32x256xf32>
    %160 = arith.mulf %157, %159 : vector<32x256xf32>
    %161 = vector.extract_strided_slice %74 {offsets = [0, 9], sizes = [32, 1], strides = [1, 1]} : vector<32x25xf32> to vector<32x1xf32>
    %162 = vector.broadcast %161 : vector<32x1xf32> to vector<32x256xf32>
    %163 = arith.mulf %160, %162 : vector<32x256xf32>
    %164 = arith.addf %152, %163 : vector<32x256xf32>
    %c2_i32 = arith.constant 2 : i32
    %165 = tpu.dynamic_rotate %72 by %c2_i32 dim 1 : vector<32x256xf32>, i32 -> vector<32x256xf32>
    %c10 = arith.constant 10 : index
    %c0_67 = arith.constant 0 : index
    %166 = vector.load %arg2[%c10, %c0_67] : memref<25x256xf32, #tpu.memory_space<vmem>>, vector<1x256xf32>
    %167 = vector.broadcast %166 : vector<1x256xf32> to vector<32x256xf32>
    %168 = arith.mulf %165, %167 : vector<32x256xf32>
    %169 = vector.extract_strided_slice %74 {offsets = [0, 10], sizes = [32, 1], strides = [1, 1]} : vector<32x25xf32> to vector<32x1xf32>
    %170 = vector.broadcast %169 : vector<32x1xf32> to vector<32x256xf32>
    %171 = arith.mulf %168, %170 : vector<32x256xf32>
    %172 = arith.addf %164, %171 : vector<32x256xf32>
    %c1_i32_68 = arith.constant 1 : i32
    %173 = tpu.dynamic_rotate %72 by %c1_i32_68 dim 1 : vector<32x256xf32>, i32 -> vector<32x256xf32>
    %c11_69 = arith.constant 11 : index
    %c0_70 = arith.constant 0 : index
    %174 = vector.load %arg2[%c11_69, %c0_70] : memref<25x256xf32, #tpu.memory_space<vmem>>, vector<1x256xf32>
    %175 = vector.broadcast %174 : vector<1x256xf32> to vector<32x256xf32>
    %176 = arith.mulf %173, %175 : vector<32x256xf32>
    %177 = vector.extract_strided_slice %74 {offsets = [0, 11], sizes = [32, 1], strides = [1, 1]} : vector<32x25xf32> to vector<32x1xf32>
    %178 = vector.broadcast %177 : vector<32x1xf32> to vector<32x256xf32>
    %179 = arith.mulf %176, %178 : vector<32x256xf32>
    %180 = arith.addf %172, %179 : vector<32x256xf32>
    %181 = vector.extract_strided_slice %73 {offsets = [0, 3], sizes = [32, 1], strides = [1, 1]} : vector<32x9xf32> to vector<32x1xf32>
    %182 = vector.broadcast %181 : vector<32x1xf32> to vector<32x256xf32>
    %183 = arith.mulf %176, %182 : vector<32x256xf32>
    %184 = arith.addf %156, %183 : vector<32x256xf32>
    %185 = vector.extract_strided_slice %74 {offsets = [0, 12], sizes = [32, 1], strides = [1, 1]} : vector<32x25xf32> to vector<32x1xf32>
    %186 = vector.broadcast %185 : vector<32x1xf32> to vector<32x256xf32>
    %187 = arith.mulf %72, %186 : vector<32x256xf32>
    %188 = arith.addf %180, %187 : vector<32x256xf32>
    %189 = vector.extract_strided_slice %73 {offsets = [0, 4], sizes = [32, 1], strides = [1, 1]} : vector<32x9xf32> to vector<32x1xf32>
    %190 = vector.broadcast %189 : vector<32x1xf32> to vector<32x256xf32>
    %191 = arith.mulf %72, %190 : vector<32x256xf32>
    %192 = arith.addf %184, %191 : vector<32x256xf32>
    %c255_i32_71 = arith.constant 255 : i32
    %193 = tpu.dynamic_rotate %72 by %c255_i32_71 dim 1 : vector<32x256xf32>, i32 -> vector<32x256xf32>
    %c13_72 = arith.constant 13 : index
    %c0_73 = arith.constant 0 : index
    %194 = vector.load %arg2[%c13_72, %c0_73] : memref<25x256xf32, #tpu.memory_space<vmem>>, vector<1x256xf32>
    %195 = vector.broadcast %194 : vector<1x256xf32> to vector<32x256xf32>
    %196 = arith.mulf %193, %195 : vector<32x256xf32>
    %197 = vector.extract_strided_slice %74 {offsets = [0, 13], sizes = [32, 1], strides = [1, 1]} : vector<32x25xf32> to vector<32x1xf32>
    %198 = vector.broadcast %197 : vector<32x1xf32> to vector<32x256xf32>
    %199 = arith.mulf %196, %198 : vector<32x256xf32>
    %200 = arith.addf %188, %199 : vector<32x256xf32>
    %201 = vector.extract_strided_slice %73 {offsets = [0, 5], sizes = [32, 1], strides = [1, 1]} : vector<32x9xf32> to vector<32x1xf32>
    %202 = vector.broadcast %201 : vector<32x1xf32> to vector<32x256xf32>
    %203 = arith.mulf %196, %202 : vector<32x256xf32>
    %204 = arith.addf %192, %203 : vector<32x256xf32>
    %c254_i32 = arith.constant 254 : i32
    %205 = tpu.dynamic_rotate %72 by %c254_i32 dim 1 : vector<32x256xf32>, i32 -> vector<32x256xf32>
    %c14 = arith.constant 14 : index
    %c0_74 = arith.constant 0 : index
    %206 = vector.load %arg2[%c14, %c0_74] : memref<25x256xf32, #tpu.memory_space<vmem>>, vector<1x256xf32>
    %207 = vector.broadcast %206 : vector<1x256xf32> to vector<32x256xf32>
    %208 = arith.mulf %205, %207 : vector<32x256xf32>
    %209 = vector.extract_strided_slice %74 {offsets = [0, 14], sizes = [32, 1], strides = [1, 1]} : vector<32x25xf32> to vector<32x1xf32>
    %210 = vector.broadcast %209 : vector<32x1xf32> to vector<32x256xf32>
    %211 = arith.mulf %208, %210 : vector<32x256xf32>
    %212 = arith.addf %200, %211 : vector<32x256xf32>
    %c242_i32 = arith.constant 242 : i32
    %213 = tpu.dynamic_rotate %72 by %c242_i32 dim 1 : vector<32x256xf32>, i32 -> vector<32x256xf32>
    %c15 = arith.constant 15 : index
    %c0_75 = arith.constant 0 : index
    %214 = vector.load %arg2[%c15, %c0_75] : memref<25x256xf32, #tpu.memory_space<vmem>>, vector<1x256xf32>
    %215 = vector.broadcast %214 : vector<1x256xf32> to vector<32x256xf32>
    %216 = arith.mulf %213, %215 : vector<32x256xf32>
    %217 = vector.extract_strided_slice %74 {offsets = [0, 15], sizes = [32, 1], strides = [1, 1]} : vector<32x25xf32> to vector<32x1xf32>
    %218 = vector.broadcast %217 : vector<32x1xf32> to vector<32x256xf32>
    %219 = arith.mulf %216, %218 : vector<32x256xf32>
    %220 = arith.addf %212, %219 : vector<32x256xf32>
    %c241_i32_76 = arith.constant 241 : i32
    %221 = tpu.dynamic_rotate %72 by %c241_i32_76 dim 1 : vector<32x256xf32>, i32 -> vector<32x256xf32>
    %c16_77 = arith.constant 16 : index
    %c0_78 = arith.constant 0 : index
    %222 = vector.load %arg2[%c16_77, %c0_78] : memref<25x256xf32, #tpu.memory_space<vmem>>, vector<1x256xf32>
    %223 = vector.broadcast %222 : vector<1x256xf32> to vector<32x256xf32>
    %224 = arith.mulf %221, %223 : vector<32x256xf32>
    %225 = vector.extract_strided_slice %74 {offsets = [0, 16], sizes = [32, 1], strides = [1, 1]} : vector<32x25xf32> to vector<32x1xf32>
    %226 = vector.broadcast %225 : vector<32x1xf32> to vector<32x256xf32>
    %227 = arith.mulf %224, %226 : vector<32x256xf32>
    %228 = arith.addf %220, %227 : vector<32x256xf32>
    %229 = vector.extract_strided_slice %73 {offsets = [0, 6], sizes = [32, 1], strides = [1, 1]} : vector<32x9xf32> to vector<32x1xf32>
    %230 = vector.broadcast %229 : vector<32x1xf32> to vector<32x256xf32>
    %231 = arith.mulf %224, %230 : vector<32x256xf32>
    %232 = arith.addf %204, %231 : vector<32x256xf32>
    %c240_i32_79 = arith.constant 240 : i32
    %233 = tpu.dynamic_rotate %72 by %c240_i32_79 dim 1 : vector<32x256xf32>, i32 -> vector<32x256xf32>
    %c17_80 = arith.constant 17 : index
    %c0_81 = arith.constant 0 : index
    %234 = vector.load %arg2[%c17_80, %c0_81] : memref<25x256xf32, #tpu.memory_space<vmem>>, vector<1x256xf32>
    %235 = vector.broadcast %234 : vector<1x256xf32> to vector<32x256xf32>
    %236 = arith.mulf %233, %235 : vector<32x256xf32>
    %237 = vector.extract_strided_slice %74 {offsets = [0, 17], sizes = [32, 1], strides = [1, 1]} : vector<32x25xf32> to vector<32x1xf32>
    %238 = vector.broadcast %237 : vector<32x1xf32> to vector<32x256xf32>
    %239 = arith.mulf %236, %238 : vector<32x256xf32>
    %240 = arith.addf %228, %239 : vector<32x256xf32>
    %241 = vector.extract_strided_slice %73 {offsets = [0, 7], sizes = [32, 1], strides = [1, 1]} : vector<32x9xf32> to vector<32x1xf32>
    %242 = vector.broadcast %241 : vector<32x1xf32> to vector<32x256xf32>
    %243 = arith.mulf %236, %242 : vector<32x256xf32>
    %244 = arith.addf %232, %243 : vector<32x256xf32>
    %c239_i32_82 = arith.constant 239 : i32
    %245 = tpu.dynamic_rotate %72 by %c239_i32_82 dim 1 : vector<32x256xf32>, i32 -> vector<32x256xf32>
    %c18_83 = arith.constant 18 : index
    %c0_84 = arith.constant 0 : index
    %246 = vector.load %arg2[%c18_83, %c0_84] : memref<25x256xf32, #tpu.memory_space<vmem>>, vector<1x256xf32>
    %247 = vector.broadcast %246 : vector<1x256xf32> to vector<32x256xf32>
    %248 = arith.mulf %245, %247 : vector<32x256xf32>
    %249 = vector.extract_strided_slice %74 {offsets = [0, 18], sizes = [32, 1], strides = [1, 1]} : vector<32x25xf32> to vector<32x1xf32>
    %250 = vector.broadcast %249 : vector<32x1xf32> to vector<32x256xf32>
    %251 = arith.mulf %248, %250 : vector<32x256xf32>
    %252 = arith.addf %240, %251 : vector<32x256xf32>
    %253 = vector.extract_strided_slice %73 {offsets = [0, 8], sizes = [32, 1], strides = [1, 1]} : vector<32x9xf32> to vector<32x1xf32>
    %254 = vector.broadcast %253 : vector<32x1xf32> to vector<32x256xf32>
    %255 = arith.mulf %248, %254 : vector<32x256xf32>
    %256 = arith.addf %244, %255 : vector<32x256xf32>
    %c238_i32 = arith.constant 238 : i32
    %257 = tpu.dynamic_rotate %72 by %c238_i32 dim 1 : vector<32x256xf32>, i32 -> vector<32x256xf32>
    %c19 = arith.constant 19 : index
    %c0_85 = arith.constant 0 : index
    %258 = vector.load %arg2[%c19, %c0_85] : memref<25x256xf32, #tpu.memory_space<vmem>>, vector<1x256xf32>
    %259 = vector.broadcast %258 : vector<1x256xf32> to vector<32x256xf32>
    %260 = arith.mulf %257, %259 : vector<32x256xf32>
    %261 = vector.extract_strided_slice %74 {offsets = [0, 19], sizes = [32, 1], strides = [1, 1]} : vector<32x25xf32> to vector<32x1xf32>
    %262 = vector.broadcast %261 : vector<32x1xf32> to vector<32x256xf32>
    %263 = arith.mulf %260, %262 : vector<32x256xf32>
    %264 = arith.addf %252, %263 : vector<32x256xf32>
    %c226_i32 = arith.constant 226 : i32
    %265 = tpu.dynamic_rotate %72 by %c226_i32 dim 1 : vector<32x256xf32>, i32 -> vector<32x256xf32>
    %c20 = arith.constant 20 : index
    %c0_86 = arith.constant 0 : index
    %266 = vector.load %arg2[%c20, %c0_86] : memref<25x256xf32, #tpu.memory_space<vmem>>, vector<1x256xf32>
    %267 = vector.broadcast %266 : vector<1x256xf32> to vector<32x256xf32>
    %268 = arith.mulf %265, %267 : vector<32x256xf32>
    %269 = vector.extract_strided_slice %74 {offsets = [0, 20], sizes = [32, 1], strides = [1, 1]} : vector<32x25xf32> to vector<32x1xf32>
    %270 = vector.broadcast %269 : vector<32x1xf32> to vector<32x256xf32>
    %271 = arith.mulf %268, %270 : vector<32x256xf32>
    %272 = arith.addf %264, %271 : vector<32x256xf32>
    %c225_i32 = arith.constant 225 : i32
    %273 = tpu.dynamic_rotate %72 by %c225_i32 dim 1 : vector<32x256xf32>, i32 -> vector<32x256xf32>
    %c21 = arith.constant 21 : index
    %c0_87 = arith.constant 0 : index
    %274 = vector.load %arg2[%c21, %c0_87] : memref<25x256xf32, #tpu.memory_space<vmem>>, vector<1x256xf32>
    %275 = vector.broadcast %274 : vector<1x256xf32> to vector<32x256xf32>
    %276 = arith.mulf %273, %275 : vector<32x256xf32>
    %277 = vector.extract_strided_slice %74 {offsets = [0, 21], sizes = [32, 1], strides = [1, 1]} : vector<32x25xf32> to vector<32x1xf32>
    %278 = vector.broadcast %277 : vector<32x1xf32> to vector<32x256xf32>
    %279 = arith.mulf %276, %278 : vector<32x256xf32>
    %280 = arith.addf %272, %279 : vector<32x256xf32>
    %c224_i32 = arith.constant 224 : i32
    %281 = tpu.dynamic_rotate %72 by %c224_i32 dim 1 : vector<32x256xf32>, i32 -> vector<32x256xf32>
    %c22 = arith.constant 22 : index
    %c0_88 = arith.constant 0 : index
    %282 = vector.load %arg2[%c22, %c0_88] : memref<25x256xf32, #tpu.memory_space<vmem>>, vector<1x256xf32>
    %283 = vector.broadcast %282 : vector<1x256xf32> to vector<32x256xf32>
    %284 = arith.mulf %281, %283 : vector<32x256xf32>
    %285 = vector.extract_strided_slice %74 {offsets = [0, 22], sizes = [32, 1], strides = [1, 1]} : vector<32x25xf32> to vector<32x1xf32>
    %286 = vector.broadcast %285 : vector<32x1xf32> to vector<32x256xf32>
    %287 = arith.mulf %284, %286 : vector<32x256xf32>
    %288 = arith.addf %280, %287 : vector<32x256xf32>
    %c223_i32 = arith.constant 223 : i32
    %289 = tpu.dynamic_rotate %72 by %c223_i32 dim 1 : vector<32x256xf32>, i32 -> vector<32x256xf32>
    %c23 = arith.constant 23 : index
    %c0_89 = arith.constant 0 : index
    %290 = vector.load %arg2[%c23, %c0_89] : memref<25x256xf32, #tpu.memory_space<vmem>>, vector<1x256xf32>
    %291 = vector.broadcast %290 : vector<1x256xf32> to vector<32x256xf32>
    %292 = arith.mulf %289, %291 : vector<32x256xf32>
    %293 = vector.extract_strided_slice %74 {offsets = [0, 23], sizes = [32, 1], strides = [1, 1]} : vector<32x25xf32> to vector<32x1xf32>
    %294 = vector.broadcast %293 : vector<32x1xf32> to vector<32x256xf32>
    %295 = arith.mulf %292, %294 : vector<32x256xf32>
    %296 = arith.addf %288, %295 : vector<32x256xf32>
    %c222_i32 = arith.constant 222 : i32
    %297 = tpu.dynamic_rotate %72 by %c222_i32 dim 1 : vector<32x256xf32>, i32 -> vector<32x256xf32>
    %c24 = arith.constant 24 : index
    %c0_90 = arith.constant 0 : index
    %298 = vector.load %arg2[%c24, %c0_90] : memref<25x256xf32, #tpu.memory_space<vmem>>, vector<1x256xf32>
    %299 = vector.broadcast %298 : vector<1x256xf32> to vector<32x256xf32>
    %300 = arith.mulf %297, %299 : vector<32x256xf32>
    %301 = vector.extract_strided_slice %74 {offsets = [0, 24], sizes = [32, 1], strides = [1, 1]} : vector<32x25xf32> to vector<32x1xf32>
    %302 = vector.broadcast %301 : vector<32x1xf32> to vector<32x256xf32>
    %303 = arith.mulf %300, %302 : vector<32x256xf32>
    %304 = arith.addf %296, %303 : vector<32x256xf32>
    %c0_91 = arith.constant 0 : index
    %c0_92 = arith.constant 0 : index
    %c0_93 = arith.constant 0 : index
    %305 = vector.load %arg7[%c0_91, %c0_92, %c0_93] : memref<2x32x32xf32, #tpu.memory_space<vmem>>, vector<1x32x32xf32>
    %306 = vector.shape_cast %305 : vector<1x32x32xf32> to vector<32x32xf32>
    %cst_94 = arith.constant dense<0.000000e+00> : vector<32x256xf32>
    %307 = tpu.matmul %306, %256, %cst_94 {dimension_numbers = #tpu.dot_dimension_numbers<[1], [0], [0], [1], [0, 0, 1, 1], [], []>} : vector<32x32xf32>, vector<32x256xf32>, vector<32x256xf32> -> vector<32x256xf32>
    %c1_95 = arith.constant 1 : index
    %c0_96 = arith.constant 0 : index
    %c0_97 = arith.constant 0 : index
    %308 = vector.load %arg7[%c1_95, %c0_96, %c0_97] : memref<2x32x32xf32, #tpu.memory_space<vmem>>, vector<1x32x32xf32>
    %309 = vector.shape_cast %308 : vector<1x32x32xf32> to vector<32x32xf32>
    %cst_98 = arith.constant dense<0.000000e+00> : vector<32x256xf32>
    %310 = tpu.matmul %309, %304, %cst_98 {dimension_numbers = #tpu.dot_dimension_numbers<[1], [0], [0], [1], [0, 0, 1, 1], [], []>} : vector<32x32xf32>, vector<32x256xf32>, vector<32x256xf32> -> vector<32x256xf32>
    %311 = arith.addf %307, %310 : vector<32x256xf32>
    %c0_99 = arith.constant 0 : index
    %c0_100 = arith.constant 0 : index
    %312 = vector.load %arg8[%c0_99, %c0_100] : memref<32x1xf32, #tpu.memory_space<vmem>>, vector<32x1xf32>
    %313 = vector.broadcast %312 : vector<32x1xf32> to vector<32x256xf32>
    %314 = arith.addf %311, %313 : vector<32x256xf32>
    %cst_101 = arith.constant dense<0.000000e+00> : vector<32xf32>
    %315 = vector.multi_reduction <add>, %314, %cst_101 [1] : vector<32x256xf32> to vector<32xf32>
    %316 = vector.shape_cast %315 : vector<32xf32> to vector<32x1xf32>
    %cst_102 = arith.constant 3.906250e-03 : f32
    %317 = vector.broadcast %cst_102 : f32 to vector<32x1xf32>
    %318 = arith.mulf %316, %317 : vector<32x1xf32>
    %c0_103 = arith.constant 0 : index
    %c0_104 = arith.constant 0 : index
    %319 = vector.load %arg9[%c0_103, %c0_104] : memref<32x2xf32, #tpu.memory_space<vmem>>, vector<32x2xf32>
    %320 = vector.broadcast %318 : vector<32x1xf32> to vector<32x2xf32>
    %321 = arith.mulf %319, %320 : vector<32x2xf32>
    %cst_105 = arith.constant dense<0.000000e+00> : vector<2xf32>
    %322 = vector.multi_reduction <add>, %321, %cst_105 [0] : vector<32x2xf32> to vector<2xf32>
    %323 = vector.shape_cast %322 : vector<2xf32> to vector<1x2xf32>
    %c0_106 = arith.constant 0 : index
    %c0_107 = arith.constant 0 : index
    %324 = vector.load %arg10[%c0_106, %c0_107] : memref<1x2xf32, #tpu.memory_space<vmem>>, vector<1x2xf32>
    %325 = arith.addf %323, %324 : vector<1x2xf32>
    %cst_108 = arith.constant 0.000000e+00 : f32
    %326 = vector.broadcast %cst_108 : f32 to vector<1x2xf32>
    %327 = arith.maximumf %325, %326 : vector<1x2xf32>
    %c0_109 = arith.constant 0 : index
    %c0_110 = arith.constant 0 : index
    %328 = vector.load %arg11[%c0_109, %c0_110] : memref<32x2xf32, #tpu.memory_space<vmem>>, vector<32x2xf32>
    %329 = vector.broadcast %327 : vector<1x2xf32> to vector<32x2xf32>
    %330 = arith.mulf %328, %329 : vector<32x2xf32>
    %cst_111 = arith.constant dense<0.000000e+00> : vector<32xf32>
    %331 = vector.multi_reduction <add>, %330, %cst_111 [1] : vector<32x2xf32> to vector<32xf32>
    %332 = vector.shape_cast %331 : vector<32xf32> to vector<32x1xf32>
    %c0_112 = arith.constant 0 : index
    %c0_113 = arith.constant 0 : index
    %333 = vector.load %arg12[%c0_112, %c0_113] : memref<32x1xf32, #tpu.memory_space<vmem>>, vector<32x1xf32>
    %334 = arith.addf %332, %333 : vector<32x1xf32>
    %335 = arith.negf %334 : vector<32x1xf32>
    %336 = math.exp %335 : vector<32x1xf32>
    %cst_114 = arith.constant 1.000000e+00 : f32
    %337 = vector.broadcast %cst_114 : f32 to vector<32x1xf32>
    %338 = arith.addf %337, %336 : vector<32x1xf32>
    %339 = arith.divf %337, %338 : vector<32x1xf32>
    %340 = vector.broadcast %339 : vector<32x1xf32> to vector<32x256xf32>
    %341 = arith.mulf %314, %340 : vector<32x256xf32>
    %342 = arith.mulf %341, %341 : vector<32x256xf32>
    %343 = arith.mulf %342, %341 : vector<32x256xf32>
    %cst_115 = arith.constant 4.471500e-02 : f32
    %344 = vector.broadcast %cst_115 : f32 to vector<32x256xf32>
    %345 = arith.mulf %344, %343 : vector<32x256xf32>
    %346 = arith.addf %341, %345 : vector<32x256xf32>
    %cst_116 = arith.constant 0.797884583 : f32
    %347 = vector.broadcast %cst_116 : f32 to vector<32x256xf32>
    %348 = arith.mulf %347, %346 : vector<32x256xf32>
    %349 = math.tanh %348 : vector<32x256xf32>
    %cst_117 = arith.constant 1.000000e+00 : f32
    %350 = vector.broadcast %cst_117 : f32 to vector<32x256xf32>
    %351 = arith.addf %350, %349 : vector<32x256xf32>
    %352 = arith.mulf %341, %351 : vector<32x256xf32>
    %c0_118 = arith.constant 0 : index
    %c0_119 = arith.constant 0 : index
    %353 = vector.load %arg13[%c0_118, %c0_119] : memref<32x1xf32, #tpu.memory_space<vmem>>, vector<32x1xf32>
    %354 = vector.broadcast %353 : vector<32x1xf32> to vector<32x256xf32>
    %355 = arith.mulf %352, %354 : vector<32x256xf32>
    %c0_120 = arith.constant 0 : index
    %c0_121 = arith.constant 0 : index
    %356 = vector.load %arg14[%c0_120, %c0_121] : memref<32x1xf32, #tpu.memory_space<vmem>>, vector<32x1xf32>
    %357 = vector.broadcast %356 : vector<32x1xf32> to vector<32x256xf32>
    %358 = arith.addf %355, %357 : vector<32x256xf32>
    %359 = arith.index_cast %c0_i32 : i32 to index
    %c0_122 = arith.constant 0 : index
    %c0_123 = arith.constant 0 : index
    %360 = vector.load %arg1[%359, %c0_122, %c0_123] : memref<2x32x256xf32, #tpu.memory_space<vmem>>, vector<1x32x256xf32>
    %361 = vector.shape_cast %360 : vector<1x32x256xf32> to vector<32x256xf32>
    %362 = arith.addf %358, %361 : vector<32x256xf32>
    %363 = arith.index_cast %c0_i32 : i32 to index
    %c0_124 = arith.constant 0 : index
    %c0_125 = arith.constant 0 : index
    %364 = vector.load %arg15[%363, %c0_124, %c0_125] : memref<2x32x256xf32, #tpu.memory_space<vmem>>, vector<1x32x256xf32>
    %365 = vector.shape_cast %364 : vector<1x32x256xf32> to vector<32x256xf32>
    %366 = vector.shape_cast %362 : vector<32x256xf32> to vector<1x32x256xf32>
    tpu.vector_store %arg15[%363, %c0_124, %c0_125], %366 {strides = array<i32>} : memref<2x32x256xf32, #tpu.memory_space<vmem>>, vector<1x32x256xf32>,
    %c1_i32_126 = arith.constant 1 : i32
    %367 = arith.index_cast %c1_i32_126 : i32 to index
    %c0_127 = arith.constant 0 : index
    %c0_128 = arith.constant 0 : index
    %368 = vector.load %arg1[%367, %c0_127, %c0_128] : memref<2x32x256xf32, #tpu.memory_space<vmem>>, vector<1x32x256xf32>
    %369 = vector.shape_cast %368 : vector<1x32x256xf32> to vector<32x256xf32>
    %c0_129 = arith.constant 0 : index
    %c0_130 = arith.constant 0 : index
    %370 = vector.load %arg4[%c0_129, %c0_130] : memref<32x1xf32, #tpu.memory_space<vmem>>, vector<32x1xf32>
    %c0_131 = arith.constant 0 : index
    %c0_132 = arith.constant 0 : index
    %c0_133 = arith.constant 0 : index
    %371 = vector.load %arg3[%c0_131, %c0_132, %c0_133] : memref<9x32x32xf32, #tpu.memory_space<vmem>>, vector<1x32x32xf32>
    %372 = vector.shape_cast %371 : vector<1x32x32xf32> to vector<32x32xf32>
    %c17_i32_134 = arith.constant 17 : i32
    %373 = tpu.dynamic_rotate %369 by %c17_i32_134 dim 1 : vector<32x256xf32>, i32 -> vector<32x256xf32>
    %c6_135 = arith.constant 6 : index
    %c0_136 = arith.constant 0 : index
    %374 = vector.load %arg2[%c6_135, %c0_136] : memref<25x256xf32, #tpu.memory_space<vmem>>, vector<1x256xf32>
    %375 = vector.broadcast %374 : vector<1x256xf32> to vector<32x256xf32>
    %376 = arith.mulf %373, %375 : vector<32x256xf32>
    %cst_137 = arith.constant dense<0.000000e+00> : vector<32x256xf32>
    %377 = tpu.matmul %372, %376, %cst_137 {dimension_numbers = #tpu.dot_dimension_numbers<[1], [0], [0], [1], [0, 0, 1, 1], [], []>} : vector<32x32xf32>, vector<32x256xf32>, vector<32x256xf32> -> vector<32x256xf32>
    %378 = vector.broadcast %370 : vector<32x1xf32> to vector<32x256xf32>
    %379 = arith.addf %378, %377 : vector<32x256xf32>
    %c1_138 = arith.constant 1 : index
    %c0_139 = arith.constant 0 : index
    %c0_140 = arith.constant 0 : index
    %380 = vector.load %arg3[%c1_138, %c0_139, %c0_140] : memref<9x32x32xf32, #tpu.memory_space<vmem>>, vector<1x32x32xf32>
    %381 = vector.shape_cast %380 : vector<1x32x32xf32> to vector<32x32xf32>
    %c16_i32_141 = arith.constant 16 : i32
    %382 = tpu.dynamic_rotate %369 by %c16_i32_141 dim 1 : vector<32x256xf32>, i32 -> vector<32x256xf32>
    %c7_142 = arith.constant 7 : index
    %c0_143 = arith.constant 0 : index
    %383 = vector.load %arg2[%c7_142, %c0_143] : memref<25x256xf32, #tpu.memory_space<vmem>>, vector<1x256xf32>
    %384 = vector.broadcast %383 : vector<1x256xf32> to vector<32x256xf32>
    %385 = arith.mulf %382, %384 : vector<32x256xf32>
    %cst_144 = arith.constant dense<0.000000e+00> : vector<32x256xf32>
    %386 = tpu.matmul %381, %385, %cst_144 {dimension_numbers = #tpu.dot_dimension_numbers<[1], [0], [0], [1], [0, 0, 1, 1], [], []>} : vector<32x32xf32>, vector<32x256xf32>, vector<32x256xf32> -> vector<32x256xf32>
    %387 = arith.addf %379, %386 : vector<32x256xf32>
    %c2_145 = arith.constant 2 : index
    %c0_146 = arith.constant 0 : index
    %c0_147 = arith.constant 0 : index
    %388 = vector.load %arg3[%c2_145, %c0_146, %c0_147] : memref<9x32x32xf32, #tpu.memory_space<vmem>>, vector<1x32x32xf32>
    %389 = vector.shape_cast %388 : vector<1x32x32xf32> to vector<32x32xf32>
    %c15_i32_148 = arith.constant 15 : i32
    %390 = tpu.dynamic_rotate %369 by %c15_i32_148 dim 1 : vector<32x256xf32>, i32 -> vector<32x256xf32>
    %c8_149 = arith.constant 8 : index
    %c0_150 = arith.constant 0 : index
    %391 = vector.load %arg2[%c8_149, %c0_150] : memref<25x256xf32, #tpu.memory_space<vmem>>, vector<1x256xf32>
    %392 = vector.broadcast %391 : vector<1x256xf32> to vector<32x256xf32>
    %393 = arith.mulf %390, %392 : vector<32x256xf32>
    %cst_151 = arith.constant dense<0.000000e+00> : vector<32x256xf32>
    %394 = tpu.matmul %389, %393, %cst_151 {dimension_numbers = #tpu.dot_dimension_numbers<[1], [0], [0], [1], [0, 0, 1, 1], [], []>} : vector<32x32xf32>, vector<32x256xf32>, vector<32x256xf32> -> vector<32x256xf32>
    %395 = arith.addf %387, %394 : vector<32x256xf32>
    %c3_152 = arith.constant 3 : index
    %c0_153 = arith.constant 0 : index
    %c0_154 = arith.constant 0 : index
    %396 = vector.load %arg3[%c3_152, %c0_153, %c0_154] : memref<9x32x32xf32, #tpu.memory_space<vmem>>, vector<1x32x32xf32>
    %397 = vector.shape_cast %396 : vector<1x32x32xf32> to vector<32x32xf32>
    %c1_i32_155 = arith.constant 1 : i32
    %398 = tpu.dynamic_rotate %369 by %c1_i32_155 dim 1 : vector<32x256xf32>, i32 -> vector<32x256xf32>
    %c11_156 = arith.constant 11 : index
    %c0_157 = arith.constant 0 : index
    %399 = vector.load %arg2[%c11_156, %c0_157] : memref<25x256xf32, #tpu.memory_space<vmem>>, vector<1x256xf32>
    %400 = vector.broadcast %399 : vector<1x256xf32> to vector<32x256xf32>
    %401 = arith.mulf %398, %400 : vector<32x256xf32>
    %cst_158 = arith.constant dense<0.000000e+00> : vector<32x256xf32>
    %402 = tpu.matmul %397, %401, %cst_158 {dimension_numbers = #tpu.dot_dimension_numbers<[1], [0], [0], [1], [0, 0, 1, 1], [], []>} : vector<32x32xf32>, vector<32x256xf32>, vector<32x256xf32> -> vector<32x256xf32>
    %403 = arith.addf %395, %402 : vector<32x256xf32>
    %c4_159 = arith.constant 4 : index
    %c0_160 = arith.constant 0 : index
    %c0_161 = arith.constant 0 : index
    %404 = vector.load %arg3[%c4_159, %c0_160, %c0_161] : memref<9x32x32xf32, #tpu.memory_space<vmem>>, vector<1x32x32xf32>
    %405 = vector.shape_cast %404 : vector<1x32x32xf32> to vector<32x32xf32>
    %cst_162 = arith.constant dense<0.000000e+00> : vector<32x256xf32>
    %406 = tpu.matmul %405, %369, %cst_162 {dimension_numbers = #tpu.dot_dimension_numbers<[1], [0], [0], [1], [0, 0, 1, 1], [], []>} : vector<32x32xf32>, vector<32x256xf32>, vector<32x256xf32> -> vector<32x256xf32>
    %407 = arith.addf %403, %406 : vector<32x256xf32>
    %c5_163 = arith.constant 5 : index
    %c0_164 = arith.constant 0 : index
    %c0_165 = arith.constant 0 : index
    %408 = vector.load %arg3[%c5_163, %c0_164, %c0_165] : memref<9x32x32xf32, #tpu.memory_space<vmem>>, vector<1x32x32xf32>
    %409 = vector.shape_cast %408 : vector<1x32x32xf32> to vector<32x32xf32>
    %c255_i32_166 = arith.constant 255 : i32
    %410 = tpu.dynamic_rotate %369 by %c255_i32_166 dim 1 : vector<32x256xf32>, i32 -> vector<32x256xf32>
    %c13_167 = arith.constant 13 : index
    %c0_168 = arith.constant 0 : index
    %411 = vector.load %arg2[%c13_167, %c0_168] : memref<25x256xf32, #tpu.memory_space<vmem>>, vector<1x256xf32>
    %412 = vector.broadcast %411 : vector<1x256xf32> to vector<32x256xf32>
    %413 = arith.mulf %410, %412 : vector<32x256xf32>
    %cst_169 = arith.constant dense<0.000000e+00> : vector<32x256xf32>
    %414 = tpu.matmul %409, %413, %cst_169 {dimension_numbers = #tpu.dot_dimension_numbers<[1], [0], [0], [1], [0, 0, 1, 1], [], []>} : vector<32x32xf32>, vector<32x256xf32>, vector<32x256xf32> -> vector<32x256xf32>
    %415 = arith.addf %407, %414 : vector<32x256xf32>
    %c6_170 = arith.constant 6 : index
    %c0_171 = arith.constant 0 : index
    %c0_172 = arith.constant 0 : index
    %416 = vector.load %arg3[%c6_170, %c0_171, %c0_172] : memref<9x32x32xf32, #tpu.memory_space<vmem>>, vector<1x32x32xf32>
    %417 = vector.shape_cast %416 : vector<1x32x32xf32> to vector<32x32xf32>
    %c241_i32_173 = arith.constant 241 : i32
    %418 = tpu.dynamic_rotate %369 by %c241_i32_173 dim 1 : vector<32x256xf32>, i32 -> vector<32x256xf32>
    %c16_174 = arith.constant 16 : index
    %c0_175 = arith.constant 0 : index
    %419 = vector.load %arg2[%c16_174, %c0_175] : memref<25x256xf32, #tpu.memory_space<vmem>>, vector<1x256xf32>
    %420 = vector.broadcast %419 : vector<1x256xf32> to vector<32x256xf32>
    %421 = arith.mulf %418, %420 : vector<32x256xf32>
    %cst_176 = arith.constant dense<0.000000e+00> : vector<32x256xf32>
    %422 = tpu.matmul %417, %421, %cst_176 {dimension_numbers = #tpu.dot_dimension_numbers<[1], [0], [0], [1], [0, 0, 1, 1], [], []>} : vector<32x32xf32>, vector<32x256xf32>, vector<32x256xf32> -> vector<32x256xf32>
    %423 = arith.addf %415, %422 : vector<32x256xf32>
    %c7_177 = arith.constant 7 : index
    %c0_178 = arith.constant 0 : index
    %c0_179 = arith.constant 0 : index
    %424 = vector.load %arg3[%c7_177, %c0_178, %c0_179] : memref<9x32x32xf32, #tpu.memory_space<vmem>>, vector<1x32x32xf32>
    %425 = vector.shape_cast %424 : vector<1x32x32xf32> to vector<32x32xf32>
    %c240_i32_180 = arith.constant 240 : i32
    %426 = tpu.dynamic_rotate %369 by %c240_i32_180 dim 1 : vector<32x256xf32>, i32 -> vector<32x256xf32>
    %c17_181 = arith.constant 17 : index
    %c0_182 = arith.constant 0 : index
    %427 = vector.load %arg2[%c17_181, %c0_182] : memref<25x256xf32, #tpu.memory_space<vmem>>, vector<1x256xf32>
    %428 = vector.broadcast %427 : vector<1x256xf32> to vector<32x256xf32>
    %429 = arith.mulf %426, %428 : vector<32x256xf32>
    %cst_183 = arith.constant dense<0.000000e+00> : vector<32x256xf32>
    %430 = tpu.matmul %425, %429, %cst_183 {dimension_numbers = #tpu.dot_dimension_numbers<[1], [0], [0], [1], [0, 0, 1, 1], [], []>} : vector<32x32xf32>, vector<32x256xf32>, vector<32x256xf32> -> vector<32x256xf32>
    %431 = arith.addf %423, %430 : vector<32x256xf32>
    %c8_184 = arith.constant 8 : index
    %c0_185 = arith.constant 0 : index
    %c0_186 = arith.constant 0 : index
    %432 = vector.load %arg3[%c8_184, %c0_185, %c0_186] : memref<9x32x32xf32, #tpu.memory_space<vmem>>, vector<1x32x32xf32>
    %433 = vector.shape_cast %432 : vector<1x32x32xf32> to vector<32x32xf32>
    %c239_i32_187 = arith.constant 239 : i32
    %434 = tpu.dynamic_rotate %369 by %c239_i32_187 dim 1 : vector<32x256xf32>, i32 -> vector<32x256xf32>
    %c18_188 = arith.constant 18 : index
    %c0_189 = arith.constant 0 : index
    %435 = vector.load %arg2[%c18_188, %c0_189] : memref<25x256xf32, #tpu.memory_space<vmem>>, vector<1x256xf32>
    %436 = vector.broadcast %435 : vector<1x256xf32> to vector<32x256xf32>
    %437 = arith.mulf %434, %436 : vector<32x256xf32>
    %cst_190 = arith.constant dense<0.000000e+00> : vector<32x256xf32>
    %438 = tpu.matmul %433, %437, %cst_190 {dimension_numbers = #tpu.dot_dimension_numbers<[1], [0], [0], [1], [0, 0, 1, 1], [], []>} : vector<32x32xf32>, vector<32x256xf32>, vector<32x256xf32> -> vector<32x256xf32>
    %439 = arith.addf %431, %438 : vector<32x256xf32>
    %c0_191 = arith.constant 0 : index
    %c0_192 = arith.constant 0 : index
    %440 = vector.load %arg5[%c0_191, %c0_192] : memref<32x9xf32, #tpu.memory_space<vmem>>, vector<32x9xf32>
    %c0_193 = arith.constant 0 : index
    %c0_194 = arith.constant 0 : index
    %441 = vector.load %arg6[%c0_193, %c0_194] : memref<32x25xf32, #tpu.memory_space<vmem>>, vector<32x25xf32>
    %c34_i32_195 = arith.constant 34 : i32
    %442 = tpu.dynamic_rotate %439 by %c34_i32_195 dim 1 : vector<32x256xf32>, i32 -> vector<32x256xf32>
    %c0_196 = arith.constant 0 : index
    %c0_197 = arith.constant 0 : index
    %443 = vector.load %arg2[%c0_196, %c0_197] : memref<25x256xf32, #tpu.memory_space<vmem>>, vector<1x256xf32>
    %444 = vector.broadcast %443 : vector<1x256xf32> to vector<32x256xf32>
    %445 = arith.mulf %442, %444 : vector<32x256xf32>
    %446 = vector.extract_strided_slice %441 {offsets = [0, 0], sizes = [32, 1], strides = [1, 1]} : vector<32x25xf32> to vector<32x1xf32>
    %447 = vector.broadcast %446 : vector<32x1xf32> to vector<32x256xf32>
    %448 = arith.mulf %445, %447 : vector<32x256xf32>
    %c33_i32_198 = arith.constant 33 : i32
    %449 = tpu.dynamic_rotate %439 by %c33_i32_198 dim 1 : vector<32x256xf32>, i32 -> vector<32x256xf32>
    %c1_199 = arith.constant 1 : index
    %c0_200 = arith.constant 0 : index
    %450 = vector.load %arg2[%c1_199, %c0_200] : memref<25x256xf32, #tpu.memory_space<vmem>>, vector<1x256xf32>
    %451 = vector.broadcast %450 : vector<1x256xf32> to vector<32x256xf32>
    %452 = arith.mulf %449, %451 : vector<32x256xf32>
    %453 = vector.extract_strided_slice %441 {offsets = [0, 1], sizes = [32, 1], strides = [1, 1]} : vector<32x25xf32> to vector<32x1xf32>
    %454 = vector.broadcast %453 : vector<32x1xf32> to vector<32x256xf32>
    %455 = arith.mulf %452, %454 : vector<32x256xf32>
    %456 = arith.addf %448, %455 : vector<32x256xf32>
    %c32_i32_201 = arith.constant 32 : i32
    %457 = tpu.dynamic_rotate %439 by %c32_i32_201 dim 1 : vector<32x256xf32>, i32 -> vector<32x256xf32>
    %c2_202 = arith.constant 2 : index
    %c0_203 = arith.constant 0 : index
    %458 = vector.load %arg2[%c2_202, %c0_203] : memref<25x256xf32, #tpu.memory_space<vmem>>, vector<1x256xf32>
    %459 = vector.broadcast %458 : vector<1x256xf32> to vector<32x256xf32>
    %460 = arith.mulf %457, %459 : vector<32x256xf32>
    %461 = vector.extract_strided_slice %441 {offsets = [0, 2], sizes = [32, 1], strides = [1, 1]} : vector<32x25xf32> to vector<32x1xf32>
    %462 = vector.broadcast %461 : vector<32x1xf32> to vector<32x256xf32>
    %463 = arith.mulf %460, %462 : vector<32x256xf32>
    %464 = arith.addf %456, %463 : vector<32x256xf32>
    %c31_i32_204 = arith.constant 31 : i32
    %465 = tpu.dynamic_rotate %439 by %c31_i32_204 dim 1 : vector<32x256xf32>, i32 -> vector<32x256xf32>
    %c3_205 = arith.constant 3 : index
    %c0_206 = arith.constant 0 : index
    %466 = vector.load %arg2[%c3_205, %c0_206] : memref<25x256xf32, #tpu.memory_space<vmem>>, vector<1x256xf32>
    %467 = vector.broadcast %466 : vector<1x256xf32> to vector<32x256xf32>
    %468 = arith.mulf %465, %467 : vector<32x256xf32>
    %469 = vector.extract_strided_slice %441 {offsets = [0, 3], sizes = [32, 1], strides = [1, 1]} : vector<32x25xf32> to vector<32x1xf32>
    %470 = vector.broadcast %469 : vector<32x1xf32> to vector<32x256xf32>
    %471 = arith.mulf %468, %470 : vector<32x256xf32>
    %472 = arith.addf %464, %471 : vector<32x256xf32>
    %c30_i32_207 = arith.constant 30 : i32
    %473 = tpu.dynamic_rotate %439 by %c30_i32_207 dim 1 : vector<32x256xf32>, i32 -> vector<32x256xf32>
    %c4_208 = arith.constant 4 : index
    %c0_209 = arith.constant 0 : index
    %474 = vector.load %arg2[%c4_208, %c0_209] : memref<25x256xf32, #tpu.memory_space<vmem>>, vector<1x256xf32>
    %475 = vector.broadcast %474 : vector<1x256xf32> to vector<32x256xf32>
    %476 = arith.mulf %473, %475 : vector<32x256xf32>
    %477 = vector.extract_strided_slice %441 {offsets = [0, 4], sizes = [32, 1], strides = [1, 1]} : vector<32x25xf32> to vector<32x1xf32>
    %478 = vector.broadcast %477 : vector<32x1xf32> to vector<32x256xf32>
    %479 = arith.mulf %476, %478 : vector<32x256xf32>
    %480 = arith.addf %472, %479 : vector<32x256xf32>
    %c18_i32_210 = arith.constant 18 : i32
    %481 = tpu.dynamic_rotate %439 by %c18_i32_210 dim 1 : vector<32x256xf32>, i32 -> vector<32x256xf32>
    %c5_211 = arith.constant 5 : index
    %c0_212 = arith.constant 0 : index
    %482 = vector.load %arg2[%c5_211, %c0_212] : memref<25x256xf32, #tpu.memory_space<vmem>>, vector<1x256xf32>
    %483 = vector.broadcast %482 : vector<1x256xf32> to vector<32x256xf32>
    %484 = arith.mulf %481, %483 : vector<32x256xf32>
    %485 = vector.extract_strided_slice %441 {offsets = [0, 5], sizes = [32, 1], strides = [1, 1]} : vector<32x25xf32> to vector<32x1xf32>
    %486 = vector.broadcast %485 : vector<32x1xf32> to vector<32x256xf32>
    %487 = arith.mulf %484, %486 : vector<32x256xf32>
    %488 = arith.addf %480, %487 : vector<32x256xf32>
    %c17_i32_213 = arith.constant 17 : i32
    %489 = tpu.dynamic_rotate %439 by %c17_i32_213 dim 1 : vector<32x256xf32>, i32 -> vector<32x256xf32>
    %c6_214 = arith.constant 6 : index
    %c0_215 = arith.constant 0 : index
    %490 = vector.load %arg2[%c6_214, %c0_215] : memref<25x256xf32, #tpu.memory_space<vmem>>, vector<1x256xf32>
    %491 = vector.broadcast %490 : vector<1x256xf32> to vector<32x256xf32>
    %492 = arith.mulf %489, %491 : vector<32x256xf32>
    %493 = vector.extract_strided_slice %441 {offsets = [0, 6], sizes = [32, 1], strides = [1, 1]} : vector<32x25xf32> to vector<32x1xf32>
    %494 = vector.broadcast %493 : vector<32x1xf32> to vector<32x256xf32>
    %495 = arith.mulf %492, %494 : vector<32x256xf32>
    %496 = arith.addf %488, %495 : vector<32x256xf32>
    %497 = vector.extract_strided_slice %440 {offsets = [0, 0], sizes = [32, 1], strides = [1, 1]} : vector<32x9xf32> to vector<32x1xf32>
    %498 = vector.broadcast %497 : vector<32x1xf32> to vector<32x256xf32>
    %499 = arith.mulf %492, %498 : vector<32x256xf32>
    %c16_i32_216 = arith.constant 16 : i32
    %500 = tpu.dynamic_rotate %439 by %c16_i32_216 dim 1 : vector<32x256xf32>, i32 -> vector<32x256xf32>
    %c7_217 = arith.constant 7 : index
    %c0_218 = arith.constant 0 : index
    %501 = vector.load %arg2[%c7_217, %c0_218] : memref<25x256xf32, #tpu.memory_space<vmem>>, vector<1x256xf32>
    %502 = vector.broadcast %501 : vector<1x256xf32> to vector<32x256xf32>
    %503 = arith.mulf %500, %502 : vector<32x256xf32>
    %504 = vector.extract_strided_slice %441 {offsets = [0, 7], sizes = [32, 1], strides = [1, 1]} : vector<32x25xf32> to vector<32x1xf32>
    %505 = vector.broadcast %504 : vector<32x1xf32> to vector<32x256xf32>
    %506 = arith.mulf %503, %505 : vector<32x256xf32>
    %507 = arith.addf %496, %506 : vector<32x256xf32>
    %508 = vector.extract_strided_slice %440 {offsets = [0, 1], sizes = [32, 1], strides = [1, 1]} : vector<32x9xf32> to vector<32x1xf32>
    %509 = vector.broadcast %508 : vector<32x1xf32> to vector<32x256xf32>
    %510 = arith.mulf %503, %509 : vector<32x256xf32>
    %511 = arith.addf %499, %510 : vector<32x256xf32>
    %c15_i32_219 = arith.constant 15 : i32
    %512 = tpu.dynamic_rotate %439 by %c15_i32_219 dim 1 : vector<32x256xf32>, i32 -> vector<32x256xf32>
    %c8_220 = arith.constant 8 : index
    %c0_221 = arith.constant 0 : index
    %513 = vector.load %arg2[%c8_220, %c0_221] : memref<25x256xf32, #tpu.memory_space<vmem>>, vector<1x256xf32>
    %514 = vector.broadcast %513 : vector<1x256xf32> to vector<32x256xf32>
    %515 = arith.mulf %512, %514 : vector<32x256xf32>
    %516 = vector.extract_strided_slice %441 {offsets = [0, 8], sizes = [32, 1], strides = [1, 1]} : vector<32x25xf32> to vector<32x1xf32>
    %517 = vector.broadcast %516 : vector<32x1xf32> to vector<32x256xf32>
    %518 = arith.mulf %515, %517 : vector<32x256xf32>
    %519 = arith.addf %507, %518 : vector<32x256xf32>
    %520 = vector.extract_strided_slice %440 {offsets = [0, 2], sizes = [32, 1], strides = [1, 1]} : vector<32x9xf32> to vector<32x1xf32>
    %521 = vector.broadcast %520 : vector<32x1xf32> to vector<32x256xf32>
    %522 = arith.mulf %515, %521 : vector<32x256xf32>
    %523 = arith.addf %511, %522 : vector<32x256xf32>
    %c14_i32_222 = arith.constant 14 : i32
    %524 = tpu.dynamic_rotate %439 by %c14_i32_222 dim 1 : vector<32x256xf32>, i32 -> vector<32x256xf32>
    %c9_223 = arith.constant 9 : index
    %c0_224 = arith.constant 0 : index
    %525 = vector.load %arg2[%c9_223, %c0_224] : memref<25x256xf32, #tpu.memory_space<vmem>>, vector<1x256xf32>
    %526 = vector.broadcast %525 : vector<1x256xf32> to vector<32x256xf32>
    %527 = arith.mulf %524, %526 : vector<32x256xf32>
    %528 = vector.extract_strided_slice %441 {offsets = [0, 9], sizes = [32, 1], strides = [1, 1]} : vector<32x25xf32> to vector<32x1xf32>
    %529 = vector.broadcast %528 : vector<32x1xf32> to vector<32x256xf32>
    %530 = arith.mulf %527, %529 : vector<32x256xf32>
    %531 = arith.addf %519, %530 : vector<32x256xf32>
    %c2_i32_225 = arith.constant 2 : i32
    %532 = tpu.dynamic_rotate %439 by %c2_i32_225 dim 1 : vector<32x256xf32>, i32 -> vector<32x256xf32>
    %c10_226 = arith.constant 10 : index
    %c0_227 = arith.constant 0 : index
    %533 = vector.load %arg2[%c10_226, %c0_227] : memref<25x256xf32, #tpu.memory_space<vmem>>, vector<1x256xf32>
    %534 = vector.broadcast %533 : vector<1x256xf32> to vector<32x256xf32>
    %535 = arith.mulf %532, %534 : vector<32x256xf32>
    %536 = vector.extract_strided_slice %441 {offsets = [0, 10], sizes = [32, 1], strides = [1, 1]} : vector<32x25xf32> to vector<32x1xf32>
    %537 = vector.broadcast %536 : vector<32x1xf32> to vector<32x256xf32>
    %538 = arith.mulf %535, %537 : vector<32x256xf32>
    %539 = arith.addf %531, %538 : vector<32x256xf32>
    %c1_i32_228 = arith.constant 1 : i32
    %540 = tpu.dynamic_rotate %439 by %c1_i32_228 dim 1 : vector<32x256xf32>, i32 -> vector<32x256xf32>
    %c11_229 = arith.constant 11 : index
    %c0_230 = arith.constant 0 : index
    %541 = vector.load %arg2[%c11_229, %c0_230] : memref<25x256xf32, #tpu.memory_space<vmem>>, vector<1x256xf32>
    %542 = vector.broadcast %541 : vector<1x256xf32> to vector<32x256xf32>
    %543 = arith.mulf %540, %542 : vector<32x256xf32>
    %544 = vector.extract_strided_slice %441 {offsets = [0, 11], sizes = [32, 1], strides = [1, 1]} : vector<32x25xf32> to vector<32x1xf32>
    %545 = vector.broadcast %544 : vector<32x1xf32> to vector<32x256xf32>
    %546 = arith.mulf %543, %545 : vector<32x256xf32>
    %547 = arith.addf %539, %546 : vector<32x256xf32>
    %548 = vector.extract_strided_slice %440 {offsets = [0, 3], sizes = [32, 1], strides = [1, 1]} : vector<32x9xf32> to vector<32x1xf32>
    %549 = vector.broadcast %548 : vector<32x1xf32> to vector<32x256xf32>
    %550 = arith.mulf %543, %549 : vector<32x256xf32>
    %551 = arith.addf %523, %550 : vector<32x256xf32>
    %552 = vector.extract_strided_slice %441 {offsets = [0, 12], sizes = [32, 1], strides = [1, 1]} : vector<32x25xf32> to vector<32x1xf32>
    %553 = vector.broadcast %552 : vector<32x1xf32> to vector<32x256xf32>
    %554 = arith.mulf %439, %553 : vector<32x256xf32>
    %555 = arith.addf %547, %554 : vector<32x256xf32>
    %556 = vector.extract_strided_slice %440 {offsets = [0, 4], sizes = [32, 1], strides = [1, 1]} : vector<32x9xf32> to vector<32x1xf32>
    %557 = vector.broadcast %556 : vector<32x1xf32> to vector<32x256xf32>
    %558 = arith.mulf %439, %557 : vector<32x256xf32>
    %559 = arith.addf %551, %558 : vector<32x256xf32>
    %c255_i32_231 = arith.constant 255 : i32
    %560 = tpu.dynamic_rotate %439 by %c255_i32_231 dim 1 : vector<32x256xf32>, i32 -> vector<32x256xf32>
    %c13_232 = arith.constant 13 : index
    %c0_233 = arith.constant 0 : index
    %561 = vector.load %arg2[%c13_232, %c0_233] : memref<25x256xf32, #tpu.memory_space<vmem>>, vector<1x256xf32>
    %562 = vector.broadcast %561 : vector<1x256xf32> to vector<32x256xf32>
    %563 = arith.mulf %560, %562 : vector<32x256xf32>
    %564 = vector.extract_strided_slice %441 {offsets = [0, 13], sizes = [32, 1], strides = [1, 1]} : vector<32x25xf32> to vector<32x1xf32>
    %565 = vector.broadcast %564 : vector<32x1xf32> to vector<32x256xf32>
    %566 = arith.mulf %563, %565 : vector<32x256xf32>
    %567 = arith.addf %555, %566 : vector<32x256xf32>
    %568 = vector.extract_strided_slice %440 {offsets = [0, 5], sizes = [32, 1], strides = [1, 1]} : vector<32x9xf32> to vector<32x1xf32>
    %569 = vector.broadcast %568 : vector<32x1xf32> to vector<32x256xf32>
    %570 = arith.mulf %563, %569 : vector<32x256xf32>
    %571 = arith.addf %559, %570 : vector<32x256xf32>
    %c254_i32_234 = arith.constant 254 : i32
    %572 = tpu.dynamic_rotate %439 by %c254_i32_234 dim 1 : vector<32x256xf32>, i32 -> vector<32x256xf32>
    %c14_235 = arith.constant 14 : index
    %c0_236 = arith.constant 0 : index
    %573 = vector.load %arg2[%c14_235, %c0_236] : memref<25x256xf32, #tpu.memory_space<vmem>>, vector<1x256xf32>
    %574 = vector.broadcast %573 : vector<1x256xf32> to vector<32x256xf32>
    %575 = arith.mulf %572, %574 : vector<32x256xf32>
    %576 = vector.extract_strided_slice %441 {offsets = [0, 14], sizes = [32, 1], strides = [1, 1]} : vector<32x25xf32> to vector<32x1xf32>
    %577 = vector.broadcast %576 : vector<32x1xf32> to vector<32x256xf32>
    %578 = arith.mulf %575, %577 : vector<32x256xf32>
    %579 = arith.addf %567, %578 : vector<32x256xf32>
    %c242_i32_237 = arith.constant 242 : i32
    %580 = tpu.dynamic_rotate %439 by %c242_i32_237 dim 1 : vector<32x256xf32>, i32 -> vector<32x256xf32>
    %c15_238 = arith.constant 15 : index
    %c0_239 = arith.constant 0 : index
    %581 = vector.load %arg2[%c15_238, %c0_239] : memref<25x256xf32, #tpu.memory_space<vmem>>, vector<1x256xf32>
    %582 = vector.broadcast %581 : vector<1x256xf32> to vector<32x256xf32>
    %583 = arith.mulf %580, %582 : vector<32x256xf32>
    %584 = vector.extract_strided_slice %441 {offsets = [0, 15], sizes = [32, 1], strides = [1, 1]} : vector<32x25xf32> to vector<32x1xf32>
    %585 = vector.broadcast %584 : vector<32x1xf32> to vector<32x256xf32>
    %586 = arith.mulf %583, %585 : vector<32x256xf32>
    %587 = arith.addf %579, %586 : vector<32x256xf32>
    %c241_i32_240 = arith.constant 241 : i32
    %588 = tpu.dynamic_rotate %439 by %c241_i32_240 dim 1 : vector<32x256xf32>, i32 -> vector<32x256xf32>
    %c16_241 = arith.constant 16 : index
    %c0_242 = arith.constant 0 : index
    %589 = vector.load %arg2[%c16_241, %c0_242] : memref<25x256xf32, #tpu.memory_space<vmem>>, vector<1x256xf32>
    %590 = vector.broadcast %589 : vector<1x256xf32> to vector<32x256xf32>
    %591 = arith.mulf %588, %590 : vector<32x256xf32>
    %592 = vector.extract_strided_slice %441 {offsets = [0, 16], sizes = [32, 1], strides = [1, 1]} : vector<32x25xf32> to vector<32x1xf32>
    %593 = vector.broadcast %592 : vector<32x1xf32> to vector<32x256xf32>
    %594 = arith.mulf %591, %593 : vector<32x256xf32>
    %595 = arith.addf %587, %594 : vector<32x256xf32>
    %596 = vector.extract_strided_slice %440 {offsets = [0, 6], sizes = [32, 1], strides = [1, 1]} : vector<32x9xf32> to vector<32x1xf32>
    %597 = vector.broadcast %596 : vector<32x1xf32> to vector<32x256xf32>
    %598 = arith.mulf %591, %597 : vector<32x256xf32>
    %599 = arith.addf %571, %598 : vector<32x256xf32>
    %c240_i32_243 = arith.constant 240 : i32
    %600 = tpu.dynamic_rotate %439 by %c240_i32_243 dim 1 : vector<32x256xf32>, i32 -> vector<32x256xf32>
    %c17_244 = arith.constant 17 : index
    %c0_245 = arith.constant 0 : index
    %601 = vector.load %arg2[%c17_244, %c0_245] : memref<25x256xf32, #tpu.memory_space<vmem>>, vector<1x256xf32>
    %602 = vector.broadcast %601 : vector<1x256xf32> to vector<32x256xf32>
    %603 = arith.mulf %600, %602 : vector<32x256xf32>
    %604 = vector.extract_strided_slice %441 {offsets = [0, 17], sizes = [32, 1], strides = [1, 1]} : vector<32x25xf32> to vector<32x1xf32>
    %605 = vector.broadcast %604 : vector<32x1xf32> to vector<32x256xf32>
    %606 = arith.mulf %603, %605 : vector<32x256xf32>
    %607 = arith.addf %595, %606 : vector<32x256xf32>
    %608 = vector.extract_strided_slice %440 {offsets = [0, 7], sizes = [32, 1], strides = [1, 1]} : vector<32x9xf32> to vector<32x1xf32>
    %609 = vector.broadcast %608 : vector<32x1xf32> to vector<32x256xf32>
    %610 = arith.mulf %603, %609 : vector<32x256xf32>
    %611 = arith.addf %599, %610 : vector<32x256xf32>
    %c239_i32_246 = arith.constant 239 : i32
    %612 = tpu.dynamic_rotate %439 by %c239_i32_246 dim 1 : vector<32x256xf32>, i32 -> vector<32x256xf32>
    %c18_247 = arith.constant 18 : index
    %c0_248 = arith.constant 0 : index
    %613 = vector.load %arg2[%c18_247, %c0_248] : memref<25x256xf32, #tpu.memory_space<vmem>>, vector<1x256xf32>
    %614 = vector.broadcast %613 : vector<1x256xf32> to vector<32x256xf32>
    %615 = arith.mulf %612, %614 : vector<32x256xf32>
    %616 = vector.extract_strided_slice %441 {offsets = [0, 18], sizes = [32, 1], strides = [1, 1]} : vector<32x25xf32> to vector<32x1xf32>
    %617 = vector.broadcast %616 : vector<32x1xf32> to vector<32x256xf32>
    %618 = arith.mulf %615, %617 : vector<32x256xf32>
    %619 = arith.addf %607, %618 : vector<32x256xf32>
    %620 = vector.extract_strided_slice %440 {offsets = [0, 8], sizes = [32, 1], strides = [1, 1]} : vector<32x9xf32> to vector<32x1xf32>
    %621 = vector.broadcast %620 : vector<32x1xf32> to vector<32x256xf32>
    %622 = arith.mulf %615, %621 : vector<32x256xf32>
    %623 = arith.addf %611, %622 : vector<32x256xf32>
    %c238_i32_249 = arith.constant 238 : i32
    %624 = tpu.dynamic_rotate %439 by %c238_i32_249 dim 1 : vector<32x256xf32>, i32 -> vector<32x256xf32>
    %c19_250 = arith.constant 19 : index
    %c0_251 = arith.constant 0 : index
    %625 = vector.load %arg2[%c19_250, %c0_251] : memref<25x256xf32, #tpu.memory_space<vmem>>, vector<1x256xf32>
    %626 = vector.broadcast %625 : vector<1x256xf32> to vector<32x256xf32>
    %627 = arith.mulf %624, %626 : vector<32x256xf32>
    %628 = vector.extract_strided_slice %441 {offsets = [0, 19], sizes = [32, 1], strides = [1, 1]} : vector<32x25xf32> to vector<32x1xf32>
    %629 = vector.broadcast %628 : vector<32x1xf32> to vector<32x256xf32>
    %630 = arith.mulf %627, %629 : vector<32x256xf32>
    %631 = arith.addf %619, %630 : vector<32x256xf32>
    %c226_i32_252 = arith.constant 226 : i32
    %632 = tpu.dynamic_rotate %439 by %c226_i32_252 dim 1 : vector<32x256xf32>, i32 -> vector<32x256xf32>
    %c20_253 = arith.constant 20 : index
    %c0_254 = arith.constant 0 : index
    %633 = vector.load %arg2[%c20_253, %c0_254] : memref<25x256xf32, #tpu.memory_space<vmem>>, vector<1x256xf32>
    %634 = vector.broadcast %633 : vector<1x256xf32> to vector<32x256xf32>
    %635 = arith.mulf %632, %634 : vector<32x256xf32>
    %636 = vector.extract_strided_slice %441 {offsets = [0, 20], sizes = [32, 1], strides = [1, 1]} : vector<32x25xf32> to vector<32x1xf32>
    %637 = vector.broadcast %636 : vector<32x1xf32> to vector<32x256xf32>
    %638 = arith.mulf %635, %637 : vector<32x256xf32>
    %639 = arith.addf %631, %638 : vector<32x256xf32>
    %c225_i32_255 = arith.constant 225 : i32
    %640 = tpu.dynamic_rotate %439 by %c225_i32_255 dim 1 : vector<32x256xf32>, i32 -> vector<32x256xf32>
    %c21_256 = arith.constant 21 : index
    %c0_257 = arith.constant 0 : index
    %641 = vector.load %arg2[%c21_256, %c0_257] : memref<25x256xf32, #tpu.memory_space<vmem>>, vector<1x256xf32>
    %642 = vector.broadcast %641 : vector<1x256xf32> to vector<32x256xf32>
    %643 = arith.mulf %640, %642 : vector<32x256xf32>
    %644 = vector.extract_strided_slice %441 {offsets = [0, 21], sizes = [32, 1], strides = [1, 1]} : vector<32x25xf32> to vector<32x1xf32>
    %645 = vector.broadcast %644 : vector<32x1xf32> to vector<32x256xf32>
    %646 = arith.mulf %643, %645 : vector<32x256xf32>
    %647 = arith.addf %639, %646 : vector<32x256xf32>
    %c224_i32_258 = arith.constant 224 : i32
    %648 = tpu.dynamic_rotate %439 by %c224_i32_258 dim 1 : vector<32x256xf32>, i32 -> vector<32x256xf32>
    %c22_259 = arith.constant 22 : index
    %c0_260 = arith.constant 0 : index
    %649 = vector.load %arg2[%c22_259, %c0_260] : memref<25x256xf32, #tpu.memory_space<vmem>>, vector<1x256xf32>
    %650 = vector.broadcast %649 : vector<1x256xf32> to vector<32x256xf32>
    %651 = arith.mulf %648, %650 : vector<32x256xf32>
    %652 = vector.extract_strided_slice %441 {offsets = [0, 22], sizes = [32, 1], strides = [1, 1]} : vector<32x25xf32> to vector<32x1xf32>
    %653 = vector.broadcast %652 : vector<32x1xf32> to vector<32x256xf32>
    %654 = arith.mulf %651, %653 : vector<32x256xf32>
    %655 = arith.addf %647, %654 : vector<32x256xf32>
    %c223_i32_261 = arith.constant 223 : i32
    %656 = tpu.dynamic_rotate %439 by %c223_i32_261 dim 1 : vector<32x256xf32>, i32 -> vector<32x256xf32>
    %c23_262 = arith.constant 23 : index
    %c0_263 = arith.constant 0 : index
    %657 = vector.load %arg2[%c23_262, %c0_263] : memref<25x256xf32, #tpu.memory_space<vmem>>, vector<1x256xf32>
    %658 = vector.broadcast %657 : vector<1x256xf32> to vector<32x256xf32>
    %659 = arith.mulf %656, %658 : vector<32x256xf32>
    %660 = vector.extract_strided_slice %441 {offsets = [0, 23], sizes = [32, 1], strides = [1, 1]} : vector<32x25xf32> to vector<32x1xf32>
    %661 = vector.broadcast %660 : vector<32x1xf32> to vector<32x256xf32>
    %662 = arith.mulf %659, %661 : vector<32x256xf32>
    %663 = arith.addf %655, %662 : vector<32x256xf32>
    %c222_i32_264 = arith.constant 222 : i32
    %664 = tpu.dynamic_rotate %439 by %c222_i32_264 dim 1 : vector<32x256xf32>, i32 -> vector<32x256xf32>
    %c24_265 = arith.constant 24 : index
    %c0_266 = arith.constant 0 : index
    %665 = vector.load %arg2[%c24_265, %c0_266] : memref<25x256xf32, #tpu.memory_space<vmem>>, vector<1x256xf32>
    %666 = vector.broadcast %665 : vector<1x256xf32> to vector<32x256xf32>
    %667 = arith.mulf %664, %666 : vector<32x256xf32>
    %668 = vector.extract_strided_slice %441 {offsets = [0, 24], sizes = [32, 1], strides = [1, 1]} : vector<32x25xf32> to vector<32x1xf32>
    %669 = vector.broadcast %668 : vector<32x1xf32> to vector<32x256xf32>
    %670 = arith.mulf %667, %669 : vector<32x256xf32>
    %671 = arith.addf %663, %670 : vector<32x256xf32>
    %c0_267 = arith.constant 0 : index
    %c0_268 = arith.constant 0 : index
    %c0_269 = arith.constant 0 : index
    %672 = vector.load %arg7[%c0_267, %c0_268, %c0_269] : memref<2x32x32xf32, #tpu.memory_space<vmem>>, vector<1x32x32xf32>
    %673 = vector.shape_cast %672 : vector<1x32x32xf32> to vector<32x32xf32>
    %cst_270 = arith.constant dense<0.000000e+00> : vector<32x256xf32>
    %674 = tpu.matmul %673, %623, %cst_270 {dimension_numbers = #tpu.dot_dimension_numbers<[1], [0], [0], [1], [0, 0, 1, 1], [], []>} : vector<32x32xf32>, vector<32x256xf32>, vector<32x256xf32> -> vector<32x256xf32>
    %c1_271 = arith.constant 1 : index
    %c0_272 = arith.constant 0 : index
    %c0_273 = arith.constant 0 : index
    %675 = vector.load %arg7[%c1_271, %c0_272, %c0_273] : memref<2x32x32xf32, #tpu.memory_space<vmem>>, vector<1x32x32xf32>
    %676 = vector.shape_cast %675 : vector<1x32x32xf32> to vector<32x32xf32>
    %cst_274 = arith.constant dense<0.000000e+00> : vector<32x256xf32>
    %677 = tpu.matmul %676, %671, %cst_274 {dimension_numbers = #tpu.dot_dimension_numbers<[1], [0], [0], [1], [0, 0, 1, 1], [], []>} : vector<32x32xf32>, vector<32x256xf32>, vector<32x256xf32> -> vector<32x256xf32>
    %678 = arith.addf %674, %677 : vector<32x256xf32>
    %c0_275 = arith.constant 0 : index
    %c0_276 = arith.constant 0 : index
    %679 = vector.load %arg8[%c0_275, %c0_276] : memref<32x1xf32, #tpu.memory_space<vmem>>, vector<32x1xf32>
    %680 = vector.broadcast %679 : vector<32x1xf32> to vector<32x256xf32>
    %681 = arith.addf %678, %680 : vector<32x256xf32>
    %cst_277 = arith.constant dense<0.000000e+00> : vector<32xf32>
    %682 = vector.multi_reduction <add>, %681, %cst_277 [1] : vector<32x256xf32> to vector<32xf32>
    %683 = vector.shape_cast %682 : vector<32xf32> to vector<32x1xf32>
    %cst_278 = arith.constant 3.906250e-03 : f32
    %684 = vector.broadcast %cst_278 : f32 to vector<32x1xf32>
    %685 = arith.mulf %683, %684 : vector<32x1xf32>
    %c0_279 = arith.constant 0 : index
    %c0_280 = arith.constant 0 : index
    %686 = vector.load %arg9[%c0_279, %c0_280] : memref<32x2xf32, #tpu.memory_space<vmem>>, vector<32x2xf32>
    %687 = vector.broadcast %685 : vector<32x1xf32> to vector<32x2xf32>
    %688 = arith.mulf %686, %687 : vector<32x2xf32>
    %cst_281 = arith.constant dense<0.000000e+00> : vector<2xf32>
    %689 = vector.multi_reduction <add>, %688, %cst_281 [0] : vector<32x2xf32> to vector<2xf32>
    %690 = vector.shape_cast %689 : vector<2xf32> to vector<1x2xf32>
    %c0_282 = arith.constant 0 : index
    %c0_283 = arith.constant 0 : index
    %691 = vector.load %arg10[%c0_282, %c0_283] : memref<1x2xf32, #tpu.memory_space<vmem>>, vector<1x2xf32>
    %692 = arith.addf %690, %691 : vector<1x2xf32>
    %cst_284 = arith.constant 0.000000e+00 : f32
    %693 = vector.broadcast %cst_284 : f32 to vector<1x2xf32>
    %694 = arith.maximumf %692, %693 : vector<1x2xf32>
    %c0_285 = arith.constant 0 : index
    %c0_286 = arith.constant 0 : index
    %695 = vector.load %arg11[%c0_285, %c0_286] : memref<32x2xf32, #tpu.memory_space<vmem>>, vector<32x2xf32>
    %696 = vector.broadcast %694 : vector<1x2xf32> to vector<32x2xf32>
    %697 = arith.mulf %695, %696 : vector<32x2xf32>
    %cst_287 = arith.constant dense<0.000000e+00> : vector<32xf32>
    %698 = vector.multi_reduction <add>, %697, %cst_287 [1] : vector<32x2xf32> to vector<32xf32>
    %699 = vector.shape_cast %698 : vector<32xf32> to vector<32x1xf32>
    %c0_288 = arith.constant 0 : index
    %c0_289 = arith.constant 0 : index
    %700 = vector.load %arg12[%c0_288, %c0_289] : memref<32x1xf32, #tpu.memory_space<vmem>>, vector<32x1xf32>
    %701 = arith.addf %699, %700 : vector<32x1xf32>
    %702 = arith.negf %701 : vector<32x1xf32>
    %703 = math.exp %702 : vector<32x1xf32>
    %cst_290 = arith.constant 1.000000e+00 : f32
    %704 = vector.broadcast %cst_290 : f32 to vector<32x1xf32>
    %705 = arith.addf %704, %703 : vector<32x1xf32>
    %706 = arith.divf %704, %705 : vector<32x1xf32>
    %707 = vector.broadcast %706 : vector<32x1xf32> to vector<32x256xf32>
    %708 = arith.mulf %681, %707 : vector<32x256xf32>
    %709 = arith.mulf %708, %708 : vector<32x256xf32>
    %710 = arith.mulf %709, %708 : vector<32x256xf32>
    %cst_291 = arith.constant 4.471500e-02 : f32
    %711 = vector.broadcast %cst_291 : f32 to vector<32x256xf32>
    %712 = arith.mulf %711, %710 : vector<32x256xf32>
    %713 = arith.addf %708, %712 : vector<32x256xf32>
    %cst_292 = arith.constant 0.797884583 : f32
    %714 = vector.broadcast %cst_292 : f32 to vector<32x256xf32>
    %715 = arith.mulf %714, %713 : vector<32x256xf32>
    %716 = math.tanh %715 : vector<32x256xf32>
    %cst_293 = arith.constant 1.000000e+00 : f32
    %717 = vector.broadcast %cst_293 : f32 to vector<32x256xf32>
    %718 = arith.addf %717, %716 : vector<32x256xf32>
    %719 = arith.mulf %708, %718 : vector<32x256xf32>
    %c0_294 = arith.constant 0 : index
    %c0_295 = arith.constant 0 : index
    %720 = vector.load %arg13[%c0_294, %c0_295] : memref<32x1xf32, #tpu.memory_space<vmem>>, vector<32x1xf32>
    %721 = vector.broadcast %720 : vector<32x1xf32> to vector<32x256xf32>
    %722 = arith.mulf %719, %721 : vector<32x256xf32>
    %c0_296 = arith.constant 0 : index
    %c0_297 = arith.constant 0 : index
    %723 = vector.load %arg14[%c0_296, %c0_297] : memref<32x1xf32, #tpu.memory_space<vmem>>, vector<32x1xf32>
    %724 = vector.broadcast %723 : vector<32x1xf32> to vector<32x256xf32>
    %725 = arith.addf %722, %724 : vector<32x256xf32>
    %726 = arith.index_cast %c1_i32_126 : i32 to index
    %c0_298 = arith.constant 0 : index
    %c0_299 = arith.constant 0 : index
    %727 = vector.load %arg1[%726, %c0_298, %c0_299] : memref<2x32x256xf32, #tpu.memory_space<vmem>>, vector<1x32x256xf32>
    %728 = vector.shape_cast %727 : vector<1x32x256xf32> to vector<32x256xf32>
    %729 = arith.addf %725, %728 : vector<32x256xf32>
    %730 = arith.index_cast %c1_i32_126 : i32 to index
    %c0_300 = arith.constant 0 : index
    %c0_301 = arith.constant 0 : index
    %731 = vector.load %arg15[%730, %c0_300, %c0_301] : memref<2x32x256xf32, #tpu.memory_space<vmem>>, vector<1x32x256xf32>
    %732 = vector.shape_cast %731 : vector<1x32x256xf32> to vector<32x256xf32>
    %733 = vector.shape_cast %729 : vector<32x256xf32> to vector<1x32x256xf32>
    tpu.vector_store %arg15[%730, %c0_300, %c0_301], %733 {strides = array<i32>} : memref<2x32x256xf32, #tpu.memory_space<vmem>>, vector<1x32x256xf32>,
    %c2_i32_302 = arith.constant 2 : i32
    return
  }
  func.func @transform_0(%arg0: i32) -> (i32, i32, i32) {
    %c0_i32 = arith.constant 0 : i32
    %c0_i32_0 = arith.constant 0 : i32
    %c0_i32_1 = arith.constant 0 : i32
    return %arg0, %c0_i32, %c0_i32_0 : i32, i32, i32
  }
  func.func @transform_1(%arg0: i32) -> (i32, i32) {
    %c0_i32 = arith.constant 0 : i32
    %c0_i32_0 = arith.constant 0 : i32
    %c0_i32_1 = arith.constant 0 : i32
    return %c0_i32, %c0_i32_0 : i32, i32
  }
  func.func @transform_2(%arg0: i32) -> (i32, i32, i32) {
    %c0_i32 = arith.constant 0 : i32
    %c0_i32_0 = arith.constant 0 : i32
    %c0_i32_1 = arith.constant 0 : i32
    %c0_i32_2 = arith.constant 0 : i32
    return %c0_i32, %c0_i32_0, %c0_i32_1 : i32, i32, i32
  }
  func.func @transform_3(%arg0: i32) -> (i32, i32) {
    %c0_i32 = arith.constant 0 : i32
    %c0_i32_0 = arith.constant 0 : i32
    %c0_i32_1 = arith.constant 0 : i32
    return %c0_i32, %c0_i32_0 : i32, i32
  }
  func.func @transform_4(%arg0: i32) -> (i32, i32) {
    %c0_i32 = arith.constant 0 : i32
    %c0_i32_0 = arith.constant 0 : i32
    %c0_i32_1 = arith.constant 0 : i32
    return %c0_i32, %c0_i32_0 : i32, i32
  }
  func.func @transform_5(%arg0: i32) -> (i32, i32) {
    %c0_i32 = arith.constant 0 : i32
    %c0_i32_0 = arith.constant 0 : i32
    %c0_i32_1 = arith.constant 0 : i32
    return %c0_i32, %c0_i32_0 : i32, i32
  }
  func.func @transform_6(%arg0: i32) -> (i32, i32, i32) {
    %c0_i32 = arith.constant 0 : i32
    %c0_i32_0 = arith.constant 0 : i32
    %c0_i32_1 = arith.constant 0 : i32
    %c0_i32_2 = arith.constant 0 : i32
    return %c0_i32, %c0_i32_0, %c0_i32_1 : i32, i32, i32
  }
  func.func @transform_7(%arg0: i32) -> (i32, i32) {
    %c0_i32 = arith.constant 0 : i32
    %c0_i32_0 = arith.constant 0 : i32
    %c0_i32_1 = arith.constant 0 : i32
    return %c0_i32, %c0_i32_0 : i32, i32
  }
  func.func @transform_8(%arg0: i32) -> (i32, i32) {
    %c0_i32 = arith.constant 0 : i32
    %c0_i32_0 = arith.constant 0 : i32
    %c0_i32_1 = arith.constant 0 : i32
    return %c0_i32, %c0_i32_0 : i32, i32
  }
  func.func @transform_9(%arg0: i32) -> (i32, i32) {
    %c0_i32 = arith.constant 0 : i32
    %c0_i32_0 = arith.constant 0 : i32
    %c0_i32_1 = arith.constant 0 : i32
    return %c0_i32, %c0_i32_0 : i32, i32
  }
  func.func @transform_10(%arg0: i32) -> (i32, i32) {
    %c0_i32 = arith.constant 0 : i32
    %c0_i32_0 = arith.constant 0 : i32
    %c0_i32_1 = arith.constant 0 : i32
    return %c0_i32, %c0_i32_0 : i32, i32
  }
  func.func @transform_11(%arg0: i32) -> (i32, i32) {
    %c0_i32 = arith.constant 0 : i32
    %c0_i32_0 = arith.constant 0 : i32
    %c0_i32_1 = arith.constant 0 : i32
    return %c0_i32, %c0_i32_0 : i32, i32
  }
  func.func @transform_12(%arg0: i32) -> (i32, i32) {
    %c0_i32 = arith.constant 0 : i32
    %c0_i32_0 = arith.constant 0 : i32
    %c0_i32_1 = arith.constant 0 : i32
    return %c0_i32, %c0_i32_0 : i32, i32
  }
  func.func @transform_13(%arg0: i32) -> (i32, i32) {
    %c0_i32 = arith.constant 0 : i32
    %c0_i32_0 = arith.constant 0 : i32
    %c0_i32_1 = arith.constant 0 : i32
    return %c0_i32, %c0_i32_0 : i32, i32
  }
  func.func @transform_14(%arg0: i32) -> (i32, i32, i32) {
    %c0_i32 = arith.constant 0 : i32
    %c0_i32_0 = arith.constant 0 : i32
    %c0_i32_1 = arith.constant 0 : i32
    return %arg0, %c0_i32, %c0_i32_0 : i32, i32, i32
  }
}

</mosaic_0001>

<llo_original>
// kernel: tpu_custom_call.1
$region0: #{tpu_custom_call.1}
  #allocation0 [shape = 'u32[]', space=smem, size = 0x4, offset = 0x4, fixed_abs, tag = 'smem constant byte address 0x4 - core index']
  #allocation1 [shape = 'u32[144,128]{1,0:T(1,128)}', space=vmem, size = 0x12000, scoped, tag = 'internal scratch']
  %s0 = inlined_call_operand.hbm [shape: f32[2,32,256], index: 0, kind: input, shape index: {}]
  %s1 = inlined_call_operand.hbm [shape: f32[25,256], index: 1, kind: input, shape index: {}]
  %s2 = inlined_call_operand.vmem [shape: f32[9,32,32], index: 2, kind: input, shape index: {}]
  %s3 = inlined_call_operand.vmem [shape: f32[32,1], index: 3, kind: input, shape index: {}]
  %s4 = inlined_call_operand.vmem [shape: f32[32,9], index: 4, kind: input, shape index: {}]
  %s5 = inlined_call_operand.hbm [shape: f32[32,25], index: 5, kind: input, shape index: {}]
  %s6 = inlined_call_operand.hbm [shape: f32[2,32,32], index: 6, kind: input, shape index: {}]
  %s7 = inlined_call_operand.vmem [shape: f32[32,1], index: 7, kind: input, shape index: {}]
  %s8 = inlined_call_operand.vmem [shape: f32[32,2], index: 8, kind: input, shape index: {}]
  %s9 = inlined_call_operand.vmem [shape: f32[1,2], index: 9, kind: input, shape index: {}]
  %s10 = inlined_call_operand.vmem [shape: f32[32,2], index: 10, kind: input, shape index: {}]
  %s11 = inlined_call_operand.vmem [shape: f32[32,1], index: 11, kind: input, shape index: {}]
  %s12 = inlined_call_operand.vmem [shape: f32[32,1], index: 12, kind: input, shape index: {}]
  %s13 = inlined_call_operand.vmem [shape: f32[32,1], index: 13, kind: input, shape index: {}]
  %s14 = inlined_call_operand.hbm [shape: f32[2,32,256], index: 14, kind: output, shape index: {}]
  %s15 = sld [smem:[#allocation0]]
  $region82: #{tpu_custom_call.1} parent=0
    _
  %s17 = ssub.s32 1, %s15
  %s18 = scalar_select 0, %s17, %s15
  $region1: #{tpu_custom_call.1} parent=0
    #allocation2 [shape = 'u8[65536]{0}', space=vmem, size = 0x10000, scoped, tag = 'input window, operand 0, single buffered']
    #allocation3 [shape = 's32[1]{0}', space=sflag, size = 0x4, scoped, tag = 'scoped memory for tpu_custom_call.1']
    #allocation4 [shape = 's32[1]{0}', space=sflag, size = 0x4, scoped, tag = 'scoped memory for tpu_custom_call.1']
    #allocation5 [shape = 'u8[32768]{0}', space=vmem, size = 0x8000, scoped, tag = 'input window, operand 1, single buffered']
    #allocation6 [shape = 's32[1]{0}', space=sflag, size = 0x4, scoped, tag = 'scoped memory for tpu_custom_call.1']
    #allocation7 [shape = 'u8[16384]{0}', space=vmem, size = 0x4000, scoped, tag = 'input window, operand 5, single buffered']
    #allocation8 [shape = 'u8[32768]{0}', space=vmem, size = 0x8000, scoped, tag = 'input window, operand 6, single buffered']
    #allocation9 [shape = 's32[1]{0}', space=sflag, size = 0x4, scoped, tag = 'scoped memory for tpu_custom_call.1']
    #allocation10 [shape = 'u8[65536]{0}', space=vmem, size = 0x10000, scoped, tag = 'output window, operand 0, single buffered']
    %19 = vsyncpa [#allocation3], 0
    %20 = vsyncpa [#allocation6], 0
    %21 = vsyncpa [#allocation9], 0
    %22 = vsyncpa [#allocation4], 0
    // Predicated region
    $region2: #{tpu_custom_call.1} parent=1 // pred_check
      _
    $region3: #{tpu_custom_call.1} parent=1 // pred_check_branch
      %24 = sbr.rel (0) target = $region5
    $region4: #{tpu_custom_call.1} parent=1 // pred_region
      %s26 = ssub.s32 2048, 2048
      %27 = vsyncadd [#allocation3], %s26
      %s28 = sshll.u32 [#allocation2], 4
      %s29 = int_to_ptr.vmem [resolvable:$true] %s28
      %34 = dma.hbm_to_vmem [thread:$0]  %s0, 2048, %s29, [#allocation3], 256, 256, 16
    $region5: #{tpu_custom_call.1} parent=1 // pred_fallthru
      _
    // Predicated region
    $region6: #{tpu_custom_call.1} parent=1 // pred_check
      _
    $region7: #{tpu_custom_call.1} parent=1 // pred_check_branch
      %36 = sbr.rel (0) target = $region9
    $region8: #{tpu_custom_call.1} parent=1 // pred_region
      %s38 = ssub.s32 1024, 1024
      %39 = vsyncadd [#allocation6], %s38
      %s40 = sshll.u32 [#allocation5], 4
      %s41 = int_to_ptr.vmem [resolvable:$true] %s40
      %46 = dma.hbm_to_vmem [thread:$0]  %s1, 1024, %s41, [#allocation6], 256, 256, 16
    $region9: #{tpu_custom_call.1} parent=1 // pred_fallthru
      _
    // Predicated region
    $region10: #{tpu_custom_call.1} parent=1 // pred_check
      _
    $region11: #{tpu_custom_call.1} parent=1 // pred_check_branch
      %48 = sbr.rel (0) target = $region13
    $region12: #{tpu_custom_call.1} parent=1 // pred_region
      _
    $region13: #{tpu_custom_call.1} parent=1 // pred_fallthru
      _
    // Predicated region
    $region14: #{tpu_custom_call.1} parent=1 // pred_check
      _
    $region15: #{tpu_custom_call.1} parent=1 // pred_check_branch
      %50 = sbr.rel (0) target = $region17
    $region16: #{tpu_custom_call.1} parent=1 // pred_region
      _
    $region17: #{tpu_custom_call.1} parent=1 // pred_fallthru
      _
    // Predicated region
    $region18: #{tpu_custom_call.1} parent=1 // pred_check
      _
    $region19: #{tpu_custom_call.1} parent=1 // pred_check_branch
      %52 = sbr.rel (0) target = $region21
    $region20: #{tpu_custom_call.1} parent=1 // pred_region
      _
    $region21: #{tpu_custom_call.1} parent=1 // pred_fallthru
      _
    // Predicated region
    $region22: #{tpu_custom_call.1} parent=1 // pred_check
      _
    $region23: #{tpu_custom_call.1} parent=1 // pred_check_branch
      %54 = sbr.rel (0) target = $region25
    $region24: #{tpu_custom_call.1} parent=1 // pred_region
      %s56 = ssub.s32 512, 512
      %57 = vsyncadd [#allocation6], %s56
      %s58 = sshll.u32 [#allocation7], 4
      %s59 = int_to_ptr.vmem [resolvable:$true] %s58
      %64 = dma.hbm_to_vmem [thread:$0]  %s5, 512, %s59, [#allocation6], 128, 128, 8
    $region25: #{tpu_custom_call.1} parent=1 // pred_fallthru
      _
    // Predicated region
    $region26: #{tpu_custom_call.1} parent=1 // pred_check
      _
    $region27: #{tpu_custom_call.1} parent=1 // pred_check_branch
      %66 = sbr.rel (0) target = $region29
    $region28: #{tpu_custom_call.1} parent=1 // pred_region
      %s68 = ssub.s32 1024, 1024
      %69 = vsyncadd [#allocation9], %s68
      %s70 = sshll.u32 [#allocation8], 4
      %s71 = int_to_ptr.vmem [resolvable:$true] %s70
      %76 = dma.hbm_to_vmem [thread:$0]  %s6, 1024, %s71, [#allocation9], 128, 128, 8
    $region29: #{tpu_custom_call.1} parent=1 // pred_fallthru
      _
    // Predicated region
    $region30: #{tpu_custom_call.1} parent=1 // pred_check
      _
    $region31: #{tpu_custom_call.1} parent=1 // pred_check_branch
      %78 = sbr.rel (0) target = $region33
    $region32: #{tpu_custom_call.1} parent=1 // pred_region
      _
    $region33: #{tpu_custom_call.1} parent=1 // pred_fallthru
      _
    // Predicated region
    $region34: #{tpu_custom_call.1} parent=1 // pred_check
      _
    $region35: #{tpu_custom_call.1} parent=1 // pred_check_branch
      %80 = sbr.rel (0) target = $region37
    $region36: #{tpu_custom_call.1} parent=1 // pred_region
      _
    $region37: #{tpu_custom_call.1} parent=1 // pred_fallthru
      _
    // Predicated region
    $region38: #{tpu_custom_call.1} parent=1 // pred_check
      _
    $region39: #{tpu_custom_call.1} parent=1 // pred_check_branch
      %82 = sbr.rel (0) target = $region41
    $region40: #{tpu_custom_call.1} parent=1 // pred_region
      _
    $region41: #{tpu_custom_call.1} parent=1 // pred_fallthru
      _
    // Predicated region
    $region42: #{tpu_custom_call.1} parent=1 // pred_check
      _
    $region43: #{tpu_custom_call.1} parent=1 // pred_check_branch
      %84 = sbr.rel (0) target = $region45
    $region44: #{tpu_custom_call.1} parent=1 // pred_region
      _
    $region45: #{tpu_custom_call.1} parent=1 // pred_fallthru
      _
    // Predicated region
    $region46: #{tpu_custom_call.1} parent=1 // pred_check
      _
    $region47: #{tpu_custom_call.1} parent=1 // pred_check_branch
      %86 = sbr.rel (0) target = $region49
    $region48: #{tpu_custom_call.1} parent=1 // pred_region
      _
    $region49: #{tpu_custom_call.1} parent=1 // pred_fallthru
      _
    // Predicated region
    $region50: #{tpu_custom_call.1} parent=1 // pred_check
      _
    $region51: #{tpu_custom_call.1} parent=1 // pred_check_branch
      %88 = sbr.rel (0) target = $region53
    $region52: #{tpu_custom_call.1} parent=1 // pred_region
      _
    $region53: #{tpu_custom_call.1} parent=1 // pred_fallthru
      _
    // Predicated region
    $region54: #{tpu_custom_call.1} parent=1 // pred_check
      _
    $region55: #{tpu_custom_call.1} parent=1 // pred_check_branch
      %90 = sbr.rel (0) target = $region57
    $region56: #{tpu_custom_call.1} parent=1 // pred_region
      _
    $region57: #{tpu_custom_call.1} parent=1 // pred_fallthru
      _
    // Predicated region
    $region58: #{tpu_custom_call.1} parent=1 // pred_check
      _
    $region59: #{tpu_custom_call.1} parent=1 // pred_check_branch
      %92 = sbr.rel (0) target = $region61
    $region60: #{tpu_custom_call.1} parent=1 // pred_region
      %93 = dma.done [#allocation3], 2048
    $region61: #{tpu_custom_call.1} parent=1 // pred_fallthru
      _
    // Predicated region
    $region62: #{tpu_custom_call.1} parent=1 // pred_check
      _
    $region63: #{tpu_custom_call.1} parent=1 // pred_check_branch
      %95 = sbr.rel (0) target = $region65
    $region64: #{tpu_custom_call.1} parent=1 // pred_region
      %96 = dma.done [#allocation6], 1024
    $region65: #{tpu_custom_call.1} parent=1 // pred_fallthru
      _
    // Predicated region
    $region66: #{tpu_custom_call.1} parent=1 // pred_check
      _
    $region67: #{tpu_custom_call.1} parent=1 // pred_check_branch
      %98 = sbr.rel (0) target = $region69
    $region68: #{tpu_custom_call.1} parent=1 // pred_region
      %99 = dma.done [#allocation6], 512
    $region69: #{tpu_custom_call.1} parent=1 // pred_fallthru
      _
    // Predicated region
    $region70: #{tpu_custom_call.1} parent=1 // pred_check
      _
    $region71: #{tpu_custom_call.1} parent=1 // pred_check_branch
      %101 = sbr.rel (0) target = $region73
    $region72: #{tpu_custom_call.1} parent=1 // pred_region
      %102 = dma.done [#allocation9], 1024
    $region73: #{tpu_custom_call.1} parent=1 // pred_fallthru
      _
    %v103 = vld [vmem:[#allocation2] sm:$0xff]
    %v104 = vld [vmem:[#allocation2 + $0x8] sm:$0xff]
    %v105 = vld [vmem:[#allocation2 + $0x10] sm:$0xff]
    %v106 = vld [vmem:[#allocation2 + $0x18] sm:$0xff]
    %v107 = vld [vmem:[#allocation2 + $0x20] sm:$0xff]
    %v108 = vld [vmem:[#allocation2 + $0x28] sm:$0xff]
    %v109 = vld [vmem:[#allocation2 + $0x30] sm:$0xff]
    %v110 = vld [vmem:[#allocation2 + $0x38] sm:$0xff]
    %v111 = vld [vmem:[%s3] sm:$0xff]
    %v112 = vld [vmem:[%s3 + $0x8] sm:$0xff]
    %v113 = vld [vmem:[%s3 + $0x10] sm:$0xff]
    %v114 = vld [vmem:[%s3 + $0x18] sm:$0xff]
    %v115 = vld [vmem:[%s2] sm:$0xff]
    %v116 = vld [vmem:[%s2 + $0x8] sm:$0xff]
    %v117 = vld [vmem:[%s2 + $0x10] sm:$0xff]
    %v118 = vld [vmem:[%s2 + $0x18] sm:$0xff]
    %119 = vrot.lane.b32.xlu0 %v103, 17
    %v120 = vpop.permute.xlu0 %119
    %121 = vrot.lane.b32.xlu0 %v105, 17
    %v122 = vpop.permute.xlu0 %121
    %123 = vrot.lane.b32.xlu0 %v107, 17
    %v124 = vpop.permute.xlu0 %123
    %125 = vrot.lane.b32.xlu0 %v109, 17
    %v126 = vpop.permute.xlu0 %125
    %127 = vrot.lane.b32.xlu0 %v104, 17
    %v128 = vpop.permute.xlu0 %127
    %129 = vrot.lane.b32.xlu0 %v106, 17
    %v130 = vpop.permute.xlu0 %129
    %131 = vrot.lane.b32.xlu0 %v108, 17
    %v132 = vpop.permute.xlu0 %131
    %133 = vrot.lane.b32.xlu0 %v110, 17
    %v134 = vpop.permute.xlu0 %133
    %v135 = vlaneseq
    %v136 = vand.u32 %v135, 127
    %vm137 = vcmp.lt.s32.totalorder %v136, 17
    %v138 = vsel %vm137, %v120, %v128
    %v139 = vsel %vm137, %v122, %v130
    %v140 = vsel %vm137, %v124, %v132
    %v141 = vsel %vm137, %v126, %v134
    %v142 = vsel %vm137, %v128, %v120
    %v143 = vsel %vm137, %v130, %v122
    %v144 = vsel %vm137, %v132, %v124
    %v145 = vsel %vm137, %v134, %v126
    %s146 = scalar_lea.vmem [#allocation5], 6
    %v147 = vld [vmem:[%s146] ss:$8 sm:$0x3]
    %v149 = vlaneseq
    %v150 = vshrl.u32 %v149, 7
    %v151 = vsub.s32 0, %v150
    %v152 = vrot.slane %v147, %v151
    %v153 = vlaneseq
    %v154 = vshrl.u32 %v153, 7
    %v155 = vsub.s32 1, %v154
    %v156 = vrot.slane %v147, %v155
    %v159 = vmul.f32 %v142, %v152
    %v160 = vmul.f32 %v138, %v156
    %v161 = vmul.f32 %v143, %v152
    %v162 = vmul.f32 %v139, %v156
    %v163 = vmul.f32 %v144, %v152
    %v164 = vmul.f32 %v140, %v156
    %v165 = vmul.f32 %v145, %v152
    %v166 = vmul.f32 %v141, %v156
    %vm167 = vcmask 261120
    %v169 = vsel %vm167, %v115, 0
    %v172 = vsel %vm167, %v116, 0
    %v175 = vsel %vm167, %v117, 0
    %v178 = vsel %vm167, %v118, 0
    %180 = vmatprep.subr.mxu0 %v160
    %181 = vmatpush1.msra.mxu0 %v159
    %182 = vmatprep.subr.mxu0 %v162
    %183 = vmatpush1.msra.mxu0 %v161
    %184 = vmatprep.subr.mxu0 %v164
    %185 = vmatpush1.msra.mxu0 %v163
    %186 = vmatprep.subr.mxu0 %v166
    %187 = vmatpush1.msra.mxu0 %v165
    %188 = vmatprep.subr.mxu0 0.0
    %189 = vmatpush1.msra.mxu0 0.0
    %190 = vmatprep.subr.mxu0 0.0
    %191 = vmatpush1.msra.mxu0 0.0
    %192 = vmatprep.subr.mxu0 0.0
    %193 = vmatpush1.msra.mxu0 0.0
    %194 = vmatprep.subr.mxu0 0.0
    %195 = vmatpush1.msra.mxu0 0.0
    %196 = vmatprep.subr.mxu0 0.0
    %197 = vmatpush1.msra.mxu0 0.0
    %198 = vmatprep.subr.mxu0 0.0
    %199 = vmatpush1.msra.mxu0 0.0
    %200 = vmatprep.subr.mxu0 0.0
    %201 = vmatpush1.msra.mxu0 0.0
    %202 = vmatprep.subr.mxu0 0.0
    %203 = vmatpush1.msra.mxu0 0.0
    %204 = vmatprep.subr.mxu0 0.0
    %205 = vmatpush1.msra.mxu0 0.0
    %206 = vmatprep.subr.mxu0 0.0
    %207 = vmatpush1.msra.mxu0 0.0
    %208 = vmatprep.subr.mxu0 0.0
    %209 = vmatpush1.msra.mxu0 0.0
    %210 = vmatprep.subr.mxu0 0.0
    %211 = vmatpush1.msra.mxu0 0.0
    %212 = vmatprep.subr.mxu0 0.0
    %213 = vmatpush1.msra.mxu0 0.0
    %214 = vmatprep.subr.mxu0 0.0
    %215 = vmatpush1.msra.mxu0 0.0
    %216 = vmatprep.subr.mxu0 0.0
    %217 = vmatpush1.msra.mxu0 0.0
    %218 = vmatprep.subr.mxu0 0.0
    %219 = vmatpush1.msra.mxu0 0.0
    %220 = vmatprep.subr.mxu0 0.0
    %221 = vmatpush1.msra.mxu0 0.0
    %222 = vmatprep.subr.mxu0 0.0
    %223 = vmatpush1.msra.mxu0 0.0
    %224 = vmatprep.subr.mxu0 0.0
    %225 = vmatpush1.msra.mxu0 0.0
    %226 = vmatprep.subr.mxu0 0.0
    %227 = vmatpush1.msra.mxu0 0.0
    %228 = vmatprep.subr.mxu0 0.0
    %229 = vmatpush1.msra.mxu0 0.0
    %230 = vmatprep.subr.mxu0 0.0
    %231 = vmatpush1.msra.mxu0 0.0
    %232 = vmatprep.subr.mxu0 0.0
    %233 = vmatpush1.msra.mxu0 0.0
    %234 = vmatprep.subr.mxu0 0.0
    %235 = vmatpush1.msra.mxu0 0.0
    %236 = vmatprep.subr.mxu0 0.0
    %237 = vmatpush1.msra.mxu0 0.0
    %238 = vmatprep.subr.mxu0 0.0
    %239 = vmatpush1.msra.mxu0 0.0
    %240 = vmatprep.subr.mxu0 0.0
    %241 = vmatpush1.msra.mxu0 0.0
    %242 = vmatprep.subr.mxu0 0.0
    %243 = vmatpush1.msra.mxu0 0.0
    %244 = vmatprep.mubr.f32.mxu0 0.0
    %245 = vmatmul.mubr.f32.gmra.mrb[0].mxu0 %v169
    %v246 = vpop.f32.mrb[0].mxu0
    %v247 = vadd.f32 0.0, %v246
    %v248 = vpop.f32.mrb[0].mxu0
    %v249 = vadd.f32 0.0, %v248
    %250 = vmatprep.mubr.f32.mxu0 0.0
    %251 = vmatmul.mubr.f32.gmra.mrb[0].mxu0 %v172
    %v252 = vpop.f32.mrb[0].mxu0
    %v253 = vadd.f32 0.0, %v252
    %v254 = vpop.f32.mrb[0].mxu0
    %v255 = vadd.f32 0.0, %v254
    %256 = vmatprep.mubr.f32.mxu0 0.0
    %257 = vmatmul.mubr.f32.gmra.mrb[0].mxu0 %v175
    %v258 = vpop.f32.mrb[0].mxu0
    %v259 = vadd.f32 0.0, %v258
    %v260 = vpop.f32.mrb[0].mxu0
    %v261 = vadd.f32 0.0, %v260
    %262 = vmatprep.mubr.f32.mxu0 0.0
    %263 = vmatmul.mubr.f32.gmra.mrb[0].mxu0 %v178
    %v264 = vpop.f32.mrb[0].mxu0
    %v265 = vadd.f32 0.0, %v264
    %v266 = vpop.f32.mrb[0].mxu0
    %v267 = vadd.f32 0.0, %v266
    %268 = vdwg.mxu0
    %270 = vset.pattern.permute.xlu0 0
    %271 = vperm.xlu0 %270, %v111
    %v272 = vpop.permute.xlu0 %271
    %275 = vset.pattern.permute.xlu0 0
    %276 = vperm.xlu0 %275, %v112
    %v277 = vpop.permute.xlu0 %276
    %280 = vset.pattern.permute.xlu0 0
    %281 = vperm.xlu0 %280, %v113
    %v282 = vpop.permute.xlu0 %281
    %285 = vset.pattern.permute.xlu0 0
    %286 = vperm.xlu0 %285, %v114
    %v287 = vpop.permute.xlu0 %286
    %v289 = vadd.f32 %v272, %v247
    %v290 = vadd.f32 %v272, %v249
    %v291 = vadd.f32 %v277, %v253
    %v292 = vadd.f32 %v277, %v255
    %v293 = vadd.f32 %v282, %v259
    %v294 = vadd.f32 %v282, %v261
    %v295 = vadd.f32 %v287, %v265
    %v296 = vadd.f32 %v287, %v267
    %s297 = scalar_lea.vmem %s2, 32
    %v298 = vld [vmem:[%s297] sm:$0xff]
    %v299 = vld [vmem:[%s297 + $0x8] sm:$0xff]
    %v300 = vld [vmem:[%s297 + $0x10] sm:$0xff]
    %v301 = vld [vmem:[%s297 + $0x18] sm:$0xff]
    %302 = vrot.lane.b32.xlu0 %v103, 16
    %v303 = vpop.permute.xlu0 %302
    %304 = vrot.lane.b32.xlu0 %v105, 16
    %v305 = vpop.permute.xlu0 %304
    %306 = vrot.lane.b32.xlu0 %v107, 16
    %v307 = vpop.permute.xlu0 %306
    %308 = vrot.lane.b32.xlu0 %v109, 16
    %v309 = vpop.permute.xlu0 %308
    %310 = vrot.lane.b32.xlu0 %v104, 16
    %v311 = vpop.permute.xlu0 %310
    %312 = vrot.lane.b32.xlu0 %v106, 16
    %v313 = vpop.permute.xlu0 %312
    %314 = vrot.lane.b32.xlu0 %v108, 16
    %v315 = vpop.permute.xlu0 %314
    %316 = vrot.lane.b32.xlu0 %v110, 16
    %v317 = vpop.permute.xlu0 %316
    %vm318 = vcmp.lt.s32.totalorder %v136, 16
    %v319 = vsel %vm318, %v303, %v311
    %v320 = vsel %vm318, %v305, %v313
    %v321 = vsel %vm318, %v307, %v315
    %v322 = vsel %vm318, %v309, %v317
    %v323 = vsel %vm318, %v311, %v303
    %v324 = vsel %vm318, %v313, %v305
    %v325 = vsel %vm318, %v315, %v307
    %v326 = vsel %vm318, %v317, %v309
    %s327 = scalar_lea.vmem [#allocation5], 7
    %v328 = vld [vmem:[%s327] ss:$8 sm:$0x3]
    %v330 = vlaneseq
    %v331 = vshrl.u32 %v330, 7
    %v332 = vsub.s32 0, %v331
    %v333 = vrot.slane %v328, %v332
    %v334 = vlaneseq
    %v335 = vshrl.u32 %v334, 7
    %v336 = vsub.s32 1, %v335
    %v337 = vrot.slane %v328, %v336
    %v340 = vmul.f32 %v323, %v333
    %v341 = vmul.f32 %v319, %v337
    %v342 = vmul.f32 %v324, %v333
    %v343 = vmul.f32 %v320, %v337
    %v344 = vmul.f32 %v325, %v333
    %v345 = vmul.f32 %v321, %v337
    %v346 = vmul.f32 %v326, %v333
    %v347 = vmul.f32 %v322, %v337
    %v349 = vsel %vm167, %v298, 0
    %v352 = vsel %vm167, %v299, 0
    %v355 = vsel %vm167, %v300, 0
    %v358 = vsel %vm167, %v301, 0
    %360 = vmatprep.subr.mxu0 %v341
    %361 = vmatpush1.msra.mxu0 %v340
    %362 = vmatprep.subr.mxu0 %v343
    %363 = vmatpush1.msra.mxu0 %v342
    %364 = vmatprep.subr.mxu0 %v345
    %365 = vmatpush1.msra.mxu0 %v344
    %366 = vmatprep.subr.mxu0 %v347
    %367 = vmatpush1.msra.mxu0 %v346
    %368 = vmatprep.subr.mxu0 0.0
    %369 = vmatpush1.msra.mxu0 0.0
    %370 = vmatprep.subr.mxu0 0.0
    %371 = vmatpush1.msra.mxu0 0.0
    %372 = vmatprep.subr.mxu0 0.0
    %373 = vmatpush1.msra.mxu0 0.0
    %374 = vmatprep.subr.mxu0 0.0
    %375 = vmatpush1.msra.mxu0 0.0
    %376 = vmatprep.subr.mxu0 0.0
    %377 = vmatpush1.msra.mxu0 0.0
    %378 = vmatprep.subr.mxu0 0.0
    %379 = vmatpush1.msra.mxu0 0.0
    %380 = vmatprep.subr.mxu0 0.0
    %381 = vmatpush1.msra.mxu0 0.0
    %382 = vmatprep.subr.mxu0 0.0
    %383 = vmatpush1.msra.mxu0 0.0
    %384 = vmatprep.subr.mxu0 0.0
    %385 = vmatpush1.msra.mxu0 0.0
    %386 = vmatprep.subr.mxu0 0.0
    %387 = vmatpush1.msra.mxu0 0.0
    %388 = vmatprep.subr.mxu0 0.0
    %389 = vmatpush1.msra.mxu0 0.0
    %390 = vmatprep.subr.mxu0 0.0
    %391 = vmatpush1.msra.mxu0 0.0
    %392 = vmatprep.subr.mxu0 0.0
    %393 = vmatpush1.msra.mxu0 0.0
    %394 = vmatprep.subr.mxu0 0.0
    %395 = vmatpush1.msra.mxu0 0.0
    %396 = vmatprep.subr.mxu0 0.0
    %397 = vmatpush1.msra.mxu0 0.0
    %398 = vmatprep.subr.mxu0 0.0
    %399 = vmatpush1.msra.mxu0 0.0
    %400 = vmatprep.subr.mxu0 0.0
    %401 = vmatpush1.msra.mxu0 0.0
    %402 = vmatprep.subr.mxu0 0.0
    %403 = vmatpush1.msra.mxu0 0.0
    %404 = vmatprep.subr.mxu0 0.0
    %405 = vmatpush1.msra.mxu0 0.0
    %406 = vmatprep.subr.mxu0 0.0
    %407 = vmatpush1.msra.mxu0 0.0
    %408 = vmatprep.subr.mxu0 0.0
    %409 = vmatpush1.msra.mxu0 0.0
    %410 = vmatprep.subr.mxu0 0.0
    %411 = vmatpush1.msra.mxu0 0.0
    %412 = vmatprep.subr.mxu0 0.0
    %413 = vmatpush1.msra.mxu0 0.0
    %414 = vmatprep.subr.mxu0 0.0
    %415 = vmatpush1.msra.mxu0 0.0
    %416 = vmatprep.subr.mxu0 0.0
    %417 = vmatpush1.msra.mxu0 0.0
    %418 = vmatprep.subr.mxu0 0.0
    %419 = vmatpush1.msra.mxu0 0.0
    %420 = vmatprep.subr.mxu0 0.0
    %421 = vmatpush1.msra.mxu0 0.0
    %422 = vmatprep.subr.mxu0 0.0
    %423 = vmatpush1.msra.mxu0 0.0
    %424 = vmatprep.mubr.f32.mxu0 0.0
    %425 = vmatmul.mubr.f32.gmra.mrb[0].mxu0 %v349
    %v426 = vpop.f32.mrb[0].mxu0
    %v427 = vadd.f32 0.0, %v426
    %v428 = vpop.f32.mrb[0].mxu0
    %v429 = vadd.f32 0.0, %v428
    %430 = vmatprep.mubr.f32.mxu0 0.0
    %431 = vmatmul.mubr.f32.gmra.mrb[0].mxu0 %v352
    %v432 = vpop.f32.mrb[0].mxu0
    %v433 = vadd.f32 0.0, %v432
    %v434 = vpop.f32.mrb[0].mxu0
    %v435 = vadd.f32 0.0, %v434
    %436 = vmatprep.mubr.f32.mxu0 0.0
    %437 = vmatmul.mubr.f32.gmra.mrb[0].mxu0 %v355
    %v438 = vpop.f32.mrb[0].mxu0
    %v439 = vadd.f32 0.0, %v438
    %v440 = vpop.f32.mrb[0].mxu0
    %v441 = vadd.f32 0.0, %v440
    %442 = vmatprep.mubr.f32.mxu0 0.0
    %443 = vmatmul.mubr.f32.gmra.mrb[0].mxu0 %v358
    %v444 = vpop.f32.mrb[0].mxu0
    %v445 = vadd.f32 0.0, %v444
    %v446 = vpop.f32.mrb[0].mxu0
    %v447 = vadd.f32 0.0, %v446
    %448 = vdwg.mxu0
    %v449 = vadd.f32 %v289, %v427
    %v450 = vadd.f32 %v290, %v429
    %v451 = vadd.f32 %v291, %v433
    %v452 = vadd.f32 %v292, %v435
    %v453 = vadd.f32 %v293, %v439
    %v454 = vadd.f32 %v294, %v441
    %v455 = vadd.f32 %v295, %v445
    %v456 = vadd.f32 %v296, %v447
    %s457 = scalar_lea.vmem %s2, 64
    %v458 = vld [vmem:[%s457] sm:$0xff]
    %v459 = vld [vmem:[%s457 + $0x8] sm:$0xff]
    %v460 = vld [vmem:[%s457 + $0x10] sm:$0xff]
    %v461 = vld [vmem:[%s457 + $0x18] sm:$0xff]
    %462 = vrot.lane.b32.xlu0 %v103, 15
    %v463 = vpop.permute.xlu0 %462
    %464 = vrot.lane.b32.xlu0 %v105, 15
    %v465 = vpop.permute.xlu0 %464
    %466 = vrot.lane.b32.xlu0 %v107, 15
    %v467 = vpop.permute.xlu0 %466
    %468 = vrot.lane.b32.xlu0 %v109, 15
    %v469 = vpop.permute.xlu0 %468
    %470 = vrot.lane.b32.xlu0 %v104, 15
    %v471 = vpop.permute.xlu0 %470
    %472 = vrot.lane.b32.xlu0 %v106, 15
    %v473 = vpop.permute.xlu0 %472
    %474 = vrot.lane.b32.xlu0 %v108, 15
    %v475 = vpop.permute.xlu0 %474
    %476 = vrot.lane.b32.xlu0 %v110, 15
    %v477 = vpop.permute.xlu0 %476
    %vm478 = vcmp.lt.s32.totalorder %v136, 15
    %v479 = vsel %vm478, %v463, %v471
    %v480 = vsel %vm478, %v465, %v473
    %v481 = vsel %vm478, %v467, %v475
    %v482 = vsel %vm478, %v469, %v477
    %v483 = vsel %vm478, %v471, %v463
    %v484 = vsel %vm478, %v473, %v465
    %v485 = vsel %vm478, %v475, %v467
    %v486 = vsel %vm478, %v477, %v469
    %s487 = scalar_lea.vmem [#allocation5], 16
    %v488 = vld [vmem:[%s487] ss:$8 sm:$0x3]
    %v490 = vlaneseq
    %v491 = vshrl.u32 %v490, 7
    %v492 = vsub.s32 0, %v491
    %v493 = vrot.slane %v488, %v492
    %v494 = vlaneseq
    %v495 = vshrl.u32 %v494, 7
    %v496 = vsub.s32 1, %v495
    %v497 = vrot.slane %v488, %v496
    %v500 = vmul.f32 %v483, %v493
    %v501 = vmul.f32 %v479, %v497
    %v502 = vmul.f32 %v484, %v493
    %v503 = vmul.f32 %v480, %v497
    %v504 = vmul.f32 %v485, %v493
    %v505 = vmul.f32 %v481, %v497
    %v506 = vmul.f32 %v486, %v493
    %v507 = vmul.f32 %v482, %v497
    %v509 = vsel %vm167, %v458, 0
    %v512 = vsel %vm167, %v459, 0
    %v515 = vsel %vm167, %v460, 0
    %v518 = vsel %vm167, %v461, 0
    %520 = vmatprep.subr.mxu0 %v501
    %521 = vmatpush1.msra.mxu0 %v500
    %522 = vmatprep.subr.mxu0 %v503
    %523 = vmatpush1.msra.mxu0 %v502
    %524 = vmatprep.subr.mxu0 %v505
    %525 = vmatpush1.msra.mxu0 %v504
    %526 = vmatprep.subr.mxu0 %v507
    %527 = vmatpush1.msra.mxu0 %v506
    %528 = vmatprep.subr.mxu0 0.0
    %529 = vmatpush1.msra.mxu0 0.0
    %530 = vmatprep.subr.mxu0 0.0
    %531 = vmatpush1.msra.mxu0 0.0
    %532 = vmatprep.subr.mxu0 0.0
    %533 = vmatpush1.msra.mxu0 0.0
    %534 = vmatprep.subr.mxu0 0.0
    %535 = vmatpush1.msra.mxu0 0.0
    %536 = vmatprep.subr.mxu0 0.0
    %537 = vmatpush1.msra.mxu0 0.0
    %538 = vmatprep.subr.mxu0 0.0
    %539 = vmatpush1.msra.mxu0 0.0
    %540 = vmatprep.subr.mxu0 0.0
    %541 = vmatpush1.msra.mxu0 0.0
    %542 = vmatprep.subr.mxu0 0.0
    %543 = vmatpush1.msra.mxu0 0.0
    %544 = vmatprep.subr.mxu0 0.0
    %545 = vmatpush1.msra.mxu0 0.0
    %546 = vmatprep.subr.mxu0 0.0
    %547 = vmatpush1.msra.mxu0 0.0
    %548 = vmatprep.subr.mxu0 0.0
    %549 = vmatpush1.msra.mxu0 0.0
    %550 = vmatprep.subr.mxu0 0.0
    %551 = vmatpush1.msra.mxu0 0.0
    %552 = vmatprep.subr.mxu0 0.0
    %553 = vmatpush1.msra.mxu0 0.0
    %554 = vmatprep.subr.mxu0 0.0
    %555 = vmatpush1.msra.mxu0 0.0
    %556 = vmatprep.subr.mxu0 0.0
    %557 = vmatpush1.msra.mxu0 0.0
    %558 = vmatprep.subr.mxu0 0.0
    %559 = vmatpush1.msra.mxu0 0.0
    %560 = vmatprep.subr.mxu0 0.0
    %561 = vmatpush1.msra.mxu0 0.0
    %562 = vmatprep.subr.mxu0 0.0
    %563 = vmatpush1.msra.mxu0 0.0
    %564 = vmatprep.subr.mxu0 0.0
    %565 = vmatpush1.msra.mxu0 0.0
    %566 = vmatprep.subr.mxu0 0.0
    %567 = vmatpush1.msra.mxu0 0.0
    %568 = vmatprep.subr.mxu0 0.0
    %569 = vmatpush1.msra.mxu0 0.0
    %570 = vmatprep.subr.mxu0 0.0
    %571 = vmatpush1.msra.mxu0 0.0
    %572 = vmatprep.subr.mxu0 0.0
    %573 = vmatpush1.msra.mxu0 0.0
    %574 = vmatprep.subr.mxu0 0.0
    %575 = vmatpush1.msra.mxu0 0.0
    %576 = vmatprep.subr.mxu0 0.0
    %577 = vmatpush1.msra.mxu0 0.0
    %578 = vmatprep.subr.mxu0 0.0
    %579 = vmatpush1.msra.mxu0 0.0
    %580 = vmatprep.subr.mxu0 0.0
    %581 = vmatpush1.msra.mxu0 0.0
    %582 = vmatprep.subr.mxu0 0.0
    %583 = vmatpush1.msra.mxu0 0.0
    %584 = vmatprep.mubr.f32.mxu0 0.0
    %585 = vmatmul.mubr.f32.gmra.mrb[0].mxu0 %v509
    %v586 = vpop.f32.mrb[0].mxu0
    %v587 = vadd.f32 0.0, %v586
    %v588 = vpop.f32.mrb[0].mxu0
    %v589 = vadd.f32 0.0, %v588
    %590 = vmatprep.mubr.f32.mxu0 0.0
    %591 = vmatmul.mubr.f32.gmra.mrb[0].mxu0 %v512
    %v592 = vpop.f32.mrb[0].mxu0
    %v593 = vadd.f32 0.0, %v592
    %v594 = vpop.f32.mrb[0].mxu0
    %v595 = vadd.f32 0.0, %v594
    %596 = vmatprep.mubr.f32.mxu0 0.0
    %597 = vmatmul.mubr.f32.gmra.mrb[0].mxu0 %v515
    %v598 = vpop.f32.mrb[0].mxu0
    %v599 = vadd.f32 0.0, %v598
    %v600 = vpop.f32.mrb[0].mxu0
    %v601 = vadd.f32 0.0, %v600
    %602 = vmatprep.mubr.f32.mxu0 0.0
    %603 = vmatmul.mubr.f32.gmra.mrb[0].mxu0 %v518
    %v604 = vpop.f32.mrb[0].mxu0
    %v605 = vadd.f32 0.0, %v604
    %v606 = vpop.f32.mrb[0].mxu0
    %v607 = vadd.f32 0.0, %v606
    %608 = vdwg.mxu0
    %v609 = vadd.f32 %v449, %v587
    %v610 = vadd.f32 %v450, %v589
    %v611 = vadd.f32 %v451, %v593
    %v612 = vadd.f32 %v452, %v595
    %v613 = vadd.f32 %v453, %v599
    %v614 = vadd.f32 %v454, %v601
    %v615 = vadd.f32 %v455, %v605
    %v616 = vadd.f32 %v456, %v607
    %s617 = scalar_lea.vmem %s2, 96
    %v618 = vld [vmem:[%s617] sm:$0xff]
    %v619 = vld [vmem:[%s617 + $0x8] sm:$0xff]
    %v620 = vld [vmem:[%s617 + $0x10] sm:$0xff]
    %v621 = vld [vmem:[%s617 + $0x18] sm:$0xff]
    %622 = vrot.lane.b32.xlu0 %v103, 1
    %v623 = vpop.permute.xlu0 %622
    %624 = vrot.lane.b32.xlu0 %v105, 1
    %v625 = vpop.permute.xlu0 %624
    %626 = vrot.lane.b32.xlu0 %v107, 1
    %v627 = vpop.permute.xlu0 %626
    %628 = vrot.lane.b32.xlu0 %v109, 1
    %v629 = vpop.permute.xlu0 %628
    %630 = vrot.lane.b32.xlu0 %v104, 1
    %v631 = vpop.permute.xlu0 %630
    %632 = vrot.lane.b32.xlu0 %v106, 1
    %v633 = vpop.permute.xlu0 %632
    %634 = vrot.lane.b32.xlu0 %v108, 1
    %v635 = vpop.permute.xlu0 %634
    %636 = vrot.lane.b32.xlu0 %v110, 1
    %v637 = vpop.permute.xlu0 %636
    %vm638 = vcmp.lt.s32.totalorder %v136, 1
    %v639 = vsel %vm638, %v623, %v631
    %v640 = vsel %vm638, %v625, %v633
    %v641 = vsel %vm638, %v627, %v635
    %v642 = vsel %vm638, %v629, %v637
    %v643 = vsel %vm638, %v631, %v623
    %v644 = vsel %vm638, %v633, %v625
    %v645 = vsel %vm638, %v635, %v627
    %v646 = vsel %vm638, %v637, %v629
    %s647 = scalar_lea.vmem [#allocation5], 19
    %v648 = vld [vmem:[%s647] ss:$8 sm:$0x3]
    %v650 = vlaneseq
    %v651 = vshrl.u32 %v650, 7
    %v652 = vsub.s32 0, %v651
    %v653 = vrot.slane %v648, %v652
    %v654 = vlaneseq
    %v655 = vshrl.u32 %v654, 7
    %v656 = vsub.s32 1, %v655
    %v657 = vrot.slane %v648, %v656
    %v660 = vmul.f32 %v643, %v653
    %v661 = vmul.f32 %v639, %v657
    %v662 = vmul.f32 %v644, %v653
    %v663 = vmul.f32 %v640, %v657
    %v664 = vmul.f32 %v645, %v653
    %v665 = vmul.f32 %v641, %v657
    %v666 = vmul.f32 %v646, %v653
    %v667 = vmul.f32 %v642, %v657
    %v669 = vsel %vm167, %v618, 0
    %v672 = vsel %vm167, %v619, 0
    %v675 = vsel %vm167, %v620, 0
    %v678 = vsel %vm167, %v621, 0
    %680 = vmatprep.subr.mxu0 %v661
    %681 = vmatpush1.msra.mxu0 %v660
    %682 = vmatprep.subr.mxu0 %v663
    %683 = vmatpush1.msra.mxu0 %v662
    %684 = vmatprep.subr.mxu0 %v665
    %685 = vmatpush1.msra.mxu0 %v664
    %686 = vmatprep.subr.mxu0 %v667
    %687 = vmatpush1.msra.mxu0 %v666
    %688 = vmatprep.subr.mxu0 0.0
    %689 = vmatpush1.msra.mxu0 0.0
    %690 = vmatprep.subr.mxu0 0.0
    %691 = vmatpush1.msra.mxu0 0.0
    %692 = vmatprep.subr.mxu0 0.0
    %693 = vmatpush1.msra.mxu0 0.0
    %694 = vmatprep.subr.mxu0 0.0
    %695 = vmatpush1.msra.mxu0 0.0
    %696 = vmatprep.subr.mxu0 0.0
    %697 = vmatpush1.msra.mxu0 0.0
    %698 = vmatprep.subr.mxu0 0.0
    %699 = vmatpush1.msra.mxu0 0.0
    %700 = vmatprep.subr.mxu0 0.0
    %701 = vmatpush1.msra.mxu0 0.0
    %702 = vmatprep.subr.mxu0 0.0
    %703 = vmatpush1.msra.mxu0 0.0
    %704 = vmatprep.subr.mxu0 0.0
    %705 = vmatpush1.msra.mxu0 0.0
    %706 = vmatprep.subr.mxu0 0.0
    %707 = vmatpush1.msra.mxu0 0.0
    %708 = vmatprep.subr.mxu0 0.0
    %709 = vmatpush1.msra.mxu0 0.0
    %710 = vmatprep.subr.mxu0 0.0
    %711 = vmatpush1.msra.mxu0 0.0
    %712 = vmatprep.subr.mxu0 0.0
    %713 = vmatpush1.msra.mxu0 0.0
    %714 = vmatprep.subr.mxu0 0.0
    %715 = vmatpush1.msra.mxu0 0.0
    %716 = vmatprep.subr.mxu0 0.0
    %717 = vmatpush1.msra.mxu0 0.0
    %718 = vmatprep.subr.mxu0 0.0
    %719 = vmatpush1.msra.mxu0 0.0
    %720 = vmatprep.subr.mxu0 0.0
    %721 = vmatpush1.msra.mxu0 0.0
    %722 = vmatprep.subr.mxu0 0.0
    %723 = vmatpush1.msra.mxu0 0.0
    %724 = vmatprep.subr.mxu0 0.0
    %725 = vmatpush1.msra.mxu0 0.0
    %726 = vmatprep.subr.mxu0 0.0
    %727 = vmatpush1.msra.mxu0 0.0
    %728 = vmatprep.subr.mxu0 0.0
    %729 = vmatpush1.msra.mxu0 0.0
    %730 = vmatprep.subr.mxu0 0.0
    %731 = vmatpush1.msra.mxu0 0.0
    %732 = vmatprep.subr.mxu0 0.0
    %733 = vmatpush1.msra.mxu0 0.0
    %734 = vmatprep.subr.mxu0 0.0
    %735 = vmatpush1.msra.mxu0 0.0
    %736 = vmatprep.subr.mxu0 0.0
    %737 = vmatpush1.msra.mxu0 0.0
    %738 = vmatprep.subr.mxu0 0.0
    %739 = vmatpush1.msra.mxu0 0.0
    %740 = vmatprep.subr.mxu0 0.0
    %741 = vmatpush1.msra.mxu0 0.0
    %742 = vmatprep.subr.mxu0 0.0
    %743 = vmatpush1.msra.mxu0 0.0
    %744 = vmatprep.mubr.f32.mxu0 0.0
    %745 = vmatmul.mubr.f32.gmra.mrb[0].mxu0 %v669
    %v746 = vpop.f32.mrb[0].mxu0
    %v747 = vadd.f32 0.0, %v746
    %v748 = vpop.f32.mrb[0].mxu0
    %v749 = vadd.f32 0.0, %v748
    %750 = vmatprep.mubr.f32.mxu0 0.0
    %751 = vmatmul.mubr.f32.gmra.mrb[0].mxu0 %v672
    %v752 = vpop.f32.mrb[0].mxu0
    %v753 = vadd.f32 0.0, %v752
    %v754 = vpop.f32.mrb[0].mxu0
    %v755 = vadd.f32 0.0, %v754
    %756 = vmatprep.mubr.f32.mxu0 0.0
    %757 = vmatmul.mubr.f32.gmra.mrb[0].mxu0 %v675
    %v758 = vpop.f32.mrb[0].mxu0
    %v759 = vadd.f32 0.0, %v758
    %v760 = vpop.f32.mrb[0].mxu0
    %v761 = vadd.f32 0.0, %v760
    %762 = vmatprep.mubr.f32.mxu0 0.0
    %763 = vmatmul.mubr.f32.gmra.mrb[0].mxu0 %v678
    %v764 = vpop.f32.mrb[0].mxu0
    %v765 = vadd.f32 0.0, %v764
    %v766 = vpop.f32.mrb[0].mxu0
    %v767 = vadd.f32 0.0, %v766
    %768 = vdwg.mxu0
    %v769 = vadd.f32 %v609, %v747
    %v770 = vadd.f32 %v610, %v749
    %v771 = vadd.f32 %v611, %v753
    %v772 = vadd.f32 %v612, %v755
    %v773 = vadd.f32 %v613, %v759
    %v774 = vadd.f32 %v614, %v761
    %v775 = vadd.f32 %v615, %v765
    %v776 = vadd.f32 %v616, %v767
    %s777 = scalar_lea.vmem %s2, 128
    %v778 = vld [vmem:[%s777] sm:$0xff]
    %v779 = vld [vmem:[%s777 + $0x8] sm:$0xff]
    %v780 = vld [vmem:[%s777 + $0x10] sm:$0xff]
    %v781 = vld [vmem:[%s777 + $0x18] sm:$0xff]
    %v783 = vsel %vm167, %v778, 0
    %v786 = vsel %vm167, %v779, 0
    %v789 = vsel %vm167, %v780, 0
    %v792 = vsel %vm167, %v781, 0
    %794 = vmatprep.subr.mxu0 %v104
    %795 = vmatpush1.msra.mxu0 %v103
    %796 = vmatprep.subr.mxu0 %v106
    %797 = vmatpush1.msra.mxu0 %v105
    %798 = vmatprep.subr.mxu0 %v108
    %799 = vmatpush1.msra.mxu0 %v107
    %800 = vmatprep.subr.mxu0 %v110
    %801 = vmatpush1.msra.mxu0 %v109
    %802 = vmatprep.subr.mxu0 0.0
    %803 = vmatpush1.msra.mxu0 0.0
    %804 = vmatprep.subr.mxu0 0.0
    %805 = vmatpush1.msra.mxu0 0.0
    %806 = vmatprep.subr.mxu0 0.0
    %807 = vmatpush1.msra.mxu0 0.0
    %808 = vmatprep.subr.mxu0 0.0
    %809 = vmatpush1.msra.mxu0 0.0
    %810 = vmatprep.subr.mxu0 0.0
    %811 = vmatpush1.msra.mxu0 0.0
    %812 = vmatprep.subr.mxu0 0.0
    %813 = vmatpush1.msra.mxu0 0.0
    %814 = vmatprep.subr.mxu0 0.0
    %815 = vmatpush1.msra.mxu0 0.0
    %816 = vmatprep.subr.mxu0 0.0
    %817 = vmatpush1.msra.mxu0 0.0
    %818 = vmatprep.subr.mxu0 0.0
    %819 = vmatpush1.msra.mxu0 0.0
    %820 = vmatprep.subr.mxu0 0.0
    %821 = vmatpush1.msra.mxu0 0.0
    %822 = vmatprep.subr.mxu0 0.0
    %823 = vmatpush1.msra.mxu0 0.0
    %824 = vmatprep.subr.mxu0 0.0
    %825 = vmatpush1.msra.mxu0 0.0
    %826 = vmatprep.subr.mxu0 0.0
    %827 = vmatpush1.msra.mxu0 0.0
    %828 = vmatprep.subr.mxu0 0.0
    %829 = vmatpush1.msra.mxu0 0.0
    %830 = vmatprep.subr.mxu0 0.0
    %831 = vmatpush1.msra.mxu0 0.0
    %832 = vmatprep.subr.mxu0 0.0
    %833 = vmatpush1.msra.mxu0 0.0
    %834 = vmatprep.subr.mxu0 0.0
    %835 = vmatpush1.msra.mxu0 0.0
    %836 = vmatprep.subr.mxu0 0.0
    %837 = vmatpush1.msra.mxu0 0.0
    %838 = vmatprep.subr.mxu0 0.0
    %839 = vmatpush1.msra.mxu0 0.0
    %840 = vmatprep.subr.mxu0 0.0
    %841 = vmatpush1.msra.mxu0 0.0
    %842 = vmatprep.subr.mxu0 0.0
    %843 = vmatpush1.msra.mxu0 0.0
    %844 = vmatprep.subr.mxu0 0.0
    %845 = vmatpush1.msra.mxu0 0.0
    %846 = vmatprep.subr.mxu0 0.0
    %847 = vmatpush1.msra.mxu0 0.0
    %848 = vmatprep.subr.mxu0 0.0
    %849 = vmatpush1.msra.mxu0 0.0
    %850 = vmatprep.subr.mxu0 0.0
    %851 = vmatpush1.msra.mxu0 0.0
    %852 = vmatprep.subr.mxu0 0.0
    %853 = vmatpush1.msra.mxu0 0.0
    %854 = vmatprep.subr.mxu0 0.0
    %855 = vmatpush1.msra.mxu0 0.0
    %856 = vmatprep.subr.mxu0 0.0
    %857 = vmatpush1.msra.mxu0 0.0
    %858 = vmatprep.mubr.f32.mxu0 0.0
    %859 = vmatmul.mubr.f32.gmra.mrb[0].mxu0 %v783
    %v860 = vpop.f32.mrb[0].mxu0
    %v861 = vadd.f32 0.0, %v860
    %v862 = vpop.f32.mrb[0].mxu0
    %v863 = vadd.f32 0.0, %v862
    %864 = vmatprep.mubr.f32.mxu0 0.0
    %865 = vmatmul.mubr.f32.gmra.mrb[0].mxu0 %v786
    %v866 = vpop.f32.mrb[0].mxu0
    %v867 = vadd.f32 0.0, %v866
    %v868 = vpop.f32.mrb[0].mxu0
    %v869 = vadd.f32 0.0, %v868
    %870 = vmatprep.mubr.f32.mxu0 0.0
    %871 = vmatmul.mubr.f32.gmra.mrb[0].mxu0 %v789
    %v872 = vpop.f32.mrb[0].mxu0
    %v873 = vadd.f32 0.0, %v872
    %v874 = vpop.f32.mrb[0].mxu0
    %v875 = vadd.f32 0.0, %v874
    %876 = vmatprep.mubr.f32.mxu0 0.0
    %877 = vmatmul.mubr.f32.gmra.mrb[0].mxu0 %v792
    %v878 = vpop.f32.mrb[0].mxu0
    %v879 = vadd.f32 0.0, %v878
    %v880 = vpop.f32.mrb[0].mxu0
    %v881 = vadd.f32 0.0, %v880
    %882 = vdwg.mxu0
    %v883 = vadd.f32 %v769, %v861
    %v884 = vadd.f32 %v770, %v863
    %v885 = vadd.f32 %v771, %v867
    %v886 = vadd.f32 %v772, %v869
    %v887 = vadd.f32 %v773, %v873
    %v888 = vadd.f32 %v774, %v875
    %v889 = vadd.f32 %v775, %v879
    %v890 = vadd.f32 %v776, %v881
    %s891 = scalar_lea.vmem %s2, 160
    %v892 = vld [vmem:[%s891] sm:$0xff]
    %v893 = vld [vmem:[%s891 + $0x8] sm:$0xff]
    %v894 = vld [vmem:[%s891 + $0x10] sm:$0xff]
    %v895 = vld [vmem:[%s891 + $0x18] sm:$0xff]
    %896 = vrot.lane.b32.xlu0 %v103, 127
    %v897 = vpop.permute.xlu0 %896
    %898 = vrot.lane.b32.xlu0 %v105, 127
    %v899 = vpop.permute.xlu0 %898
    %900 = vrot.lane.b32.xlu0 %v107, 127
    %v901 = vpop.permute.xlu0 %900
    %902 = vrot.lane.b32.xlu0 %v109, 127
    %v903 = vpop.permute.xlu0 %902
    %904 = vrot.lane.b32.xlu0 %v104, 127
    %v905 = vpop.permute.xlu0 %904
    %906 = vrot.lane.b32.xlu0 %v106, 127
    %v907 = vpop.permute.xlu0 %906
    %908 = vrot.lane.b32.xlu0 %v108, 127
    %v909 = vpop.permute.xlu0 %908
    %910 = vrot.lane.b32.xlu0 %v110, 127
    %v911 = vpop.permute.xlu0 %910
    %vm912 = vcmp.lt.s32.totalorder %v136, 127
    %v913 = vsel %vm912, %v897, %v905
    %v914 = vsel %vm912, %v899, %v907
    %v915 = vsel %vm912, %v901, %v909
    %v916 = vsel %vm912, %v903, %v911
    %v917 = vsel %vm912, %v905, %v897
    %v918 = vsel %vm912, %v907, %v899
    %v919 = vsel %vm912, %v909, %v901
    %v920 = vsel %vm912, %v911, %v903
    %s921 = scalar_lea.vmem [#allocation5], 21
    %v922 = vld [vmem:[%s921] ss:$8 sm:$0x3]
    %v924 = vlaneseq
    %v925 = vshrl.u32 %v924, 7
    %v926 = vsub.s32 0, %v925
    %v927 = vrot.slane %v922, %v926
    %v928 = vlaneseq
    %v929 = vshrl.u32 %v928, 7
    %v930 = vsub.s32 1, %v929
    %v931 = vrot.slane %v922, %v930
    %v934 = vmul.f32 %v913, %v927
    %v935 = vmul.f32 %v917, %v931
    %v936 = vmul.f32 %v914, %v927
    %v937 = vmul.f32 %v918, %v931
    %v938 = vmul.f32 %v915, %v927
    %v939 = vmul.f32 %v919, %v931
    %v940 = vmul.f32 %v916, %v927
    %v941 = vmul.f32 %v920, %v931
    %v943 = vsel %vm167, %v892, 0
    %v946 = vsel %vm167, %v893, 0
    %v949 = vsel %vm167, %v894, 0
    %v952 = vsel %vm167, %v895, 0
    %954 = vmatprep.subr.mxu0 %v935
    %955 = vmatpush1.msra.mxu0 %v934
    %956 = vmatprep.subr.mxu0 %v937
    %957 = vmatpush1.msra.mxu0 %v936
    %958 = vmatprep.subr.mxu0 %v939
    %959 = vmatpush1.msra.mxu0 %v938
    %960 = vmatprep.subr.mxu0 %v941
    %961 = vmatpush1.msra.mxu0 %v940
    %962 = vmatprep.subr.mxu0 0.0
    %963 = vmatpush1.msra.mxu0 0.0
    %964 = vmatprep.subr.mxu0 0.0
    %965 = vmatpush1.msra.mxu0 0.0
    %966 = vmatprep.subr.mxu0 0.0
    %967 = vmatpush1.msra.mxu0 0.0
    %968 = vmatprep.subr.mxu0 0.0
    %969 = vmatpush1.msra.mxu0 0.0
    %970 = vmatprep.subr.mxu0 0.0
    %971 = vmatpush1.msra.mxu0 0.0
    %972 = vmatprep.subr.mxu0 0.0
    %973 = vmatpush1.msra.mxu0 0.0
    %974 = vmatprep.subr.mxu0 0.0
    %975 = vmatpush1.msra.mxu0 0.0
    %976 = vmatprep.subr.mxu0 0.0
    %977 = vmatpush1.msra.mxu0 0.0
    %978 = vmatprep.subr.mxu0 0.0
    %979 = vmatpush1.msra.mxu0 0.0
    %980 = vmatprep.subr.mxu0 0.0
    %981 = vmatpush1.msra.mxu0 0.0
    %982 = vmatprep.subr.mxu0 0.0
    %983 = vmatpush1.msra.mxu0 0.0
    %984 = vmatprep.subr.mxu0 0.0
    %985 = vmatpush1.msra.mxu0 0.0
    %986 = vmatprep.subr.mxu0 0.0
    %987 = vmatpush1.msra.mxu0 0.0
    %988 = vmatprep.subr.mxu0 0.0
    %989 = vmatpush1.msra.mxu0 0.0
    %990 = vmatprep.subr.mxu0 0.0
    %991 = vmatpush1.msra.mxu0 0.0
    %992 = vmatprep.subr.mxu0 0.0
    %993 = vmatpush1.msra.mxu0 0.0
    %994 = vmatprep.subr.mxu0 0.0
    %995 = vmatpush1.msra.mxu0 0.0
    %996 = vmatprep.subr.mxu0 0.0
    %997 = vmatpush1.msra.mxu0 0.0
    %998 = vmatprep.subr.mxu0 0.0
    %999 = vmatpush1.msra.mxu0 0.0
    %1000 = vmatprep.subr.mxu0 0.0
    %1001 = vmatpush1.msra.mxu0 0.0
    %1002 = vmatprep.subr.mxu0 0.0
    %1003 = vmatpush1.msra.mxu0 0.0
    %1004 = vmatprep.subr.mxu0 0.0
    %1005 = vmatpush1.msra.mxu0 0.0
    %1006 = vmatprep.subr.mxu0 0.0
    %1007 = vmatpush1.msra.mxu0 0.0
    %1008 = vmatprep.subr.mxu0 0.0
    %1009 = vmatpush1.msra.mxu0 0.0
    %1010 = vmatprep.subr.mxu0 0.0
    %1011 = vmatpush1.msra.mxu0 0.0
    %1012 = vmatprep.subr.mxu0 0.0
    %1013 = vmatpush1.msra.mxu0 0.0
    %1014 = vmatprep.subr.mxu0 0.0
    %1015 = vmatpush1.msra.mxu0 0.0
    %1016 = vmatprep.subr.mxu0 0.0
    %1017 = vmatpush1.msra.mxu0 0.0
    %1018 = vmatprep.mubr.f32.mxu0 0.0
    %1019 = vmatmul.mubr.f32.gmra.mrb[0].mxu0 %v943
    %v1020 = vpop.f32.mrb[0].mxu0
    %v1021 = vadd.f32 0.0, %v1020
    %v1022 = vpop.f32.mrb[0].mxu0
    %v1023 = vadd.f32 0.0, %v1022
    %1024 = vmatprep.mubr.f32.mxu0 0.0
    %1025 = vmatmul.mubr.f32.gmra.mrb[0].mxu0 %v946
    %v1026 = vpop.f32.mrb[0].mxu0
    %v1027 = vadd.f32 0.0, %v1026
    %v1028 = vpop.f32.mrb[0].mxu0
    %v1029 = vadd.f32 0.0, %v1028
    %1030 = vmatprep.mubr.f32.mxu0 0.0
    %1031 = vmatmul.mubr.f32.gmra.mrb[0].mxu0 %v949
    %v1032 = vpop.f32.mrb[0].mxu0
    %v1033 = vadd.f32 0.0, %v1032
    %v1034 = vpop.f32.mrb[0].mxu0
    %v1035 = vadd.f32 0.0, %v1034
    %1036 = vmatprep.mubr.f32.mxu0 0.0
    %1037 = vmatmul.mubr.f32.gmra.mrb[0].mxu0 %v952
    %v1038 = vpop.f32.mrb[0].mxu0
    %v1039 = vadd.f32 0.0, %v1038
    %v1040 = vpop.f32.mrb[0].mxu0
    %v1041 = vadd.f32 0.0, %v1040
    %1042 = vdwg.mxu0
    %v1043 = vadd.f32 %v883, %v1021
    %v1044 = vadd.f32 %v884, %v1023
    %v1045 = vadd.f32 %v885, %v1027
    %v1046 = vadd.f32 %v886, %v1029
    %v1047 = vadd.f32 %v887, %v1033
    %v1048 = vadd.f32 %v888, %v1035
    %v1049 = vadd.f32 %v889, %v1039
    %v1050 = vadd.f32 %v890, %v1041
    %s1051 = scalar_lea.vmem %s2, 192
    %v1052 = vld [vmem:[%s1051] sm:$0xff]
    %v1053 = vld [vmem:[%s1051 + $0x8] sm:$0xff]
    %v1054 = vld [vmem:[%s1051 + $0x10] sm:$0xff]
    %v1055 = vld [vmem:[%s1051 + $0x18] sm:$0xff]
    %1056 = vrot.lane.b32.xlu0 %v103, 113
    %v1057 = vpop.permute.xlu0 %1056
    %1058 = vrot.lane.b32.xlu0 %v105, 113
    %v1059 = vpop.permute.xlu0 %1058
    %1060 = vrot.lane.b32.xlu0 %v107, 113
    %v1061 = vpop.permute.xlu0 %1060
    %1062 = vrot.lane.b32.xlu0 %v109, 113
    %v1063 = vpop.permute.xlu0 %1062
    %1064 = vrot.lane.b32.xlu0 %v104, 113
    %v1065 = vpop.permute.xlu0 %1064
    %1066 = vrot.lane.b32.xlu0 %v106, 113
    %v1067 = vpop.permute.xlu0 %1066
    %1068 = vrot.lane.b32.xlu0 %v108, 113
    %v1069 = vpop.permute.xlu0 %1068
    %1070 = vrot.lane.b32.xlu0 %v110, 113
    %v1071 = vpop.permute.xlu0 %1070
    %vm1072 = vcmp.lt.s32.totalorder %v136, 113
    %v1073 = vsel %vm1072, %v1057, %v1065
    %v1074 = vsel %vm1072, %v1059, %v1067
    %v1075 = vsel %vm1072, %v1061, %v1069
    %v1076 = vsel %vm1072, %v1063, %v1071
    %v1077 = vsel %vm1072, %v1065, %v1057
    %v1078 = vsel %vm1072, %v1067, %v1059
    %v1079 = vsel %vm1072, %v1069, %v1061
    %v1080 = vsel %vm1072, %v1071, %v1063
    %s1081 = scalar_lea.vmem [#allocation5], 32
    %v1082 = vld [vmem:[%s1081] ss:$8 sm:$0x3]
    %v1084 = vlaneseq
    %v1085 = vshrl.u32 %v1084, 7
    %v1086 = vsub.s32 0, %v1085
    %v1087 = vrot.slane %v1082, %v1086
    %v1088 = vlaneseq
    %v1089 = vshrl.u32 %v1088, 7
    %v1090 = vsub.s32 1, %v1089
    %v1091 = vrot.slane %v1082, %v1090
    %v1094 = vmul.f32 %v1073, %v1087
    %v1095 = vmul.f32 %v1077, %v1091
    %v1096 = vmul.f32 %v1074, %v1087
    %v1097 = vmul.f32 %v1078, %v1091
    %v1098 = vmul.f32 %v1075, %v1087
    %v1099 = vmul.f32 %v1079, %v1091
    %v1100 = vmul.f32 %v1076, %v1087
    %v1101 = vmul.f32 %v1080, %v1091
    %v1103 = vsel %vm167, %v1052, 0
    %v1106 = vsel %vm167, %v1053, 0
    %v1109 = vsel %vm167, %v1054, 0
    %v1112 = vsel %vm167, %v1055, 0
    %1114 = vmatprep.subr.mxu0 %v1095
    %1115 = vmatpush1.msra.mxu0 %v1094
    %1116 = vmatprep.subr.mxu0 %v1097
    %1117 = vmatpush1.msra.mxu0 %v1096
    %1118 = vmatprep.subr.mxu0 %v1099
    %1119 = vmatpush1.msra.mxu0 %v1098
    %1120 = vmatprep.subr.mxu0 %v1101
    %1121 = vmatpush1.msra.mxu0 %v1100
    %1122 = vmatprep.subr.mxu0 0.0
    %1123 = vmatpush1.msra.mxu0 0.0
    %1124 = vmatprep.subr.mxu0 0.0
    %1125 = vmatpush1.msra.mxu0 0.0
    %1126 = vmatprep.subr.mxu0 0.0
    %1127 = vmatpush1.msra.mxu0 0.0
    %1128 = vmatprep.subr.mxu0 0.0
    %1129 = vmatpush1.msra.mxu0 0.0
    %1130 = vmatprep.subr.mxu0 0.0
    %1131 = vmatpush1.msra.mxu0 0.0
    %1132 = vmatprep.subr.mxu0 0.0
    %1133 = vmatpush1.msra.mxu0 0.0
    %1134 = vmatprep.subr.mxu0 0.0
    %1135 = vmatpush1.msra.mxu0 0.0
    %1136 = vmatprep.subr.mxu0 0.0
    %1137 = vmatpush1.msra.mxu0 0.0
    %1138 = vmatprep.subr.mxu0 0.0
    %1139 = vmatpush1.msra.mxu0 0.0
    %1140 = vmatprep.subr.mxu0 0.0
    %1141 = vmatpush1.msra.mxu0 0.0
    %1142 = vmatprep.subr.mxu0 0.0
    %1143 = vmatpush1.msra.mxu0 0.0
    %1144 = vmatprep.subr.mxu0 0.0
    %1145 = vmatpush1.msra.mxu0 0.0
    %1146 = vmatprep.subr.mxu0 0.0
    %1147 = vmatpush1.msra.mxu0 0.0
    %1148 = vmatprep.subr.mxu0 0.0
    %1149 = vmatpush1.msra.mxu0 0.0
    %1150 = vmatprep.subr.mxu0 0.0
    %1151 = vmatpush1.msra.mxu0 0.0
    %1152 = vmatprep.subr.mxu0 0.0
    %1153 = vmatpush1.msra.mxu0 0.0
    %1154 = vmatprep.subr.mxu0 0.0
    %1155 = vmatpush1.msra.mxu0 0.0
    %1156 = vmatprep.subr.mxu0 0.0
    %1157 = vmatpush1.msra.mxu0 0.0
    %1158 = vmatprep.subr.mxu0 0.0
    %1159 = vmatpush1.msra.mxu0 0.0
    %1160 = vmatprep.subr.mxu0 0.0
    %1161 = vmatpush1.msra.mxu0 0.0
    %1162 = vmatprep.subr.mxu0 0.0
    %1163 = vmatpush1.msra.mxu0 0.0
    %1164 = vmatprep.subr.mxu0 0.0
    %1165 = vmatpush1.msra.mxu0 0.0
    %1166 = vmatprep.subr.mxu0 0.0
    %1167 = vmatpush1.msra.mxu0 0.0
    %1168 = vmatprep.subr.mxu0 0.0
    %1169 = vmatpush1.msra.mxu0 0.0
    %1170 = vmatprep.subr.mxu0 0.0
    %1171 = vmatpush1.msra.mxu0 0.0
    %1172 = vmatprep.subr.mxu0 0.0
    %1173 = vmatpush1.msra.mxu0 0.0
    %1174 = vmatprep.subr.mxu0 0.0
    %1175 = vmatpush1.msra.mxu0 0.0
    %1176 = vmatprep.subr.mxu0 0.0
    %1177 = vmatpush1.msra.mxu0 0.0
    %1178 = vmatprep.mubr.f32.mxu0 0.0
    %1179 = vmatmul.mubr.f32.gmra.mrb[0].mxu0 %v1103
    %v1180 = vpop.f32.mrb[0].mxu0
    %v1181 = vadd.f32 0.0, %v1180
    %v1182 = vpop.f32.mrb[0].mxu0
    %v1183 = vadd.f32 0.0, %v1182
    %1184 = vmatprep.mubr.f32.mxu0 0.0
    %1185 = vmatmul.mubr.f32.gmra.mrb[0].mxu0 %v1106
    %v1186 = vpop.f32.mrb[0].mxu0
    %v1187 = vadd.f32 0.0, %v1186
    %v1188 = vpop.f32.mrb[0].mxu0
    %v1189 = vadd.f32 0.0, %v1188
    %1190 = vmatprep.mubr.f32.mxu0 0.0
    %1191 = vmatmul.mubr.f32.gmra.mrb[0].mxu0 %v1109
    %v1192 = vpop.f32.mrb[0].mxu0
    %v1193 = vadd.f32 0.0, %v1192
    %v1194 = vpop.f32.mrb[0].mxu0
    %v1195 = vadd.f32 0.0, %v1194
    %1196 = vmatprep.mubr.f32.mxu0 0.0
    %1197 = vmatmul.mubr.f32.gmra.mrb[0].mxu0 %v1112
    %v1198 = vpop.f32.mrb[0].mxu0
    %v1199 = vadd.f32 0.0, %v1198
    %v1200 = vpop.f32.mrb[0].mxu0
    %v1201 = vadd.f32 0.0, %v1200
    %1202 = vdwg.mxu0
    %v1203 = vadd.f32 %v1043, %v1181
    %v1204 = vadd.f32 %v1044, %v1183
    %v1205 = vadd.f32 %v1045, %v1187
    %v1206 = vadd.f32 %v1046, %v1189
    %v1207 = vadd.f32 %v1047, %v1193
    %v1208 = vadd.f32 %v1048, %v1195
    %v1209 = vadd.f32 %v1049, %v1199
    %v1210 = vadd.f32 %v1050, %v1201
    %s1211 = scalar_lea.vmem %s2, 224
    %v1212 = vld [vmem:[%s1211] sm:$0xff]
    %v1213 = vld [vmem:[%s1211 + $0x8] sm:$0xff]
    %v1214 = vld [vmem:[%s1211 + $0x10] sm:$0xff]
    %v1215 = vld [vmem:[%s1211 + $0x18] sm:$0xff]
    %1216 = vrot.lane.b32.xlu0 %v103, 112
    %v1217 = vpop.permute.xlu0 %1216
    %1218 = vrot.lane.b32.xlu0 %v105, 112
    %v1219 = vpop.permute.xlu0 %1218
    %1220 = vrot.lane.b32.xlu0 %v107, 112
    %v1221 = vpop.permute.xlu0 %1220
    %1222 = vrot.lane.b32.xlu0 %v109, 112
    %v1223 = vpop.permute.xlu0 %1222
    %1224 = vrot.lane.b32.xlu0 %v104, 112
    %v1225 = vpop.permute.xlu0 %1224
    %1226 = vrot.lane.b32.xlu0 %v106, 112
    %v1227 = vpop.permute.xlu0 %1226
    %1228 = vrot.lane.b32.xlu0 %v108, 112
    %v1229 = vpop.permute.xlu0 %1228
    %1230 = vrot.lane.b32.xlu0 %v110, 112
    %v1231 = vpop.permute.xlu0 %1230
    %vm1232 = vcmp.lt.s32.totalorder %v136, 112
    %v1233 = vsel %vm1232, %v1217, %v1225
    %v1234 = vsel %vm1232, %v1219, %v1227
    %v1235 = vsel %vm1232, %v1221, %v1229
    %v1236 = vsel %vm1232, %v1223, %v1231
    %v1237 = vsel %vm1232, %v1225, %v1217
    %v1238 = vsel %vm1232, %v1227, %v1219
    %v1239 = vsel %vm1232, %v1229, %v1221
    %v1240 = vsel %vm1232, %v1231, %v1223
    %s1241 = scalar_lea.vmem [#allocation5], 33
    %v1242 = vld [vmem:[%s1241] ss:$8 sm:$0x3]
    %v1244 = vlaneseq
    %v1245 = vshrl.u32 %v1244, 7
    %v1246 = vsub.s32 0, %v1245
    %v1247 = vrot.slane %v1242, %v1246
    %v1248 = vlaneseq
    %v1249 = vshrl.u32 %v1248, 7
    %v1250 = vsub.s32 1, %v1249
    %v1251 = vrot.slane %v1242, %v1250
    %v1254 = vmul.f32 %v1233, %v1247
    %v1255 = vmul.f32 %v1237, %v1251
    %v1256 = vmul.f32 %v1234, %v1247
    %v1257 = vmul.f32 %v1238, %v1251
    %v1258 = vmul.f32 %v1235, %v1247
    %v1259 = vmul.f32 %v1239, %v1251
    %v1260 = vmul.f32 %v1236, %v1247
    %v1261 = vmul.f32 %v1240, %v1251
    %v1263 = vsel %vm167, %v1212, 0
    %v1266 = vsel %vm167, %v1213, 0
    %v1269 = vsel %vm167, %v1214, 0
    %v1272 = vsel %vm167, %v1215, 0
    %1274 = vmatprep.subr.mxu0 %v1255
    %1275 = vmatpush1.msra.mxu0 %v1254
    %1276 = vmatprep.subr.mxu0 %v1257
    %1277 = vmatpush1.msra.mxu0 %v1256
    %1278 = vmatprep.subr.mxu0 %v1259
    %1279 = vmatpush1.msra.mxu0 %v1258
    %1280 = vmatprep.subr.mxu0 %v1261
    %1281 = vmatpush1.msra.mxu0 %v1260
    %1282 = vmatprep.subr.mxu0 0.0
    %1283 = vmatpush1.msra.mxu0 0.0
    %1284 = vmatprep.subr.mxu0 0.0
    %1285 = vmatpush1.msra.mxu0 0.0
    %1286 = vmatprep.subr.mxu0 0.0
    %1287 = vmatpush1.msra.mxu0 0.0
    %1288 = vmatprep.subr.mxu0 0.0
    %1289 = vmatpush1.msra.mxu0 0.0
    %1290 = vmatprep.subr.mxu0 0.0
    %1291 = vmatpush1.msra.mxu0 0.0
    %1292 = vmatprep.subr.mxu0 0.0
    %1293 = vmatpush1.msra.mxu0 0.0
    %1294 = vmatprep.subr.mxu0 0.0
    %1295 = vmatpush1.msra.mxu0 0.0
    %1296 = vmatprep.subr.mxu0 0.0
    %1297 = vmatpush1.msra.mxu0 0.0
    %1298 = vmatprep.subr.mxu0 0.0
    %1299 = vmatpush1.msra.mxu0 0.0
    %1300 = vmatprep.subr.mxu0 0.0
    %1301 = vmatpush1.msra.mxu0 0.0
    %1302 = vmatprep.subr.mxu0 0.0
    %1303 = vmatpush1.msra.mxu0 0.0
    %1304 = vmatprep.subr.mxu0 0.0
    %1305 = vmatpush1.msra.mxu0 0.0
    %1306 = vmatprep.subr.mxu0 0.0
    %1307 = vmatpush1.msra.mxu0 0.0
    %1308 = vmatprep.subr.mxu0 0.0
    %1309 = vmatpush1.msra.mxu0 0.0
    %1310 = vmatprep.subr.mxu0 0.0
    %1311 = vmatpush1.msra.mxu0 0.0
    %1312 = vmatprep.subr.mxu0 0.0
    %1313 = vmatpush1.msra.mxu0 0.0
    %1314 = vmatprep.subr.mxu0 0.0
    %1315 = vmatpush1.msra.mxu0 0.0
    %1316 = vmatprep.subr.mxu0 0.0
    %1317 = vmatpush1.msra.mxu0 0.0
    %1318 = vmatprep.subr.mxu0 0.0
    %1319 = vmatpush1.msra.mxu0 0.0
    %1320 = vmatprep.subr.mxu0 0.0
    %1321 = vmatpush1.msra.mxu0 0.0
    %1322 = vmatprep.subr.mxu0 0.0
    %1323 = vmatpush1.msra.mxu0 0.0
    %1324 = vmatprep.subr.mxu0 0.0
    %1325 = vmatpush1.msra.mxu0 0.0
    %1326 = vmatprep.subr.mxu0 0.0
    %1327 = vmatpush1.msra.mxu0 0.0
    %1328 = vmatprep.subr.mxu0 0.0
    %1329 = vmatpush1.msra.mxu0 0.0
    %1330 = vmatprep.subr.mxu0 0.0
    %1331 = vmatpush1.msra.mxu0 0.0
    %1332 = vmatprep.subr.mxu0 0.0
    %1333 = vmatpush1.msra.mxu0 0.0
    %1334 = vmatprep.subr.mxu0 0.0
    %1335 = vmatpush1.msra.mxu0 0.0
    %1336 = vmatprep.subr.mxu0 0.0
    %1337 = vmatpush1.msra.mxu0 0.0
    %1338 = vmatprep.mubr.f32.mxu0 0.0
    %1339 = vmatmul.mubr.f32.gmra.mrb[0].mxu0 %v1263
    %v1340 = vpop.f32.mrb[0].mxu0
    %v1341 = vadd.f32 0.0, %v1340
    %v1342 = vpop.f32.mrb[0].mxu0
    %v1343 = vadd.f32 0.0, %v1342
    %1344 = vmatprep.mubr.f32.mxu0 0.0
    %1345 = vmatmul.mubr.f32.gmra.mrb[0].mxu0 %v1266
    %v1346 = vpop.f32.mrb[0].mxu0
    %v1347 = vadd.f32 0.0, %v1346
    %v1348 = vpop.f32.mrb[0].mxu0
    %v1349 = vadd.f32 0.0, %v1348
    %1350 = vmatprep.mubr.f32.mxu0 0.0
    %1351 = vmatmul.mubr.f32.gmra.mrb[0].mxu0 %v1269
    %v1352 = vpop.f32.mrb[0].mxu0
    %v1353 = vadd.f32 0.0, %v1352
    %v1354 = vpop.f32.mrb[0].mxu0
    %v1355 = vadd.f32 0.0, %v1354
    %1356 = vmatprep.mubr.f32.mxu0 0.0
    %1357 = vmatmul.mubr.f32.gmra.mrb[0].mxu0 %v1272
    %v1358 = vpop.f32.mrb[0].mxu0
    %v1359 = vadd.f32 0.0, %v1358
    %v1360 = vpop.f32.mrb[0].mxu0
    %v1361 = vadd.f32 0.0, %v1360
    %1362 = vdwg.mxu0
    %v1363 = vadd.f32 %v1203, %v1341
    %v1364 = vadd.f32 %v1204, %v1343
    %v1365 = vadd.f32 %v1205, %v1347
    %v1366 = vadd.f32 %v1206, %v1349
    %v1367 = vadd.f32 %v1207, %v1353
    %v1368 = vadd.f32 %v1208, %v1355
    %v1369 = vadd.f32 %v1209, %v1359
    %v1370 = vadd.f32 %v1210, %v1361
    %s1371 = scalar_lea.vmem %s2, 256
    %v1372 = vld [vmem:[%s1371] sm:$0xff]
    %v1373 = vld [vmem:[%s1371 + $0x8] sm:$0xff]
    %v1374 = vld [vmem:[%s1371 + $0x10] sm:$0xff]
    %v1375 = vld [vmem:[%s1371 + $0x18] sm:$0xff]
    %1376 = vrot.lane.b32.xlu0 %v103, 111
    %v1377 = vpop.permute.xlu0 %1376
    %1378 = vrot.lane.b32.xlu0 %v105, 111
    %v1379 = vpop.permute.xlu0 %1378
    %1380 = vrot.lane.b32.xlu0 %v107, 111
    %v1381 = vpop.permute.xlu0 %1380
    %1382 = vrot.lane.b32.xlu0 %v109, 111
    %v1383 = vpop.permute.xlu0 %1382
    %1384 = vrot.lane.b32.xlu0 %v104, 111
    %v1385 = vpop.permute.xlu0 %1384
    %1386 = vrot.lane.b32.xlu0 %v106, 111
    %v1387 = vpop.permute.xlu0 %1386
    %1388 = vrot.lane.b32.xlu0 %v108, 111
    %v1389 = vpop.permute.xlu0 %1388
    %1390 = vrot.lane.b32.xlu0 %v110, 111
    %v1391 = vpop.permute.xlu0 %1390
    %vm1392 = vcmp.lt.s32.totalorder %v136, 111
    %v1393 = vsel %vm1392, %v1377, %v1385
    %v1394 = vsel %vm1392, %v1379, %v1387
    %v1395 = vsel %vm1392, %v1381, %v1389
    %v1396 = vsel %vm1392, %v1383, %v1391
    %v1397 = vsel %vm1392, %v1385, %v1377
    %v1398 = vsel %vm1392, %v1387, %v1379
    %v1399 = vsel %vm1392, %v1389, %v1381
    %v1400 = vsel %vm1392, %v1391, %v1383
    %s1401 = scalar_lea.vmem [#allocation5], 34
    %v1402 = vld [vmem:[%s1401] ss:$8 sm:$0x3]
    %v1404 = vlaneseq
    %v1405 = vshrl.u32 %v1404, 7
    %v1406 = vsub.s32 0, %v1405
    %v1407 = vrot.slane %v1402, %v1406
    %v1408 = vlaneseq
    %v1409 = vshrl.u32 %v1408, 7
    %v1410 = vsub.s32 1, %v1409
    %v1411 = vrot.slane %v1402, %v1410
    %v1414 = vmul.f32 %v1393, %v1407
    %v1415 = vmul.f32 %v1397, %v1411
    %v1416 = vmul.f32 %v1394, %v1407
    %v1417 = vmul.f32 %v1398, %v1411
    %v1418 = vmul.f32 %v1395, %v1407
    %v1419 = vmul.f32 %v1399, %v1411
    %v1420 = vmul.f32 %v1396, %v1407
    %v1421 = vmul.f32 %v1400, %v1411
    %v1423 = vsel %vm167, %v1372, 0
    %v1426 = vsel %vm167, %v1373, 0
    %v1429 = vsel %vm167, %v1374, 0
    %v1432 = vsel %vm167, %v1375, 0
    %1434 = vmatprep.subr.mxu0 %v1415
    %1435 = vmatpush1.msra.mxu0 %v1414
    %1436 = vmatprep.subr.mxu0 %v1417
    %1437 = vmatpush1.msra.mxu0 %v1416
    %1438 = vmatprep.subr.mxu0 %v1419
    %1439 = vmatpush1.msra.mxu0 %v1418
    %1440 = vmatprep.subr.mxu0 %v1421
    %1441 = vmatpush1.msra.mxu0 %v1420
    %1442 = vmatprep.subr.mxu0 0.0
    %1443 = vmatpush1.msra.mxu0 0.0
    %1444 = vmatprep.subr.mxu0 0.0
    %1445 = vmatpush1.msra.mxu0 0.0
    %1446 = vmatprep.subr.mxu0 0.0
    %1447 = vmatpush1.msra.mxu0 0.0
    %1448 = vmatprep.subr.mxu0 0.0
    %1449 = vmatpush1.msra.mxu0 0.0
    %1450 = vmatprep.subr.mxu0 0.0
    %1451 = vmatpush1.msra.mxu0 0.0
    %1452 = vmatprep.subr.mxu0 0.0
    %1453 = vmatpush1.msra.mxu0 0.0
    %1454 = vmatprep.subr.mxu0 0.0
    %1455 = vmatpush1.msra.mxu0 0.0
    %1456 = vmatprep.subr.mxu0 0.0
    %1457 = vmatpush1.msra.mxu0 0.0
    %1458 = vmatprep.subr.mxu0 0.0
    %1459 = vmatpush1.msra.mxu0 0.0
    %1460 = vmatprep.subr.mxu0 0.0
    %1461 = vmatpush1.msra.mxu0 0.0
    %1462 = vmatprep.subr.mxu0 0.0
    %1463 = vmatpush1.msra.mxu0 0.0
    %1464 = vmatprep.subr.mxu0 0.0
    %1465 = vmatpush1.msra.mxu0 0.0
    %1466 = vmatprep.subr.mxu0 0.0
    %1467 = vmatpush1.msra.mxu0 0.0
    %1468 = vmatprep.subr.mxu0 0.0
    %1469 = vmatpush1.msra.mxu0 0.0
    %1470 = vmatprep.subr.mxu0 0.0
    %1471 = vmatpush1.msra.mxu0 0.0
    %1472 = vmatprep.subr.mxu0 0.0
    %1473 = vmatpush1.msra.mxu0 0.0
    %1474 = vmatprep.subr.mxu0 0.0
    %1475 = vmatpush1.msra.mxu0 0.0
    %1476 = vmatprep.subr.mxu0 0.0
    %1477 = vmatpush1.msra.mxu0 0.0
    %1478 = vmatprep.subr.mxu0 0.0
    %1479 = vmatpush1.msra.mxu0 0.0
    %1480 = vmatprep.subr.mxu0 0.0
    %1481 = vmatpush1.msra.mxu0 0.0
    %1482 = vmatprep.subr.mxu0 0.0
    %1483 = vmatpush1.msra.mxu0 0.0
    %1484 = vmatprep.subr.mxu0 0.0
    %1485 = vmatpush1.msra.mxu0 0.0
    %1486 = vmatprep.subr.mxu0 0.0
    %1487 = vmatpush1.msra.mxu0 0.0
    %1488 = vmatprep.subr.mxu0 0.0
    %1489 = vmatpush1.msra.mxu0 0.0
    %1490 = vmatprep.subr.mxu0 0.0
    %1491 = vmatpush1.msra.mxu0 0.0
    %1492 = vmatprep.subr.mxu0 0.0
    %1493 = vmatpush1.msra.mxu0 0.0
    %1494 = vmatprep.subr.mxu0 0.0
    %1495 = vmatpush1.msra.mxu0 0.0
    %1496 = vmatprep.subr.mxu0 0.0
    %1497 = vmatpush1.msra.mxu0 0.0
    %1498 = vmatprep.mubr.f32.mxu0 0.0
    %1499 = vmatmul.mubr.f32.gmra.mrb[0].mxu0 %v1423
    %v1500 = vpop.f32.mrb[0].mxu0
    %v1501 = vadd.f32 0.0, %v1500
    %v1502 = vpop.f32.mrb[0].mxu0
    %v1503 = vadd.f32 0.0, %v1502
    %1504 = vmatprep.mubr.f32.mxu0 0.0
    %1505 = vmatmul.mubr.f32.gmra.mrb[0].mxu0 %v1426
    %v1506 = vpop.f32.mrb[0].mxu0
    %v1507 = vadd.f32 0.0, %v1506
    %v1508 = vpop.f32.mrb[0].mxu0
    %v1509 = vadd.f32 0.0, %v1508
    %1510 = vmatprep.mubr.f32.mxu0 0.0
    %1511 = vmatmul.mubr.f32.gmra.mrb[0].mxu0 %v1429
    %v1512 = vpop.f32.mrb[0].mxu0
    %v1513 = vadd.f32 0.0, %v1512
    %v1514 = vpop.f32.mrb[0].mxu0
    %v1515 = vadd.f32 0.0, %v1514
    %1516 = vmatprep.mubr.f32.mxu0 0.0
    %1517 = vmatmul.mubr.f32.gmra.mrb[0].mxu0 %v1432
    %v1518 = vpop.f32.mrb[0].mxu0
    %v1519 = vadd.f32 0.0, %v1518
    %v1520 = vpop.f32.mrb[0].mxu0
    %v1521 = vadd.f32 0.0, %v1520
    %1522 = vdwg.mxu0
    %v1523 = vadd.f32 %v1363, %v1501
    %v1524 = vadd.f32 %v1364, %v1503
    %v1525 = vadd.f32 %v1365, %v1507
    %v1526 = vadd.f32 %v1366, %v1509
    %v1527 = vadd.f32 %v1367, %v1513
    %v1528 = vadd.f32 %v1368, %v1515
    %v1529 = vadd.f32 %v1369, %v1519
    %v1530 = vadd.f32 %v1370, %v1521
    %v1531 = vld [vmem:[%s4] sm:$0xff]
    %v1532 = vld [vmem:[%s4 + $0x8] sm:$0xff]
    %v1533 = vld [vmem:[%s4 + $0x10] sm:$0xff]
    %v1534 = vld [vmem:[%s4 + $0x18] sm:$0xff]
    %v1535 = vld [vmem:[#allocation7] sm:$0xff]
    %v1536 = vld [vmem:[#allocation7 + $0x8] sm:$0xff]
    %v1537 = vld [vmem:[#allocation7 + $0x10] sm:$0xff]
    %v1538 = vld [vmem:[#allocation7 + $0x18] sm:$0xff]
    %1539 = vrot.lane.b32.xlu0 %v1523, 34
    %v1540 = vpop.permute.xlu0 %1539
    %1541 = vrot.lane.b32.xlu0 %v1525, 34
    %v1542 = vpop.permute.xlu0 %1541
    %1543 = vrot.lane.b32.xlu0 %v1527, 34
    %v1544 = vpop.permute.xlu0 %1543
    %1545 = vrot.lane.b32.xlu0 %v1529, 34
    %v1546 = vpop.permute.xlu0 %1545
    %1547 = vrot.lane.b32.xlu0 %v1524, 34
    %v1548 = vpop.permute.xlu0 %1547
    %1549 = vrot.lane.b32.xlu0 %v1526, 34
    %v1550 = vpop.permute.xlu0 %1549
    %1551 = vrot.lane.b32.xlu0 %v1528, 34
    %v1552 = vpop.permute.xlu0 %1551
    %1553 = vrot.lane.b32.xlu0 %v1530, 34
    %v1554 = vpop.permute.xlu0 %1553
    %vm1555 = vcmp.lt.s32.totalorder %v136, 34
    %v1556 = vsel %vm1555, %v1540, %v1548
    %v1557 = vsel %vm1555, %v1542, %v1550
    %v1558 = vsel %vm1555, %v1544, %v1552
    %v1559 = vsel %vm1555, %v1546, %v1554
    %v1560 = vsel %vm1555, %v1548, %v1540
    %v1561 = vsel %vm1555, %v1550, %v1542
    %v1562 = vsel %vm1555, %v1552, %v1544
    %v1563 = vsel %vm1555, %v1554, %v1546
    %v1564 = vld [vmem:[#allocation5] ss:$8 sm:$0x3]
    %v1566 = vlaneseq
    %v1567 = vshrl.u32 %v1566, 7
    %v1568 = vsub.s32 0, %v1567
    %v1569 = vrot.slane %v1564, %v1568
    %v1570 = vlaneseq
    %v1571 = vshrl.u32 %v1570, 7
    %v1572 = vsub.s32 1, %v1571
    %v1573 = vrot.slane %v1564, %v1572
    %v1576 = vmul.f32 %v1560, %v1569
    %v1577 = vmul.f32 %v1556, %v1573
    %v1578 = vmul.f32 %v1561, %v1569
    %v1579 = vmul.f32 %v1557, %v1573
    %v1580 = vmul.f32 %v1562, %v1569
    %v1581 = vmul.f32 %v1558, %v1573
    %v1582 = vmul.f32 %v1563, %v1569
    %v1583 = vmul.f32 %v1559, %v1573
    %1585 = vset.pattern.permute.xlu0 0
    %1586 = vperm.xlu0 %1585, %v1535
    %v1587 = vpop.permute.xlu0 %1586
    %1590 = vset.pattern.permute.xlu0 0
    %1591 = vperm.xlu0 %1590, %v1536
    %v1592 = vpop.permute.xlu0 %1591
    %1595 = vset.pattern.permute.xlu0 0
    %1596 = vperm.xlu0 %1595, %v1537
    %v1597 = vpop.permute.xlu0 %1596
    %1600 = vset.pattern.permute.xlu0 0
    %1601 = vperm.xlu0 %1600, %v1538
    %v1602 = vpop.permute.xlu0 %1601
    %v1604 = vmul.f32 %v1576, %v1587
    %v1605 = vmul.f32 %v1577, %v1587
    %v1606 = vmul.f32 %v1578, %v1592
    %v1607 = vmul.f32 %v1579, %v1592
    %v1608 = vmul.f32 %v1580, %v1597
    %v1609 = vmul.f32 %v1581, %v1597
    %v1610 = vmul.f32 %v1582, %v1602
    %v1611 = vmul.f32 %v1583, %v1602
    %1612 = vrot.lane.b32.xlu0 %v1523, 33
    %v1613 = vpop.permute.xlu0 %1612
    %1614 = vrot.lane.b32.xlu0 %v1525, 33
    %v1615 = vpop.permute.xlu0 %1614
    %1616 = vrot.lane.b32.xlu0 %v1527, 33
    %v1617 = vpop.permute.xlu0 %1616
    %1618 = vrot.lane.b32.xlu0 %v1529, 33
    %v1619 = vpop.permute.xlu0 %1618
    %1620 = vrot.lane.b32.xlu0 %v1524, 33
    %v1621 = vpop.permute.xlu0 %1620
    %1622 = vrot.lane.b32.xlu0 %v1526, 33
    %v1623 = vpop.permute.xlu0 %1622
    %1624 = vrot.lane.b32.xlu0 %v1528, 33
    %v1625 = vpop.permute.xlu0 %1624
    %1626 = vrot.lane.b32.xlu0 %v1530, 33
    %v1627 = vpop.permute.xlu0 %1626
    %vm1628 = vcmp.lt.s32.totalorder %v136, 33
    %v1629 = vsel %vm1628, %v1613, %v1621
    %v1630 = vsel %vm1628, %v1615, %v1623
    %v1631 = vsel %vm1628, %v1617, %v1625
    %v1632 = vsel %vm1628, %v1619, %v1627
    %v1633 = vsel %vm1628, %v1621, %v1613
    %v1634 = vsel %vm1628, %v1623, %v1615
    %v1635 = vsel %vm1628, %v1625, %v1617
    %v1636 = vsel %vm1628, %v1627, %v1619
    %s1637 = scalar_lea.vmem [#allocation5], 1
    %v1638 = vld [vmem:[%s1637] ss:$8 sm:$0x3]
    %v1640 = vlaneseq
    %v1641 = vshrl.u32 %v1640, 7
    %v1642 = vsub.s32 0, %v1641
    %v1643 = vrot.slane %v1638, %v1642
    %v1644 = vlaneseq
    %v1645 = vshrl.u32 %v1644, 7
    %v1646 = vsub.s32 1, %v1645
    %v1647 = vrot.slane %v1638, %v1646
    %v1650 = vmul.f32 %v1633, %v1643
    %v1651 = vmul.f32 %v1629, %v1647
    %v1652 = vmul.f32 %v1634, %v1643
    %v1653 = vmul.f32 %v1630, %v1647
    %v1654 = vmul.f32 %v1635, %v1643
    %v1655 = vmul.f32 %v1631, %v1647
    %v1656 = vmul.f32 %v1636, %v1643
    %v1657 = vmul.f32 %v1632, %v1647
    %1658 = vset.pattern.permute.xlu0 1
    %1659 = vperm.xlu0 %1658, %v1535
    %v1660 = vpop.permute.xlu0 %1659
    %1662 = vset.pattern.permute.xlu0 1
    %1663 = vperm.xlu0 %1662, %v1536
    %v1664 = vpop.permute.xlu0 %1663
    %1666 = vset.pattern.permute.xlu0 1
    %1667 = vperm.xlu0 %1666, %v1537
    %v1668 = vpop.permute.xlu0 %1667
    %1670 = vset.pattern.permute.xlu0 1
    %1671 = vperm.xlu0 %1670, %v1538
    %v1672 = vpop.permute.xlu0 %1671
    %v1674 = vmul.f32 %v1650, %v1660
    %v1675 = vmul.f32 %v1651, %v1660
    %v1676 = vmul.f32 %v1652, %v1664
    %v1677 = vmul.f32 %v1653, %v1664
    %v1678 = vmul.f32 %v1654, %v1668
    %v1679 = vmul.f32 %v1655, %v1668
    %v1680 = vmul.f32 %v1656, %v1672
    %v1681 = vmul.f32 %v1657, %v1672
    %v1682 = vadd.f32 %v1604, %v1674
    %v1683 = vadd.f32 %v1605, %v1675
    %v1684 = vadd.f32 %v1606, %v1676
    %v1685 = vadd.f32 %v1607, %v1677
    %v1686 = vadd.f32 %v1608, %v1678
    %v1687 = vadd.f32 %v1609, %v1679
    %v1688 = vadd.f32 %v1610, %v1680
    %v1689 = vadd.f32 %v1611, %v1681
    %1690 = vrot.lane.b32.xlu0 %v1523, 32
    %v1691 = vpop.permute.xlu0 %1690
    %1692 = vrot.lane.b32.xlu0 %v1525, 32
    %v1693 = vpop.permute.xlu0 %1692
    %1694 = vrot.lane.b32.xlu0 %v1527, 32
    %v1695 = vpop.permute.xlu0 %1694
    %1696 = vrot.lane.b32.xlu0 %v1529, 32
    %v1697 = vpop.permute.xlu0 %1696
    %1698 = vrot.lane.b32.xlu0 %v1524, 32
    %v1699 = vpop.permute.xlu0 %1698
    %1700 = vrot.lane.b32.xlu0 %v1526, 32
    %v1701 = vpop.permute.xlu0 %1700
    %1702 = vrot.lane.b32.xlu0 %v1528, 32
    %v1703 = vpop.permute.xlu0 %1702
    %1704 = vrot.lane.b32.xlu0 %v1530, 32
    %v1705 = vpop.permute.xlu0 %1704
    %vm1706 = vcmp.lt.s32.totalorder %v136, 32
    %v1707 = vsel %vm1706, %v1691, %v1699
    %v1708 = vsel %vm1706, %v1693, %v1701
    %v1709 = vsel %vm1706, %v1695, %v1703
    %v1710 = vsel %vm1706, %v1697, %v1705
    %v1711 = vsel %vm1706, %v1699, %v1691
    %v1712 = vsel %vm1706, %v1701, %v1693
    %v1713 = vsel %vm1706, %v1703, %v1695
    %v1714 = vsel %vm1706, %v1705, %v1697
    %s1715 = scalar_lea.vmem [#allocation5], 2
    %v1716 = vld [vmem:[%s1715] ss:$8 sm:$0x3]
    %v1718 = vlaneseq
    %v1719 = vshrl.u32 %v1718, 7
    %v1720 = vsub.s32 0, %v1719
    %v1721 = vrot.slane %v1716, %v1720
    %v1722 = vlaneseq
    %v1723 = vshrl.u32 %v1722, 7
    %v1724 = vsub.s32 1, %v1723
    %v1725 = vrot.slane %v1716, %v1724
    %v1728 = vmul.f32 %v1711, %v1721
    %v1729 = vmul.f32 %v1707, %v1725
    %v1730 = vmul.f32 %v1712, %v1721
    %v1731 = vmul.f32 %v1708, %v1725
    %v1732 = vmul.f32 %v1713, %v1721
    %v1733 = vmul.f32 %v1709, %v1725
    %v1734 = vmul.f32 %v1714, %v1721
    %v1735 = vmul.f32 %v1710, %v1725
    %1736 = vset.pattern.permute.xlu0 2
    %1737 = vperm.xlu0 %1736, %v1535
    %v1738 = vpop.permute.xlu0 %1737
    %1740 = vset.pattern.permute.xlu0 2
    %1741 = vperm.xlu0 %1740, %v1536
    %v1742 = vpop.permute.xlu0 %1741
    %1744 = vset.pattern.permute.xlu0 2
    %1745 = vperm.xlu0 %1744, %v1537
    %v1746 = vpop.permute.xlu0 %1745
    %1748 = vset.pattern.permute.xlu0 2
    %1749 = vperm.xlu0 %1748, %v1538
    %v1750 = vpop.permute.xlu0 %1749
    %v1752 = vmul.f32 %v1728, %v1738
    %v1753 = vmul.f32 %v1729, %v1738
    %v1754 = vmul.f32 %v1730, %v1742
    %v1755 = vmul.f32 %v1731, %v1742
    %v1756 = vmul.f32 %v1732, %v1746
    %v1757 = vmul.f32 %v1733, %v1746
    %v1758 = vmul.f32 %v1734, %v1750
    %v1759 = vmul.f32 %v1735, %v1750
    %v1760 = vadd.f32 %v1682, %v1752
    %v1761 = vadd.f32 %v1683, %v1753
    %v1762 = vadd.f32 %v1684, %v1754
    %v1763 = vadd.f32 %v1685, %v1755
    %v1764 = vadd.f32 %v1686, %v1756
    %v1765 = vadd.f32 %v1687, %v1757
    %v1766 = vadd.f32 %v1688, %v1758
    %v1767 = vadd.f32 %v1689, %v1759
    %1768 = vrot.lane.b32.xlu0 %v1523, 31
    %v1769 = vpop.permute.xlu0 %1768
    %1770 = vrot.lane.b32.xlu0 %v1525, 31
    %v1771 = vpop.permute.xlu0 %1770
    %1772 = vrot.lane.b32.xlu0 %v1527, 31
    %v1773 = vpop.permute.xlu0 %1772
    %1774 = vrot.lane.b32.xlu0 %v1529, 31
    %v1775 = vpop.permute.xlu0 %1774
    %1776 = vrot.lane.b32.xlu0 %v1524, 31
    %v1777 = vpop.permute.xlu0 %1776
    %1778 = vrot.lane.b32.xlu0 %v1526, 31
    %v1779 = vpop.permute.xlu0 %1778
    %1780 = vrot.lane.b32.xlu0 %v1528, 31
    %v1781 = vpop.permute.xlu0 %1780
    %1782 = vrot.lane.b32.xlu0 %v1530, 31
    %v1783 = vpop.permute.xlu0 %1782
    %vm1784 = vcmp.lt.s32.totalorder %v136, 31
    %v1785 = vsel %vm1784, %v1769, %v1777
    %v1786 = vsel %vm1784, %v1771, %v1779
    %v1787 = vsel %vm1784, %v1773, %v1781
    %v1788 = vsel %vm1784, %v1775, %v1783
    %v1789 = vsel %vm1784, %v1777, %v1769
    %v1790 = vsel %vm1784, %v1779, %v1771
    %v1791 = vsel %vm1784, %v1781, %v1773
    %v1792 = vsel %vm1784, %v1783, %v1775
    %s1793 = scalar_lea.vmem [#allocation5], 3
    %v1794 = vld [vmem:[%s1793] ss:$8 sm:$0x3]
    %v1796 = vlaneseq
    %v1797 = vshrl.u32 %v1796, 7
    %v1798 = vsub.s32 0, %v1797
    %v1799 = vrot.slane %v1794, %v1798
    %v1800 = vlaneseq
    %v1801 = vshrl.u32 %v1800, 7
    %v1802 = vsub.s32 1, %v1801
    %v1803 = vrot.slane %v1794, %v1802
    %v1806 = vmul.f32 %v1789, %v1799
    %v1807 = vmul.f32 %v1785, %v1803
    %v1808 = vmul.f32 %v1790, %v1799
    %v1809 = vmul.f32 %v1786, %v1803
    %v1810 = vmul.f32 %v1791, %v1799
    %v1811 = vmul.f32 %v1787, %v1803
    %v1812 = vmul.f32 %v1792, %v1799
    %v1813 = vmul.f32 %v1788, %v1803
    %1814 = vset.pattern.permute.xlu0 3
    %1815 = vperm.xlu0 %1814, %v1535
    %v1816 = vpop.permute.xlu0 %1815
    %1818 = vset.pattern.permute.xlu0 3
    %1819 = vperm.xlu0 %1818, %v1536
    %v1820 = vpop.permute.xlu0 %1819
    %1822 = vset.pattern.permute.xlu0 3
    %1823 = vperm.xlu0 %1822, %v1537
    %v1824 = vpop.permute.xlu0 %1823
    %1826 = vset.pattern.permute.xlu0 3
    %1827 = vperm.xlu0 %1826, %v1538
    %v1828 = vpop.permute.xlu0 %1827
    %v1830 = vmul.f32 %v1806, %v1816
    %v1831 = vmul.f32 %v1807, %v1816
    %v1832 = vmul.f32 %v1808, %v1820
    %v1833 = vmul.f32 %v1809, %v1820
    %v1834 = vmul.f32 %v1810, %v1824
    %v1835 = vmul.f32 %v1811, %v1824
    %v1836 = vmul.f32 %v1812, %v1828
    %v1837 = vmul.f32 %v1813, %v1828
    %v1838 = vadd.f32 %v1760, %v1830
    %v1839 = vadd.f32 %v1761, %v1831
    %v1840 = vadd.f32 %v1762, %v1832
    %v1841 = vadd.f32 %v1763, %v1833
    %v1842 = vadd.f32 %v1764, %v1834
    %v1843 = vadd.f32 %v1765, %v1835
    %v1844 = vadd.f32 %v1766, %v1836
    %v1845 = vadd.f32 %v1767, %v1837
    %1846 = vrot.lane.b32.xlu0 %v1523, 30
    %v1847 = vpop.permute.xlu0 %1846
    %1848 = vrot.lane.b32.xlu0 %v1525, 30
    %v1849 = vpop.permute.xlu0 %1848
    %1850 = vrot.lane.b32.xlu0 %v1527, 30
    %v1851 = vpop.permute.xlu0 %1850
    %1852 = vrot.lane.b32.xlu0 %v1529, 30
    %v1853 = vpop.permute.xlu0 %1852
    %1854 = vrot.lane.b32.xlu0 %v1524, 30
    %v1855 = vpop.permute.xlu0 %1854
    %1856 = vrot.lane.b32.xlu0 %v1526, 30
    %v1857 = vpop.permute.xlu0 %1856
    %1858 = vrot.lane.b32.xlu0 %v1528, 30
    %v1859 = vpop.permute.xlu0 %1858
    %1860 = vrot.lane.b32.xlu0 %v1530, 30
    %v1861 = vpop.permute.xlu0 %1860
    %vm1862 = vcmp.lt.s32.totalorder %v136, 30
    %v1863 = vsel %vm1862, %v1847, %v1855
    %v1864 = vsel %vm1862, %v1849, %v1857
    %v1865 = vsel %vm1862, %v1851, %v1859
    %v1866 = vsel %vm1862, %v1853, %v1861
    %v1867 = vsel %vm1862, %v1855, %v1847
    %v1868 = vsel %vm1862, %v1857, %v1849
    %v1869 = vsel %vm1862, %v1859, %v1851
    %v1870 = vsel %vm1862, %v1861, %v1853
    %s1871 = scalar_lea.vmem [#allocation5], 4
    %v1872 = vld [vmem:[%s1871] ss:$8 sm:$0x3]
    %v1874 = vlaneseq
    %v1875 = vshrl.u32 %v1874, 7
    %v1876 = vsub.s32 0, %v1875
    %v1877 = vrot.slane %v1872, %v1876
    %v1878 = vlaneseq
    %v1879 = vshrl.u32 %v1878, 7
    %v1880 = vsub.s32 1, %v1879
    %v1881 = vrot.slane %v1872, %v1880
    %v1884 = vmul.f32 %v1867, %v1877
    %v1885 = vmul.f32 %v1863, %v1881
    %v1886 = vmul.f32 %v1868, %v1877
    %v1887 = vmul.f32 %v1864, %v1881
    %v1888 = vmul.f32 %v1869, %v1877
    %v1889 = vmul.f32 %v1865, %v1881
    %v1890 = vmul.f32 %v1870, %v1877
    %v1891 = vmul.f32 %v1866, %v1881
    %1892 = vset.pattern.permute.xlu0 4
    %1893 = vperm.xlu0 %1892, %v1535
    %v1894 = vpop.permute.xlu0 %1893
    %1896 = vset.pattern.permute.xlu0 4
    %1897 = vperm.xlu0 %1896, %v1536
    %v1898 = vpop.permute.xlu0 %1897
    %1900 = vset.pattern.permute.xlu0 4
    %1901 = vperm.xlu0 %1900, %v1537
    %v1902 = vpop.permute.xlu0 %1901
    %1904 = vset.pattern.permute.xlu0 4
    %1905 = vperm.xlu0 %1904, %v1538
    %v1906 = vpop.permute.xlu0 %1905
    %v1908 = vmul.f32 %v1884, %v1894
    %v1909 = vmul.f32 %v1885, %v1894
    %v1910 = vmul.f32 %v1886, %v1898
    %v1911 = vmul.f32 %v1887, %v1898
    %v1912 = vmul.f32 %v1888, %v1902
    %v1913 = vmul.f32 %v1889, %v1902
    %v1914 = vmul.f32 %v1890, %v1906
    %v1915 = vmul.f32 %v1891, %v1906
    %v1916 = vadd.f32 %v1838, %v1908
    %v1917 = vadd.f32 %v1839, %v1909
    %v1918 = vadd.f32 %v1840, %v1910
    %v1919 = vadd.f32 %v1841, %v1911
    %v1920 = vadd.f32 %v1842, %v1912
    %v1921 = vadd.f32 %v1843, %v1913
    %v1922 = vadd.f32 %v1844, %v1914
    %v1923 = vadd.f32 %v1845, %v1915
    %1924 = vrot.lane.b32.xlu0 %v1523, 18
    %v1925 = vpop.permute.xlu0 %1924
    %1926 = vrot.lane.b32.xlu0 %v1525, 18
    %v1927 = vpop.permute.xlu0 %1926
    %1928 = vrot.lane.b32.xlu0 %v1527, 18
    %v1929 = vpop.permute.xlu0 %1928
    %1930 = vrot.lane.b32.xlu0 %v1529, 18
    %v1931 = vpop.permute.xlu0 %1930
    %1932 = vrot.lane.b32.xlu0 %v1524, 18
    %v1933 = vpop.permute.xlu0 %1932
    %1934 = vrot.lane.b32.xlu0 %v1526, 18
    %v1935 = vpop.permute.xlu0 %1934
    %1936 = vrot.lane.b32.xlu0 %v1528, 18
    %v1937 = vpop.permute.xlu0 %1936
    %1938 = vrot.lane.b32.xlu0 %v1530, 18
    %v1939 = vpop.permute.xlu0 %1938
    %vm1940 = vcmp.lt.s32.totalorder %v136, 18
    %v1941 = vsel %vm1940, %v1925, %v1933
    %v1942 = vsel %vm1940, %v1927, %v1935
    %v1943 = vsel %vm1940, %v1929, %v1937
    %v1944 = vsel %vm1940, %v1931, %v1939
    %v1945 = vsel %vm1940, %v1933, %v1925
    %v1946 = vsel %vm1940, %v1935, %v1927
    %v1947 = vsel %vm1940, %v1937, %v1929
    %v1948 = vsel %vm1940, %v1939, %v1931
    %s1949 = scalar_lea.vmem [#allocation5], 5
    %v1950 = vld [vmem:[%s1949] ss:$8 sm:$0x3]
    %v1952 = vlaneseq
    %v1953 = vshrl.u32 %v1952, 7
    %v1954 = vsub.s32 0, %v1953
    %v1955 = vrot.slane %v1950, %v1954
    %v1956 = vlaneseq
    %v1957 = vshrl.u32 %v1956, 7
    %v1958 = vsub.s32 1, %v1957
    %v1959 = vrot.slane %v1950, %v1958
    %v1962 = vmul.f32 %v1945, %v1955
    %v1963 = vmul.f32 %v1941, %v1959
    %v1964 = vmul.f32 %v1946, %v1955
    %v1965 = vmul.f32 %v1942, %v1959
    %v1966 = vmul.f32 %v1947, %v1955
    %v1967 = vmul.f32 %v1943, %v1959
    %v1968 = vmul.f32 %v1948, %v1955
    %v1969 = vmul.f32 %v1944, %v1959
    %1970 = vset.pattern.permute.xlu0 5
    %1971 = vperm.xlu0 %1970, %v1535
    %v1972 = vpop.permute.xlu0 %1971
    %1974 = vset.pattern.permute.xlu0 5
    %1975 = vperm.xlu0 %1974, %v1536
    %v1976 = vpop.permute.xlu0 %1975
    %1978 = vset.pattern.permute.xlu0 5
    %1979 = vperm.xlu0 %1978, %v1537
    %v1980 = vpop.permute.xlu0 %1979
    %1982 = vset.pattern.permute.xlu0 5
    %1983 = vperm.xlu0 %1982, %v1538
    %v1984 = vpop.permute.xlu0 %1983
    %v1986 = vmul.f32 %v1962, %v1972
    %v1987 = vmul.f32 %v1963, %v1972
    %v1988 = vmul.f32 %v1964, %v1976
    %v1989 = vmul.f32 %v1965, %v1976
    %v1990 = vmul.f32 %v1966, %v1980
    %v1991 = vmul.f32 %v1967, %v1980
    %v1992 = vmul.f32 %v1968, %v1984
    %v1993 = vmul.f32 %v1969, %v1984
    %v1994 = vadd.f32 %v1916, %v1986
    %v1995 = vadd.f32 %v1917, %v1987
    %v1996 = vadd.f32 %v1918, %v1988
    %v1997 = vadd.f32 %v1919, %v1989
    %v1998 = vadd.f32 %v1920, %v1990
    %v1999 = vadd.f32 %v1921, %v1991
    %v2000 = vadd.f32 %v1922, %v1992
    %v2001 = vadd.f32 %v1923, %v1993
    %2002 = vrot.lane.b32.xlu0 %v1523, 17
    %v2003 = vpop.permute.xlu0 %2002
    %2004 = vrot.lane.b32.xlu0 %v1525, 17
    %v2005 = vpop.permute.xlu0 %2004
    %2006 = vrot.lane.b32.xlu0 %v1527, 17
    %v2007 = vpop.permute.xlu0 %2006
    %2008 = vrot.lane.b32.xlu0 %v1529, 17
    %v2009 = vpop.permute.xlu0 %2008
    %2010 = vrot.lane.b32.xlu0 %v1524, 17
    %v2011 = vpop.permute.xlu0 %2010
    %2012 = vrot.lane.b32.xlu0 %v1526, 17
    %v2013 = vpop.permute.xlu0 %2012
    %2014 = vrot.lane.b32.xlu0 %v1528, 17
    %v2015 = vpop.permute.xlu0 %2014
    %2016 = vrot.lane.b32.xlu0 %v1530, 17
    %v2017 = vpop.permute.xlu0 %2016
    %v2018 = vsel %vm137, %v2003, %v2011
    %v2019 = vsel %vm137, %v2005, %v2013
    %v2020 = vsel %vm137, %v2007, %v2015
    %v2021 = vsel %vm137, %v2009, %v2017
    %v2022 = vsel %vm137, %v2011, %v2003
    %v2023 = vsel %vm137, %v2013, %v2005
    %v2024 = vsel %vm137, %v2015, %v2007
    %v2025 = vsel %vm137, %v2017, %v2009
    %v2026 = vmul.f32 %v2022, %v152
    %v2027 = vmul.f32 %v2018, %v156
    %v2028 = vmul.f32 %v2023, %v152
    %v2029 = vmul.f32 %v2019, %v156
    %v2030 = vmul.f32 %v2024, %v152
    %v2031 = vmul.f32 %v2020, %v156
    %v2032 = vmul.f32 %v2025, %v152
    %v2033 = vmul.f32 %v2021, %v156
    %2034 = vset.pattern.permute.xlu0 6
    %2035 = vperm.xlu0 %2034, %v1535
    %v2036 = vpop.permute.xlu0 %2035
    %2038 = vset.pattern.permute.xlu0 6
    %2039 = vperm.xlu0 %2038, %v1536
    %v2040 = vpop.permute.xlu0 %2039
    %2042 = vset.pattern.permute.xlu0 6
    %2043 = vperm.xlu0 %2042, %v1537
    %v2044 = vpop.permute.xlu0 %2043
    %2046 = vset.pattern.permute.xlu0 6
    %2047 = vperm.xlu0 %2046, %v1538
    %v2048 = vpop.permute.xlu0 %2047
    %v2050 = vmul.f32 %v2026, %v2036
    %v2051 = vmul.f32 %v2027, %v2036
    %v2052 = vmul.f32 %v2028, %v2040
    %v2053 = vmul.f32 %v2029, %v2040
    %v2054 = vmul.f32 %v2030, %v2044
    %v2055 = vmul.f32 %v2031, %v2044
    %v2056 = vmul.f32 %v2032, %v2048
    %v2057 = vmul.f32 %v2033, %v2048
    %v2058 = vadd.f32 %v1994, %v2050
    %v2059 = vadd.f32 %v1995, %v2051
    %v2060 = vadd.f32 %v1996, %v2052
    %v2061 = vadd.f32 %v1997, %v2053
    %v2062 = vadd.f32 %v1998, %v2054
    %v2063 = vadd.f32 %v1999, %v2055
    %v2064 = vadd.f32 %v2000, %v2056
    %v2065 = vadd.f32 %v2001, %v2057
    %2067 = vset.pattern.permute.xlu0 0
    %2068 = vperm.xlu0 %2067, %v1531
    %v2069 = vpop.permute.xlu0 %2068
    %2072 = vset.pattern.permute.xlu0 0
    %2073 = vperm.xlu0 %2072, %v1532
    %v2074 = vpop.permute.xlu0 %2073
    %2077 = vset.pattern.permute.xlu0 0
    %2078 = vperm.xlu0 %2077, %v1533
    %v2079 = vpop.permute.xlu0 %2078
    %2082 = vset.pattern.permute.xlu0 0
    %2083 = vperm.xlu0 %2082, %v1534
    %v2084 = vpop.permute.xlu0 %2083
    %v2086 = vmul.f32 %v2026, %v2069
    %v2087 = vmul.f32 %v2027, %v2069
    %v2088 = vmul.f32 %v2028, %v2074
    %v2089 = vmul.f32 %v2029, %v2074
    %v2090 = vmul.f32 %v2030, %v2079
    %v2091 = vmul.f32 %v2031, %v2079
    %v2092 = vmul.f32 %v2032, %v2084
    %v2093 = vmul.f32 %v2033, %v2084
    %2094 = vrot.lane.b32.xlu0 %v1523, 16
    %v2095 = vpop.permute.xlu0 %2094
    %2096 = vrot.lane.b32.xlu0 %v1525, 16
    %v2097 = vpop.permute.xlu0 %2096
    %2098 = vrot.lane.b32.xlu0 %v1527, 16
    %v2099 = vpop.permute.xlu0 %2098
    %2100 = vrot.lane.b32.xlu0 %v1529, 16
    %v2101 = vpop.permute.xlu0 %2100
    %2102 = vrot.lane.b32.xlu0 %v1524, 16
    %v2103 = vpop.permute.xlu0 %2102
    %2104 = vrot.lane.b32.xlu0 %v1526, 16
    %v2105 = vpop.permute.xlu0 %2104
    %2106 = vrot.lane.b32.xlu0 %v1528, 16
    %v2107 = vpop.permute.xlu0 %2106
    %2108 = vrot.lane.b32.xlu0 %v1530, 16
    %v2109 = vpop.permute.xlu0 %2108
    %v2110 = vsel %vm318, %v2095, %v2103
    %v2111 = vsel %vm318, %v2097, %v2105
    %v2112 = vsel %vm318, %v2099, %v2107
    %v2113 = vsel %vm318, %v2101, %v2109
    %v2114 = vsel %vm318, %v2103, %v2095
    %v2115 = vsel %vm318, %v2105, %v2097
    %v2116 = vsel %vm318, %v2107, %v2099
    %v2117 = vsel %vm318, %v2109, %v2101
    %v2118 = vmul.f32 %v2114, %v333
    %v2119 = vmul.f32 %v2110, %v337
    %v2120 = vmul.f32 %v2115, %v333
    %v2121 = vmul.f32 %v2111, %v337
    %v2122 = vmul.f32 %v2116, %v333
    %v2123 = vmul.f32 %v2112, %v337
    %v2124 = vmul.f32 %v2117, %v333
    %v2125 = vmul.f32 %v2113, %v337
    %2126 = vset.pattern.permute.xlu0 7
    %2127 = vperm.xlu0 %2126, %v1535
    %v2128 = vpop.permute.xlu0 %2127
    %2130 = vset.pattern.permute.xlu0 7
    %2131 = vperm.xlu0 %2130, %v1536
    %v2132 = vpop.permute.xlu0 %2131
    %2134 = vset.pattern.permute.xlu0 7
    %2135 = vperm.xlu0 %2134, %v1537
    %v2136 = vpop.permute.xlu0 %2135
    %2138 = vset.pattern.permute.xlu0 7
    %2139 = vperm.xlu0 %2138, %v1538
    %v2140 = vpop.permute.xlu0 %2139
    %v2142 = vmul.f32 %v2118, %v2128
    %v2143 = vmul.f32 %v2119, %v2128
    %v2144 = vmul.f32 %v2120, %v2132
    %v2145 = vmul.f32 %v2121, %v2132
    %v2146 = vmul.f32 %v2122, %v2136
    %v2147 = vmul.f32 %v2123, %v2136
    %v2148 = vmul.f32 %v2124, %v2140
    %v2149 = vmul.f32 %v2125, %v2140
    %v2150 = vadd.f32 %v2058, %v2142
    %v2151 = vadd.f32 %v2059, %v2143
    %v2152 = vadd.f32 %v2060, %v2144
    %v2153 = vadd.f32 %v2061, %v2145
    %v2154 = vadd.f32 %v2062, %v2146
    %v2155 = vadd.f32 %v2063, %v2147
    %v2156 = vadd.f32 %v2064, %v2148
    %v2157 = vadd.f32 %v2065, %v2149
    %2158 = vset.pattern.permute.xlu0 1
    %2159 = vperm.xlu0 %2158, %v1531
    %v2160 = vpop.permute.xlu0 %2159
    %2162 = vset.pattern.permute.xlu0 1
    %2163 = vperm.xlu0 %2162, %v1532
    %v2164 = vpop.permute.xlu0 %2163
    %2166 = vset.pattern.permute.xlu0 1
    %2167 = vperm.xlu0 %2166, %v1533
    %v2168 = vpop.permute.xlu0 %2167
    %2170 = vset.pattern.permute.xlu0 1
    %2171 = vperm.xlu0 %2170, %v1534
    %v2172 = vpop.permute.xlu0 %2171
    %v2174 = vmul.f32 %v2118, %v2160
    %v2175 = vmul.f32 %v2119, %v2160
    %v2176 = vmul.f32 %v2120, %v2164
    %v2177 = vmul.f32 %v2121, %v2164
    %v2178 = vmul.f32 %v2122, %v2168
    %v2179 = vmul.f32 %v2123, %v2168
    %v2180 = vmul.f32 %v2124, %v2172
    %v2181 = vmul.f32 %v2125, %v2172
    %v2182 = vadd.f32 %v2086, %v2174
    %v2183 = vadd.f32 %v2087, %v2175
    %v2184 = vadd.f32 %v2088, %v2176
    %v2185 = vadd.f32 %v2089, %v2177
    %v2186 = vadd.f32 %v2090, %v2178
    %v2187 = vadd.f32 %v2091, %v2179
    %v2188 = vadd.f32 %v2092, %v2180
    %v2189 = vadd.f32 %v2093, %v2181
    %2190 = vrot.lane.b32.xlu0 %v1523, 15
    %v2191 = vpop.permute.xlu0 %2190
    %2192 = vrot.lane.b32.xlu0 %v1525, 15
    %v2193 = vpop.permute.xlu0 %2192
    %2194 = vrot.lane.b32.xlu0 %v1527, 15
    %v2195 = vpop.permute.xlu0 %2194
    %2196 = vrot.lane.b32.xlu0 %v1529, 15
    %v2197 = vpop.permute.xlu0 %2196
    %2198 = vrot.lane.b32.xlu0 %v1524, 15
    %v2199 = vpop.permute.xlu0 %2198
    %2200 = vrot.lane.b32.xlu0 %v1526, 15
    %v2201 = vpop.permute.xlu0 %2200
    %2202 = vrot.lane.b32.xlu0 %v1528, 15
    %v2203 = vpop.permute.xlu0 %2202
    %2204 = vrot.lane.b32.xlu0 %v1530, 15
    %v2205 = vpop.permute.xlu0 %2204
    %v2206 = vsel %vm478, %v2191, %v2199
    %v2207 = vsel %vm478, %v2193, %v2201
    %v2208 = vsel %vm478, %v2195, %v2203
    %v2209 = vsel %vm478, %v2197, %v2205
    %v2210 = vsel %vm478, %v2199, %v2191
    %v2211 = vsel %vm478, %v2201, %v2193
    %v2212 = vsel %vm478, %v2203, %v2195
    %v2213 = vsel %vm478, %v2205, %v2197
    %v2214 = vmul.f32 %v2210, %v493
    %v2215 = vmul.f32 %v2206, %v497
    %v2216 = vmul.f32 %v2211, %v493
    %v2217 = vmul.f32 %v2207, %v497
    %v2218 = vmul.f32 %v2212, %v493
    %v2219 = vmul.f32 %v2208, %v497
    %v2220 = vmul.f32 %v2213, %v493
    %v2221 = vmul.f32 %v2209, %v497
    %2222 = vset.pattern.permute.xlu0 8
    %2223 = vperm.xlu0 %2222, %v1535
    %v2224 = vpop.permute.xlu0 %2223
    %2226 = vset.pattern.permute.xlu0 8
    %2227 = vperm.xlu0 %2226, %v1536
    %v2228 = vpop.permute.xlu0 %2227
    %2230 = vset.pattern.permute.xlu0 8
    %2231 = vperm.xlu0 %2230, %v1537
    %v2232 = vpop.permute.xlu0 %2231
    %2234 = vset.pattern.permute.xlu0 8
    %2235 = vperm.xlu0 %2234, %v1538
    %v2236 = vpop.permute.xlu0 %2235
    %v2238 = vmul.f32 %v2214, %v2224
    %v2239 = vmul.f32 %v2215, %v2224
    %v2240 = vmul.f32 %v2216, %v2228
    %v2241 = vmul.f32 %v2217, %v2228
    %v2242 = vmul.f32 %v2218, %v2232
    %v2243 = vmul.f32 %v2219, %v2232
    %v2244 = vmul.f32 %v2220, %v2236
    %v2245 = vmul.f32 %v2221, %v2236
    %v2246 = vadd.f32 %v2150, %v2238
    %v2247 = vadd.f32 %v2151, %v2239
    %v2248 = vadd.f32 %v2152, %v2240
    %v2249 = vadd.f32 %v2153, %v2241
    %v2250 = vadd.f32 %v2154, %v2242
    %v2251 = vadd.f32 %v2155, %v2243
    %v2252 = vadd.f32 %v2156, %v2244
    %v2253 = vadd.f32 %v2157, %v2245
    %2254 = vset.pattern.permute.xlu0 2
    %2255 = vperm.xlu0 %2254, %v1531
    %v2256 = vpop.permute.xlu0 %2255
    %2258 = vset.pattern.permute.xlu0 2
    %2259 = vperm.xlu0 %2258, %v1532
    %v2260 = vpop.permute.xlu0 %2259
    %2262 = vset.pattern.permute.xlu0 2
    %2263 = vperm.xlu0 %2262, %v1533
    %v2264 = vpop.permute.xlu0 %2263
    %2266 = vset.pattern.permute.xlu0 2
    %2267 = vperm.xlu0 %2266, %v1534
    %v2268 = vpop.permute.xlu0 %2267
    %v2270 = vmul.f32 %v2214, %v2256
    %v2271 = vmul.f32 %v2215, %v2256
    %v2272 = vmul.f32 %v2216, %v2260
    %v2273 = vmul.f32 %v2217, %v2260
    %v2274 = vmul.f32 %v2218, %v2264
    %v2275 = vmul.f32 %v2219, %v2264
    %v2276 = vmul.f32 %v2220, %v2268
    %v2277 = vmul.f32 %v2221, %v2268
    %v2278 = vadd.f32 %v2182, %v2270
    %v2279 = vadd.f32 %v2183, %v2271
    %v2280 = vadd.f32 %v2184, %v2272
    %v2281 = vadd.f32 %v2185, %v2273
    %v2282 = vadd.f32 %v2186, %v2274
    %v2283 = vadd.f32 %v2187, %v2275
    %v2284 = vadd.f32 %v2188, %v2276
    %v2285 = vadd.f32 %v2189, %v2277
    %2286 = vrot.lane.b32.xlu0 %v1523, 14
    %v2287 = vpop.permute.xlu0 %2286
    %2288 = vrot.lane.b32.xlu0 %v1525, 14
    %v2289 = vpop.permute.xlu0 %2288
    %2290 = vrot.lane.b32.xlu0 %v1527, 14
    %v2291 = vpop.permute.xlu0 %2290
    %2292 = vrot.lane.b32.xlu0 %v1529, 14
    %v2293 = vpop.permute.xlu0 %2292
    %2294 = vrot.lane.b32.xlu0 %v1524, 14
    %v2295 = vpop.permute.xlu0 %2294
    %2296 = vrot.lane.b32.xlu0 %v1526, 14
    %v2297 = vpop.permute.xlu0 %2296
    %2298 = vrot.lane.b32.xlu0 %v1528, 14
    %v2299 = vpop.permute.xlu0 %2298
    %2300 = vrot.lane.b32.xlu0 %v1530, 14
    %v2301 = vpop.permute.xlu0 %2300
    %vm2302 = vcmp.lt.s32.totalorder %v136, 14
    %v2303 = vsel %vm2302, %v2287, %v2295
    %v2304 = vsel %vm2302, %v2289, %v2297
    %v2305 = vsel %vm2302, %v2291, %v2299
    %v2306 = vsel %vm2302, %v2293, %v2301
    %v2307 = vsel %vm2302, %v2295, %v2287
    %v2308 = vsel %vm2302, %v2297, %v2289
    %v2309 = vsel %vm2302, %v2299, %v2291
    %v2310 = vsel %vm2302, %v2301, %v2293
    %s2311 = scalar_lea.vmem [#allocation5], 17
    %v2312 = vld [vmem:[%s2311] ss:$8 sm:$0x3]
    %v2314 = vlaneseq
    %v2315 = vshrl.u32 %v2314, 7
    %v2316 = vsub.s32 0, %v2315
    %v2317 = vrot.slane %v2312, %v2316
    %v2318 = vlaneseq
    %v2319 = vshrl.u32 %v2318, 7
    %v2320 = vsub.s32 1, %v2319
    %v2321 = vrot.slane %v2312, %v2320
    %v2324 = vmul.f32 %v2307, %v2317
    %v2325 = vmul.f32 %v2303, %v2321
    %v2326 = vmul.f32 %v2308, %v2317
    %v2327 = vmul.f32 %v2304, %v2321
    %v2328 = vmul.f32 %v2309, %v2317
    %v2329 = vmul.f32 %v2305, %v2321
    %v2330 = vmul.f32 %v2310, %v2317
    %v2331 = vmul.f32 %v2306, %v2321
    %2332 = vset.pattern.permute.xlu0 9
    %2333 = vperm.xlu0 %2332, %v1535
    %v2334 = vpop.permute.xlu0 %2333
    %2336 = vset.pattern.permute.xlu0 9
    %2337 = vperm.xlu0 %2336, %v1536
    %v2338 = vpop.permute.xlu0 %2337
    %2340 = vset.pattern.permute.xlu0 9
    %2341 = vperm.xlu0 %2340, %v1537
    %v2342 = vpop.permute.xlu0 %2341
    %2344 = vset.pattern.permute.xlu0 9
    %2345 = vperm.xlu0 %2344, %v1538
    %v2346 = vpop.permute.xlu0 %2345
    %v2348 = vmul.f32 %v2324, %v2334
    %v2349 = vmul.f32 %v2325, %v2334
    %v2350 = vmul.f32 %v2326, %v2338
    %v2351 = vmul.f32 %v2327, %v2338
    %v2352 = vmul.f32 %v2328, %v2342
    %v2353 = vmul.f32 %v2329, %v2342
    %v2354 = vmul.f32 %v2330, %v2346
    %v2355 = vmul.f32 %v2331, %v2346
    %v2356 = vadd.f32 %v2246, %v2348
    %v2357 = vadd.f32 %v2247, %v2349
    %v2358 = vadd.f32 %v2248, %v2350
    %v2359 = vadd.f32 %v2249, %v2351
    %v2360 = vadd.f32 %v2250, %v2352
    %v2361 = vadd.f32 %v2251, %v2353
    %v2362 = vadd.f32 %v2252, %v2354
    %v2363 = vadd.f32 %v2253, %v2355
    %2364 = vrot.lane.b32.xlu0 %v1523, 2
    %v2365 = vpop.permute.xlu0 %2364
    %2366 = vrot.lane.b32.xlu0 %v1525, 2
    %v2367 = vpop.permute.xlu0 %2366
    %2368 = vrot.lane.b32.xlu0 %v1527, 2
    %v2369 = vpop.permute.xlu0 %2368
    %2370 = vrot.lane.b32.xlu0 %v1529, 2
    %v2371 = vpop.permute.xlu0 %2370
    %2372 = vrot.lane.b32.xlu0 %v1524, 2
    %v2373 = vpop.permute.xlu0 %2372
    %2374 = vrot.lane.b32.xlu0 %v1526, 2
    %v2375 = vpop.permute.xlu0 %2374
    %2376 = vrot.lane.b32.xlu0 %v1528, 2
    %v2377 = vpop.permute.xlu0 %2376
    %2378 = vrot.lane.b32.xlu0 %v1530, 2
    %v2379 = vpop.permute.xlu0 %2378
    %vm2380 = vcmp.lt.s32.totalorder %v136, 2
    %v2381 = vsel %vm2380, %v2365, %v2373
    %v2382 = vsel %vm2380, %v2367, %v2375
    %v2383 = vsel %vm2380, %v2369, %v2377
    %v2384 = vsel %vm2380, %v2371, %v2379
    %v2385 = vsel %vm2380, %v2373, %v2365
    %v2386 = vsel %vm2380, %v2375, %v2367
    %v2387 = vsel %vm2380, %v2377, %v2369
    %v2388 = vsel %vm2380, %v2379, %v2371
    %s2389 = scalar_lea.vmem [#allocation5], 18
    %v2390 = vld [vmem:[%s2389] ss:$8 sm:$0x3]
    %v2392 = vlaneseq
    %v2393 = vshrl.u32 %v2392, 7
    %v2394 = vsub.s32 0, %v2393
    %v2395 = vrot.slane %v2390, %v2394
    %v2396 = vlaneseq
    %v2397 = vshrl.u32 %v2396, 7
    %v2398 = vsub.s32 1, %v2397
    %v2399 = vrot.slane %v2390, %v2398
    %v2402 = vmul.f32 %v2385, %v2395
    %v2403 = vmul.f32 %v2381, %v2399
    %v2404 = vmul.f32 %v2386, %v2395
    %v2405 = vmul.f32 %v2382, %v2399
    %v2406 = vmul.f32 %v2387, %v2395
    %v2407 = vmul.f32 %v2383, %v2399
    %v2408 = vmul.f32 %v2388, %v2395
    %v2409 = vmul.f32 %v2384, %v2399
    %2410 = vset.pattern.permute.xlu0 10
    %2411 = vperm.xlu0 %2410, %v1535
    %v2412 = vpop.permute.xlu0 %2411
    %2414 = vset.pattern.permute.xlu0 10
    %2415 = vperm.xlu0 %2414, %v1536
    %v2416 = vpop.permute.xlu0 %2415
    %2418 = vset.pattern.permute.xlu0 10
    %2419 = vperm.xlu0 %2418, %v1537
    %v2420 = vpop.permute.xlu0 %2419
    %2422 = vset.pattern.permute.xlu0 10
    %2423 = vperm.xlu0 %2422, %v1538
    %v2424 = vpop.permute.xlu0 %2423
    %v2426 = vmul.f32 %v2402, %v2412
    %v2427 = vmul.f32 %v2403, %v2412
    %v2428 = vmul.f32 %v2404, %v2416
    %v2429 = vmul.f32 %v2405, %v2416
    %v2430 = vmul.f32 %v2406, %v2420
    %v2431 = vmul.f32 %v2407, %v2420
    %v2432 = vmul.f32 %v2408, %v2424
    %v2433 = vmul.f32 %v2409, %v2424
    %v2434 = vadd.f32 %v2356, %v2426
    %v2435 = vadd.f32 %v2357, %v2427
    %v2436 = vadd.f32 %v2358, %v2428
    %v2437 = vadd.f32 %v2359, %v2429
    %v2438 = vadd.f32 %v2360, %v2430
    %v2439 = vadd.f32 %v2361, %v2431
    %v2440 = vadd.f32 %v2362, %v2432
    %v2441 = vadd.f32 %v2363, %v2433
    %2442 = vrot.lane.b32.xlu0 %v1523, 1
    %v2443 = vpop.permute.xlu0 %2442
    %2444 = vrot.lane.b32.xlu0 %v1525, 1
    %v2445 = vpop.permute.xlu0 %2444
    %2446 = vrot.lane.b32.xlu0 %v1527, 1
    %v2447 = vpop.permute.xlu0 %2446
    %2448 = vrot.lane.b32.xlu0 %v1529, 1
    %v2449 = vpop.permute.xlu0 %2448
    %2450 = vrot.lane.b32.xlu0 %v1524, 1
    %v2451 = vpop.permute.xlu0 %2450
    %2452 = vrot.lane.b32.xlu0 %v1526, 1
    %v2453 = vpop.permute.xlu0 %2452
    %2454 = vrot.lane.b32.xlu0 %v1528, 1
    %v2455 = vpop.permute.xlu0 %2454
    %2456 = vrot.lane.b32.xlu0 %v1530, 1
    %v2457 = vpop.permute.xlu0 %2456
    %v2458 = vsel %vm638, %v2443, %v2451
    %v2459 = vsel %vm638, %v2445, %v2453
    %v2460 = vsel %vm638, %v2447, %v2455
    %v2461 = vsel %vm638, %v2449, %v2457
    %v2462 = vsel %vm638, %v2451, %v2443
    %v2463 = vsel %vm638, %v2453, %v2445
    %v2464 = vsel %vm638, %v2455, %v2447
    %v2465 = vsel %vm638, %v2457, %v2449
    %v2466 = vmul.f32 %v2462, %v653
    %v2467 = vmul.f32 %v2458, %v657
    %v2468 = vmul.f32 %v2463, %v653
    %v2469 = vmul.f32 %v2459, %v657
    %v2470 = vmul.f32 %v2464, %v653
    %v2471 = vmul.f32 %v2460, %v657
    %v2472 = vmul.f32 %v2465, %v653
    %v2473 = vmul.f32 %v2461, %v657
    %2474 = vset.pattern.permute.xlu0 11
    %2475 = vperm.xlu0 %2474, %v1535
    %v2476 = vpop.permute.xlu0 %2475
    %2478 = vset.pattern.permute.xlu0 11
    %2479 = vperm.xlu0 %2478, %v1536
    %v2480 = vpop.permute.xlu0 %2479
    %2482 = vset.pattern.permute.xlu0 11
    %2483 = vperm.xlu0 %2482, %v1537
    %v2484 = vpop.permute.xlu0 %2483
    %2486 = vset.pattern.permute.xlu0 11
    %2487 = vperm.xlu0 %2486, %v1538
    %v2488 = vpop.permute.xlu0 %2487
    %v2490 = vmul.f32 %v2466, %v2476
    %v2491 = vmul.f32 %v2467, %v2476
    %v2492 = vmul.f32 %v2468, %v2480
    %v2493 = vmul.f32 %v2469, %v2480
    %v2494 = vmul.f32 %v2470, %v2484
    %v2495 = vmul.f32 %v2471, %v2484
    %v2496 = vmul.f32 %v2472, %v2488
    %v2497 = vmul.f32 %v2473, %v2488
    %v2498 = vadd.f32 %v2434, %v2490
    %v2499 = vadd.f32 %v2435, %v2491
    %v2500 = vadd.f32 %v2436, %v2492
    %v2501 = vadd.f32 %v2437, %v2493
    %v2502 = vadd.f32 %v2438, %v2494
    %v2503 = vadd.f32 %v2439, %v2495
    %v2504 = vadd.f32 %v2440, %v2496
    %v2505 = vadd.f32 %v2441, %v2497
    %2506 = vset.pattern.permute.xlu0 3
    %2507 = vperm.xlu0 %2506, %v1531
    %v2508 = vpop.permute.xlu0 %2507
    %2510 = vset.pattern.permute.xlu0 3
    %2511 = vperm.xlu0 %2510, %v1532
    %v2512 = vpop.permute.xlu0 %2511
    %2514 = vset.pattern.permute.xlu0 3
    %2515 = vperm.xlu0 %2514, %v1533
    %v2516 = vpop.permute.xlu0 %2515
    %2518 = vset.pattern.permute.xlu0 3
    %2519 = vperm.xlu0 %2518, %v1534
    %v2520 = vpop.permute.xlu0 %2519
    %v2522 = vmul.f32 %v2466, %v2508
    %v2523 = vmul.f32 %v2467, %v2508
    %v2524 = vmul.f32 %v2468, %v2512
    %v2525 = vmul.f32 %v2469, %v2512
    %v2526 = vmul.f32 %v2470, %v2516
    %v2527 = vmul.f32 %v2471, %v2516
    %v2528 = vmul.f32 %v2472, %v2520
    %v2529 = vmul.f32 %v2473, %v2520
    %v2530 = vadd.f32 %v2278, %v2522
    %v2531 = vadd.f32 %v2279, %v2523
    %v2532 = vadd.f32 %v2280, %v2524
    %v2533 = vadd.f32 %v2281, %v2525
    %v2534 = vadd.f32 %v2282, %v2526
    %v2535 = vadd.f32 %v2283, %v2527
    %v2536 = vadd.f32 %v2284, %v2528
    %v2537 = vadd.f32 %v2285, %v2529
    %2538 = vset.pattern.permute.xlu0 12
    %2539 = vperm.xlu0 %2538, %v1535
    %v2540 = vpop.permute.xlu0 %2539
    %2542 = vset.pattern.permute.xlu0 12
    %2543 = vperm.xlu0 %2542, %v1536
    %v2544 = vpop.permute.xlu0 %2543
    %2546 = vset.pattern.permute.xlu0 12
    %2547 = vperm.xlu0 %2546, %v1537
    %v2548 = vpop.permute.xlu0 %2547
    %2550 = vset.pattern.permute.xlu0 12
    %2551 = vperm.xlu0 %2550, %v1538
    %v2552 = vpop.permute.xlu0 %2551
    %v2554 = vmul.f32 %v1523, %v2540
    %v2555 = vmul.f32 %v1524, %v2540
    %v2556 = vmul.f32 %v1525, %v2544
    %v2557 = vmul.f32 %v1526, %v2544
    %v2558 = vmul.f32 %v1527, %v2548
    %v2559 = vmul.f32 %v1528, %v2548
    %v2560 = vmul.f32 %v1529, %v2552
    %v2561 = vmul.f32 %v1530, %v2552
    %v2562 = vadd.f32 %v2498, %v2554
    %v2563 = vadd.f32 %v2499, %v2555
    %v2564 = vadd.f32 %v2500, %v2556
    %v2565 = vadd.f32 %v2501, %v2557
    %v2566 = vadd.f32 %v2502, %v2558
    %v2567 = vadd.f32 %v2503, %v2559
    %v2568 = vadd.f32 %v2504, %v2560
    %v2569 = vadd.f32 %v2505, %v2561
    %2570 = vset.pattern.permute.xlu0 4
    %2571 = vperm.xlu0 %2570, %v1531
    %v2572 = vpop.permute.xlu0 %2571
    %2574 = vset.pattern.permute.xlu0 4
    %2575 = vperm.xlu0 %2574, %v1532
    %v2576 = vpop.permute.xlu0 %2575
    %2578 = vset.pattern.permute.xlu0 4
    %2579 = vperm.xlu0 %2578, %v1533
    %v2580 = vpop.permute.xlu0 %2579
    %2582 = vset.pattern.permute.xlu0 4
    %2583 = vperm.xlu0 %2582, %v1534
    %v2584 = vpop.permute.xlu0 %2583
    %v2586 = vmul.f32 %v1523, %v2572
    %v2587 = vmul.f32 %v1524, %v2572
    %v2588 = vmul.f32 %v1525, %v2576
    %v2589 = vmul.f32 %v1526, %v2576
    %v2590 = vmul.f32 %v1527, %v2580
    %v2591 = vmul.f32 %v1528, %v2580
    %v2592 = vmul.f32 %v1529, %v2584
    %v2593 = vmul.f32 %v1530, %v2584
    %v2594 = vadd.f32 %v2530, %v2586
    %v2595 = vadd.f32 %v2531, %v2587
    %v2596 = vadd.f32 %v2532, %v2588
    %v2597 = vadd.f32 %v2533, %v2589
    %v2598 = vadd.f32 %v2534, %v2590
    %v2599 = vadd.f32 %v2535, %v2591
    %v2600 = vadd.f32 %v2536, %v2592
    %v2601 = vadd.f32 %v2537, %v2593
    %2602 = vrot.lane.b32.xlu0 %v1523, 127
    %v2603 = vpop.permute.xlu0 %2602
    %2604 = vrot.lane.b32.xlu0 %v1525, 127
    %v2605 = vpop.permute.xlu0 %2604
    %2606 = vrot.lane.b32.xlu0 %v1527, 127
    %v2607 = vpop.permute.xlu0 %2606
    %2608 = vrot.lane.b32.xlu0 %v1529, 127
    %v2609 = vpop.permute.xlu0 %2608
    %2610 = vrot.lane.b32.xlu0 %v1524, 127
    %v2611 = vpop.permute.xlu0 %2610
    %2612 = vrot.lane.b32.xlu0 %v1526, 127
    %v2613 = vpop.permute.xlu0 %2612
    %2614 = vrot.lane.b32.xlu0 %v1528, 127
    %v2615 = vpop.permute.xlu0 %2614
    %2616 = vrot.lane.b32.xlu0 %v1530, 127
    %v2617 = vpop.permute.xlu0 %2616
    %v2618 = vsel %vm912, %v2603, %v2611
    %v2619 = vsel %vm912, %v2605, %v2613
    %v2620 = vsel %vm912, %v2607, %v2615
    %v2621 = vsel %vm912, %v2609, %v2617
    %v2622 = vsel %vm912, %v2611, %v2603
    %v2623 = vsel %vm912, %v2613, %v2605
    %v2624 = vsel %vm912, %v2615, %v2607
    %v2625 = vsel %vm912, %v2617, %v2609
    %v2626 = vmul.f32 %v2618, %v927
    %v2627 = vmul.f32 %v2622, %v931
    %v2628 = vmul.f32 %v2619, %v927
    %v2629 = vmul.f32 %v2623, %v931
    %v2630 = vmul.f32 %v2620, %v927
    %v2631 = vmul.f32 %v2624, %v931
    %v2632 = vmul.f32 %v2621, %v927
    %v2633 = vmul.f32 %v2625, %v931
    %2634 = vset.pattern.permute.xlu0 13
    %2635 = vperm.xlu0 %2634, %v1535
    %v2636 = vpop.permute.xlu0 %2635
    %2638 = vset.pattern.permute.xlu0 13
    %2639 = vperm.xlu0 %2638, %v1536
    %v2640 = vpop.permute.xlu0 %2639
    %2642 = vset.pattern.permute.xlu0 13
    %2643 = vperm.xlu0 %2642, %v1537
    %v2644 = vpop.permute.xlu0 %2643
    %2646 = vset.pattern.permute.xlu0 13
    %2647 = vperm.xlu0 %2646, %v1538
    %v2648 = vpop.permute.xlu0 %2647
    %v2650 = vmul.f32 %v2626, %v2636
    %v2651 = vmul.f32 %v2627, %v2636
    %v2652 = vmul.f32 %v2628, %v2640
    %v2653 = vmul.f32 %v2629, %v2640
    %v2654 = vmul.f32 %v2630, %v2644
    %v2655 = vmul.f32 %v2631, %v2644
    %v2656 = vmul.f32 %v2632, %v2648
    %v2657 = vmul.f32 %v2633, %v2648
    %v2658 = vadd.f32 %v2562, %v2650
    %v2659 = vadd.f32 %v2563, %v2651
    %v2660 = vadd.f32 %v2564, %v2652
    %v2661 = vadd.f32 %v2565, %v2653
    %v2662 = vadd.f32 %v2566, %v2654
    %v2663 = vadd.f32 %v2567, %v2655
    %v2664 = vadd.f32 %v2568, %v2656
    %v2665 = vadd.f32 %v2569, %v2657
    %2666 = vset.pattern.permute.xlu0 5
    %2667 = vperm.xlu0 %2666, %v1531
    %v2668 = vpop.permute.xlu0 %2667
    %2670 = vset.pattern.permute.xlu0 5
    %2671 = vperm.xlu0 %2670, %v1532
    %v2672 = vpop.permute.xlu0 %2671
    %2674 = vset.pattern.permute.xlu0 5
    %2675 = vperm.xlu0 %2674, %v1533
    %v2676 = vpop.permute.xlu0 %2675
    %2678 = vset.pattern.permute.xlu0 5
    %2679 = vperm.xlu0 %2678, %v1534
    %v2680 = vpop.permute.xlu0 %2679
    %v2682 = vmul.f32 %v2626, %v2668
    %v2683 = vmul.f32 %v2627, %v2668
    %v2684 = vmul.f32 %v2628, %v2672
    %v2685 = vmul.f32 %v2629, %v2672
    %v2686 = vmul.f32 %v2630, %v2676
    %v2687 = vmul.f32 %v2631, %v2676
    %v2688 = vmul.f32 %v2632, %v2680
    %v2689 = vmul.f32 %v2633, %v2680
    %v2690 = vadd.f32 %v2594, %v2682
    %v2691 = vadd.f32 %v2595, %v2683
    %v2692 = vadd.f32 %v2596, %v2684
    %v2693 = vadd.f32 %v2597, %v2685
    %v2694 = vadd.f32 %v2598, %v2686
    %v2695 = vadd.f32 %v2599, %v2687
    %v2696 = vadd.f32 %v2600, %v2688
    %v2697 = vadd.f32 %v2601, %v2689
    %2698 = vrot.lane.b32.xlu0 %v1523, 126
    %v2699 = vpop.permute.xlu0 %2698
    %2700 = vrot.lane.b32.xlu0 %v1525, 126
    %v2701 = vpop.permute.xlu0 %2700
    %2702 = vrot.lane.b32.xlu0 %v1527, 126
    %v2703 = vpop.permute.xlu0 %2702
    %2704 = vrot.lane.b32.xlu0 %v1529, 126
    %v2705 = vpop.permute.xlu0 %2704
    %2706 = vrot.lane.b32.xlu0 %v1524, 126
    %v2707 = vpop.permute.xlu0 %2706
    %2708 = vrot.lane.b32.xlu0 %v1526, 126
    %v2709 = vpop.permute.xlu0 %2708
    %2710 = vrot.lane.b32.xlu0 %v1528, 126
    %v2711 = vpop.permute.xlu0 %2710
    %2712 = vrot.lane.b32.xlu0 %v1530, 126
    %v2713 = vpop.permute.xlu0 %2712
    %vm2714 = vcmp.lt.s32.totalorder %v136, 126
    %v2715 = vsel %vm2714, %v2699, %v2707
    %v2716 = vsel %vm2714, %v2701, %v2709
    %v2717 = vsel %vm2714, %v2703, %v2711
    %v2718 = vsel %vm2714, %v2705, %v2713
    %v2719 = vsel %vm2714, %v2707, %v2699
    %v2720 = vsel %vm2714, %v2709, %v2701
    %v2721 = vsel %vm2714, %v2711, %v2703
    %v2722 = vsel %vm2714, %v2713, %v2705
    %s2723 = scalar_lea.vmem [#allocation5], 22
    %v2724 = vld [vmem:[%s2723] ss:$8 sm:$0x3]
    %v2726 = vlaneseq
    %v2727 = vshrl.u32 %v2726, 7
    %v2728 = vsub.s32 0, %v2727
    %v2729 = vrot.slane %v2724, %v2728
    %v2730 = vlaneseq
    %v2731 = vshrl.u32 %v2730, 7
    %v2732 = vsub.s32 1, %v2731
    %v2733 = vrot.slane %v2724, %v2732
    %v2736 = vmul.f32 %v2715, %v2729
    %v2737 = vmul.f32 %v2719, %v2733
    %v2738 = vmul.f32 %v2716, %v2729
    %v2739 = vmul.f32 %v2720, %v2733
    %v2740 = vmul.f32 %v2717, %v2729
    %v2741 = vmul.f32 %v2721, %v2733
    %v2742 = vmul.f32 %v2718, %v2729
    %v2743 = vmul.f32 %v2722, %v2733
    %2744 = vset.pattern.permute.xlu0 14
    %2745 = vperm.xlu0 %2744, %v1535
    %v2746 = vpop.permute.xlu0 %2745
    %2748 = vset.pattern.permute.xlu0 14
    %2749 = vperm.xlu0 %2748, %v1536
    %v2750 = vpop.permute.xlu0 %2749
    %2752 = vset.pattern.permute.xlu0 14
    %2753 = vperm.xlu0 %2752, %v1537
    %v2754 = vpop.permute.xlu0 %2753
    %2756 = vset.pattern.permute.xlu0 14
    %2757 = vperm.xlu0 %2756, %v1538
    %v2758 = vpop.permute.xlu0 %2757
    %v2760 = vmul.f32 %v2736, %v2746
    %v2761 = vmul.f32 %v2737, %v2746
    %v2762 = vmul.f32 %v2738, %v2750
    %v2763 = vmul.f32 %v2739, %v2750
    %v2764 = vmul.f32 %v2740, %v2754
    %v2765 = vmul.f32 %v2741, %v2754
    %v2766 = vmul.f32 %v2742, %v2758
    %v2767 = vmul.f32 %v2743, %v2758
    %v2768 = vadd.f32 %v2658, %v2760
    %v2769 = vadd.f32 %v2659, %v2761
    %v2770 = vadd.f32 %v2660, %v2762
    %v2771 = vadd.f32 %v2661, %v2763
    %v2772 = vadd.f32 %v2662, %v2764
    %v2773 = vadd.f32 %v2663, %v2765
    %v2774 = vadd.f32 %v2664, %v2766
    %v2775 = vadd.f32 %v2665, %v2767
    %2776 = vrot.lane.b32.xlu0 %v1523, 114
    %v2777 = vpop.permute.xlu0 %2776
    %2778 = vrot.lane.b32.xlu0 %v1525, 114
    %v2779 = vpop.permute.xlu0 %2778
    %2780 = vrot.lane.b32.xlu0 %v1527, 114
    %v2781 = vpop.permute.xlu0 %2780
    %2782 = vrot.lane.b32.xlu0 %v1529, 114
    %v2783 = vpop.permute.xlu0 %2782
    %2784 = vrot.lane.b32.xlu0 %v1524, 114
    %v2785 = vpop.permute.xlu0 %2784
    %2786 = vrot.lane.b32.xlu0 %v1526, 114
    %v2787 = vpop.permute.xlu0 %2786
    %2788 = vrot.lane.b32.xlu0 %v1528, 114
    %v2789 = vpop.permute.xlu0 %2788
    %2790 = vrot.lane.b32.xlu0 %v1530, 114
    %v2791 = vpop.permute.xlu0 %2790
    %vm2792 = vcmp.lt.s32.totalorder %v136, 114
    %v2793 = vsel %vm2792, %v2777, %v2785
    %v2794 = vsel %vm2792, %v2779, %v2787
    %v2795 = vsel %vm2792, %v2781, %v2789
    %v2796 = vsel %vm2792, %v2783, %v2791
    %v2797 = vsel %vm2792, %v2785, %v2777
    %v2798 = vsel %vm2792, %v2787, %v2779
    %v2799 = vsel %vm2792, %v2789, %v2781
    %v2800 = vsel %vm2792, %v2791, %v2783
    %s2801 = scalar_lea.vmem [#allocation5], 23
    %v2802 = vld [vmem:[%s2801] ss:$8 sm:$0x3]
    %v2804 = vlaneseq
    %v2805 = vshrl.u32 %v2804, 7
    %v2806 = vsub.s32 0, %v2805
    %v2807 = vrot.slane %v2802, %v2806
    %v2808 = vlaneseq
    %v2809 = vshrl.u32 %v2808, 7
    %v2810 = vsub.s32 1, %v2809
    %v2811 = vrot.slane %v2802, %v2810
    %v2814 = vmul.f32 %v2793, %v2807
    %v2815 = vmul.f32 %v2797, %v2811
    %v2816 = vmul.f32 %v2794, %v2807
    %v2817 = vmul.f32 %v2798, %v2811
    %v2818 = vmul.f32 %v2795, %v2807
    %v2819 = vmul.f32 %v2799, %v2811
    %v2820 = vmul.f32 %v2796, %v2807
    %v2821 = vmul.f32 %v2800, %v2811
    %2822 = vset.pattern.permute.xlu0 15
    %2823 = vperm.xlu0 %2822, %v1535
    %v2824 = vpop.permute.xlu0 %2823
    %2826 = vset.pattern.permute.xlu0 15
    %2827 = vperm.xlu0 %2826, %v1536
    %v2828 = vpop.permute.xlu0 %2827
    %2830 = vset.pattern.permute.xlu0 15
    %2831 = vperm.xlu0 %2830, %v1537
    %v2832 = vpop.permute.xlu0 %2831
    %2834 = vset.pattern.permute.xlu0 15
    %2835 = vperm.xlu0 %2834, %v1538
    %v2836 = vpop.permute.xlu0 %2835
    %v2838 = vmul.f32 %v2814, %v2824
    %v2839 = vmul.f32 %v2815, %v2824
    %v2840 = vmul.f32 %v2816, %v2828
    %v2841 = vmul.f32 %v2817, %v2828
    %v2842 = vmul.f32 %v2818, %v2832
    %v2843 = vmul.f32 %v2819, %v2832
    %v2844 = vmul.f32 %v2820, %v2836
    %v2845 = vmul.f32 %v2821, %v2836
    %v2846 = vadd.f32 %v2768, %v2838
    %v2847 = vadd.f32 %v2769, %v2839
    %v2848 = vadd.f32 %v2770, %v2840
    %v2849 = vadd.f32 %v2771, %v2841
    %v2850 = vadd.f32 %v2772, %v2842
    %v2851 = vadd.f32 %v2773, %v2843
    %v2852 = vadd.f32 %v2774, %v2844
    %v2853 = vadd.f32 %v2775, %v2845
    %2854 = vrot.lane.b32.xlu0 %v1523, 113
    %v2855 = vpop.permute.xlu0 %2854
    %2856 = vrot.lane.b32.xlu0 %v1525, 113
    %v2857 = vpop.permute.xlu0 %2856
    %2858 = vrot.lane.b32.xlu0 %v1527, 113
    %v2859 = vpop.permute.xlu0 %2858
    %2860 = vrot.lane.b32.xlu0 %v1529, 113
    %v2861 = vpop.permute.xlu0 %2860
    %2862 = vrot.lane.b32.xlu0 %v1524, 113
    %v2863 = vpop.permute.xlu0 %2862
    %2864 = vrot.lane.b32.xlu0 %v1526, 113
    %v2865 = vpop.permute.xlu0 %2864
    %2866 = vrot.lane.b32.xlu0 %v1528, 113
    %v2867 = vpop.permute.xlu0 %2866
    %2868 = vrot.lane.b32.xlu0 %v1530, 113
    %v2869 = vpop.permute.xlu0 %2868
    %v2870 = vsel %vm1072, %v2855, %v2863
    %v2871 = vsel %vm1072, %v2857, %v2865
    %v2872 = vsel %vm1072, %v2859, %v2867
    %v2873 = vsel %vm1072, %v2861, %v2869
    %v2874 = vsel %vm1072, %v2863, %v2855
    %v2875 = vsel %vm1072, %v2865, %v2857
    %v2876 = vsel %vm1072, %v2867, %v2859
    %v2877 = vsel %vm1072, %v2869, %v2861
    %v2878 = vmul.f32 %v2870, %v1087
    %v2879 = vmul.f32 %v2874, %v1091
    %v2880 = vmul.f32 %v2871, %v1087
    %v2881 = vmul.f32 %v2875, %v1091
    %v2882 = vmul.f32 %v2872, %v1087
    %v2883 = vmul.f32 %v2876, %v1091
    %v2884 = vmul.f32 %v2873, %v1087
    %v2885 = vmul.f32 %v2877, %v1091
    %2886 = vset.pattern.permute.xlu0 16
    %2887 = vperm.xlu0 %2886, %v1535
    %v2888 = vpop.permute.xlu0 %2887
    %2890 = vset.pattern.permute.xlu0 16
    %2891 = vperm.xlu0 %2890, %v1536
    %v2892 = vpop.permute.xlu0 %2891
    %2894 = vset.pattern.permute.xlu0 16
    %2895 = vperm.xlu0 %2894, %v1537
    %v2896 = vpop.permute.xlu0 %2895
    %2898 = vset.pattern.permute.xlu0 16
    %2899 = vperm.xlu0 %2898, %v1538
    %v2900 = vpop.permute.xlu0 %2899
    %v2902 = vmul.f32 %v2878, %v2888
    %v2903 = vmul.f32 %v2879, %v2888
    %v2904 = vmul.f32 %v2880, %v2892
    %v2905 = vmul.f32 %v2881, %v2892
    %v2906 = vmul.f32 %v2882, %v2896
    %v2907 = vmul.f32 %v2883, %v2896
    %v2908 = vmul.f32 %v2884, %v2900
    %v2909 = vmul.f32 %v2885, %v2900
    %v2910 = vadd.f32 %v2846, %v2902
    %v2911 = vadd.f32 %v2847, %v2903
    %v2912 = vadd.f32 %v2848, %v2904
    %v2913 = vadd.f32 %v2849, %v2905
    %v2914 = vadd.f32 %v2850, %v2906
    %v2915 = vadd.f32 %v2851, %v2907
    %v2916 = vadd.f32 %v2852, %v2908
    %v2917 = vadd.f32 %v2853, %v2909
    %2918 = vset.pattern.permute.xlu0 6
    %2919 = vperm.xlu0 %2918, %v1531
    %v2920 = vpop.permute.xlu0 %2919
    %2922 = vset.pattern.permute.xlu0 6
    %2923 = vperm.xlu0 %2922, %v1532
    %v2924 = vpop.permute.xlu0 %2923
    %2926 = vset.pattern.permute.xlu0 6
    %2927 = vperm.xlu0 %2926, %v1533
    %v2928 = vpop.permute.xlu0 %2927
    %2930 = vset.pattern.permute.xlu0 6
    %2931 = vperm.xlu0 %2930, %v1534
    %v2932 = vpop.permute.xlu0 %2931
    %v2934 = vmul.f32 %v2878, %v2920
    %v2935 = vmul.f32 %v2879, %v2920
    %v2936 = vmul.f32 %v2880, %v2924
    %v2937 = vmul.f32 %v2881, %v2924
    %v2938 = vmul.f32 %v2882, %v2928
    %v2939 = vmul.f32 %v2883, %v2928
    %v2940 = vmul.f32 %v2884, %v2932
    %v2941 = vmul.f32 %v2885, %v2932
    %v2942 = vadd.f32 %v2690, %v2934
    %v2943 = vadd.f32 %v2691, %v2935
    %v2944 = vadd.f32 %v2692, %v2936
    %v2945 = vadd.f32 %v2693, %v2937
    %v2946 = vadd.f32 %v2694, %v2938
    %v2947 = vadd.f32 %v2695, %v2939
    %v2948 = vadd.f32 %v2696, %v2940
    %v2949 = vadd.f32 %v2697, %v2941
    %2950 = vrot.lane.b32.xlu0 %v1523, 112
    %v2951 = vpop.permute.xlu0 %2950
    %2952 = vrot.lane.b32.xlu0 %v1525, 112
    %v2953 = vpop.permute.xlu0 %2952
    %2954 = vrot.lane.b32.xlu0 %v1527, 112
    %v2955 = vpop.permute.xlu0 %2954
    %2956 = vrot.lane.b32.xlu0 %v1529, 112
    %v2957 = vpop.permute.xlu0 %2956
    %2958 = vrot.lane.b32.xlu0 %v1524, 112
    %v2959 = vpop.permute.xlu0 %2958
    %2960 = vrot.lane.b32.xlu0 %v1526, 112
    %v2961 = vpop.permute.xlu0 %2960
    %2962 = vrot.lane.b32.xlu0 %v1528, 112
    %v2963 = vpop.permute.xlu0 %2962
    %2964 = vrot.lane.b32.xlu0 %v1530, 112
    %v2965 = vpop.permute.xlu0 %2964
    %v2966 = vsel %vm1232, %v2951, %v2959
    %v2967 = vsel %vm1232, %v2953, %v2961
    %v2968 = vsel %vm1232, %v2955, %v2963
    %v2969 = vsel %vm1232, %v2957, %v2965
    %v2970 = vsel %vm1232, %v2959, %v2951
    %v2971 = vsel %vm1232, %v2961, %v2953
    %v2972 = vsel %vm1232, %v2963, %v2955
    %v2973 = vsel %vm1232, %v2965, %v2957
    %v2974 = vmul.f32 %v2966, %v1247
    %v2975 = vmul.f32 %v2970, %v1251
    %v2976 = vmul.f32 %v2967, %v1247
    %v2977 = vmul.f32 %v2971, %v1251
    %v2978 = vmul.f32 %v2968, %v1247
    %v2979 = vmul.f32 %v2972, %v1251
    %v2980 = vmul.f32 %v2969, %v1247
    %v2981 = vmul.f32 %v2973, %v1251
    %2982 = vset.pattern.permute.xlu0 17
    %2983 = vperm.xlu0 %2982, %v1535
    %v2984 = vpop.permute.xlu0 %2983
    %2986 = vset.pattern.permute.xlu0 17
    %2987 = vperm.xlu0 %2986, %v1536
    %v2988 = vpop.permute.xlu0 %2987
    %2990 = vset.pattern.permute.xlu0 17
    %2991 = vperm.xlu0 %2990, %v1537
    %v2992 = vpop.permute.xlu0 %2991
    %2994 = vset.pattern.permute.xlu0 17
    %2995 = vperm.xlu0 %2994, %v1538
    %v2996 = vpop.permute.xlu0 %2995
    %v2998 = vmul.f32 %v2974, %v2984
    %v2999 = vmul.f32 %v2975, %v2984
    %v3000 = vmul.f32 %v2976, %v2988
    %v3001 = vmul.f32 %v2977, %v2988
    %v3002 = vmul.f32 %v2978, %v2992
    %v3003 = vmul.f32 %v2979, %v2992
    %v3004 = vmul.f32 %v2980, %v2996
    %v3005 = vmul.f32 %v2981, %v2996
    %v3006 = vadd.f32 %v2910, %v2998
    %v3007 = vadd.f32 %v2911, %v2999
    %v3008 = vadd.f32 %v2912, %v3000
    %v3009 = vadd.f32 %v2913, %v3001
    %v3010 = vadd.f32 %v2914, %v3002
    %v3011 = vadd.f32 %v2915, %v3003
    %v3012 = vadd.f32 %v2916, %v3004
    %v3013 = vadd.f32 %v2917, %v3005
    %3014 = vset.pattern.permute.xlu0 7
    %3015 = vperm.xlu0 %3014, %v1531
    %v3016 = vpop.permute.xlu0 %3015
    %3018 = vset.pattern.permute.xlu0 7
    %3019 = vperm.xlu0 %3018, %v1532
    %v3020 = vpop.permute.xlu0 %3019
    %3022 = vset.pattern.permute.xlu0 7
    %3023 = vperm.xlu0 %3022, %v1533
    %v3024 = vpop.permute.xlu0 %3023
    %3026 = vset.pattern.permute.xlu0 7
    %3027 = vperm.xlu0 %3026, %v1534
    %v3028 = vpop.permute.xlu0 %3027
    %v3030 = vmul.f32 %v2974, %v3016
    %v3031 = vmul.f32 %v2975, %v3016
    %v3032 = vmul.f32 %v2976, %v3020
    %v3033 = vmul.f32 %v2977, %v3020
    %v3034 = vmul.f32 %v2978, %v3024
    %v3035 = vmul.f32 %v2979, %v3024
    %v3036 = vmul.f32 %v2980, %v3028
    %v3037 = vmul.f32 %v2981, %v3028
    %v3038 = vadd.f32 %v2942, %v3030
    %v3039 = vadd.f32 %v2943, %v3031
    %v3040 = vadd.f32 %v2944, %v3032
    %v3041 = vadd.f32 %v2945, %v3033
    %v3042 = vadd.f32 %v2946, %v3034
    %v3043 = vadd.f32 %v2947, %v3035
    %v3044 = vadd.f32 %v2948, %v3036
    %v3045 = vadd.f32 %v2949, %v3037
    %3046 = vrot.lane.b32.xlu0 %v1523, 111
    %v3047 = vpop.permute.xlu0 %3046
    %3048 = vrot.lane.b32.xlu0 %v1525, 111
    %v3049 = vpop.permute.xlu0 %3048
    %3050 = vrot.lane.b32.xlu0 %v1527, 111
    %v3051 = vpop.permute.xlu0 %3050
    %3052 = vrot.lane.b32.xlu0 %v1529, 111
    %v3053 = vpop.permute.xlu0 %3052
    %3054 = vrot.lane.b32.xlu0 %v1524, 111
    %v3055 = vpop.permute.xlu0 %3054
    %3056 = vrot.lane.b32.xlu0 %v1526, 111
    %v3057 = vpop.permute.xlu0 %3056
    %3058 = vrot.lane.b32.xlu0 %v1528, 111
    %v3059 = vpop.permute.xlu0 %3058
    %3060 = vrot.lane.b32.xlu0 %v1530, 111
    %v3061 = vpop.permute.xlu0 %3060
    %v3062 = vsel %vm1392, %v3047, %v3055
    %v3063 = vsel %vm1392, %v3049, %v3057
    %v3064 = vsel %vm1392, %v3051, %v3059
    %v3065 = vsel %vm1392, %v3053, %v3061
    %v3066 = vsel %vm1392, %v3055, %v3047
    %v3067 = vsel %vm1392, %v3057, %v3049
    %v3068 = vsel %vm1392, %v3059, %v3051
    %v3069 = vsel %vm1392, %v3061, %v3053
    %v3070 = vmul.f32 %v3062, %v1407
    %v3071 = vmul.f32 %v3066, %v1411
    %v3072 = vmul.f32 %v3063, %v1407
    %v3073 = vmul.f32 %v3067, %v1411
    %v3074 = vmul.f32 %v3064, %v1407
    %v3075 = vmul.f32 %v3068, %v1411
    %v3076 = vmul.f32 %v3065, %v1407
    %v3077 = vmul.f32 %v3069, %v1411
    %3078 = vset.pattern.permute.xlu0 18
    %3079 = vperm.xlu0 %3078, %v1535
    %v3080 = vpop.permute.xlu0 %3079
    %3082 = vset.pattern.permute.xlu0 18
    %3083 = vperm.xlu0 %3082, %v1536
    %v3084 = vpop.permute.xlu0 %3083
    %3086 = vset.pattern.permute.xlu0 18
    %3087 = vperm.xlu0 %3086, %v1537
    %v3088 = vpop.permute.xlu0 %3087
    %3090 = vset.pattern.permute.xlu0 18
    %3091 = vperm.xlu0 %3090, %v1538
    %v3092 = vpop.permute.xlu0 %3091
    %v3094 = vmul.f32 %v3070, %v3080
    %v3095 = vmul.f32 %v3071, %v3080
    %v3096 = vmul.f32 %v3072, %v3084
    %v3097 = vmul.f32 %v3073, %v3084
    %v3098 = vmul.f32 %v3074, %v3088
    %v3099 = vmul.f32 %v3075, %v3088
    %v3100 = vmul.f32 %v3076, %v3092
    %v3101 = vmul.f32 %v3077, %v3092
    %v3102 = vadd.f32 %v3006, %v3094
    %v3103 = vadd.f32 %v3007, %v3095
    %v3104 = vadd.f32 %v3008, %v3096
    %v3105 = vadd.f32 %v3009, %v3097
    %v3106 = vadd.f32 %v3010, %v3098
    %v3107 = vadd.f32 %v3011, %v3099
    %v3108 = vadd.f32 %v3012, %v3100
    %v3109 = vadd.f32 %v3013, %v3101
    %3110 = vset.pattern.permute.xlu0 8
    %3111 = vperm.xlu0 %3110, %v1531
    %v3112 = vpop.permute.xlu0 %3111
    %3114 = vset.pattern.permute.xlu0 8
    %3115 = vperm.xlu0 %3114, %v1532
    %v3116 = vpop.permute.xlu0 %3115
    %3118 = vset.pattern.permute.xlu0 8
    %3119 = vperm.xlu0 %3118, %v1533
    %v3120 = vpop.permute.xlu0 %3119
    %3122 = vset.pattern.permute.xlu0 8
    %3123 = vperm.xlu0 %3122, %v1534
    %v3124 = vpop.permute.xlu0 %3123
    %v3126 = vmul.f32 %v3070, %v3112
    %v3127 = vmul.f32 %v3071, %v3112
    %v3128 = vmul.f32 %v3072, %v3116
    %v3129 = vmul.f32 %v3073, %v3116
    %v3130 = vmul.f32 %v3074, %v3120
    %v3131 = vmul.f32 %v3075, %v3120
    %v3132 = vmul.f32 %v3076, %v3124
    %v3133 = vmul.f32 %v3077, %v3124
    %v3134 = vadd.f32 %v3038, %v3126
    %v3135 = vadd.f32 %v3039, %v3127
    %v3136 = vadd.f32 %v3040, %v3128
    %v3137 = vadd.f32 %v3041, %v3129
    %v3138 = vadd.f32 %v3042, %v3130
    %v3139 = vadd.f32 %v3043, %v3131
    %v3140 = vadd.f32 %v3044, %v3132
    %v3141 = vadd.f32 %v3045, %v3133
    %3142 = vrot.lane.b32.xlu0 %v1523, 110
    %v3143 = vpop.permute.xlu0 %3142
    %3144 = vrot.lane.b32.xlu0 %v1525, 110
    %v3145 = vpop.permute.xlu0 %3144
    %3146 = vrot.lane.b32.xlu0 %v1527, 110
    %v3147 = vpop.permute.xlu0 %3146
    %3148 = vrot.lane.b32.xlu0 %v1529, 110
    %v3149 = vpop.permute.xlu0 %3148
    %3150 = vrot.lane.b32.xlu0 %v1524, 110
    %v3151 = vpop.permute.xlu0 %3150
    %3152 = vrot.lane.b32.xlu0 %v1526, 110
    %v3153 = vpop.permute.xlu0 %3152
    %3154 = vrot.lane.b32.xlu0 %v1528, 110
    %v3155 = vpop.permute.xlu0 %3154
    %3156 = vrot.lane.b32.xlu0 %v1530, 110
    %v3157 = vpop.permute.xlu0 %3156
    %vm3158 = vcmp.lt.s32.totalorder %v136, 110
    %v3159 = vsel %vm3158, %v3143, %v3151
    %v3160 = vsel %vm3158, %v3145, %v3153
    %v3161 = vsel %vm3158, %v3147, %v3155
    %v3162 = vsel %vm3158, %v3149, %v3157
    %v3163 = vsel %vm3158, %v3151, %v3143
    %v3164 = vsel %vm3158, %v3153, %v3145
    %v3165 = vsel %vm3158, %v3155, %v3147
    %v3166 = vsel %vm3158, %v3157, %v3149
    %s3167 = scalar_lea.vmem [#allocation5], 35
    %v3168 = vld [vmem:[%s3167] ss:$8 sm:$0x3]
    %v3170 = vlaneseq
    %v3171 = vshrl.u32 %v3170, 7
    %v3172 = vsub.s32 0, %v3171
    %v3173 = vrot.slane %v3168, %v3172
    %v3174 = vlaneseq
    %v3175 = vshrl.u32 %v3174, 7
    %v3176 = vsub.s32 1, %v3175
    %v3177 = vrot.slane %v3168, %v3176
    %v3180 = vmul.f32 %v3159, %v3173
    %v3181 = vmul.f32 %v3163, %v3177
    %v3182 = vmul.f32 %v3160, %v3173
    %v3183 = vmul.f32 %v3164, %v3177
    %v3184 = vmul.f32 %v3161, %v3173
    %v3185 = vmul.f32 %v3165, %v3177
    %v3186 = vmul.f32 %v3162, %v3173
    %v3187 = vmul.f32 %v3166, %v3177
    %3188 = vset.pattern.permute.xlu0 19
    %3189 = vperm.xlu0 %3188, %v1535
    %v3190 = vpop.permute.xlu0 %3189
    %3192 = vset.pattern.permute.xlu0 19
    %3193 = vperm.xlu0 %3192, %v1536
    %v3194 = vpop.permute.xlu0 %3193
    %3196 = vset.pattern.permute.xlu0 19
    %3197 = vperm.xlu0 %3196, %v1537
    %v3198 = vpop.permute.xlu0 %3197
    %3200 = vset.pattern.permute.xlu0 19
    %3201 = vperm.xlu0 %3200, %v1538
    %v3202 = vpop.permute.xlu0 %3201
    %v3204 = vmul.f32 %v3180, %v3190
    %v3205 = vmul.f32 %v3181, %v3190
    %v3206 = vmul.f32 %v3182, %v3194
    %v3207 = vmul.f32 %v3183, %v3194
    %v3208 = vmul.f32 %v3184, %v3198
    %v3209 = vmul.f32 %v3185, %v3198
    %v3210 = vmul.f32 %v3186, %v3202
    %v3211 = vmul.f32 %v3187, %v3202
    %v3212 = vadd.f32 %v3102, %v3204
    %v3213 = vadd.f32 %v3103, %v3205
    %v3214 = vadd.f32 %v3104, %v3206
    %v3215 = vadd.f32 %v3105, %v3207
    %v3216 = vadd.f32 %v3106, %v3208
    %v3217 = vadd.f32 %v3107, %v3209
    %v3218 = vadd.f32 %v3108, %v3210
    %v3219 = vadd.f32 %v3109, %v3211
    %3220 = vrot.lane.b32.xlu0 %v1523, 98
    %v3221 = vpop.permute.xlu0 %3220
    %3222 = vrot.lane.b32.xlu0 %v1525, 98
    %v3223 = vpop.permute.xlu0 %3222
    %3224 = vrot.lane.b32.xlu0 %v1527, 98
    %v3225 = vpop.permute.xlu0 %3224
    %3226 = vrot.lane.b32.xlu0 %v1529, 98
    %v3227 = vpop.permute.xlu0 %3226
    %3228 = vrot.lane.b32.xlu0 %v1524, 98
    %v3229 = vpop.permute.xlu0 %3228
    %3230 = vrot.lane.b32.xlu0 %v1526, 98
    %v3231 = vpop.permute.xlu0 %3230
    %3232 = vrot.lane.b32.xlu0 %v1528, 98
    %v3233 = vpop.permute.xlu0 %3232
    %3234 = vrot.lane.b32.xlu0 %v1530, 98
    %v3235 = vpop.permute.xlu0 %3234
    %vm3236 = vcmp.lt.s32.totalorder %v136, 98
    %v3237 = vsel %vm3236, %v3221, %v3229
    %v3238 = vsel %vm3236, %v3223, %v3231
    %v3239 = vsel %vm3236, %v3225, %v3233
    %v3240 = vsel %vm3236, %v3227, %v3235
    %v3241 = vsel %vm3236, %v3229, %v3221
    %v3242 = vsel %vm3236, %v3231, %v3223
    %v3243 = vsel %vm3236, %v3233, %v3225
    %v3244 = vsel %vm3236, %v3235, %v3227
    %s3245 = scalar_lea.vmem [#allocation5], 36
    %v3246 = vld [vmem:[%s3245] ss:$8 sm:$0x3]
    %v3248 = vlaneseq
    %v3249 = vshrl.u32 %v3248, 7
    %v3250 = vsub.s32 0, %v3249
    %v3251 = vrot.slane %v3246, %v3250
    %v3252 = vlaneseq
    %v3253 = vshrl.u32 %v3252, 7
    %v3254 = vsub.s32 1, %v3253
    %v3255 = vrot.slane %v3246, %v3254
    %v3258 = vmul.f32 %v3237, %v3251
    %v3259 = vmul.f32 %v3241, %v3255
    %v3260 = vmul.f32 %v3238, %v3251
    %v3261 = vmul.f32 %v3242, %v3255
    %v3262 = vmul.f32 %v3239, %v3251
    %v3263 = vmul.f32 %v3243, %v3255
    %v3264 = vmul.f32 %v3240, %v3251
    %v3265 = vmul.f32 %v3244, %v3255
    %3266 = vset.pattern.permute.xlu0 20
    %3267 = vperm.xlu0 %3266, %v1535
    %v3268 = vpop.permute.xlu0 %3267
    %3270 = vset.pattern.permute.xlu0 20
    %3271 = vperm.xlu0 %3270, %v1536
    %v3272 = vpop.permute.xlu0 %3271
    %3274 = vset.pattern.permute.xlu0 20
    %3275 = vperm.xlu0 %3274, %v1537
    %v3276 = vpop.permute.xlu0 %3275
    %3278 = vset.pattern.permute.xlu0 20
    %3279 = vperm.xlu0 %3278, %v1538
    %v3280 = vpop.permute.xlu0 %3279
    %v3282 = vmul.f32 %v3258, %v3268
    %v3283 = vmul.f32 %v3259, %v3268
    %v3284 = vmul.f32 %v3260, %v3272
    %v3285 = vmul.f32 %v3261, %v3272
    %v3286 = vmul.f32 %v3262, %v3276
    %v3287 = vmul.f32 %v3263, %v3276
    %v3288 = vmul.f32 %v3264, %v3280
    %v3289 = vmul.f32 %v3265, %v3280
    %v3290 = vadd.f32 %v3212, %v3282
    %v3291 = vadd.f32 %v3213, %v3283
    %v3292 = vadd.f32 %v3214, %v3284
    %v3293 = vadd.f32 %v3215, %v3285
    %v3294 = vadd.f32 %v3216, %v3286
    %v3295 = vadd.f32 %v3217, %v3287
    %v3296 = vadd.f32 %v3218, %v3288
    %v3297 = vadd.f32 %v3219, %v3289
    %3298 = vrot.lane.b32.xlu0 %v1523, 97
    %v3299 = vpop.permute.xlu0 %3298
    %3300 = vrot.lane.b32.xlu0 %v1525, 97
    %v3301 = vpop.permute.xlu0 %3300
    %3302 = vrot.lane.b32.xlu0 %v1527, 97
    %v3303 = vpop.permute.xlu0 %3302
    %3304 = vrot.lane.b32.xlu0 %v1529, 97
    %v3305 = vpop.permute.xlu0 %3304
    %3306 = vrot.lane.b32.xlu0 %v1524, 97
    %v3307 = vpop.permute.xlu0 %3306
    %3308 = vrot.lane.b32.xlu0 %v1526, 97
    %v3309 = vpop.permute.xlu0 %3308
    %3310 = vrot.lane.b32.xlu0 %v1528, 97
    %v3311 = vpop.permute.xlu0 %3310
    %3312 = vrot.lane.b32.xlu0 %v1530, 97
    %v3313 = vpop.permute.xlu0 %3312
    %vm3314 = vcmp.lt.s32.totalorder %v136, 97
    %v3315 = vsel %vm3314, %v3299, %v3307
    %v3316 = vsel %vm3314, %v3301, %v3309
    %v3317 = vsel %vm3314, %v3303, %v3311
    %v3318 = vsel %vm3314, %v3305, %v3313
    %v3319 = vsel %vm3314, %v3307, %v3299
    %v3320 = vsel %vm3314, %v3309, %v3301
    %v3321 = vsel %vm3314, %v3311, %v3303
    %v3322 = vsel %vm3314, %v3313, %v3305
    %s3323 = scalar_lea.vmem [#allocation5], 37
    %v3324 = vld [vmem:[%s3323] ss:$8 sm:$0x3]
    %v3326 = vlaneseq
    %v3327 = vshrl.u32 %v3326, 7
    %v3328 = vsub.s32 0, %v3327
    %v3329 = vrot.slane %v3324, %v3328
    %v3330 = vlaneseq
    %v3331 = vshrl.u32 %v3330, 7
    %v3332 = vsub.s32 1, %v3331
    %v3333 = vrot.slane %v3324, %v3332
    %v3336 = vmul.f32 %v3315, %v3329
    %v3337 = vmul.f32 %v3319, %v3333
    %v3338 = vmul.f32 %v3316, %v3329
    %v3339 = vmul.f32 %v3320, %v3333
    %v3340 = vmul.f32 %v3317, %v3329
    %v3341 = vmul.f32 %v3321, %v3333
    %v3342 = vmul.f32 %v3318, %v3329
    %v3343 = vmul.f32 %v3322, %v3333
    %3344 = vset.pattern.permute.xlu0 21
    %3345 = vperm.xlu0 %3344, %v1535
    %v3346 = vpop.permute.xlu0 %3345
    %3348 = vset.pattern.permute.xlu0 21
    %3349 = vperm.xlu0 %3348, %v1536
    %v3350 = vpop.permute.xlu0 %3349
    %3352 = vset.pattern.permute.xlu0 21
    %3353 = vperm.xlu0 %3352, %v1537
    %v3354 = vpop.permute.xlu0 %3353
    %3356 = vset.pattern.permute.xlu0 21
    %3357 = vperm.xlu0 %3356, %v1538
    %v3358 = vpop.permute.xlu0 %3357
    %v3360 = vmul.f32 %v3336, %v3346
    %v3361 = vmul.f32 %v3337, %v3346
    %v3362 = vmul.f32 %v3338, %v3350
    %v3363 = vmul.f32 %v3339, %v3350
    %v3364 = vmul.f32 %v3340, %v3354
    %v3365 = vmul.f32 %v3341, %v3354
    %v3366 = vmul.f32 %v3342, %v3358
    %v3367 = vmul.f32 %v3343, %v3358
    %v3368 = vadd.f32 %v3290, %v3360
    %v3369 = vadd.f32 %v3291, %v3361
    %v3370 = vadd.f32 %v3292, %v3362
    %v3371 = vadd.f32 %v3293, %v3363
    %v3372 = vadd.f32 %v3294, %v3364
    %v3373 = vadd.f32 %v3295, %v3365
    %v3374 = vadd.f32 %v3296, %v3366
    %v3375 = vadd.f32 %v3297, %v3367
    %3376 = vrot.lane.b32.xlu0 %v1523, 96
    %v3377 = vpop.permute.xlu0 %3376
    %3378 = vrot.lane.b32.xlu0 %v1525, 96
    %v3379 = vpop.permute.xlu0 %3378
    %3380 = vrot.lane.b32.xlu0 %v1527, 96
    %v3381 = vpop.permute.xlu0 %3380
    %3382 = vrot.lane.b32.xlu0 %v1529, 96
    %v3383 = vpop.permute.xlu0 %3382
    %3384 = vrot.lane.b32.xlu0 %v1524, 96
    %v3385 = vpop.permute.xlu0 %3384
    %3386 = vrot.lane.b32.xlu0 %v1526, 96
    %v3387 = vpop.permute.xlu0 %3386
    %3388 = vrot.lane.b32.xlu0 %v1528, 96
    %v3389 = vpop.permute.xlu0 %3388
    %3390 = vrot.lane.b32.xlu0 %v1530, 96
    %v3391 = vpop.permute.xlu0 %3390
    %vm3392 = vcmp.lt.s32.totalorder %v136, 96
    %v3393 = vsel %vm3392, %v3377, %v3385
    %v3394 = vsel %vm3392, %v3379, %v3387
    %v3395 = vsel %vm3392, %v3381, %v3389
    %v3396 = vsel %vm3392, %v3383, %v3391
    %v3397 = vsel %vm3392, %v3385, %v3377
    %v3398 = vsel %vm3392, %v3387, %v3379
    %v3399 = vsel %vm3392, %v3389, %v3381
    %v3400 = vsel %vm3392, %v3391, %v3383
    %s3401 = scalar_lea.vmem [#allocation5], 38
    %v3402 = vld [vmem:[%s3401] ss:$8 sm:$0x3]
    %v3404 = vlaneseq
    %v3405 = vshrl.u32 %v3404, 7
    %v3406 = vsub.s32 0, %v3405
    %v3407 = vrot.slane %v3402, %v3406
    %v3408 = vlaneseq
    %v3409 = vshrl.u32 %v3408, 7
    %v3410 = vsub.s32 1, %v3409
    %v3411 = vrot.slane %v3402, %v3410
    %v3414 = vmul.f32 %v3393, %v3407
    %v3415 = vmul.f32 %v3397, %v3411
    %v3416 = vmul.f32 %v3394, %v3407
    %v3417 = vmul.f32 %v3398, %v3411
    %v3418 = vmul.f32 %v3395, %v3407
    %v3419 = vmul.f32 %v3399, %v3411
    %v3420 = vmul.f32 %v3396, %v3407
    %v3421 = vmul.f32 %v3400, %v3411
    %3422 = vset.pattern.permute.xlu0 22
    %3423 = vperm.xlu0 %3422, %v1535
    %v3424 = vpop.permute.xlu0 %3423
    %3426 = vset.pattern.permute.xlu0 22
    %3427 = vperm.xlu0 %3426, %v1536
    %v3428 = vpop.permute.xlu0 %3427
    %3430 = vset.pattern.permute.xlu0 22
    %3431 = vperm.xlu0 %3430, %v1537
    %v3432 = vpop.permute.xlu0 %3431
    %3434 = vset.pattern.permute.xlu0 22
    %3435 = vperm.xlu0 %3434, %v1538
    %v3436 = vpop.permute.xlu0 %3435
    %v3438 = vmul.f32 %v3414, %v3424
    %v3439 = vmul.f32 %v3415, %v3424
    %v3440 = vmul.f32 %v3416, %v3428
    %v3441 = vmul.f32 %v3417, %v3428
    %v3442 = vmul.f32 %v3418, %v3432
    %v3443 = vmul.f32 %v3419, %v3432
    %v3444 = vmul.f32 %v3420, %v3436
    %v3445 = vmul.f32 %v3421, %v3436
    %v3446 = vadd.f32 %v3368, %v3438
    %v3447 = vadd.f32 %v3369, %v3439
    %v3448 = vadd.f32 %v3370, %v3440
    %v3449 = vadd.f32 %v3371, %v3441
    %v3450 = vadd.f32 %v3372, %v3442
    %v3451 = vadd.f32 %v3373, %v3443
    %v3452 = vadd.f32 %v3374, %v3444
    %v3453 = vadd.f32 %v3375, %v3445
    %3454 = vrot.lane.b32.xlu0 %v1523, 95
    %v3455 = vpop.permute.xlu0 %3454
    %3456 = vrot.lane.b32.xlu0 %v1525, 95
    %v3457 = vpop.permute.xlu0 %3456
    %3458 = vrot.lane.b32.xlu0 %v1527, 95
    %v3459 = vpop.permute.xlu0 %3458
    %3460 = vrot.lane.b32.xlu0 %v1529, 95
    %v3461 = vpop.permute.xlu0 %3460
    %3462 = vrot.lane.b32.xlu0 %v1524, 95
    %v3463 = vpop.permute.xlu0 %3462
    %3464 = vrot.lane.b32.xlu0 %v1526, 95
    %v3465 = vpop.permute.xlu0 %3464
    %3466 = vrot.lane.b32.xlu0 %v1528, 95
    %v3467 = vpop.permute.xlu0 %3466
    %3468 = vrot.lane.b32.xlu0 %v1530, 95
    %v3469 = vpop.permute.xlu0 %3468
    %vm3470 = vcmp.lt.s32.totalorder %v136, 95
    %v3471 = vsel %vm3470, %v3455, %v3463
    %v3472 = vsel %vm3470, %v3457, %v3465
    %v3473 = vsel %vm3470, %v3459, %v3467
    %v3474 = vsel %vm3470, %v3461, %v3469
    %v3475 = vsel %vm3470, %v3463, %v3455
    %v3476 = vsel %vm3470, %v3465, %v3457
    %v3477 = vsel %vm3470, %v3467, %v3459
    %v3478 = vsel %vm3470, %v3469, %v3461
    %s3479 = scalar_lea.vmem [#allocation5], 39
    %v3480 = vld [vmem:[%s3479] ss:$8 sm:$0x3]
    %v3482 = vlaneseq
    %v3483 = vshrl.u32 %v3482, 7
    %v3484 = vsub.s32 0, %v3483
    %v3485 = vrot.slane %v3480, %v3484
    %v3486 = vlaneseq
    %v3487 = vshrl.u32 %v3486, 7
    %v3488 = vsub.s32 1, %v3487
    %v3489 = vrot.slane %v3480, %v3488
    %v3492 = vmul.f32 %v3471, %v3485
    %v3493 = vmul.f32 %v3475, %v3489
    %v3494 = vmul.f32 %v3472, %v3485
    %v3495 = vmul.f32 %v3476, %v3489
    %v3496 = vmul.f32 %v3473, %v3485
    %v3497 = vmul.f32 %v3477, %v3489
    %v3498 = vmul.f32 %v3474, %v3485
    %v3499 = vmul.f32 %v3478, %v3489
    %3500 = vset.pattern.permute.xlu0 23
    %3501 = vperm.xlu0 %3500, %v1535
    %v3502 = vpop.permute.xlu0 %3501
    %3504 = vset.pattern.permute.xlu0 23
    %3505 = vperm.xlu0 %3504, %v1536
    %v3506 = vpop.permute.xlu0 %3505
    %3508 = vset.pattern.permute.xlu0 23
    %3509 = vperm.xlu0 %3508, %v1537
    %v3510 = vpop.permute.xlu0 %3509
    %3512 = vset.pattern.permute.xlu0 23
    %3513 = vperm.xlu0 %3512, %v1538
    %v3514 = vpop.permute.xlu0 %3513
    %v3516 = vmul.f32 %v3492, %v3502
    %v3517 = vmul.f32 %v3493, %v3502
    %v3518 = vmul.f32 %v3494, %v3506
    %v3519 = vmul.f32 %v3495, %v3506
    %v3520 = vmul.f32 %v3496, %v3510
    %v3521 = vmul.f32 %v3497, %v3510
    %v3522 = vmul.f32 %v3498, %v3514
    %v3523 = vmul.f32 %v3499, %v3514
    %v3524 = vadd.f32 %v3446, %v3516
    %v3525 = vadd.f32 %v3447, %v3517
    %v3526 = vadd.f32 %v3448, %v3518
    %v3527 = vadd.f32 %v3449, %v3519
    %v3528 = vadd.f32 %v3450, %v3520
    %v3529 = vadd.f32 %v3451, %v3521
    %v3530 = vadd.f32 %v3452, %v3522
    %v3531 = vadd.f32 %v3453, %v3523
    %3532 = vrot.lane.b32.xlu0 %v1523, 94
    %v3533 = vpop.permute.xlu0 %3532
    %3534 = vrot.lane.b32.xlu0 %v1525, 94
    %v3535 = vpop.permute.xlu0 %3534
    %3536 = vrot.lane.b32.xlu0 %v1527, 94
    %v3537 = vpop.permute.xlu0 %3536
    %3538 = vrot.lane.b32.xlu0 %v1529, 94
    %v3539 = vpop.permute.xlu0 %3538
    %3540 = vrot.lane.b32.xlu0 %v1524, 94
    %v3541 = vpop.permute.xlu0 %3540
    %3542 = vrot.lane.b32.xlu0 %v1526, 94
    %v3543 = vpop.permute.xlu0 %3542
    %3544 = vrot.lane.b32.xlu0 %v1528, 94
    %v3545 = vpop.permute.xlu0 %3544
    %3546 = vrot.lane.b32.xlu0 %v1530, 94
    %v3547 = vpop.permute.xlu0 %3546
    %vm3548 = vcmp.lt.s32.totalorder %v136, 94
    %v3549 = vsel %vm3548, %v3533, %v3541
    %v3550 = vsel %vm3548, %v3535, %v3543
    %v3551 = vsel %vm3548, %v3537, %v3545
    %v3552 = vsel %vm3548, %v3539, %v3547
    %v3553 = vsel %vm3548, %v3541, %v3533
    %v3554 = vsel %vm3548, %v3543, %v3535
    %v3555 = vsel %vm3548, %v3545, %v3537
    %v3556 = vsel %vm3548, %v3547, %v3539
    %s3557 = scalar_lea.vmem [#allocation5], 48
    %v3558 = vld [vmem:[%s3557] ss:$8 sm:$0x3]
    %v3560 = vlaneseq
    %v3561 = vshrl.u32 %v3560, 7
    %v3562 = vsub.s32 0, %v3561
    %v3563 = vrot.slane %v3558, %v3562
    %v3564 = vlaneseq
    %v3565 = vshrl.u32 %v3564, 7
    %v3566 = vsub.s32 1, %v3565
    %v3567 = vrot.slane %v3558, %v3566
    %v3570 = vmul.f32 %v3549, %v3563
    %v3571 = vmul.f32 %v3553, %v3567
    %v3572 = vmul.f32 %v3550, %v3563
    %v3573 = vmul.f32 %v3554, %v3567
    %v3574 = vmul.f32 %v3551, %v3563
    %v3575 = vmul.f32 %v3555, %v3567
    %v3576 = vmul.f32 %v3552, %v3563
    %v3577 = vmul.f32 %v3556, %v3567
    %3578 = vset.pattern.permute.xlu0 24
    %3579 = vperm.xlu0 %3578, %v1535
    %v3580 = vpop.permute.xlu0 %3579
    %3582 = vset.pattern.permute.xlu0 24
    %3583 = vperm.xlu0 %3582, %v1536
    %v3584 = vpop.permute.xlu0 %3583
    %3586 = vset.pattern.permute.xlu0 24
    %3587 = vperm.xlu0 %3586, %v1537
    %v3588 = vpop.permute.xlu0 %3587
    %3590 = vset.pattern.permute.xlu0 24
    %3591 = vperm.xlu0 %3590, %v1538
    %v3592 = vpop.permute.xlu0 %3591
    %v3594 = vmul.f32 %v3570, %v3580
    %v3595 = vmul.f32 %v3571, %v3580
    %v3596 = vmul.f32 %v3572, %v3584
    %v3597 = vmul.f32 %v3573, %v3584
    %v3598 = vmul.f32 %v3574, %v3588
    %v3599 = vmul.f32 %v3575, %v3588
    %v3600 = vmul.f32 %v3576, %v3592
    %v3601 = vmul.f32 %v3577, %v3592
    %v3602 = vadd.f32 %v3524, %v3594
    %v3603 = vadd.f32 %v3525, %v3595
    %v3604 = vadd.f32 %v3526, %v3596
    %v3605 = vadd.f32 %v3527, %v3597
    %v3606 = vadd.f32 %v3528, %v3598
    %v3607 = vadd.f32 %v3529, %v3599
    %v3608 = vadd.f32 %v3530, %v3600
    %v3609 = vadd.f32 %v3531, %v3601
    %v3610 = vld [vmem:[#allocation8] sm:$0xff]
    %v3611 = vld [vmem:[#allocation8 + $0x8] sm:$0xff]
    %v3612 = vld [vmem:[#allocation8 + $0x10] sm:$0xff]
    %v3613 = vld [vmem:[#allocation8 + $0x18] sm:$0xff]
    %s3614 = scalar_lea.vmem [#allocation8], 32
    %v3615 = vld [vmem:[%s3614] sm:$0xff]
    %v3616 = vld [vmem:[%s3614 + $0x8] sm:$0xff]
    %v3617 = vld [vmem:[%s3614 + $0x10] sm:$0xff]
    %v3618 = vld [vmem:[%s3614 + $0x18] sm:$0xff]
    %v3620 = vsel %vm167, %v3615, 0
    %v3623 = vsel %vm167, %v3616, 0
    %v3626 = vsel %vm167, %v3617, 0
    %v3629 = vsel %vm167, %v3618, 0
    %3631 = vmatprep.subr.mxu0 %v3603
    %3632 = vmatpush1.msra.mxu0 %v3602
    %3633 = vmatprep.subr.mxu0 %v3605
    %3634 = vmatpush1.msra.mxu0 %v3604
    %3635 = vmatprep.subr.mxu0 %v3607
    %3636 = vmatpush1.msra.mxu0 %v3606
    %3637 = vmatprep.subr.mxu0 %v3609
    %3638 = vmatpush1.msra.mxu0 %v3608
    %3639 = vmatprep.subr.mxu0 0.0
    %3640 = vmatpush1.msra.mxu0 0.0
    %3641 = vmatprep.subr.mxu0 0.0
    %3642 = vmatpush1.msra.mxu0 0.0
    %3643 = vmatprep.subr.mxu0 0.0
    %3644 = vmatpush1.msra.mxu0 0.0
    %3645 = vmatprep.subr.mxu0 0.0
    %3646 = vmatpush1.msra.mxu0 0.0
    %3647 = vmatprep.subr.mxu0 0.0
    %3648 = vmatpush1.msra.mxu0 0.0
    %3649 = vmatprep.subr.mxu0 0.0
    %3650 = vmatpush1.msra.mxu0 0.0
    %3651 = vmatprep.subr.mxu0 0.0
    %3652 = vmatpush1.msra.mxu0 0.0
    %3653 = vmatprep.subr.mxu0 0.0
    %3654 = vmatpush1.msra.mxu0 0.0
    %3655 = vmatprep.subr.mxu0 0.0
    %3656 = vmatpush1.msra.mxu0 0.0
    %3657 = vmatprep.subr.mxu0 0.0
    %3658 = vmatpush1.msra.mxu0 0.0
    %3659 = vmatprep.subr.mxu0 0.0
    %3660 = vmatpush1.msra.mxu0 0.0
    %3661 = vmatprep.subr.mxu0 0.0
    %3662 = vmatpush1.msra.mxu0 0.0
    %3663 = vmatprep.subr.mxu0 0.0
    %3664 = vmatpush1.msra.mxu0 0.0
    %3665 = vmatprep.subr.mxu0 0.0
    %3666 = vmatpush1.msra.mxu0 0.0
    %3667 = vmatprep.subr.mxu0 0.0
    %3668 = vmatpush1.msra.mxu0 0.0
    %3669 = vmatprep.subr.mxu0 0.0
    %3670 = vmatpush1.msra.mxu0 0.0
    %3671 = vmatprep.subr.mxu0 0.0
    %3672 = vmatpush1.msra.mxu0 0.0
    %3673 = vmatprep.subr.mxu0 0.0
    %3674 = vmatpush1.msra.mxu0 0.0
    %3675 = vmatprep.subr.mxu0 0.0
    %3676 = vmatpush1.msra.mxu0 0.0
    %3677 = vmatprep.subr.mxu0 0.0
    %3678 = vmatpush1.msra.mxu0 0.0
    %3679 = vmatprep.subr.mxu0 0.0
    %3680 = vmatpush1.msra.mxu0 0.0
    %3681 = vmatprep.subr.mxu0 0.0
    %3682 = vmatpush1.msra.mxu0 0.0
    %3683 = vmatprep.subr.mxu0 0.0
    %3684 = vmatpush1.msra.mxu0 0.0
    %3685 = vmatprep.subr.mxu0 0.0
    %3686 = vmatpush1.msra.mxu0 0.0
    %3687 = vmatprep.subr.mxu0 0.0
    %3688 = vmatpush1.msra.mxu0 0.0
    %3689 = vmatprep.subr.mxu0 0.0
    %3690 = vmatpush1.msra.mxu0 0.0
    %3691 = vmatprep.subr.mxu0 0.0
    %3692 = vmatpush1.msra.mxu0 0.0
    %3693 = vmatprep.subr.mxu0 0.0
    %3694 = vmatpush1.msra.mxu0 0.0
    %3695 = vmatprep.mubr.f32.mxu0 0.0
    %3696 = vmatmul.mubr.f32.gmra.mrb[0].mxu0 %v3620
    %v3697 = vpop.f32.mrb[0].mxu0
    %v3698 = vadd.f32 0.0, %v3697
    %v3699 = vpop.f32.mrb[0].mxu0
    %v3700 = vadd.f32 0.0, %v3699
    %3701 = vmatprep.mubr.f32.mxu0 0.0
    %3702 = vmatmul.mubr.f32.gmra.mrb[0].mxu0 %v3623
    %v3703 = vpop.f32.mrb[0].mxu0
    %v3704 = vadd.f32 0.0, %v3703
    %v3705 = vpop.f32.mrb[0].mxu0
    %v3706 = vadd.f32 0.0, %v3705
    %3707 = vmatprep.mubr.f32.mxu0 0.0
    %3708 = vmatmul.mubr.f32.gmra.mrb[0].mxu0 %v3626
    %v3709 = vpop.f32.mrb[0].mxu0
    %v3710 = vadd.f32 0.0, %v3709
    %v3711 = vpop.f32.mrb[0].mxu0
    %v3712 = vadd.f32 0.0, %v3711
    %3713 = vmatprep.mubr.f32.mxu0 0.0
    %3714 = vmatmul.mubr.f32.gmra.mrb[0].mxu0 %v3629
    %v3715 = vpop.f32.mrb[0].mxu0
    %v3716 = vadd.f32 0.0, %v3715
    %v3717 = vpop.f32.mrb[0].mxu0
    %v3718 = vadd.f32 0.0, %v3717
    %3719 = vdwg.mxu0
    %v3721 = vsel %vm167, %v3610, 0
    %v3724 = vsel %vm167, %v3611, 0
    %v3727 = vsel %vm167, %v3612, 0
    %v3730 = vsel %vm167, %v3613, 0
    %3732 = vmatprep.subr.mxu0 %v3135
    %3733 = vmatpush1.msra.mxu0 %v3134
    %3734 = vmatprep.subr.mxu0 %v3137
    %3735 = vmatpush1.msra.mxu0 %v3136
    %3736 = vmatprep.subr.mxu0 %v3139
    %3737 = vmatpush1.msra.mxu0 %v3138
    %3738 = vmatprep.subr.mxu0 %v3141
    %3739 = vmatpush1.msra.mxu0 %v3140
    %3740 = vmatprep.subr.mxu0 0.0
    %3741 = vmatpush1.msra.mxu0 0.0
    %3742 = vmatprep.subr.mxu0 0.0
    %3743 = vmatpush1.msra.mxu0 0.0
    %3744 = vmatprep.subr.mxu0 0.0
    %3745 = vmatpush1.msra.mxu0 0.0
    %3746 = vmatprep.subr.mxu0 0.0
    %3747 = vmatpush1.msra.mxu0 0.0
    %3748 = vmatprep.subr.mxu0 0.0
    %3749 = vmatpush1.msra.mxu0 0.0
    %3750 = vmatprep.subr.mxu0 0.0
    %3751 = vmatpush1.msra.mxu0 0.0
    %3752 = vmatprep.subr.mxu0 0.0
    %3753 = vmatpush1.msra.mxu0 0.0
    %3754 = vmatprep.subr.mxu0 0.0
    %3755 = vmatpush1.msra.mxu0 0.0
    %3756 = vmatprep.subr.mxu0 0.0
    %3757 = vmatpush1.msra.mxu0 0.0
    %3758 = vmatprep.subr.mxu0 0.0
    %3759 = vmatpush1.msra.mxu0 0.0
    %3760 = vmatprep.subr.mxu0 0.0
    %3761 = vmatpush1.msra.mxu0 0.0
    %3762 = vmatprep.subr.mxu0 0.0
    %3763 = vmatpush1.msra.mxu0 0.0
    %3764 = vmatprep.subr.mxu0 0.0
    %3765 = vmatpush1.msra.mxu0 0.0
    %3766 = vmatprep.subr.mxu0 0.0
    %3767 = vmatpush1.msra.mxu0 0.0
    %3768 = vmatprep.subr.mxu0 0.0
    %3769 = vmatpush1.msra.mxu0 0.0
    %3770 = vmatprep.subr.mxu0 0.0
    %3771 = vmatpush1.msra.mxu0 0.0
    %3772 = vmatprep.subr.mxu0 0.0
    %3773 = vmatpush1.msra.mxu0 0.0
    %3774 = vmatprep.subr.mxu0 0.0
    %3775 = vmatpush1.msra.mxu0 0.0
    %3776 = vmatprep.subr.mxu0 0.0
    %3777 = vmatpush1.msra.mxu0 0.0
    %3778 = vmatprep.subr.mxu0 0.0
    %3779 = vmatpush1.msra.mxu0 0.0
    %3780 = vmatprep.subr.mxu0 0.0
    %3781 = vmatpush1.msra.mxu0 0.0
    %3782 = vmatprep.subr.mxu0 0.0
    %3783 = vmatpush1.msra.mxu0 0.0
    %3784 = vmatprep.subr.mxu0 0.0
    %3785 = vmatpush1.msra.mxu0 0.0
    %3786 = vmatprep.subr.mxu0 0.0
    %3787 = vmatpush1.msra.mxu0 0.0
    %3788 = vmatprep.subr.mxu0 0.0
    %3789 = vmatpush1.msra.mxu0 0.0
    %3790 = vmatprep.subr.mxu0 0.0
    %3791 = vmatpush1.msra.mxu0 0.0
    %3792 = vmatprep.subr.mxu0 0.0
    %3793 = vmatpush1.msra.mxu0 0.0
    %3794 = vmatprep.subr.mxu0 0.0
    %3795 = vmatpush1.msra.mxu0 0.0
    %3796 = vmatprep.mubr.f32.mxu0 0.0
    %3797 = vmatmul.mubr.f32.gmra.mrb[0].mxu0 %v3721
    %v3798 = vpop.f32.mrb[0].mxu0
    %v3799 = vadd.f32 %v3698, %v3798
    %v3800 = vpop.f32.mrb[0].mxu0
    %v3801 = vadd.f32 %v3700, %v3800
    %3802 = vmatprep.mubr.f32.mxu0 0.0
    %3803 = vmatmul.mubr.f32.gmra.mrb[0].mxu0 %v3724
    %v3804 = vpop.f32.mrb[0].mxu0
    %v3805 = vadd.f32 %v3704, %v3804
    %v3806 = vpop.f32.mrb[0].mxu0
    %v3807 = vadd.f32 %v3706, %v3806
    %3808 = vmatprep.mubr.f32.mxu0 0.0
    %3809 = vmatmul.mubr.f32.gmra.mrb[0].mxu0 %v3727
    %v3810 = vpop.f32.mrb[0].mxu0
    %v3811 = vadd.f32 %v3710, %v3810
    %v3812 = vpop.f32.mrb[0].mxu0
    %v3813 = vadd.f32 %v3712, %v3812
    %3814 = vmatprep.mubr.f32.mxu0 0.0
    %3815 = vmatmul.mubr.f32.gmra.mrb[0].mxu0 %v3730
    %v3816 = vpop.f32.mrb[0].mxu0
    %v3817 = vadd.f32 %v3716, %v3816
    %v3818 = vpop.f32.mrb[0].mxu0
    %v3819 = vadd.f32 %v3718, %v3818
    %3820 = vdwg.mxu0
    %v3821 = vld [vmem:[%s7] sm:$0xff]
    %v3822 = vld [vmem:[%s7 + $0x8] sm:$0xff]
    %v3823 = vld [vmem:[%s7 + $0x10] sm:$0xff]
    %v3824 = vld [vmem:[%s7 + $0x18] sm:$0xff]
    %3826 = vset.pattern.permute.xlu0 0
    %3827 = vperm.xlu0 %3826, %v3821
    %v3828 = vpop.permute.xlu0 %3827
    %3831 = vset.pattern.permute.xlu0 0
    %3832 = vperm.xlu0 %3831, %v3822
    %v3833 = vpop.permute.xlu0 %3832
    %3836 = vset.pattern.permute.xlu0 0
    %3837 = vperm.xlu0 %3836, %v3823
    %v3838 = vpop.permute.xlu0 %3837
    %3841 = vset.pattern.permute.xlu0 0
    %3842 = vperm.xlu0 %3841, %v3824
    %v3843 = vpop.permute.xlu0 %3842
    %v3845 = vadd.f32 %v3799, %v3828
    %v3846 = vadd.f32 %v3801, %v3828
    %v3847 = vadd.f32 %v3805, %v3833
    %v3848 = vadd.f32 %v3807, %v3833
    %v3849 = vadd.f32 %v3811, %v3838
    %v3850 = vadd.f32 %v3813, %v3838
    %v3851 = vadd.f32 %v3817, %v3843
    %v3852 = vadd.f32 %v3819, %v3843
    %v3853 = vadd.f32 %v3845, %v3846
    %3854 = vadd.xlane.f32.xlu0 %v3853
    %v3855 = vpop.xlane.xlu0 %3854
    %v3856 = vadd.f32 %v3847, %v3848
    %3857 = vadd.xlane.f32.xlu0 %v3856
    %v3858 = vpop.xlane.xlu0 %3857
    %v3859 = vadd.f32 %v3849, %v3850
    %3860 = vadd.xlane.f32.xlu0 %v3859
    %v3861 = vpop.xlane.xlu0 %3860
    %v3862 = vadd.f32 %v3851, %v3852
    %3863 = vadd.xlane.f32.xlu0 %v3862
    %v3864 = vpop.xlane.xlu0 %3863
    %v3865 = vmul.f32 %v3855, 0.00390625
    %v3866 = vmul.f32 %v3858, 0.00390625
    %v3867 = vmul.f32 %v3861, 0.00390625
    %v3868 = vmul.f32 %v3864, 0.00390625
    %v3869 = vld [vmem:[%s8] sm:$0xff]
    %v3870 = vld [vmem:[%s8 + $0x8] sm:$0xff]
    %v3871 = vld [vmem:[%s8 + $0x10] sm:$0xff]
    %v3872 = vld [vmem:[%s8 + $0x18] sm:$0xff]
    %v3873 = vmul.f32 %v3869, %v3865
    %v3874 = vmul.f32 %v3870, %v3866
    %v3875 = vmul.f32 %v3871, %v3867
    %v3876 = vmul.f32 %v3872, %v3868
    %vm3877 = vcmask 15360
    %v3878 = vsel %vm3877, %v3873, 0.0
    %v3879 = vsel %vm3877, %v3874, 0.0
    %v3880 = vadd.f32 %v3878, %v3879
    %v3881 = vsel %vm3877, %v3875, 0.0
    %v3882 = vadd.f32 %v3880, %v3881
    %v3883 = vsel %vm3877, %v3876, 0.0
    %v3884 = vadd.f32 %v3882, %v3883
    %v3885 = vrot.slane %v3884, 4
    %v3886 = vadd.f32 %v3884, %v3885
    %v3887 = vrot.slane %v3886, 2
    %v3888 = vadd.f32 %v3886, %v3887
    %v3889 = vrot.slane %v3888, 1
    %v3890 = vadd.f32 %v3888, %v3889
    %v3891 = vld [vmem:[%s9] sm:$0x1]
    %v3892 = vadd.f32 %v3890, %v3891
    %v3893 = vmax.f32 %v3892, 0.0
    %v3894 = vld [vmem:[%s10] sm:$0xff]
    %v3895 = vld [vmem:[%s10 + $0x8] sm:$0xff]
    %v3896 = vld [vmem:[%s10 + $0x10] sm:$0xff]
    %v3897 = vld [vmem:[%s10 + $0x18] sm:$0xff]
    %v3898 = vlaneseq
    %v3899 = vshrl.u32 %v3898, 7
    %v3900 = vsub.s32 0, %v3899
    %v3901 = vrot.slane %v3893, %v3900
    %v3902 = vmul.f32 %v3894, %v3901
    %v3903 = vmul.f32 %v3895, %v3901
    %v3904 = vmul.f32 %v3896, %v3901
    %v3905 = vmul.f32 %v3897, %v3901
    %v3906 = vsel %vm3877, %v3902, 0.0
    %3907 = vadd.xlane.f32.xlu0 %v3906
    %v3908 = vpop.xlane.xlu0 %3907
    %v3909 = vsel %vm3877, %v3903, 0.0
    %3910 = vadd.xlane.f32.xlu0 %v3909
    %v3911 = vpop.xlane.xlu0 %3910
    %v3912 = vsel %vm3877, %v3904, 0.0
    %3913 = vadd.xlane.f32.xlu0 %v3912
    %v3914 = vpop.xlane.xlu0 %3913
    %v3915 = vsel %vm3877, %v3905, 0.0
    %3916 = vadd.xlane.f32.xlu0 %v3915
    %v3917 = vpop.xlane.xlu0 %3916
    %v3918 = vld [vmem:[%s11] sm:$0xff]
    %v3919 = vld [vmem:[%s11 + $0x8] sm:$0xff]
    %v3920 = vld [vmem:[%s11 + $0x10] sm:$0xff]
    %v3921 = vld [vmem:[%s11 + $0x18] sm:$0xff]
    %v3922 = vadd.f32 %v3908, %v3918
    %v3923 = vadd.f32 %v3911, %v3919
    %v3924 = vadd.f32 %v3914, %v3920
    %v3925 = vadd.f32 %v3917, %v3921
    %v3926 = vxor.u32 %v3922, 2147483648
    %v3927 = vxor.u32 %v3923, 2147483648
    %v3928 = vxor.u32 %v3924, 2147483648
    %v3929 = vxor.u32 %v3925, 2147483648
    %v3930 = vmul.f32 %v3926, 1.442695
    %v3931 = vpow.pop %v3930
    %v3932 = vmul.f32 %v3927, 1.442695
    %v3933 = vpow.pop %v3932
    %v3934 = vmul.f32 %v3928, 1.442695
    %v3935 = vpow.pop %v3934
    %v3936 = vmul.f32 %v3929, 1.442695
    %v3937 = vpow.pop %v3936
    %v3938 = vadd.f32 %v3931, 1.0
    %v3939 = vadd.f32 %v3933, 1.0
    %v3940 = vadd.f32 %v3935, 1.0
    %v3941 = vadd.f32 %v3937, 1.0
    %v3942 = vrcp.pop %v3938
    %v3943 = vmul.f32 1.0, %v3942
    %v3944 = vrcp.pop %v3939
    %v3945 = vmul.f32 1.0, %v3944
    %v3946 = vrcp.pop %v3940
    %v3947 = vmul.f32 1.0, %v3946
    %v3948 = vrcp.pop %v3941
    %v3949 = vmul.f32 1.0, %v3948
    %3951 = vset.pattern.permute.xlu0 0
    %3952 = vperm.xlu0 %3951, %v3943
    %v3953 = vpop.permute.xlu0 %3952
    %3956 = vset.pattern.permute.xlu0 0
    %3957 = vperm.xlu0 %3956, %v3945
    %v3958 = vpop.permute.xlu0 %3957
    %3961 = vset.pattern.permute.xlu0 0
    %3962 = vperm.xlu0 %3961, %v3947
    %v3963 = vpop.permute.xlu0 %3962
    %3966 = vset.pattern.permute.xlu0 0
    %3967 = vperm.xlu0 %3966, %v3949
    %v3968 = vpop.permute.xlu0 %3967
    %v3970 = vmul.f32 %v3845, %v3953
    %v3971 = vmul.f32 %v3846, %v3953
    %v3972 = vmul.f32 %v3847, %v3958
    %v3973 = vmul.f32 %v3848, %v3958
    %v3974 = vmul.f32 %v3849, %v3963
    %v3975 = vmul.f32 %v3850, %v3963
    %v3976 = vmul.f32 %v3851, %v3968
    %v3977 = vmul.f32 %v3852, %v3968
    %v3978 = vmul.f32 %v3970, %v3970
    %v3979 = vmul.f32 %v3971, %v3971
    %v3980 = vmul.f32 %v3972, %v3972
    %v3981 = vmul.f32 %v3973, %v3973
    %v3982 = vmul.f32 %v3974, %v3974
    %v3983 = vmul.f32 %v3975, %v3975
    %v3984 = vmul.f32 %v3976, %v3976
    %v3985 = vmul.f32 %v3977, %v3977
    %v3986 = vmul.f32 %v3978, %v3970
    %v3987 = vmul.f32 %v3979, %v3971
    %v3988 = vmul.f32 %v3980, %v3972
    %v3989 = vmul.f32 %v3981, %v3973
    %v3990 = vmul.f32 %v3982, %v3974
    %v3991 = vmul.f32 %v3983, %v3975
    %v3992 = vmul.f32 %v3984, %v3976
    %v3993 = vmul.f32 %v3985, %v3977
    %v3994 = vmul.f32 %v3986, 0.044715
    %v3995 = vmul.f32 %v3987, 0.044715
    %v3996 = vmul.f32 %v3988, 0.044715
    %v3997 = vmul.f32 %v3989, 0.044715
    %v3998 = vmul.f32 %v3990, 0.044715
    %v3999 = vmul.f32 %v3991, 0.044715
    %v4000 = vmul.f32 %v3992, 0.044715
    %v4001 = vmul.f32 %v3993, 0.044715
    %v4002 = vadd.f32 %v3970, %v3994
    %v4003 = vadd.f32 %v3971, %v3995
    %v4004 = vadd.f32 %v3972, %v3996
    %v4005 = vadd.f32 %v3973, %v3997
    %v4006 = vadd.f32 %v3974, %v3998
    %v4007 = vadd.f32 %v3975, %v3999
    %v4008 = vadd.f32 %v3976, %v4000
    %v4009 = vadd.f32 %v3977, %v4001
    %v4010 = vmul.f32 %v4002, 0.7978846
    %v4011 = vmul.f32 %v4003, 0.7978846
    %v4012 = vmul.f32 %v4004, 0.7978846
    %v4013 = vmul.f32 %v4005, 0.7978846
    %v4014 = vmul.f32 %v4006, 0.7978846
    %v4015 = vmul.f32 %v4007, 0.7978846
    %v4016 = vmul.f32 %v4008, 0.7978846
    %v4017 = vmul.f32 %v4009, 0.7978846
    %v4018 = vtanh.pop %v4010
    %v4019 = vtanh.pop %v4011
    %v4020 = vtanh.pop %v4012
    %v4021 = vtanh.pop %v4013
    %v4022 = vtanh.pop %v4014
    %v4023 = vtanh.pop %v4015
    %v4024 = vtanh.pop %v4016
    %v4025 = vtanh.pop %v4017
    %v4026 = vadd.f32 %v4018, 1.0
    %v4027 = vadd.f32 %v4019, 1.0
    %v4028 = vadd.f32 %v4020, 1.0
    %v4029 = vadd.f32 %v4021, 1.0
    %v4030 = vadd.f32 %v4022, 1.0
    %v4031 = vadd.f32 %v4023, 1.0
    %v4032 = vadd.f32 %v4024, 1.0
    %v4033 = vadd.f32 %v4025, 1.0
    %v4034 = vmul.f32 %v3970, %v4026
    %v4035 = vmul.f32 %v3971, %v4027
    %v4036 = vmul.f32 %v3972, %v4028
    %v4037 = vmul.f32 %v3973, %v4029
    %v4038 = vmul.f32 %v3974, %v4030
    %v4039 = vmul.f32 %v3975, %v4031
    %v4040 = vmul.f32 %v3976, %v4032
    %v4041 = vmul.f32 %v3977, %v4033
    %v4042 = vld [vmem:[%s12] sm:$0xff]
    %v4043 = vld [vmem:[%s12 + $0x8] sm:$0xff]
    %v4044 = vld [vmem:[%s12 + $0x10] sm:$0xff]
    %v4045 = vld [vmem:[%s12 + $0x18] sm:$0xff]
    %4047 = vset.pattern.permute.xlu0 0
    %4048 = vperm.xlu0 %4047, %v4042
    %v4049 = vpop.permute.xlu0 %4048
    %4052 = vset.pattern.permute.xlu0 0
    %4053 = vperm.xlu0 %4052, %v4043
    %v4054 = vpop.permute.xlu0 %4053
    %4057 = vset.pattern.permute.xlu0 0
    %4058 = vperm.xlu0 %4057, %v4044
    %v4059 = vpop.permute.xlu0 %4058
    %4062 = vset.pattern.permute.xlu0 0
    %4063 = vperm.xlu0 %4062, %v4045
    %v4064 = vpop.permute.xlu0 %4063
    %v4066 = vmul.f32 %v4034, %v4049
    %v4067 = vmul.f32 %v4035, %v4049
    %v4068 = vmul.f32 %v4036, %v4054
    %v4069 = vmul.f32 %v4037, %v4054
    %v4070 = vmul.f32 %v4038, %v4059
    %v4071 = vmul.f32 %v4039, %v4059
    %v4072 = vmul.f32 %v4040, %v4064
    %v4073 = vmul.f32 %v4041, %v4064
    %v4074 = vld [vmem:[%s13] sm:$0xff]
    %v4075 = vld [vmem:[%s13 + $0x8] sm:$0xff]
    %v4076 = vld [vmem:[%s13 + $0x10] sm:$0xff]
    %v4077 = vld [vmem:[%s13 + $0x18] sm:$0xff]
    %4079 = vset.pattern.permute.xlu0 0
    %4080 = vperm.xlu0 %4079, %v4074
    %v4081 = vpop.permute.xlu0 %4080
    %4084 = vset.pattern.permute.xlu0 0
    %4085 = vperm.xlu0 %4084, %v4075
    %v4086 = vpop.permute.xlu0 %4085
    %4089 = vset.pattern.permute.xlu0 0
    %4090 = vperm.xlu0 %4089, %v4076
    %v4091 = vpop.permute.xlu0 %4090
    %4094 = vset.pattern.permute.xlu0 0
    %4095 = vperm.xlu0 %4094, %v4077
    %v4096 = vpop.permute.xlu0 %4095
    %v4098 = vadd.f32 %v4066, %v4081
    %v4099 = vadd.f32 %v4067, %v4081
    %v4100 = vadd.f32 %v4068, %v4086
    %v4101 = vadd.f32 %v4069, %v4086
    %v4102 = vadd.f32 %v4070, %v4091
    %v4103 = vadd.f32 %v4071, %v4091
    %v4104 = vadd.f32 %v4072, %v4096
    %v4105 = vadd.f32 %v4073, %v4096
    %v4106 = vadd.f32 %v4098, %v103
    %v4107 = vadd.f32 %v4099, %v104
    %v4108 = vadd.f32 %v4100, %v105
    %v4109 = vadd.f32 %v4101, %v106
    %v4110 = vadd.f32 %v4102, %v107
    %v4111 = vadd.f32 %v4103, %v108
    %v4112 = vadd.f32 %v4104, %v109
    %v4113 = vadd.f32 %v4105, %v110
    %4114 = vst [vmem:[#allocation10] sm:$0xff] %v4106
    %4115 = vst [vmem:[#allocation10 + $0x8] sm:$0xff] %v4107
    %4116 = vst [vmem:[#allocation10 + $0x10] sm:$0xff] %v4108
    %4117 = vst [vmem:[#allocation10 + $0x18] sm:$0xff] %v4109
    %4118 = vst [vmem:[#allocation10 + $0x20] sm:$0xff] %v4110
    %4119 = vst [vmem:[#allocation10 + $0x28] sm:$0xff] %v4111
    %4120 = vst [vmem:[#allocation10 + $0x30] sm:$0xff] %v4112
    %4121 = vst [vmem:[#allocation10 + $0x38] sm:$0xff] %v4113
    %s4122 = scalar_lea.vmem [#allocation2], 64
    %v4123 = vld [vmem:[%s4122] sm:$0xff]
    %v4124 = vld [vmem:[%s4122 + $0x8] sm:$0xff]
    %v4125 = vld [vmem:[%s4122 + $0x10] sm:$0xff]
    %v4126 = vld [vmem:[%s4122 + $0x18] sm:$0xff]
    %v4127 = vld [vmem:[%s4122 + $0x20] sm:$0xff]
    %v4128 = vld [vmem:[%s4122 + $0x28] sm:$0xff]
    %v4129 = vld [vmem:[%s4122 + $0x30] sm:$0xff]
    %v4130 = vld [vmem:[%s4122 + $0x38] sm:$0xff]
    %v4131 = vld [vmem:[%s3] sm:$0xff]
    %v4132 = vld [vmem:[%s3 + $0x8] sm:$0xff]
    %v4133 = vld [vmem:[%s3 + $0x10] sm:$0xff]
    %v4134 = vld [vmem:[%s3 + $0x18] sm:$0xff]
    %v4135 = vld [vmem:[%s2] sm:$0xff]
    %v4136 = vld [vmem:[%s2 + $0x8] sm:$0xff]
    %v4137 = vld [vmem:[%s2 + $0x10] sm:$0xff]
    %v4138 = vld [vmem:[%s2 + $0x18] sm:$0xff]
    %4139 = vrot.lane.b32.xlu0 %v4123, 17
    %v4140 = vpop.permute.xlu0 %4139
    %4141 = vrot.lane.b32.xlu0 %v4125, 17
    %v4142 = vpop.permute.xlu0 %4141
    %4143 = vrot.lane.b32.xlu0 %v4127, 17
    %v4144 = vpop.permute.xlu0 %4143
    %4145 = vrot.lane.b32.xlu0 %v4129, 17
    %v4146 = vpop.permute.xlu0 %4145
    %4147 = vrot.lane.b32.xlu0 %v4124, 17
    %v4148 = vpop.permute.xlu0 %4147
    %4149 = vrot.lane.b32.xlu0 %v4126, 17
    %v4150 = vpop.permute.xlu0 %4149
    %4151 = vrot.lane.b32.xlu0 %v4128, 17
    %v4152 = vpop.permute.xlu0 %4151
    %4153 = vrot.lane.b32.xlu0 %v4130, 17
    %v4154 = vpop.permute.xlu0 %4153
    %v4155 = vsel %vm137, %v4140, %v4148
    %v4156 = vsel %vm137, %v4142, %v4150
    %v4157 = vsel %vm137, %v4144, %v4152
    %v4158 = vsel %vm137, %v4146, %v4154
    %v4159 = vsel %vm137, %v4148, %v4140
    %v4160 = vsel %vm137, %v4150, %v4142
    %v4161 = vsel %vm137, %v4152, %v4144
    %v4162 = vsel %vm137, %v4154, %v4146
    %v4163 = vld [vmem:[%s146] ss:$8 sm:$0x3]
    %v4165 = vlaneseq
    %v4166 = vshrl.u32 %v4165, 7
    %v4167 = vsub.s32 0, %v4166
    %v4168 = vrot.slane %v4163, %v4167
    %v4169 = vlaneseq
    %v4170 = vshrl.u32 %v4169, 7
    %v4171 = vsub.s32 1, %v4170
    %v4172 = vrot.slane %v4163, %v4171
    %v4175 = vmul.f32 %v4159, %v4168
    %v4176 = vmul.f32 %v4155, %v4172
    %v4177 = vmul.f32 %v4160, %v4168
    %v4178 = vmul.f32 %v4156, %v4172
    %v4179 = vmul.f32 %v4161, %v4168
    %v4180 = vmul.f32 %v4157, %v4172
    %v4181 = vmul.f32 %v4162, %v4168
    %v4182 = vmul.f32 %v4158, %v4172
    %v4184 = vsel %vm167, %v4135, 0
    %v4187 = vsel %vm167, %v4136, 0
    %v4190 = vsel %vm167, %v4137, 0
    %v4193 = vsel %vm167, %v4138, 0
    %4195 = vmatprep.subr.mxu0 %v4176
    %4196 = vmatpush1.msra.mxu0 %v4175
    %4197 = vmatprep.subr.mxu0 %v4178
    %4198 = vmatpush1.msra.mxu0 %v4177
    %4199 = vmatprep.subr.mxu0 %v4180
    %4200 = vmatpush1.msra.mxu0 %v4179
    %4201 = vmatprep.subr.mxu0 %v4182
    %4202 = vmatpush1.msra.mxu0 %v4181
    %4203 = vmatprep.subr.mxu0 0.0
    %4204 = vmatpush1.msra.mxu0 0.0
    %4205 = vmatprep.subr.mxu0 0.0
    %4206 = vmatpush1.msra.mxu0 0.0
    %4207 = vmatprep.subr.mxu0 0.0
    %4208 = vmatpush1.msra.mxu0 0.0
    %4209 = vmatprep.subr.mxu0 0.0
    %4210 = vmatpush1.msra.mxu0 0.0
    %4211 = vmatprep.subr.mxu0 0.0
    %4212 = vmatpush1.msra.mxu0 0.0
    %4213 = vmatprep.subr.mxu0 0.0
    %4214 = vmatpush1.msra.mxu0 0.0
    %4215 = vmatprep.subr.mxu0 0.0
    %4216 = vmatpush1.msra.mxu0 0.0
    %4217 = vmatprep.subr.mxu0 0.0
    %4218 = vmatpush1.msra.mxu0 0.0
    %4219 = vmatprep.subr.mxu0 0.0
    %4220 = vmatpush1.msra.mxu0 0.0
    %4221 = vmatprep.subr.mxu0 0.0
    %4222 = vmatpush1.msra.mxu0 0.0
    %4223 = vmatprep.subr.mxu0 0.0
    %4224 = vmatpush1.msra.mxu0 0.0
    %4225 = vmatprep.subr.mxu0 0.0
    %4226 = vmatpush1.msra.mxu0 0.0
    %4227 = vmatprep.subr.mxu0 0.0
    %4228 = vmatpush1.msra.mxu0 0.0
    %4229 = vmatprep.subr.mxu0 0.0
    %4230 = vmatpush1.msra.mxu0 0.0
    %4231 = vmatprep.subr.mxu0 0.0
    %4232 = vmatpush1.msra.mxu0 0.0
    %4233 = vmatprep.subr.mxu0 0.0
    %4234 = vmatpush1.msra.mxu0 0.0
    %4235 = vmatprep.subr.mxu0 0.0
    %4236 = vmatpush1.msra.mxu0 0.0
    %4237 = vmatprep.subr.mxu0 0.0
    %4238 = vmatpush1.msra.mxu0 0.0
    %4239 = vmatprep.subr.mxu0 0.0
    %4240 = vmatpush1.msra.mxu0 0.0
    %4241 = vmatprep.subr.mxu0 0.0
    %4242 = vmatpush1.msra.mxu0 0.0
    %4243 = vmatprep.subr.mxu0 0.0
    %4244 = vmatpush1.msra.mxu0 0.0
    %4245 = vmatprep.subr.mxu0 0.0
    %4246 = vmatpush1.msra.mxu0 0.0
    %4247 = vmatprep.subr.mxu0 0.0
    %4248 = vmatpush1.msra.mxu0 0.0
    %4249 = vmatprep.subr.mxu0 0.0
    %4250 = vmatpush1.msra.mxu0 0.0
    %4251 = vmatprep.subr.mxu0 0.0
    %4252 = vmatpush1.msra.mxu0 0.0
    %4253 = vmatprep.subr.mxu0 0.0
    %4254 = vmatpush1.msra.mxu0 0.0
    %4255 = vmatprep.subr.mxu0 0.0
    %4256 = vmatpush1.msra.mxu0 0.0
    %4257 = vmatprep.subr.mxu0 0.0
    %4258 = vmatpush1.msra.mxu0 0.0
    %4259 = vmatprep.mubr.f32.mxu0 0.0
    %4260 = vmatmul.mubr.f32.gmra.mrb[0].mxu0 %v4184
    %v4261 = vpop.f32.mrb[0].mxu0
    %v4262 = vadd.f32 0.0, %v4261
    %v4263 = vpop.f32.mrb[0].mxu0
    %v4264 = vadd.f32 0.0, %v4263
    %4265 = vmatprep.mubr.f32.mxu0 0.0
    %4266 = vmatmul.mubr.f32.gmra.mrb[0].mxu0 %v4187
    %v4267 = vpop.f32.mrb[0].mxu0
    %v4268 = vadd.f32 0.0, %v4267
    %v4269 = vpop.f32.mrb[0].mxu0
    %v4270 = vadd.f32 0.0, %v4269
    %4271 = vmatprep.mubr.f32.mxu0 0.0
    %4272 = vmatmul.mubr.f32.gmra.mrb[0].mxu0 %v4190
    %v4273 = vpop.f32.mrb[0].mxu0
    %v4274 = vadd.f32 0.0, %v4273
    %v4275 = vpop.f32.mrb[0].mxu0
    %v4276 = vadd.f32 0.0, %v4275
    %4277 = vmatprep.mubr.f32.mxu0 0.0
    %4278 = vmatmul.mubr.f32.gmra.mrb[0].mxu0 %v4193
    %v4279 = vpop.f32.mrb[0].mxu0
    %v4280 = vadd.f32 0.0, %v4279
    %v4281 = vpop.f32.mrb[0].mxu0
    %v4282 = vadd.f32 0.0, %v4281
    %4283 = vdwg.mxu0
    %4285 = vset.pattern.permute.xlu0 0
    %4286 = vperm.xlu0 %4285, %v4131
    %v4287 = vpop.permute.xlu0 %4286
    %4290 = vset.pattern.permute.xlu0 0
    %4291 = vperm.xlu0 %4290, %v4132
    %v4292 = vpop.permute.xlu0 %4291
    %4295 = vset.pattern.permute.xlu0 0
    %4296 = vperm.xlu0 %4295, %v4133
    %v4297 = vpop.permute.xlu0 %4296
    %4300 = vset.pattern.permute.xlu0 0
    %4301 = vperm.xlu0 %4300, %v4134
    %v4302 = vpop.permute.xlu0 %4301
    %v4304 = vadd.f32 %v4287, %v4262
    %v4305 = vadd.f32 %v4287, %v4264
    %v4306 = vadd.f32 %v4292, %v4268
    %v4307 = vadd.f32 %v4292, %v4270
    %v4308 = vadd.f32 %v4297, %v4274
    %v4309 = vadd.f32 %v4297, %v4276
    %v4310 = vadd.f32 %v4302, %v4280
    %v4311 = vadd.f32 %v4302, %v4282
    %v4312 = vld [vmem:[%s297] sm:$0xff]
    %v4313 = vld [vmem:[%s297 + $0x8] sm:$0xff]
    %v4314 = vld [vmem:[%s297 + $0x10] sm:$0xff]
    %v4315 = vld [vmem:[%s297 + $0x18] sm:$0xff]
    %4316 = vrot.lane.b32.xlu0 %v4123, 16
    %v4317 = vpop.permute.xlu0 %4316
    %4318 = vrot.lane.b32.xlu0 %v4125, 16
    %v4319 = vpop.permute.xlu0 %4318
    %4320 = vrot.lane.b32.xlu0 %v4127, 16
    %v4321 = vpop.permute.xlu0 %4320
    %4322 = vrot.lane.b32.xlu0 %v4129, 16
    %v4323 = vpop.permute.xlu0 %4322
    %4324 = vrot.lane.b32.xlu0 %v4124, 16
    %v4325 = vpop.permute.xlu0 %4324
    %4326 = vrot.lane.b32.xlu0 %v4126, 16
    %v4327 = vpop.permute.xlu0 %4326
    %4328 = vrot.lane.b32.xlu0 %v4128, 16
    %v4329 = vpop.permute.xlu0 %4328
    %4330 = vrot.lane.b32.xlu0 %v4130, 16
    %v4331 = vpop.permute.xlu0 %4330
    %v4332 = vsel %vm318, %v4317, %v4325
    %v4333 = vsel %vm318, %v4319, %v4327
    %v4334 = vsel %vm318, %v4321, %v4329
    %v4335 = vsel %vm318, %v4323, %v4331
    %v4336 = vsel %vm318, %v4325, %v4317
    %v4337 = vsel %vm318, %v4327, %v4319
    %v4338 = vsel %vm318, %v4329, %v4321
    %v4339 = vsel %vm318, %v4331, %v4323
    %v4340 = vld [vmem:[%s327] ss:$8 sm:$0x3]
    %v4342 = vlaneseq
    %v4343 = vshrl.u32 %v4342, 7
    %v4344 = vsub.s32 0, %v4343
    %v4345 = vrot.slane %v4340, %v4344
    %v4346 = vlaneseq
    %v4347 = vshrl.u32 %v4346, 7
    %v4348 = vsub.s32 1, %v4347
    %v4349 = vrot.slane %v4340, %v4348
    %v4352 = vmul.f32 %v4336, %v4345
    %v4353 = vmul.f32 %v4332, %v4349
    %v4354 = vmul.f32 %v4337, %v4345
    %v4355 = vmul.f32 %v4333, %v4349
    %v4356 = vmul.f32 %v4338, %v4345
    %v4357 = vmul.f32 %v4334, %v4349
    %v4358 = vmul.f32 %v4339, %v4345
    %v4359 = vmul.f32 %v4335, %v4349
    %v4361 = vsel %vm167, %v4312, 0
    %v4364 = vsel %vm167, %v4313, 0
    %v4367 = vsel %vm167, %v4314, 0
    %v4370 = vsel %vm167, %v4315, 0
    %4372 = vmatprep.subr.mxu0 %v4353
    %4373 = vmatpush1.msra.mxu0 %v4352
    %4374 = vmatprep.subr.mxu0 %v4355
    %4375 = vmatpush1.msra.mxu0 %v4354
    %4376 = vmatprep.subr.mxu0 %v4357
    %4377 = vmatpush1.msra.mxu0 %v4356
    %4378 = vmatprep.subr.mxu0 %v4359
    %4379 = vmatpush1.msra.mxu0 %v4358
    %4380 = vmatprep.subr.mxu0 0.0
    %4381 = vmatpush1.msra.mxu0 0.0
    %4382 = vmatprep.subr.mxu0 0.0
    %4383 = vmatpush1.msra.mxu0 0.0
    %4384 = vmatprep.subr.mxu0 0.0
    %4385 = vmatpush1.msra.mxu0 0.0
    %4386 = vmatprep.subr.mxu0 0.0
    %4387 = vmatpush1.msra.mxu0 0.0
    %4388 = vmatprep.subr.mxu0 0.0
    %4389 = vmatpush1.msra.mxu0 0.0
    %4390 = vmatprep.subr.mxu0 0.0
    %4391 = vmatpush1.msra.mxu0 0.0
    %4392 = vmatprep.subr.mxu0 0.0
    %4393 = vmatpush1.msra.mxu0 0.0
    %4394 = vmatprep.subr.mxu0 0.0
    %4395 = vmatpush1.msra.mxu0 0.0
    %4396 = vmatprep.subr.mxu0 0.0
    %4397 = vmatpush1.msra.mxu0 0.0
    %4398 = vmatprep.subr.mxu0 0.0
    %4399 = vmatpush1.msra.mxu0 0.0
    %4400 = vmatprep.subr.mxu0 0.0
    %4401 = vmatpush1.msra.mxu0 0.0
    %4402 = vmatprep.subr.mxu0 0.0
    %4403 = vmatpush1.msra.mxu0 0.0
    %4404 = vmatprep.subr.mxu0 0.0
    %4405 = vmatpush1.msra.mxu0 0.0
    %4406 = vmatprep.subr.mxu0 0.0
    %4407 = vmatpush1.msra.mxu0 0.0
    %4408 = vmatprep.subr.mxu0 0.0
    %4409 = vmatpush1.msra.mxu0 0.0
    %4410 = vmatprep.subr.mxu0 0.0
    %4411 = vmatpush1.msra.mxu0 0.0
    %4412 = vmatprep.subr.mxu0 0.0
    %4413 = vmatpush1.msra.mxu0 0.0
    %4414 = vmatprep.subr.mxu0 0.0
    %4415 = vmatpush1.msra.mxu0 0.0
    %4416 = vmatprep.subr.mxu0 0.0
    %4417 = vmatpush1.msra.mxu0 0.0
    %4418 = vmatprep.subr.mxu0 0.0
    %4419 = vmatpush1.msra.mxu0 0.0
    %4420 = vmatprep.subr.mxu0 0.0
    %4421 = vmatpush1.msra.mxu0 0.0
    %4422 = vmatprep.subr.mxu0 0.0
    %4423 = vmatpush1.msra.mxu0 0.0
    %4424 = vmatprep.subr.mxu0 0.0
    %4425 = vmatpush1.msra.mxu0 0.0
    %4426 = vmatprep.subr.mxu0 0.0
    %4427 = vmatpush1.msra.mxu0 0.0
    %4428 = vmatprep.subr.mxu0 0.0
    %4429 = vmatpush1.msra.mxu0 0.0
    %4430 = vmatprep.subr.mxu0 0.0
    %4431 = vmatpush1.msra.mxu0 0.0
    %4432 = vmatprep.subr.mxu0 0.0
    %4433 = vmatpush1.msra.mxu0 0.0
    %4434 = vmatprep.subr.mxu0 0.0
    %4435 = vmatpush1.msra.mxu0 0.0
    %4436 = vmatprep.mubr.f32.mxu0 0.0
    %4437 = vmatmul.mubr.f32.gmra.mrb[0].mxu0 %v4361
    %v4438 = vpop.f32.mrb[0].mxu0
    %v4439 = vadd.f32 0.0, %v4438
    %v4440 = vpop.f32.mrb[0].mxu0
    %v4441 = vadd.f32 0.0, %v4440
    %4442 = vmatprep.mubr.f32.mxu0 0.0
    %4443 = vmatmul.mubr.f32.gmra.mrb[0].mxu0 %v4364
    %v4444 = vpop.f32.mrb[0].mxu0
    %v4445 = vadd.f32 0.0, %v4444
    %v4446 = vpop.f32.mrb[0].mxu0
    %v4447 = vadd.f32 0.0, %v4446
    %4448 = vmatprep.mubr.f32.mxu0 0.0
    %4449 = vmatmul.mubr.f32.gmra.mrb[0].mxu0 %v4367
    %v4450 = vpop.f32.mrb[0].mxu0
    %v4451 = vadd.f32 0.0, %v4450
    %v4452 = vpop.f32.mrb[0].mxu0
    %v4453 = vadd.f32 0.0, %v4452
    %4454 = vmatprep.mubr.f32.mxu0 0.0
    %4455 = vmatmul.mubr.f32.gmra.mrb[0].mxu0 %v4370
    %v4456 = vpop.f32.mrb[0].mxu0
    %v4457 = vadd.f32 0.0, %v4456
    %v4458 = vpop.f32.mrb[0].mxu0
    %v4459 = vadd.f32 0.0, %v4458
    %4460 = vdwg.mxu0
    %v4461 = vadd.f32 %v4304, %v4439
    %v4462 = vadd.f32 %v4305, %v4441
    %v4463 = vadd.f32 %v4306, %v4445
    %v4464 = vadd.f32 %v4307, %v4447
    %v4465 = vadd.f32 %v4308, %v4451
    %v4466 = vadd.f32 %v4309, %v4453
    %v4467 = vadd.f32 %v4310, %v4457
    %v4468 = vadd.f32 %v4311, %v4459
    %v4469 = vld [vmem:[%s457] sm:$0xff]
    %v4470 = vld [vmem:[%s457 + $0x8] sm:$0xff]
    %v4471 = vld [vmem:[%s457 + $0x10] sm:$0xff]
    %v4472 = vld [vmem:[%s457 + $0x18] sm:$0xff]
    %4473 = vrot.lane.b32.xlu0 %v4123, 15
    %v4474 = vpop.permute.xlu0 %4473
    %4475 = vrot.lane.b32.xlu0 %v4125, 15
    %v4476 = vpop.permute.xlu0 %4475
    %4477 = vrot.lane.b32.xlu0 %v4127, 15
    %v4478 = vpop.permute.xlu0 %4477
    %4479 = vrot.lane.b32.xlu0 %v4129, 15
    %v4480 = vpop.permute.xlu0 %4479
    %4481 = vrot.lane.b32.xlu0 %v4124, 15
    %v4482 = vpop.permute.xlu0 %4481
    %4483 = vrot.lane.b32.xlu0 %v4126, 15
    %v4484 = vpop.permute.xlu0 %4483
    %4485 = vrot.lane.b32.xlu0 %v4128, 15
    %v4486 = vpop.permute.xlu0 %4485
    %4487 = vrot.lane.b32.xlu0 %v4130, 15
    %v4488 = vpop.permute.xlu0 %4487
    %v4489 = vsel %vm478, %v4474, %v4482
    %v4490 = vsel %vm478, %v4476, %v4484
    %v4491 = vsel %vm478, %v4478, %v4486
    %v4492 = vsel %vm478, %v4480, %v4488
    %v4493 = vsel %vm478, %v4482, %v4474
    %v4494 = vsel %vm478, %v4484, %v4476
    %v4495 = vsel %vm478, %v4486, %v4478
    %v4496 = vsel %vm478, %v4488, %v4480
    %v4497 = vld [vmem:[%s487] ss:$8 sm:$0x3]
    %v4499 = vlaneseq
    %v4500 = vshrl.u32 %v4499, 7
    %v4501 = vsub.s32 0, %v4500
    %v4502 = vrot.slane %v4497, %v4501
    %v4503 = vlaneseq
    %v4504 = vshrl.u32 %v4503, 7
    %v4505 = vsub.s32 1, %v4504
    %v4506 = vrot.slane %v4497, %v4505
    %v4509 = vmul.f32 %v4493, %v4502
    %v4510 = vmul.f32 %v4489, %v4506
    %v4511 = vmul.f32 %v4494, %v4502
    %v4512 = vmul.f32 %v4490, %v4506
    %v4513 = vmul.f32 %v4495, %v4502
    %v4514 = vmul.f32 %v4491, %v4506
    %v4515 = vmul.f32 %v4496, %v4502
    %v4516 = vmul.f32 %v4492, %v4506
    %v4518 = vsel %vm167, %v4469, 0
    %v4521 = vsel %vm167, %v4470, 0
    %v4524 = vsel %vm167, %v4471, 0
    %v4527 = vsel %vm167, %v4472, 0
    %4529 = vmatprep.subr.mxu0 %v4510
    %4530 = vmatpush1.msra.mxu0 %v4509
    %4531 = vmatprep.subr.mxu0 %v4512
    %4532 = vmatpush1.msra.mxu0 %v4511
    %4533 = vmatprep.subr.mxu0 %v4514
    %4534 = vmatpush1.msra.mxu0 %v4513
    %4535 = vmatprep.subr.mxu0 %v4516
    %4536 = vmatpush1.msra.mxu0 %v4515
    %4537 = vmatprep.subr.mxu0 0.0
    %4538 = vmatpush1.msra.mxu0 0.0
    %4539 = vmatprep.subr.mxu0 0.0
    %4540 = vmatpush1.msra.mxu0 0.0
    %4541 = vmatprep.subr.mxu0 0.0
    %4542 = vmatpush1.msra.mxu0 0.0
    %4543 = vmatprep.subr.mxu0 0.0
    %4544 = vmatpush1.msra.mxu0 0.0
    %4545 = vmatprep.subr.mxu0 0.0
    %4546 = vmatpush1.msra.mxu0 0.0
    %4547 = vmatprep.subr.mxu0 0.0
    %4548 = vmatpush1.msra.mxu0 0.0
    %4549 = vmatprep.subr.mxu0 0.0
    %4550 = vmatpush1.msra.mxu0 0.0
    %4551 = vmatprep.subr.mxu0 0.0
    %4552 = vmatpush1.msra.mxu0 0.0
    %4553 = vmatprep.subr.mxu0 0.0
    %4554 = vmatpush1.msra.mxu0 0.0
    %4555 = vmatprep.subr.mxu0 0.0
    %4556 = vmatpush1.msra.mxu0 0.0
    %4557 = vmatprep.subr.mxu0 0.0
    %4558 = vmatpush1.msra.mxu0 0.0
    %4559 = vmatprep.subr.mxu0 0.0
    %4560 = vmatpush1.msra.mxu0 0.0
    %4561 = vmatprep.subr.mxu0 0.0
    %4562 = vmatpush1.msra.mxu0 0.0
    %4563 = vmatprep.subr.mxu0 0.0
    %4564 = vmatpush1.msra.mxu0 0.0
    %4565 = vmatprep.subr.mxu0 0.0
    %4566 = vmatpush1.msra.mxu0 0.0
    %4567 = vmatprep.subr.mxu0 0.0
    %4568 = vmatpush1.msra.mxu0 0.0
    %4569 = vmatprep.subr.mxu0 0.0
    %4570 = vmatpush1.msra.mxu0 0.0
    %4571 = vmatprep.subr.mxu0 0.0
    %4572 = vmatpush1.msra.mxu0 0.0
    %4573 = vmatprep.subr.mxu0 0.0
    %4574 = vmatpush1.msra.mxu0 0.0
    %4575 = vmatprep.subr.mxu0 0.0
    %4576 = vmatpush1.msra.mxu0 0.0
    %4577 = vmatprep.subr.mxu0 0.0
    %4578 = vmatpush1.msra.mxu0 0.0
    %4579 = vmatprep.subr.mxu0 0.0
    %4580 = vmatpush1.msra.mxu0 0.0
    %4581 = vmatprep.subr.mxu0 0.0
    %4582 = vmatpush1.msra.mxu0 0.0
    %4583 = vmatprep.subr.mxu0 0.0
    %4584 = vmatpush1.msra.mxu0 0.0
    %4585 = vmatprep.subr.mxu0 0.0
    %4586 = vmatpush1.msra.mxu0 0.0
    %4587 = vmatprep.subr.mxu0 0.0
    %4588 = vmatpush1.msra.mxu0 0.0
    %4589 = vmatprep.subr.mxu0 0.0
    %4590 = vmatpush1.msra.mxu0 0.0
    %4591 = vmatprep.subr.mxu0 0.0
    %4592 = vmatpush1.msra.mxu0 0.0
    %4593 = vmatprep.mubr.f32.mxu0 0.0
    %4594 = vmatmul.mubr.f32.gmra.mrb[0].mxu0 %v4518
    %v4595 = vpop.f32.mrb[0].mxu0
    %v4596 = vadd.f32 0.0, %v4595
    %v4597 = vpop.f32.mrb[0].mxu0
    %v4598 = vadd.f32 0.0, %v4597
    %4599 = vmatprep.mubr.f32.mxu0 0.0
    %4600 = vmatmul.mubr.f32.gmra.mrb[0].mxu0 %v4521
    %v4601 = vpop.f32.mrb[0].mxu0
    %v4602 = vadd.f32 0.0, %v4601
    %v4603 = vpop.f32.mrb[0].mxu0
    %v4604 = vadd.f32 0.0, %v4603
    %4605 = vmatprep.mubr.f32.mxu0 0.0
    %4606 = vmatmul.mubr.f32.gmra.mrb[0].mxu0 %v4524
    %v4607 = vpop.f32.mrb[0].mxu0
    %v4608 = vadd.f32 0.0, %v4607
    %v4609 = vpop.f32.mrb[0].mxu0
    %v4610 = vadd.f32 0.0, %v4609
    %4611 = vmatprep.mubr.f32.mxu0 0.0
    %4612 = vmatmul.mubr.f32.gmra.mrb[0].mxu0 %v4527
    %v4613 = vpop.f32.mrb[0].mxu0
    %v4614 = vadd.f32 0.0, %v4613
    %v4615 = vpop.f32.mrb[0].mxu0
    %v4616 = vadd.f32 0.0, %v4615
    %4617 = vdwg.mxu0
    %v4618 = vadd.f32 %v4461, %v4596
    %v4619 = vadd.f32 %v4462, %v4598
    %v4620 = vadd.f32 %v4463, %v4602
    %v4621 = vadd.f32 %v4464, %v4604
    %v4622 = vadd.f32 %v4465, %v4608
    %v4623 = vadd.f32 %v4466, %v4610
    %v4624 = vadd.f32 %v4467, %v4614
    %v4625 = vadd.f32 %v4468, %v4616
    %v4626 = vld [vmem:[%s617] sm:$0xff]
    %v4627 = vld [vmem:[%s617 + $0x8] sm:$0xff]
    %v4628 = vld [vmem:[%s617 + $0x10] sm:$0xff]
    %v4629 = vld [vmem:[%s617 + $0x18] sm:$0xff]
    %4630 = vrot.lane.b32.xlu0 %v4123, 1
    %v4631 = vpop.permute.xlu0 %4630
    %4632 = vrot.lane.b32.xlu0 %v4125, 1
    %v4633 = vpop.permute.xlu0 %4632
    %4634 = vrot.lane.b32.xlu0 %v4127, 1
    %v4635 = vpop.permute.xlu0 %4634
    %4636 = vrot.lane.b32.xlu0 %v4129, 1
    %v4637 = vpop.permute.xlu0 %4636
    %4638 = vrot.lane.b32.xlu0 %v4124, 1
    %v4639 = vpop.permute.xlu0 %4638
    %4640 = vrot.lane.b32.xlu0 %v4126, 1
    %v4641 = vpop.permute.xlu0 %4640
    %4642 = vrot.lane.b32.xlu0 %v4128, 1
    %v4643 = vpop.permute.xlu0 %4642
    %4644 = vrot.lane.b32.xlu0 %v4130, 1
    %v4645 = vpop.permute.xlu0 %4644
    %v4646 = vsel %vm638, %v4631, %v4639
    %v4647 = vsel %vm638, %v4633, %v4641
    %v4648 = vsel %vm638, %v4635, %v4643
    %v4649 = vsel %vm638, %v4637, %v4645
    %v4650 = vsel %vm638, %v4639, %v4631
    %v4651 = vsel %vm638, %v4641, %v4633
    %v4652 = vsel %vm638, %v4643, %v4635
    %v4653 = vsel %vm638, %v4645, %v4637
    %v4654 = vld [vmem:[%s647] ss:$8 sm:$0x3]
    %v4656 = vlaneseq
    %v4657 = vshrl.u32 %v4656, 7
    %v4658 = vsub.s32 0, %v4657
    %v4659 = vrot.slane %v4654, %v4658
    %v4660 = vlaneseq
    %v4661 = vshrl.u32 %v4660, 7
    %v4662 = vsub.s32 1, %v4661
    %v4663 = vrot.slane %v4654, %v4662
    %v4666 = vmul.f32 %v4650, %v4659
    %v4667 = vmul.f32 %v4646, %v4663
    %v4668 = vmul.f32 %v4651, %v4659
    %v4669 = vmul.f32 %v4647, %v4663
    %v4670 = vmul.f32 %v4652, %v4659
    %v4671 = vmul.f32 %v4648, %v4663
    %v4672 = vmul.f32 %v4653, %v4659
    %v4673 = vmul.f32 %v4649, %v4663
    %v4675 = vsel %vm167, %v4626, 0
    %v4678 = vsel %vm167, %v4627, 0
    %v4681 = vsel %vm167, %v4628, 0
    %v4684 = vsel %vm167, %v4629, 0
    %4686 = vmatprep.subr.mxu0 %v4667
    %4687 = vmatpush1.msra.mxu0 %v4666
    %4688 = vmatprep.subr.mxu0 %v4669
    %4689 = vmatpush1.msra.mxu0 %v4668
    %4690 = vmatprep.subr.mxu0 %v4671
    %4691 = vmatpush1.msra.mxu0 %v4670
    %4692 = vmatprep.subr.mxu0 %v4673
    %4693 = vmatpush1.msra.mxu0 %v4672
    %4694 = vmatprep.subr.mxu0 0.0
    %4695 = vmatpush1.msra.mxu0 0.0
    %4696 = vmatprep.subr.mxu0 0.0
    %4697 = vmatpush1.msra.mxu0 0.0
    %4698 = vmatprep.subr.mxu0 0.0
    %4699 = vmatpush1.msra.mxu0 0.0
    %4700 = vmatprep.subr.mxu0 0.0
    %4701 = vmatpush1.msra.mxu0 0.0
    %4702 = vmatprep.subr.mxu0 0.0
    %4703 = vmatpush1.msra.mxu0 0.0
    %4704 = vmatprep.subr.mxu0 0.0
    %4705 = vmatpush1.msra.mxu0 0.0
    %4706 = vmatprep.subr.mxu0 0.0
    %4707 = vmatpush1.msra.mxu0 0.0
    %4708 = vmatprep.subr.mxu0 0.0
    %4709 = vmatpush1.msra.mxu0 0.0
    %4710 = vmatprep.subr.mxu0 0.0
    %4711 = vmatpush1.msra.mxu0 0.0
    %4712 = vmatprep.subr.mxu0 0.0
    %4713 = vmatpush1.msra.mxu0 0.0
    %4714 = vmatprep.subr.mxu0 0.0
    %4715 = vmatpush1.msra.mxu0 0.0
    %4716 = vmatprep.subr.mxu0 0.0
    %4717 = vmatpush1.msra.mxu0 0.0
    %4718 = vmatprep.subr.mxu0 0.0
    %4719 = vmatpush1.msra.mxu0 0.0
    %4720 = vmatprep.subr.mxu0 0.0
    %4721 = vmatpush1.msra.mxu0 0.0
    %4722 = vmatprep.subr.mxu0 0.0
    %4723 = vmatpush1.msra.mxu0 0.0
    %4724 = vmatprep.subr.mxu0 0.0
    %4725 = vmatpush1.msra.mxu0 0.0
    %4726 = vmatprep.subr.mxu0 0.0
    %4727 = vmatpush1.msra.mxu0 0.0
    %4728 = vmatprep.subr.mxu0 0.0
    %4729 = vmatpush1.msra.mxu0 0.0
    %4730 = vmatprep.subr.mxu0 0.0
    %4731 = vmatpush1.msra.mxu0 0.0
    %4732 = vmatprep.subr.mxu0 0.0
    %4733 = vmatpush1.msra.mxu0 0.0
    %4734 = vmatprep.subr.mxu0 0.0
    %4735 = vmatpush1.msra.mxu0 0.0
    %4736 = vmatprep.subr.mxu0 0.0
    %4737 = vmatpush1.msra.mxu0 0.0
    %4738 = vmatprep.subr.mxu0 0.0
    %4739 = vmatpush1.msra.mxu0 0.0
    %4740 = vmatprep.subr.mxu0 0.0
    %4741 = vmatpush1.msra.mxu0 0.0
    %4742 = vmatprep.subr.mxu0 0.0
    %4743 = vmatpush1.msra.mxu0 0.0
    %4744 = vmatprep.subr.mxu0 0.0
    %4745 = vmatpush1.msra.mxu0 0.0
    %4746 = vmatprep.subr.mxu0 0.0
    %4747 = vmatpush1.msra.mxu0 0.0
    %4748 = vmatprep.subr.mxu0 0.0
    %4749 = vmatpush1.msra.mxu0 0.0
    %4750 = vmatprep.mubr.f32.mxu0 0.0
    %4751 = vmatmul.mubr.f32.gmra.mrb[0].mxu0 %v4675
    %v4752 = vpop.f32.mrb[0].mxu0
    %v4753 = vadd.f32 0.0, %v4752
    %v4754 = vpop.f32.mrb[0].mxu0
    %v4755 = vadd.f32 0.0, %v4754
    %4756 = vmatprep.mubr.f32.mxu0 0.0
    %4757 = vmatmul.mubr.f32.gmra.mrb[0].mxu0 %v4678
    %v4758 = vpop.f32.mrb[0].mxu0
    %v4759 = vadd.f32 0.0, %v4758
    %v4760 = vpop.f32.mrb[0].mxu0
    %v4761 = vadd.f32 0.0, %v4760
    %4762 = vmatprep.mubr.f32.mxu0 0.0
    %4763 = vmatmul.mubr.f32.gmra.mrb[0].mxu0 %v4681
    %v4764 = vpop.f32.mrb[0].mxu0
    %v4765 = vadd.f32 0.0, %v4764
    %v4766 = vpop.f32.mrb[0].mxu0
    %v4767 = vadd.f32 0.0, %v4766
    %4768 = vmatprep.mubr.f32.mxu0 0.0
    %4769 = vmatmul.mubr.f32.gmra.mrb[0].mxu0 %v4684
    %v4770 = vpop.f32.mrb[0].mxu0
    %v4771 = vadd.f32 0.0, %v4770
    %v4772 = vpop.f32.mrb[0].mxu0
    %v4773 = vadd.f32 0.0, %v4772
    %4774 = vdwg.mxu0
    %v4775 = vadd.f32 %v4618, %v4753
    %v4776 = vadd.f32 %v4619, %v4755
    %v4777 = vadd.f32 %v4620, %v4759
    %v4778 = vadd.f32 %v4621, %v4761
    %v4779 = vadd.f32 %v4622, %v4765
    %v4780 = vadd.f32 %v4623, %v4767
    %v4781 = vadd.f32 %v4624, %v4771
    %v4782 = vadd.f32 %v4625, %v4773
    %v4783 = vld [vmem:[%s777] sm:$0xff]
    %v4784 = vld [vmem:[%s777 + $0x8] sm:$0xff]
    %v4785 = vld [vmem:[%s777 + $0x10] sm:$0xff]
    %v4786 = vld [vmem:[%s777 + $0x18] sm:$0xff]
    %v4788 = vsel %vm167, %v4783, 0
    %v4791 = vsel %vm167, %v4784, 0
    %v4794 = vsel %vm167, %v4785, 0
    %v4797 = vsel %vm167, %v4786, 0
    %4799 = vmatprep.subr.mxu0 %v4124
    %4800 = vmatpush1.msra.mxu0 %v4123
    %4801 = vmatprep.subr.mxu0 %v4126
    %4802 = vmatpush1.msra.mxu0 %v4125
    %4803 = vmatprep.subr.mxu0 %v4128
    %4804 = vmatpush1.msra.mxu0 %v4127
    %4805 = vmatprep.subr.mxu0 %v4130
    %4806 = vmatpush1.msra.mxu0 %v4129
    %4807 = vmatprep.subr.mxu0 0.0
    %4808 = vmatpush1.msra.mxu0 0.0
    %4809 = vmatprep.subr.mxu0 0.0
    %4810 = vmatpush1.msra.mxu0 0.0
    %4811 = vmatprep.subr.mxu0 0.0
    %4812 = vmatpush1.msra.mxu0 0.0
    %4813 = vmatprep.subr.mxu0 0.0
    %4814 = vmatpush1.msra.mxu0 0.0
    %4815 = vmatprep.subr.mxu0 0.0
    %4816 = vmatpush1.msra.mxu0 0.0
    %4817 = vmatprep.subr.mxu0 0.0
    %4818 = vmatpush1.msra.mxu0 0.0
    %4819 = vmatprep.subr.mxu0 0.0
    %4820 = vmatpush1.msra.mxu0 0.0
    %4821 = vmatprep.subr.mxu0 0.0
    %4822 = vmatpush1.msra.mxu0 0.0
    %4823 = vmatprep.subr.mxu0 0.0
    %4824 = vmatpush1.msra.mxu0 0.0
    %4825 = vmatprep.subr.mxu0 0.0
    %4826 = vmatpush1.msra.mxu0 0.0
    %4827 = vmatprep.subr.mxu0 0.0
    %4828 = vmatpush1.msra.mxu0 0.0
    %4829 = vmatprep.subr.mxu0 0.0
    %4830 = vmatpush1.msra.mxu0 0.0
    %4831 = vmatprep.subr.mxu0 0.0
    %4832 = vmatpush1.msra.mxu0 0.0
    %4833 = vmatprep.subr.mxu0 0.0
    %4834 = vmatpush1.msra.mxu0 0.0
    %4835 = vmatprep.subr.mxu0 0.0
    %4836 = vmatpush1.msra.mxu0 0.0
    %4837 = vmatprep.subr.mxu0 0.0
    %4838 = vmatpush1.msra.mxu0 0.0
    %4839 = vmatprep.subr.mxu0 0.0
    %4840 = vmatpush1.msra.mxu0 0.0
    %4841 = vmatprep.subr.mxu0 0.0
    %4842 = vmatpush1.msra.mxu0 0.0
    %4843 = vmatprep.subr.mxu0 0.0
    %4844 = vmatpush1.msra.mxu0 0.0
    %4845 = vmatprep.subr.mxu0 0.0
    %4846 = vmatpush1.msra.mxu0 0.0
    %4847 = vmatprep.subr.mxu0 0.0
    %4848 = vmatpush1.msra.mxu0 0.0
    %4849 = vmatprep.subr.mxu0 0.0
    %4850 = vmatpush1.msra.mxu0 0.0
    %4851 = vmatprep.subr.mxu0 0.0
    %4852 = vmatpush1.msra.mxu0 0.0
    %4853 = vmatprep.subr.mxu0 0.0
    %4854 = vmatpush1.msra.mxu0 0.0
    %4855 = vmatprep.subr.mxu0 0.0
    %4856 = vmatpush1.msra.mxu0 0.0
    %4857 = vmatprep.subr.mxu0 0.0
    %4858 = vmatpush1.msra.mxu0 0.0
    %4859 = vmatprep.subr.mxu0 0.0
    %4860 = vmatpush1.msra.mxu0 0.0
    %4861 = vmatprep.subr.mxu0 0.0
    %4862 = vmatpush1.msra.mxu0 0.0
    %4863 = vmatprep.mubr.f32.mxu0 0.0
    %4864 = vmatmul.mubr.f32.gmra.mrb[0].mxu0 %v4788
    %v4865 = vpop.f32.mrb[0].mxu0
    %v4866 = vadd.f32 0.0, %v4865
    %v4867 = vpop.f32.mrb[0].mxu0
    %v4868 = vadd.f32 0.0, %v4867
    %4869 = vmatprep.mubr.f32.mxu0 0.0
    %4870 = vmatmul.mubr.f32.gmra.mrb[0].mxu0 %v4791
    %v4871 = vpop.f32.mrb[0].mxu0
    %v4872 = vadd.f32 0.0, %v4871
    %v4873 = vpop.f32.mrb[0].mxu0
    %v4874 = vadd.f32 0.0, %v4873
    %4875 = vmatprep.mubr.f32.mxu0 0.0
    %4876 = vmatmul.mubr.f32.gmra.mrb[0].mxu0 %v4794
    %v4877 = vpop.f32.mrb[0].mxu0
    %v4878 = vadd.f32 0.0, %v4877
    %v4879 = vpop.f32.mrb[0].mxu0
    %v4880 = vadd.f32 0.0, %v4879
    %4881 = vmatprep.mubr.f32.mxu0 0.0
    %4882 = vmatmul.mubr.f32.gmra.mrb[0].mxu0 %v4797
    %v4883 = vpop.f32.mrb[0].mxu0
    %v4884 = vadd.f32 0.0, %v4883
    %v4885 = vpop.f32.mrb[0].mxu0
    %v4886 = vadd.f32 0.0, %v4885
    %4887 = vdwg.mxu0
    %v4888 = vadd.f32 %v4775, %v4866
    %v4889 = vadd.f32 %v4776, %v4868
    %v4890 = vadd.f32 %v4777, %v4872
    %v4891 = vadd.f32 %v4778, %v4874
    %v4892 = vadd.f32 %v4779, %v4878
    %v4893 = vadd.f32 %v4780, %v4880
    %v4894 = vadd.f32 %v4781, %v4884
    %v4895 = vadd.f32 %v4782, %v4886
    %v4896 = vld [vmem:[%s891] sm:$0xff]
    %v4897 = vld [vmem:[%s891 + $0x8] sm:$0xff]
    %v4898 = vld [vmem:[%s891 + $0x10] sm:$0xff]
    %v4899 = vld [vmem:[%s891 + $0x18] sm:$0xff]
    %4900 = vrot.lane.b32.xlu0 %v4123, 127
    %v4901 = vpop.permute.xlu0 %4900
    %4902 = vrot.lane.b32.xlu0 %v4125, 127
    %v4903 = vpop.permute.xlu0 %4902
    %4904 = vrot.lane.b32.xlu0 %v4127, 127
    %v4905 = vpop.permute.xlu0 %4904
    %4906 = vrot.lane.b32.xlu0 %v4129, 127
    %v4907 = vpop.permute.xlu0 %4906
    %4908 = vrot.lane.b32.xlu0 %v4124, 127
    %v4909 = vpop.permute.xlu0 %4908
    %4910 = vrot.lane.b32.xlu0 %v4126, 127
    %v4911 = vpop.permute.xlu0 %4910
    %4912 = vrot.lane.b32.xlu0 %v4128, 127
    %v4913 = vpop.permute.xlu0 %4912
    %4914 = vrot.lane.b32.xlu0 %v4130, 127
    %v4915 = vpop.permute.xlu0 %4914
    %v4916 = vsel %vm912, %v4901, %v4909
    %v4917 = vsel %vm912, %v4903, %v4911
    %v4918 = vsel %vm912, %v4905, %v4913
    %v4919 = vsel %vm912, %v4907, %v4915
    %v4920 = vsel %vm912, %v4909, %v4901
    %v4921 = vsel %vm912, %v4911, %v4903
    %v4922 = vsel %vm912, %v4913, %v4905
    %v4923 = vsel %vm912, %v4915, %v4907
    %v4924 = vld [vmem:[%s921] ss:$8 sm:$0x3]
    %v4926 = vlaneseq
    %v4927 = vshrl.u32 %v4926, 7
    %v4928 = vsub.s32 0, %v4927
    %v4929 = vrot.slane %v4924, %v4928
    %v4930 = vlaneseq
    %v4931 = vshrl.u32 %v4930, 7
    %v4932 = vsub.s32 1, %v4931
    %v4933 = vrot.slane %v4924, %v4932
    %v4936 = vmul.f32 %v4916, %v4929
    %v4937 = vmul.f32 %v4920, %v4933
    %v4938 = vmul.f32 %v4917, %v4929
    %v4939 = vmul.f32 %v4921, %v4933
    %v4940 = vmul.f32 %v4918, %v4929
    %v4941 = vmul.f32 %v4922, %v4933
    %v4942 = vmul.f32 %v4919, %v4929
    %v4943 = vmul.f32 %v4923, %v4933
    %v4945 = vsel %vm167, %v4896, 0
    %v4948 = vsel %vm167, %v4897, 0
    %v4951 = vsel %vm167, %v4898, 0
    %v4954 = vsel %vm167, %v4899, 0
    %4956 = vmatprep.subr.mxu0 %v4937
    %4957 = vmatpush1.msra.mxu0 %v4936
    %4958 = vmatprep.subr.mxu0 %v4939
    %4959 = vmatpush1.msra.mxu0 %v4938
    %4960 = vmatprep.subr.mxu0 %v4941
    %4961 = vmatpush1.msra.mxu0 %v4940
    %4962 = vmatprep.subr.mxu0 %v4943
    %4963 = vmatpush1.msra.mxu0 %v4942
    %4964 = vmatprep.subr.mxu0 0.0
    %4965 = vmatpush1.msra.mxu0 0.0
    %4966 = vmatprep.subr.mxu0 0.0
    %4967 = vmatpush1.msra.mxu0 0.0
    %4968 = vmatprep.subr.mxu0 0.0
    %4969 = vmatpush1.msra.mxu0 0.0
    %4970 = vmatprep.subr.mxu0 0.0
    %4971 = vmatpush1.msra.mxu0 0.0
    %4972 = vmatprep.subr.mxu0 0.0
    %4973 = vmatpush1.msra.mxu0 0.0
    %4974 = vmatprep.subr.mxu0 0.0
    %4975 = vmatpush1.msra.mxu0 0.0
    %4976 = vmatprep.subr.mxu0 0.0
    %4977 = vmatpush1.msra.mxu0 0.0
    %4978 = vmatprep.subr.mxu0 0.0
    %4979 = vmatpush1.msra.mxu0 0.0
    %4980 = vmatprep.subr.mxu0 0.0
    %4981 = vmatpush1.msra.mxu0 0.0
    %4982 = vmatprep.subr.mxu0 0.0
    %4983 = vmatpush1.msra.mxu0 0.0
    %4984 = vmatprep.subr.mxu0 0.0
    %4985 = vmatpush1.msra.mxu0 0.0
    %4986 = vmatprep.subr.mxu0 0.0
    %4987 = vmatpush1.msra.mxu0 0.0
    %4988 = vmatprep.subr.mxu0 0.0
    %4989 = vmatpush1.msra.mxu0 0.0
    %4990 = vmatprep.subr.mxu0 0.0
    %4991 = vmatpush1.msra.mxu0 0.0
    %4992 = vmatprep.subr.mxu0 0.0
    %4993 = vmatpush1.msra.mxu0 0.0
    %4994 = vmatprep.subr.mxu0 0.0
    %4995 = vmatpush1.msra.mxu0 0.0
    %4996 = vmatprep.subr.mxu0 0.0
    %4997 = vmatpush1.msra.mxu0 0.0
    %4998 = vmatprep.subr.mxu0 0.0
    %4999 = vmatpush1.msra.mxu0 0.0
    %5000 = vmatprep.subr.mxu0 0.0
    %5001 = vmatpush1.msra.mxu0 0.0
    %5002 = vmatprep.subr.mxu0 0.0
    %5003 = vmatpush1.msra.mxu0 0.0
    %5004 = vmatprep.subr.mxu0 0.0
    %5005 = vmatpush1.msra.mxu0 0.0
    %5006 = vmatprep.subr.mxu0 0.0
    %5007 = vmatpush1.msra.mxu0 0.0
    %5008 = vmatprep.subr.mxu0 0.0
    %5009 = vmatpush1.msra.mxu0 0.0
    %5010 = vmatprep.subr.mxu0 0.0
    %5011 = vmatpush1.msra.mxu0 0.0
    %5012 = vmatprep.subr.mxu0 0.0
    %5013 = vmatpush1.msra.mxu0 0.0
    %5014 = vmatprep.subr.mxu0 0.0
    %5015 = vmatpush1.msra.mxu0 0.0
    %5016 = vmatprep.subr.mxu0 0.0
    %5017 = vmatpush1.msra.mxu0 0.0
    %5018 = vmatprep.subr.mxu0 0.0
    %5019 = vmatpush1.msra.mxu0 0.0
    %5020 = vmatprep.mubr.f32.mxu0 0.0
    %5021 = vmatmul.mubr.f32.gmra.mrb[0].mxu0 %v4945
    %v5022 = vpop.f32.mrb[0].mxu0
    %v5023 = vadd.f32 0.0, %v5022
    %v5024 = vpop.f32.mrb[0].mxu0
    %v5025 = vadd.f32 0.0, %v5024
    %5026 = vmatprep.mubr.f32.mxu0 0.0
    %5027 = vmatmul.mubr.f32.gmra.mrb[0].mxu0 %v4948
    %v5028 = vpop.f32.mrb[0].mxu0
    %v5029 = vadd.f32 0.0, %v5028
    %v5030 = vpop.f32.mrb[0].mxu0
    %v5031 = vadd.f32 0.0, %v5030
    %5032 = vmatprep.mubr.f32.mxu0 0.0
    %5033 = vmatmul.mubr.f32.gmra.mrb[0].mxu0 %v4951
    %v5034 = vpop.f32.mrb[0].mxu0
    %v5035 = vadd.f32 0.0, %v5034
    %v5036 = vpop.f32.mrb[0].mxu0
    %v5037 = vadd.f32 0.0, %v5036
    %5038 = vmatprep.mubr.f32.mxu0 0.0
    %5039 = vmatmul.mubr.f32.gmra.mrb[0].mxu0 %v4954
    %v5040 = vpop.f32.mrb[0].mxu0
    %v5041 = vadd.f32 0.0, %v5040
    %v5042 = vpop.f32.mrb[0].mxu0
    %v5043 = vadd.f32 0.0, %v5042
    %5044 = vdwg.mxu0
    %v5045 = vadd.f32 %v4888, %v5023
    %v5046 = vadd.f32 %v4889, %v5025
    %v5047 = vadd.f32 %v4890, %v5029
    %v5048 = vadd.f32 %v4891, %v5031
    %v5049 = vadd.f32 %v4892, %v5035
    %v5050 = vadd.f32 %v4893, %v5037
    %v5051 = vadd.f32 %v4894, %v5041
    %v5052 = vadd.f32 %v4895, %v5043
    %v5053 = vld [vmem:[%s1051] sm:$0xff]
    %v5054 = vld [vmem:[%s1051 + $0x8] sm:$0xff]
    %v5055 = vld [vmem:[%s1051 + $0x10] sm:$0xff]
    %v5056 = vld [vmem:[%s1051 + $0x18] sm:$0xff]
    %5057 = vrot.lane.b32.xlu0 %v4123, 113
    %v5058 = vpop.permute.xlu0 %5057
    %5059 = vrot.lane.b32.xlu0 %v4125, 113
    %v5060 = vpop.permute.xlu0 %5059
    %5061 = vrot.lane.b32.xlu0 %v4127, 113
    %v5062 = vpop.permute.xlu0 %5061
    %5063 = vrot.lane.b32.xlu0 %v4129, 113
    %v5064 = vpop.permute.xlu0 %5063
    %5065 = vrot.lane.b32.xlu0 %v4124, 113
    %v5066 = vpop.permute.xlu0 %5065
    %5067 = vrot.lane.b32.xlu0 %v4126, 113
    %v5068 = vpop.permute.xlu0 %5067
    %5069 = vrot.lane.b32.xlu0 %v4128, 113
    %v5070 = vpop.permute.xlu0 %5069
    %5071 = vrot.lane.b32.xlu0 %v4130, 113
    %v5072 = vpop.permute.xlu0 %5071
    %v5073 = vsel %vm1072, %v5058, %v5066
    %v5074 = vsel %vm1072, %v5060, %v5068
    %v5075 = vsel %vm1072, %v5062, %v5070
    %v5076 = vsel %vm1072, %v5064, %v5072
    %v5077 = vsel %vm1072, %v5066, %v5058
    %v5078 = vsel %vm1072, %v5068, %v5060
    %v5079 = vsel %vm1072, %v5070, %v5062
    %v5080 = vsel %vm1072, %v5072, %v5064
    %v5081 = vld [vmem:[%s1081] ss:$8 sm:$0x3]
    %v5083 = vlaneseq
    %v5084 = vshrl.u32 %v5083, 7
    %v5085 = vsub.s32 0, %v5084
    %v5086 = vrot.slane %v5081, %v5085
    %v5087 = vlaneseq
    %v5088 = vshrl.u32 %v5087, 7
    %v5089 = vsub.s32 1, %v5088
    %v5090 = vrot.slane %v5081, %v5089
    %v5093 = vmul.f32 %v5073, %v5086
    %v5094 = vmul.f32 %v5077, %v5090
    %v5095 = vmul.f32 %v5074, %v5086
    %v5096 = vmul.f32 %v5078, %v5090
    %v5097 = vmul.f32 %v5075, %v5086
    %v5098 = vmul.f32 %v5079, %v5090
    %v5099 = vmul.f32 %v5076, %v5086
    %v5100 = vmul.f32 %v5080, %v5090
    %v5102 = vsel %vm167, %v5053, 0
    %v5105 = vsel %vm167, %v5054, 0
    %v5108 = vsel %vm167, %v5055, 0
    %v5111 = vsel %vm167, %v5056, 0
    %5113 = vmatprep.subr.mxu0 %v5094
    %5114 = vmatpush1.msra.mxu0 %v5093
    %5115 = vmatprep.subr.mxu0 %v5096
    %5116 = vmatpush1.msra.mxu0 %v5095
    %5117 = vmatprep.subr.mxu0 %v5098
    %5118 = vmatpush1.msra.mxu0 %v5097
    %5119 = vmatprep.subr.mxu0 %v5100
    %5120 = vmatpush1.msra.mxu0 %v5099
    %5121 = vmatprep.subr.mxu0 0.0
    %5122 = vmatpush1.msra.mxu0 0.0
    %5123 = vmatprep.subr.mxu0 0.0
    %5124 = vmatpush1.msra.mxu0 0.0
    %5125 = vmatprep.subr.mxu0 0.0
    %5126 = vmatpush1.msra.mxu0 0.0
    %5127 = vmatprep.subr.mxu0 0.0
    %5128 = vmatpush1.msra.mxu0 0.0
    %5129 = vmatprep.subr.mxu0 0.0
    %5130 = vmatpush1.msra.mxu0 0.0
    %5131 = vmatprep.subr.mxu0 0.0
    %5132 = vmatpush1.msra.mxu0 0.0
    %5133 = vmatprep.subr.mxu0 0.0
    %5134 = vmatpush1.msra.mxu0 0.0
    %5135 = vmatprep.subr.mxu0 0.0
    %5136 = vmatpush1.msra.mxu0 0.0
    %5137 = vmatprep.subr.mxu0 0.0
    %5138 = vmatpush1.msra.mxu0 0.0
    %5139 = vmatprep.subr.mxu0 0.0
    %5140 = vmatpush1.msra.mxu0 0.0
    %5141 = vmatprep.subr.mxu0 0.0
    %5142 = vmatpush1.msra.mxu0 0.0
    %5143 = vmatprep.subr.mxu0 0.0
    %5144 = vmatpush1.msra.mxu0 0.0
    %5145 = vmatprep.subr.mxu0 0.0
    %5146 = vmatpush1.msra.mxu0 0.0
    %5147 = vmatprep.subr.mxu0 0.0
    %5148 = vmatpush1.msra.mxu0 0.0
    %5149 = vmatprep.subr.mxu0 0.0
    %5150 = vmatpush1.msra.mxu0 0.0
    %5151 = vmatprep.subr.mxu0 0.0
    %5152 = vmatpush1.msra.mxu0 0.0
    %5153 = vmatprep.subr.mxu0 0.0
    %5154 = vmatpush1.msra.mxu0 0.0
    %5155 = vmatprep.subr.mxu0 0.0
    %5156 = vmatpush1.msra.mxu0 0.0
    %5157 = vmatprep.subr.mxu0 0.0
    %5158 = vmatpush1.msra.mxu0 0.0
    %5159 = vmatprep.subr.mxu0 0.0
    %5160 = vmatpush1.msra.mxu0 0.0
    %5161 = vmatprep.subr.mxu0 0.0
    %5162 = vmatpush1.msra.mxu0 0.0
    %5163 = vmatprep.subr.mxu0 0.0
    %5164 = vmatpush1.msra.mxu0 0.0
    %5165 = vmatprep.subr.mxu0 0.0
    %5166 = vmatpush1.msra.mxu0 0.0
    %5167 = vmatprep.subr.mxu0 0.0
    %5168 = vmatpush1.msra.mxu0 0.0
    %5169 = vmatprep.subr.mxu0 0.0
    %5170 = vmatpush1.msra.mxu0 0.0
    %5171 = vmatprep.subr.mxu0 0.0
    %5172 = vmatpush1.msra.mxu0 0.0
    %5173 = vmatprep.subr.mxu0 0.0
    %5174 = vmatpush1.msra.mxu0 0.0
    %5175 = vmatprep.subr.mxu0 0.0
    %5176 = vmatpush1.msra.mxu0 0.0
    %5177 = vmatprep.mubr.f32.mxu0 0.0
    %5178 = vmatmul.mubr.f32.gmra.mrb[0].mxu0 %v5102
    %v5179 = vpop.f32.mrb[0].mxu0
    %v5180 = vadd.f32 0.0, %v5179
    %v5181 = vpop.f32.mrb[0].mxu0
    %v5182 = vadd.f32 0.0, %v5181
    %5183 = vmatprep.mubr.f32.mxu0 0.0
    %5184 = vmatmul.mubr.f32.gmra.mrb[0].mxu0 %v5105
    %v5185 = vpop.f32.mrb[0].mxu0
    %v5186 = vadd.f32 0.0, %v5185
    %v5187 = vpop.f32.mrb[0].mxu0
    %v5188 = vadd.f32 0.0, %v5187
    %5189 = vmatprep.mubr.f32.mxu0 0.0
    %5190 = vmatmul.mubr.f32.gmra.mrb[0].mxu0 %v5108
    %v5191 = vpop.f32.mrb[0].mxu0
    %v5192 = vadd.f32 0.0, %v5191
    %v5193 = vpop.f32.mrb[0].mxu0
    %v5194 = vadd.f32 0.0, %v5193
    %5195 = vmatprep.mubr.f32.mxu0 0.0
    %5196 = vmatmul.mubr.f32.gmra.mrb[0].mxu0 %v5111
    %v5197 = vpop.f32.mrb[0].mxu0
    %v5198 = vadd.f32 0.0, %v5197
    %v5199 = vpop.f32.mrb[0].mxu0
    %v5200 = vadd.f32 0.0, %v5199
    %5201 = vdwg.mxu0
    %v5202 = vadd.f32 %v5045, %v5180
    %v5203 = vadd.f32 %v5046, %v5182
    %v5204 = vadd.f32 %v5047, %v5186
    %v5205 = vadd.f32 %v5048, %v5188
    %v5206 = vadd.f32 %v5049, %v5192
    %v5207 = vadd.f32 %v5050, %v5194
    %v5208 = vadd.f32 %v5051, %v5198
    %v5209 = vadd.f32 %v5052, %v5200
    %v5210 = vld [vmem:[%s1211] sm:$0xff]
    %v5211 = vld [vmem:[%s1211 + $0x8] sm:$0xff]
    %v5212 = vld [vmem:[%s1211 + $0x10] sm:$0xff]
    %v5213 = vld [vmem:[%s1211 + $0x18] sm:$0xff]
    %5214 = vrot.lane.b32.xlu0 %v4123, 112
    %v5215 = vpop.permute.xlu0 %5214
    %5216 = vrot.lane.b32.xlu0 %v4125, 112
    %v5217 = vpop.permute.xlu0 %5216
    %5218 = vrot.lane.b32.xlu0 %v4127, 112
    %v5219 = vpop.permute.xlu0 %5218
    %5220 = vrot.lane.b32.xlu0 %v4129, 112
    %v5221 = vpop.permute.xlu0 %5220
    %5222 = vrot.lane.b32.xlu0 %v4124, 112
    %v5223 = vpop.permute.xlu0 %5222
    %5224 = vrot.lane.b32.xlu0 %v4126, 112
    %v5225 = vpop.permute.xlu0 %5224
    %5226 = vrot.lane.b32.xlu0 %v4128, 112
    %v5227 = vpop.permute.xlu0 %5226
    %5228 = vrot.lane.b32.xlu0 %v4130, 112
    %v5229 = vpop.permute.xlu0 %5228
    %v5230 = vsel %vm1232, %v5215, %v5223
    %v5231 = vsel %vm1232, %v5217, %v5225
    %v5232 = vsel %vm1232, %v5219, %v5227
    %v5233 = vsel %vm1232, %v5221, %v5229
    %v5234 = vsel %vm1232, %v5223, %v5215
    %v5235 = vsel %vm1232, %v5225, %v5217
    %v5236 = vsel %vm1232, %v5227, %v5219
    %v5237 = vsel %vm1232, %v5229, %v5221
    %v5238 = vld [vmem:[%s1241] ss:$8 sm:$0x3]
    %v5240 = vlaneseq
    %v5241 = vshrl.u32 %v5240, 7
    %v5242 = vsub.s32 0, %v5241
    %v5243 = vrot.slane %v5238, %v5242
    %v5244 = vlaneseq
    %v5245 = vshrl.u32 %v5244, 7
    %v5246 = vsub.s32 1, %v5245
    %v5247 = vrot.slane %v5238, %v5246
    %v5250 = vmul.f32 %v5230, %v5243
    %v5251 = vmul.f32 %v5234, %v5247
    %v5252 = vmul.f32 %v5231, %v5243
    %v5253 = vmul.f32 %v5235, %v5247
    %v5254 = vmul.f32 %v5232, %v5243
    %v5255 = vmul.f32 %v5236, %v5247
    %v5256 = vmul.f32 %v5233, %v5243
    %v5257 = vmul.f32 %v5237, %v5247
    %v5259 = vsel %vm167, %v5210, 0
    %v5262 = vsel %vm167, %v5211, 0
    %v5265 = vsel %vm167, %v5212, 0
    %v5268 = vsel %vm167, %v5213, 0
    %5270 = vmatprep.subr.mxu0 %v5251
    %5271 = vmatpush1.msra.mxu0 %v5250
    %5272 = vmatprep.subr.mxu0 %v5253
    %5273 = vmatpush1.msra.mxu0 %v5252
    %5274 = vmatprep.subr.mxu0 %v5255
    %5275 = vmatpush1.msra.mxu0 %v5254
    %5276 = vmatprep.subr.mxu0 %v5257
    %5277 = vmatpush1.msra.mxu0 %v5256
    %5278 = vmatprep.subr.mxu0 0.0
    %5279 = vmatpush1.msra.mxu0 0.0
    %5280 = vmatprep.subr.mxu0 0.0
    %5281 = vmatpush1.msra.mxu0 0.0
    %5282 = vmatprep.subr.mxu0 0.0
    %5283 = vmatpush1.msra.mxu0 0.0
    %5284 = vmatprep.subr.mxu0 0.0
    %5285 = vmatpush1.msra.mxu0 0.0
    %5286 = vmatprep.subr.mxu0 0.0
    %5287 = vmatpush1.msra.mxu0 0.0
    %5288 = vmatprep.subr.mxu0 0.0
    %5289 = vmatpush1.msra.mxu0 0.0
    %5290 = vmatprep.subr.mxu0 0.0
    %5291 = vmatpush1.msra.mxu0 0.0
    %5292 = vmatprep.subr.mxu0 0.0
    %5293 = vmatpush1.msra.mxu0 0.0
    %5294 = vmatprep.subr.mxu0 0.0
    %5295 = vmatpush1.msra.mxu0 0.0
    %5296 = vmatprep.subr.mxu0 0.0
    %5297 = vmatpush1.msra.mxu0 0.0
    %5298 = vmatprep.subr.mxu0 0.0
    %5299 = vmatpush1.msra.mxu0 0.0
    %5300 = vmatprep.subr.mxu0 0.0
    %5301 = vmatpush1.msra.mxu0 0.0
    %5302 = vmatprep.subr.mxu0 0.0
    %5303 = vmatpush1.msra.mxu0 0.0
    %5304 = vmatprep.subr.mxu0 0.0
    %5305 = vmatpush1.msra.mxu0 0.0
    %5306 = vmatprep.subr.mxu0 0.0
    %5307 = vmatpush1.msra.mxu0 0.0
    %5308 = vmatprep.subr.mxu0 0.0
    %5309 = vmatpush1.msra.mxu0 0.0
    %5310 = vmatprep.subr.mxu0 0.0
    %5311 = vmatpush1.msra.mxu0 0.0
    %5312 = vmatprep.subr.mxu0 0.0
    %5313 = vmatpush1.msra.mxu0 0.0
    %5314 = vmatprep.subr.mxu0 0.0
    %5315 = vmatpush1.msra.mxu0 0.0
    %5316 = vmatprep.subr.mxu0 0.0
    %5317 = vmatpush1.msra.mxu0 0.0
    %5318 = vmatprep.subr.mxu0 0.0
    %5319 = vmatpush1.msra.mxu0 0.0
    %5320 = vmatprep.subr.mxu0 0.0
    %5321 = vmatpush1.msra.mxu0 0.0
    %5322 = vmatprep.subr.mxu0 0.0
    %5323 = vmatpush1.msra.mxu0 0.0
    %5324 = vmatprep.subr.mxu0 0.0
    %5325 = vmatpush1.msra.mxu0 0.0
    %5326 = vmatprep.subr.mxu0 0.0
    %5327 = vmatpush1.msra.mxu0 0.0
    %5328 = vmatprep.subr.mxu0 0.0
    %5329 = vmatpush1.msra.mxu0 0.0
    %5330 = vmatprep.subr.mxu0 0.0
    %5331 = vmatpush1.msra.mxu0 0.0
    %5332 = vmatprep.subr.mxu0 0.0
    %5333 = vmatpush1.msra.mxu0 0.0
    %5334 = vmatprep.mubr.f32.mxu0 0.0
    %5335 = vmatmul.mubr.f32.gmra.mrb[0].mxu0 %v5259
    %v5336 = vpop.f32.mrb[0].mxu0
    %v5337 = vadd.f32 0.0, %v5336
    %v5338 = vpop.f32.mrb[0].mxu0
    %v5339 = vadd.f32 0.0, %v5338
    %5340 = vmatprep.mubr.f32.mxu0 0.0
    %5341 = vmatmul.mubr.f32.gmra.mrb[0].mxu0 %v5262
    %v5342 = vpop.f32.mrb[0].mxu0
    %v5343 = vadd.f32 0.0, %v5342
    %v5344 = vpop.f32.mrb[0].mxu0
    %v5345 = vadd.f32 0.0, %v5344
    %5346 = vmatprep.mubr.f32.mxu0 0.0
    %5347 = vmatmul.mubr.f32.gmra.mrb[0].mxu0 %v5265
    %v5348 = vpop.f32.mrb[0].mxu0
    %v5349 = vadd.f32 0.0, %v5348
    %v5350 = vpop.f32.mrb[0].mxu0
    %v5351 = vadd.f32 0.0, %v5350
    %5352 = vmatprep.mubr.f32.mxu0 0.0
    %5353 = vmatmul.mubr.f32.gmra.mrb[0].mxu0 %v5268
    %v5354 = vpop.f32.mrb[0].mxu0
    %v5355 = vadd.f32 0.0, %v5354
    %v5356 = vpop.f32.mrb[0].mxu0
    %v5357 = vadd.f32 0.0, %v5356
    %5358 = vdwg.mxu0
    %v5359 = vadd.f32 %v5202, %v5337
    %v5360 = vadd.f32 %v5203, %v5339
    %v5361 = vadd.f32 %v5204, %v5343
    %v5362 = vadd.f32 %v5205, %v5345
    %v5363 = vadd.f32 %v5206, %v5349
    %v5364 = vadd.f32 %v5207, %v5351
    %v5365 = vadd.f32 %v5208, %v5355
    %v5366 = vadd.f32 %v5209, %v5357
    %v5367 = vld [vmem:[%s1371] sm:$0xff]
    %v5368 = vld [vmem:[%s1371 + $0x8] sm:$0xff]
    %v5369 = vld [vmem:[%s1371 + $0x10] sm:$0xff]
    %v5370 = vld [vmem:[%s1371 + $0x18] sm:$0xff]
    %5371 = vrot.lane.b32.xlu0 %v4123, 111
    %v5372 = vpop.permute.xlu0 %5371
    %5373 = vrot.lane.b32.xlu0 %v4125, 111
    %v5374 = vpop.permute.xlu0 %5373
    %5375 = vrot.lane.b32.xlu0 %v4127, 111
    %v5376 = vpop.permute.xlu0 %5375
    %5377 = vrot.lane.b32.xlu0 %v4129, 111
    %v5378 = vpop.permute.xlu0 %5377
    %5379 = vrot.lane.b32.xlu0 %v4124, 111
    %v5380 = vpop.permute.xlu0 %5379
    %5381 = vrot.lane.b32.xlu0 %v4126, 111
    %v5382 = vpop.permute.xlu0 %5381
    %5383 = vrot.lane.b32.xlu0 %v4128, 111
    %v5384 = vpop.permute.xlu0 %5383
    %5385 = vrot.lane.b32.xlu0 %v4130, 111
    %v5386 = vpop.permute.xlu0 %5385
    %v5387 = vsel %vm1392, %v5372, %v5380
    %v5388 = vsel %vm1392, %v5374, %v5382
    %v5389 = vsel %vm1392, %v5376, %v5384
    %v5390 = vsel %vm1392, %v5378, %v5386
    %v5391 = vsel %vm1392, %v5380, %v5372
    %v5392 = vsel %vm1392, %v5382, %v5374
    %v5393 = vsel %vm1392, %v5384, %v5376
    %v5394 = vsel %vm1392, %v5386, %v5378
    %v5395 = vld [vmem:[%s1401] ss:$8 sm:$0x3]
    %v5397 = vlaneseq
    %v5398 = vshrl.u32 %v5397, 7
    %v5399 = vsub.s32 0, %v5398
    %v5400 = vrot.slane %v5395, %v5399
    %v5401 = vlaneseq
    %v5402 = vshrl.u32 %v5401, 7
    %v5403 = vsub.s32 1, %v5402
    %v5404 = vrot.slane %v5395, %v5403
    %v5407 = vmul.f32 %v5387, %v5400
    %v5408 = vmul.f32 %v5391, %v5404
    %v5409 = vmul.f32 %v5388, %v5400
    %v5410 = vmul.f32 %v5392, %v5404
    %v5411 = vmul.f32 %v5389, %v5400
    %v5412 = vmul.f32 %v5393, %v5404
    %v5413 = vmul.f32 %v5390, %v5400
    %v5414 = vmul.f32 %v5394, %v5404
    %v5416 = vsel %vm167, %v5367, 0
    %v5419 = vsel %vm167, %v5368, 0
    %v5422 = vsel %vm167, %v5369, 0
    %v5425 = vsel %vm167, %v5370, 0
    %5427 = vmatprep.subr.mxu0 %v5408
    %5428 = vmatpush1.msra.mxu0 %v5407
    %5429 = vmatprep.subr.mxu0 %v5410
    %5430 = vmatpush1.msra.mxu0 %v5409
    %5431 = vmatprep.subr.mxu0 %v5412
    %5432 = vmatpush1.msra.mxu0 %v5411
    %5433 = vmatprep.subr.mxu0 %v5414
    %5434 = vmatpush1.msra.mxu0 %v5413
    %5435 = vmatprep.subr.mxu0 0.0
    %5436 = vmatpush1.msra.mxu0 0.0
    %5437 = vmatprep.subr.mxu0 0.0
    %5438 = vmatpush1.msra.mxu0 0.0
    %5439 = vmatprep.subr.mxu0 0.0
    %5440 = vmatpush1.msra.mxu0 0.0
    %5441 = vmatprep.subr.mxu0 0.0
    %5442 = vmatpush1.msra.mxu0 0.0
    %5443 = vmatprep.subr.mxu0 0.0
    %5444 = vmatpush1.msra.mxu0 0.0
    %5445 = vmatprep.subr.mxu0 0.0
    %5446 = vmatpush1.msra.mxu0 0.0
    %5447 = vmatprep.subr.mxu0 0.0
    %5448 = vmatpush1.msra.mxu0 0.0
    %5449 = vmatprep.subr.mxu0 0.0
    %5450 = vmatpush1.msra.mxu0 0.0
    %5451 = vmatprep.subr.mxu0 0.0
    %5452 = vmatpush1.msra.mxu0 0.0
    %5453 = vmatprep.subr.mxu0 0.0
    %5454 = vmatpush1.msra.mxu0 0.0
    %5455 = vmatprep.subr.mxu0 0.0
    %5456 = vmatpush1.msra.mxu0 0.0
    %5457 = vmatprep.subr.mxu0 0.0
    %5458 = vmatpush1.msra.mxu0 0.0
    %5459 = vmatprep.subr.mxu0 0.0
    %5460 = vmatpush1.msra.mxu0 0.0
    %5461 = vmatprep.subr.mxu0 0.0
    %5462 = vmatpush1.msra.mxu0 0.0
    %5463 = vmatprep.subr.mxu0 0.0
    %5464 = vmatpush1.msra.mxu0 0.0
    %5465 = vmatprep.subr.mxu0 0.0
    %5466 = vmatpush1.msra.mxu0 0.0
    %5467 = vmatprep.subr.mxu0 0.0
    %5468 = vmatpush1.msra.mxu0 0.0
    %5469 = vmatprep.subr.mxu0 0.0
    %5470 = vmatpush1.msra.mxu0 0.0
    %5471 = vmatprep.subr.mxu0 0.0
    %5472 = vmatpush1.msra.mxu0 0.0
    %5473 = vmatprep.subr.mxu0 0.0
    %5474 = vmatpush1.msra.mxu0 0.0
    %5475 = vmatprep.subr.mxu0 0.0
    %5476 = vmatpush1.msra.mxu0 0.0
    %5477 = vmatprep.subr.mxu0 0.0
    %5478 = vmatpush1.msra.mxu0 0.0
    %5479 = vmatprep.subr.mxu0 0.0
    %5480 = vmatpush1.msra.mxu0 0.0
    %5481 = vmatprep.subr.mxu0 0.0
    %5482 = vmatpush1.msra.mxu0 0.0
    %5483 = vmatprep.subr.mxu0 0.0
    %5484 = vmatpush1.msra.mxu0 0.0
    %5485 = vmatprep.subr.mxu0 0.0
    %5486 = vmatpush1.msra.mxu0 0.0
    %5487 = vmatprep.subr.mxu0 0.0
    %5488 = vmatpush1.msra.mxu0 0.0
    %5489 = vmatprep.subr.mxu0 0.0
    %5490 = vmatpush1.msra.mxu0 0.0
    %5491 = vmatprep.mubr.f32.mxu0 0.0
    %5492 = vmatmul.mubr.f32.gmra.mrb[0].mxu0 %v5416
    %v5493 = vpop.f32.mrb[0].mxu0
    %v5494 = vadd.f32 0.0, %v5493
    %v5495 = vpop.f32.mrb[0].mxu0
    %v5496 = vadd.f32 0.0, %v5495
    %5497 = vmatprep.mubr.f32.mxu0 0.0
    %5498 = vmatmul.mubr.f32.gmra.mrb[0].mxu0 %v5419
    %v5499 = vpop.f32.mrb[0].mxu0
    %v5500 = vadd.f32 0.0, %v5499
    %v5501 = vpop.f32.mrb[0].mxu0
    %v5502 = vadd.f32 0.0, %v5501
    %5503 = vmatprep.mubr.f32.mxu0 0.0
    %5504 = vmatmul.mubr.f32.gmra.mrb[0].mxu0 %v5422
    %v5505 = vpop.f32.mrb[0].mxu0
    %v5506 = vadd.f32 0.0, %v5505
    %v5507 = vpop.f32.mrb[0].mxu0
    %v5508 = vadd.f32 0.0, %v5507
    %5509 = vmatprep.mubr.f32.mxu0 0.0
    %5510 = vmatmul.mubr.f32.gmra.mrb[0].mxu0 %v5425
    %v5511 = vpop.f32.mrb[0].mxu0
    %v5512 = vadd.f32 0.0, %v5511
    %v5513 = vpop.f32.mrb[0].mxu0
    %v5514 = vadd.f32 0.0, %v5513
    %5515 = vdwg.mxu0
    %v5516 = vadd.f32 %v5359, %v5494
    %v5517 = vadd.f32 %v5360, %v5496
    %v5518 = vadd.f32 %v5361, %v5500
    %v5519 = vadd.f32 %v5362, %v5502
    %v5520 = vadd.f32 %v5363, %v5506
    %v5521 = vadd.f32 %v5364, %v5508
    %v5522 = vadd.f32 %v5365, %v5512
    %v5523 = vadd.f32 %v5366, %v5514
    %v5524 = vld [vmem:[%s4] sm:$0xff]
    %v5525 = vld [vmem:[%s4 + $0x8] sm:$0xff]
    %v5526 = vld [vmem:[%s4 + $0x10] sm:$0xff]
    %v5527 = vld [vmem:[%s4 + $0x18] sm:$0xff]
    %v5528 = vld [vmem:[#allocation7] sm:$0xff]
    %v5529 = vld [vmem:[#allocation7 + $0x8] sm:$0xff]
    %v5530 = vld [vmem:[#allocation7 + $0x10] sm:$0xff]
    %v5531 = vld [vmem:[#allocation7 + $0x18] sm:$0xff]
    %5532 = vrot.lane.b32.xlu0 %v5516, 34
    %v5533 = vpop.permute.xlu0 %5532
    %5534 = vrot.lane.b32.xlu0 %v5518, 34
    %v5535 = vpop.permute.xlu0 %5534
    %5536 = vrot.lane.b32.xlu0 %v5520, 34
    %v5537 = vpop.permute.xlu0 %5536
    %5538 = vrot.lane.b32.xlu0 %v5522, 34
    %v5539 = vpop.permute.xlu0 %5538
    %5540 = vrot.lane.b32.xlu0 %v5517, 34
    %v5541 = vpop.permute.xlu0 %5540
    %5542 = vrot.lane.b32.xlu0 %v5519, 34
    %v5543 = vpop.permute.xlu0 %5542
    %5544 = vrot.lane.b32.xlu0 %v5521, 34
    %v5545 = vpop.permute.xlu0 %5544
    %5546 = vrot.lane.b32.xlu0 %v5523, 34
    %v5547 = vpop.permute.xlu0 %5546
    %v5548 = vsel %vm1555, %v5533, %v5541
    %v5549 = vsel %vm1555, %v5535, %v5543
    %v5550 = vsel %vm1555, %v5537, %v5545
    %v5551 = vsel %vm1555, %v5539, %v5547
    %v5552 = vsel %vm1555, %v5541, %v5533
    %v5553 = vsel %vm1555, %v5543, %v5535
    %v5554 = vsel %vm1555, %v5545, %v5537
    %v5555 = vsel %vm1555, %v5547, %v5539
    %v5556 = vld [vmem:[#allocation5] ss:$8 sm:$0x3]
    %v5558 = vlaneseq
    %v5559 = vshrl.u32 %v5558, 7
    %v5560 = vsub.s32 0, %v5559
    %v5561 = vrot.slane %v5556, %v5560
    %v5562 = vlaneseq
    %v5563 = vshrl.u32 %v5562, 7
    %v5564 = vsub.s32 1, %v5563
    %v5565 = vrot.slane %v5556, %v5564
    %v5568 = vmul.f32 %v5552, %v5561
    %v5569 = vmul.f32 %v5548, %v5565
    %v5570 = vmul.f32 %v5553, %v5561
    %v5571 = vmul.f32 %v5549, %v5565
    %v5572 = vmul.f32 %v5554, %v5561
    %v5573 = vmul.f32 %v5550, %v5565
    %v5574 = vmul.f32 %v5555, %v5561
    %v5575 = vmul.f32 %v5551, %v5565
    %5577 = vset.pattern.permute.xlu0 0
    %5578 = vperm.xlu0 %5577, %v5528
    %v5579 = vpop.permute.xlu0 %5578
    %5582 = vset.pattern.permute.xlu0 0
    %5583 = vperm.xlu0 %5582, %v5529
    %v5584 = vpop.permute.xlu0 %5583
    %5587 = vset.pattern.permute.xlu0 0
    %5588 = vperm.xlu0 %5587, %v5530
    %v5589 = vpop.permute.xlu0 %5588
    %5592 = vset.pattern.permute.xlu0 0
    %5593 = vperm.xlu0 %5592, %v5531
    %v5594 = vpop.permute.xlu0 %5593
    %v5596 = vmul.f32 %v5568, %v5579
    %v5597 = vmul.f32 %v5569, %v5579
    %v5598 = vmul.f32 %v5570, %v5584
    %v5599 = vmul.f32 %v5571, %v5584
    %v5600 = vmul.f32 %v5572, %v5589
    %v5601 = vmul.f32 %v5573, %v5589
    %v5602 = vmul.f32 %v5574, %v5594
    %v5603 = vmul.f32 %v5575, %v5594
    %5604 = vrot.lane.b32.xlu0 %v5516, 33
    %v5605 = vpop.permute.xlu0 %5604
    %5606 = vrot.lane.b32.xlu0 %v5518, 33
    %v5607 = vpop.permute.xlu0 %5606
    %5608 = vrot.lane.b32.xlu0 %v5520, 33
    %v5609 = vpop.permute.xlu0 %5608
    %5610 = vrot.lane.b32.xlu0 %v5522, 33
    %v5611 = vpop.permute.xlu0 %5610
    %5612 = vrot.lane.b32.xlu0 %v5517, 33
    %v5613 = vpop.permute.xlu0 %5612
    %5614 = vrot.lane.b32.xlu0 %v5519, 33
    %v5615 = vpop.permute.xlu0 %5614
    %5616 = vrot.lane.b32.xlu0 %v5521, 33
    %v5617 = vpop.permute.xlu0 %5616
    %5618 = vrot.lane.b32.xlu0 %v5523, 33
    %v5619 = vpop.permute.xlu0 %5618
    %v5620 = vsel %vm1628, %v5605, %v5613
    %v5621 = vsel %vm1628, %v5607, %v5615
    %v5622 = vsel %vm1628, %v5609, %v5617
    %v5623 = vsel %vm1628, %v5611, %v5619
    %v5624 = vsel %vm1628, %v5613, %v5605
    %v5625 = vsel %vm1628, %v5615, %v5607
    %v5626 = vsel %vm1628, %v5617, %v5609
    %v5627 = vsel %vm1628, %v5619, %v5611
    %v5628 = vld [vmem:[%s1637] ss:$8 sm:$0x3]
    %v5630 = vlaneseq
    %v5631 = vshrl.u32 %v5630, 7
    %v5632 = vsub.s32 0, %v5631
    %v5633 = vrot.slane %v5628, %v5632
    %v5634 = vlaneseq
    %v5635 = vshrl.u32 %v5634, 7
    %v5636 = vsub.s32 1, %v5635
    %v5637 = vrot.slane %v5628, %v5636
    %v5640 = vmul.f32 %v5624, %v5633
    %v5641 = vmul.f32 %v5620, %v5637
    %v5642 = vmul.f32 %v5625, %v5633
    %v5643 = vmul.f32 %v5621, %v5637
    %v5644 = vmul.f32 %v5626, %v5633
    %v5645 = vmul.f32 %v5622, %v5637
    %v5646 = vmul.f32 %v5627, %v5633
    %v5647 = vmul.f32 %v5623, %v5637
    %5648 = vset.pattern.permute.xlu0 1
    %5649 = vperm.xlu0 %5648, %v5528
    %v5650 = vpop.permute.xlu0 %5649
    %5652 = vset.pattern.permute.xlu0 1
    %5653 = vperm.xlu0 %5652, %v5529
    %v5654 = vpop.permute.xlu0 %5653
    %5656 = vset.pattern.permute.xlu0 1
    %5657 = vperm.xlu0 %5656, %v5530
    %v5658 = vpop.permute.xlu0 %5657
    %5660 = vset.pattern.permute.xlu0 1
    %5661 = vperm.xlu0 %5660, %v5531
    %v5662 = vpop.permute.xlu0 %5661
    %v5664 = vmul.f32 %v5640, %v5650
    %v5665 = vmul.f32 %v5641, %v5650
    %v5666 = vmul.f32 %v5642, %v5654
    %v5667 = vmul.f32 %v5643, %v5654
    %v5668 = vmul.f32 %v5644, %v5658
    %v5669 = vmul.f32 %v5645, %v5658
    %v5670 = vmul.f32 %v5646, %v5662
    %v5671 = vmul.f32 %v5647, %v5662
    %v5672 = vadd.f32 %v5596, %v5664
    %v5673 = vadd.f32 %v5597, %v5665
    %v5674 = vadd.f32 %v5598, %v5666
    %v5675 = vadd.f32 %v5599, %v5667
    %v5676 = vadd.f32 %v5600, %v5668
    %v5677 = vadd.f32 %v5601, %v5669
    %v5678 = vadd.f32 %v5602, %v5670
    %v5679 = vadd.f32 %v5603, %v5671
    %5680 = vrot.lane.b32.xlu0 %v5516, 32
    %v5681 = vpop.permute.xlu0 %5680
    %5682 = vrot.lane.b32.xlu0 %v5518, 32
    %v5683 = vpop.permute.xlu0 %5682
    %5684 = vrot.lane.b32.xlu0 %v5520, 32
    %v5685 = vpop.permute.xlu0 %5684
    %5686 = vrot.lane.b32.xlu0 %v5522, 32
    %v5687 = vpop.permute.xlu0 %5686
    %5688 = vrot.lane.b32.xlu0 %v5517, 32
    %v5689 = vpop.permute.xlu0 %5688
    %5690 = vrot.lane.b32.xlu0 %v5519, 32
    %v5691 = vpop.permute.xlu0 %5690
    %5692 = vrot.lane.b32.xlu0 %v5521, 32
    %v5693 = vpop.permute.xlu0 %5692
    %5694 = vrot.lane.b32.xlu0 %v5523, 32
    %v5695 = vpop.permute.xlu0 %5694
    %v5696 = vsel %vm1706, %v5681, %v5689
    %v5697 = vsel %vm1706, %v5683, %v5691
    %v5698 = vsel %vm1706, %v5685, %v5693
    %v5699 = vsel %vm1706, %v5687, %v5695
    %v5700 = vsel %vm1706, %v5689, %v5681
    %v5701 = vsel %vm1706, %v5691, %v5683
    %v5702 = vsel %vm1706, %v5693, %v5685
    %v5703 = vsel %vm1706, %v5695, %v5687
    %v5704 = vld [vmem:[%s1715] ss:$8 sm:$0x3]
    %v5706 = vlaneseq
    %v5707 = vshrl.u32 %v5706, 7
    %v5708 = vsub.s32 0, %v5707
    %v5709 = vrot.slane %v5704, %v5708
    %v5710 = vlaneseq
    %v5711 = vshrl.u32 %v5710, 7
    %v5712 = vsub.s32 1, %v5711
    %v5713 = vrot.slane %v5704, %v5712
    %v5716 = vmul.f32 %v5700, %v5709
    %v5717 = vmul.f32 %v5696, %v5713
    %v5718 = vmul.f32 %v5701, %v5709
    %v5719 = vmul.f32 %v5697, %v5713
    %v5720 = vmul.f32 %v5702, %v5709
    %v5721 = vmul.f32 %v5698, %v5713
    %v5722 = vmul.f32 %v5703, %v5709
    %v5723 = vmul.f32 %v5699, %v5713
    %5724 = vset.pattern.permute.xlu0 2
    %5725 = vperm.xlu0 %5724, %v5528
    %v5726 = vpop.permute.xlu0 %5725
    %5728 = vset.pattern.permute.xlu0 2
    %5729 = vperm.xlu0 %5728, %v5529
    %v5730 = vpop.permute.xlu0 %5729
    %5732 = vset.pattern.permute.xlu0 2
    %5733 = vperm.xlu0 %5732, %v5530
    %v5734 = vpop.permute.xlu0 %5733
    %5736 = vset.pattern.permute.xlu0 2
    %5737 = vperm.xlu0 %5736, %v5531
    %v5738 = vpop.permute.xlu0 %5737
    %v5740 = vmul.f32 %v5716, %v5726
    %v5741 = vmul.f32 %v5717, %v5726
    %v5742 = vmul.f32 %v5718, %v5730
    %v5743 = vmul.f32 %v5719, %v5730
    %v5744 = vmul.f32 %v5720, %v5734
    %v5745 = vmul.f32 %v5721, %v5734
    %v5746 = vmul.f32 %v5722, %v5738
    %v5747 = vmul.f32 %v5723, %v5738
    %v5748 = vadd.f32 %v5672, %v5740
    %v5749 = vadd.f32 %v5673, %v5741
    %v5750 = vadd.f32 %v5674, %v5742
    %v5751 = vadd.f32 %v5675, %v5743
    %v5752 = vadd.f32 %v5676, %v5744
    %v5753 = vadd.f32 %v5677, %v5745
    %v5754 = vadd.f32 %v5678, %v5746
    %v5755 = vadd.f32 %v5679, %v5747
    %5756 = vrot.lane.b32.xlu0 %v5516, 31
    %v5757 = vpop.permute.xlu0 %5756
    %5758 = vrot.lane.b32.xlu0 %v5518, 31
    %v5759 = vpop.permute.xlu0 %5758
    %5760 = vrot.lane.b32.xlu0 %v5520, 31
    %v5761 = vpop.permute.xlu0 %5760
    %5762 = vrot.lane.b32.xlu0 %v5522, 31
    %v5763 = vpop.permute.xlu0 %5762
    %5764 = vrot.lane.b32.xlu0 %v5517, 31
    %v5765 = vpop.permute.xlu0 %5764
    %5766 = vrot.lane.b32.xlu0 %v5519, 31
    %v5767 = vpop.permute.xlu0 %5766
    %5768 = vrot.lane.b32.xlu0 %v5521, 31
    %v5769 = vpop.permute.xlu0 %5768
    %5770 = vrot.lane.b32.xlu0 %v5523, 31
    %v5771 = vpop.permute.xlu0 %5770
    %v5772 = vsel %vm1784, %v5757, %v5765
    %v5773 = vsel %vm1784, %v5759, %v5767
    %v5774 = vsel %vm1784, %v5761, %v5769
    %v5775 = vsel %vm1784, %v5763, %v5771
    %v5776 = vsel %vm1784, %v5765, %v5757
    %v5777 = vsel %vm1784, %v5767, %v5759
    %v5778 = vsel %vm1784, %v5769, %v5761
    %v5779 = vsel %vm1784, %v5771, %v5763
    %v5780 = vld [vmem:[%s1793] ss:$8 sm:$0x3]
    %v5782 = vlaneseq
    %v5783 = vshrl.u32 %v5782, 7
    %v5784 = vsub.s32 0, %v5783
    %v5785 = vrot.slane %v5780, %v5784
    %v5786 = vlaneseq
    %v5787 = vshrl.u32 %v5786, 7
    %v5788 = vsub.s32 1, %v5787
    %v5789 = vrot.slane %v5780, %v5788
    %v5792 = vmul.f32 %v5776, %v5785
    %v5793 = vmul.f32 %v5772, %v5789
    %v5794 = vmul.f32 %v5777, %v5785
    %v5795 = vmul.f32 %v5773, %v5789
    %v5796 = vmul.f32 %v5778, %v5785
    %v5797 = vmul.f32 %v5774, %v5789
    %v5798 = vmul.f32 %v5779, %v5785
    %v5799 = vmul.f32 %v5775, %v5789
    %5800 = vset.pattern.permute.xlu0 3
    %5801 = vperm.xlu0 %5800, %v5528
    %v5802 = vpop.permute.xlu0 %5801
    %5804 = vset.pattern.permute.xlu0 3
    %5805 = vperm.xlu0 %5804, %v5529
    %v5806 = vpop.permute.xlu0 %5805
    %5808 = vset.pattern.permute.xlu0 3
    %5809 = vperm.xlu0 %5808, %v5530
    %v5810 = vpop.permute.xlu0 %5809
    %5812 = vset.pattern.permute.xlu0 3
    %5813 = vperm.xlu0 %5812, %v5531
    %v5814 = vpop.permute.xlu0 %5813
    %v5816 = vmul.f32 %v5792, %v5802
    %v5817 = vmul.f32 %v5793, %v5802
    %v5818 = vmul.f32 %v5794, %v5806
    %v5819 = vmul.f32 %v5795, %v5806
    %v5820 = vmul.f32 %v5796, %v5810
    %v5821 = vmul.f32 %v5797, %v5810
    %v5822 = vmul.f32 %v5798, %v5814
    %v5823 = vmul.f32 %v5799, %v5814
    %v5824 = vadd.f32 %v5748, %v5816
    %v5825 = vadd.f32 %v5749, %v5817
    %v5826 = vadd.f32 %v5750, %v5818
    %v5827 = vadd.f32 %v5751, %v5819
    %v5828 = vadd.f32 %v5752, %v5820
    %v5829 = vadd.f32 %v5753, %v5821
    %v5830 = vadd.f32 %v5754, %v5822
    %v5831 = vadd.f32 %v5755, %v5823
    %5832 = vrot.lane.b32.xlu0 %v5516, 30
    %v5833 = vpop.permute.xlu0 %5832
    %5834 = vrot.lane.b32.xlu0 %v5518, 30
    %v5835 = vpop.permute.xlu0 %5834
    %5836 = vrot.lane.b32.xlu0 %v5520, 30
    %v5837 = vpop.permute.xlu0 %5836
    %5838 = vrot.lane.b32.xlu0 %v5522, 30
    %v5839 = vpop.permute.xlu0 %5838
    %5840 = vrot.lane.b32.xlu0 %v5517, 30
    %v5841 = vpop.permute.xlu0 %5840
    %5842 = vrot.lane.b32.xlu0 %v5519, 30
    %v5843 = vpop.permute.xlu0 %5842
    %5844 = vrot.lane.b32.xlu0 %v5521, 30
    %v5845 = vpop.permute.xlu0 %5844
    %5846 = vrot.lane.b32.xlu0 %v5523, 30
    %v5847 = vpop.permute.xlu0 %5846
    %v5848 = vsel %vm1862, %v5833, %v5841
    %v5849 = vsel %vm1862, %v5835, %v5843
    %v5850 = vsel %vm1862, %v5837, %v5845
    %v5851 = vsel %vm1862, %v5839, %v5847
    %v5852 = vsel %vm1862, %v5841, %v5833
    %v5853 = vsel %vm1862, %v5843, %v5835
    %v5854 = vsel %vm1862, %v5845, %v5837
    %v5855 = vsel %vm1862, %v5847, %v5839
    %v5856 = vld [vmem:[%s1871] ss:$8 sm:$0x3]
    %v5858 = vlaneseq
    %v5859 = vshrl.u32 %v5858, 7
    %v5860 = vsub.s32 0, %v5859
    %v5861 = vrot.slane %v5856, %v5860
    %v5862 = vlaneseq
    %v5863 = vshrl.u32 %v5862, 7
    %v5864 = vsub.s32 1, %v5863
    %v5865 = vrot.slane %v5856, %v5864
    %v5868 = vmul.f32 %v5852, %v5861
    %v5869 = vmul.f32 %v5848, %v5865
    %v5870 = vmul.f32 %v5853, %v5861
    %v5871 = vmul.f32 %v5849, %v5865
    %v5872 = vmul.f32 %v5854, %v5861
    %v5873 = vmul.f32 %v5850, %v5865
    %v5874 = vmul.f32 %v5855, %v5861
    %v5875 = vmul.f32 %v5851, %v5865
    %5876 = vset.pattern.permute.xlu0 4
    %5877 = vperm.xlu0 %5876, %v5528
    %v5878 = vpop.permute.xlu0 %5877
    %5880 = vset.pattern.permute.xlu0 4
    %5881 = vperm.xlu0 %5880, %v5529
    %v5882 = vpop.permute.xlu0 %5881
    %5884 = vset.pattern.permute.xlu0 4
    %5885 = vperm.xlu0 %5884, %v5530
    %v5886 = vpop.permute.xlu0 %5885
    %5888 = vset.pattern.permute.xlu0 4
    %5889 = vperm.xlu0 %5888, %v5531
    %v5890 = vpop.permute.xlu0 %5889
    %v5892 = vmul.f32 %v5868, %v5878
    %v5893 = vmul.f32 %v5869, %v5878
    %v5894 = vmul.f32 %v5870, %v5882
    %v5895 = vmul.f32 %v5871, %v5882
    %v5896 = vmul.f32 %v5872, %v5886
    %v5897 = vmul.f32 %v5873, %v5886
    %v5898 = vmul.f32 %v5874, %v5890
    %v5899 = vmul.f32 %v5875, %v5890
    %v5900 = vadd.f32 %v5824, %v5892
    %v5901 = vadd.f32 %v5825, %v5893
    %v5902 = vadd.f32 %v5826, %v5894
    %v5903 = vadd.f32 %v5827, %v5895
    %v5904 = vadd.f32 %v5828, %v5896
    %v5905 = vadd.f32 %v5829, %v5897
    %v5906 = vadd.f32 %v5830, %v5898
    %v5907 = vadd.f32 %v5831, %v5899
    %5908 = vrot.lane.b32.xlu0 %v5516, 18
    %v5909 = vpop.permute.xlu0 %5908
    %5910 = vrot.lane.b32.xlu0 %v5518, 18
    %v5911 = vpop.permute.xlu0 %5910
    %5912 = vrot.lane.b32.xlu0 %v5520, 18
    %v5913 = vpop.permute.xlu0 %5912
    %5914 = vrot.lane.b32.xlu0 %v5522, 18
    %v5915 = vpop.permute.xlu0 %5914
    %5916 = vrot.lane.b32.xlu0 %v5517, 18
    %v5917 = vpop.permute.xlu0 %5916
    %5918 = vrot.lane.b32.xlu0 %v5519, 18
    %v5919 = vpop.permute.xlu0 %5918
    %5920 = vrot.lane.b32.xlu0 %v5521, 18
    %v5921 = vpop.permute.xlu0 %5920
    %5922 = vrot.lane.b32.xlu0 %v5523, 18
    %v5923 = vpop.permute.xlu0 %5922
    %v5924 = vsel %vm1940, %v5909, %v5917
    %v5925 = vsel %vm1940, %v5911, %v5919
    %v5926 = vsel %vm1940, %v5913, %v5921
    %v5927 = vsel %vm1940, %v5915, %v5923
    %v5928 = vsel %vm1940, %v5917, %v5909
    %v5929 = vsel %vm1940, %v5919, %v5911
    %v5930 = vsel %vm1940, %v5921, %v5913
    %v5931 = vsel %vm1940, %v5923, %v5915
    %v5932 = vld [vmem:[%s1949] ss:$8 sm:$0x3]
    %v5934 = vlaneseq
    %v5935 = vshrl.u32 %v5934, 7
    %v5936 = vsub.s32 0, %v5935
    %v5937 = vrot.slane %v5932, %v5936
    %v5938 = vlaneseq
    %v5939 = vshrl.u32 %v5938, 7
    %v5940 = vsub.s32 1, %v5939
    %v5941 = vrot.slane %v5932, %v5940
    %v5944 = vmul.f32 %v5928, %v5937
    %v5945 = vmul.f32 %v5924, %v5941
    %v5946 = vmul.f32 %v5929, %v5937
    %v5947 = vmul.f32 %v5925, %v5941
    %v5948 = vmul.f32 %v5930, %v5937
    %v5949 = vmul.f32 %v5926, %v5941
    %v5950 = vmul.f32 %v5931, %v5937
    %v5951 = vmul.f32 %v5927, %v5941
    %5952 = vset.pattern.permute.xlu0 5
    %5953 = vperm.xlu0 %5952, %v5528
    %v5954 = vpop.permute.xlu0 %5953
    %5956 = vset.pattern.permute.xlu0 5
    %5957 = vperm.xlu0 %5956, %v5529
    %v5958 = vpop.permute.xlu0 %5957
    %5960 = vset.pattern.permute.xlu0 5
    %5961 = vperm.xlu0 %5960, %v5530
    %v5962 = vpop.permute.xlu0 %5961
    %5964 = vset.pattern.permute.xlu0 5
    %5965 = vperm.xlu0 %5964, %v5531
    %v5966 = vpop.permute.xlu0 %5965
    %v5968 = vmul.f32 %v5944, %v5954
    %v5969 = vmul.f32 %v5945, %v5954
    %v5970 = vmul.f32 %v5946, %v5958
    %v5971 = vmul.f32 %v5947, %v5958
    %v5972 = vmul.f32 %v5948, %v5962
    %v5973 = vmul.f32 %v5949, %v5962
    %v5974 = vmul.f32 %v5950, %v5966
    %v5975 = vmul.f32 %v5951, %v5966
    %v5976 = vadd.f32 %v5900, %v5968
    %v5977 = vadd.f32 %v5901, %v5969
    %v5978 = vadd.f32 %v5902, %v5970
    %v5979 = vadd.f32 %v5903, %v5971
    %v5980 = vadd.f32 %v5904, %v5972
    %v5981 = vadd.f32 %v5905, %v5973
    %v5982 = vadd.f32 %v5906, %v5974
    %v5983 = vadd.f32 %v5907, %v5975
    %5984 = vrot.lane.b32.xlu0 %v5516, 17
    %v5985 = vpop.permute.xlu0 %5984
    %5986 = vrot.lane.b32.xlu0 %v5518, 17
    %v5987 = vpop.permute.xlu0 %5986
    %5988 = vrot.lane.b32.xlu0 %v5520, 17
    %v5989 = vpop.permute.xlu0 %5988
    %5990 = vrot.lane.b32.xlu0 %v5522, 17
    %v5991 = vpop.permute.xlu0 %5990
    %5992 = vrot.lane.b32.xlu0 %v5517, 17
    %v5993 = vpop.permute.xlu0 %5992
    %5994 = vrot.lane.b32.xlu0 %v5519, 17
    %v5995 = vpop.permute.xlu0 %5994
    %5996 = vrot.lane.b32.xlu0 %v5521, 17
    %v5997 = vpop.permute.xlu0 %5996
    %5998 = vrot.lane.b32.xlu0 %v5523, 17
    %v5999 = vpop.permute.xlu0 %5998
    %v6000 = vsel %vm137, %v5985, %v5993
    %v6001 = vsel %vm137, %v5987, %v5995
    %v6002 = vsel %vm137, %v5989, %v5997
    %v6003 = vsel %vm137, %v5991, %v5999
    %v6004 = vsel %vm137, %v5993, %v5985
    %v6005 = vsel %vm137, %v5995, %v5987
    %v6006 = vsel %vm137, %v5997, %v5989
    %v6007 = vsel %vm137, %v5999, %v5991
    %v6008 = vmul.f32 %v6004, %v4168
    %v6009 = vmul.f32 %v6000, %v4172
    %v6010 = vmul.f32 %v6005, %v4168
    %v6011 = vmul.f32 %v6001, %v4172
    %v6012 = vmul.f32 %v6006, %v4168
    %v6013 = vmul.f32 %v6002, %v4172
    %v6014 = vmul.f32 %v6007, %v4168
    %v6015 = vmul.f32 %v6003, %v4172
    %6016 = vset.pattern.permute.xlu0 6
    %6017 = vperm.xlu0 %6016, %v5528
    %v6018 = vpop.permute.xlu0 %6017
    %6020 = vset.pattern.permute.xlu0 6
    %6021 = vperm.xlu0 %6020, %v5529
    %v6022 = vpop.permute.xlu0 %6021
    %6024 = vset.pattern.permute.xlu0 6
    %6025 = vperm.xlu0 %6024, %v5530
    %v6026 = vpop.permute.xlu0 %6025
    %6028 = vset.pattern.permute.xlu0 6
    %6029 = vperm.xlu0 %6028, %v5531
    %v6030 = vpop.permute.xlu0 %6029
    %v6032 = vmul.f32 %v6008, %v6018
    %v6033 = vmul.f32 %v6009, %v6018
    %v6034 = vmul.f32 %v6010, %v6022
    %v6035 = vmul.f32 %v6011, %v6022
    %v6036 = vmul.f32 %v6012, %v6026
    %v6037 = vmul.f32 %v6013, %v6026
    %v6038 = vmul.f32 %v6014, %v6030
    %v6039 = vmul.f32 %v6015, %v6030
    %v6040 = vadd.f32 %v5976, %v6032
    %v6041 = vadd.f32 %v5977, %v6033
    %v6042 = vadd.f32 %v5978, %v6034
    %v6043 = vadd.f32 %v5979, %v6035
    %v6044 = vadd.f32 %v5980, %v6036
    %v6045 = vadd.f32 %v5981, %v6037
    %v6046 = vadd.f32 %v5982, %v6038
    %v6047 = vadd.f32 %v5983, %v6039
    %6049 = vset.pattern.permute.xlu0 0
    %6050 = vperm.xlu0 %6049, %v5524
    %v6051 = vpop.permute.xlu0 %6050
    %6054 = vset.pattern.permute.xlu0 0
    %6055 = vperm.xlu0 %6054, %v5525
    %v6056 = vpop.permute.xlu0 %6055
    %6059 = vset.pattern.permute.xlu0 0
    %6060 = vperm.xlu0 %6059, %v5526
    %v6061 = vpop.permute.xlu0 %6060
    %6064 = vset.pattern.permute.xlu0 0
    %6065 = vperm.xlu0 %6064, %v5527
    %v6066 = vpop.permute.xlu0 %6065
    %v6068 = vmul.f32 %v6008, %v6051
    %v6069 = vmul.f32 %v6009, %v6051
    %v6070 = vmul.f32 %v6010, %v6056
    %v6071 = vmul.f32 %v6011, %v6056
    %v6072 = vmul.f32 %v6012, %v6061
    %v6073 = vmul.f32 %v6013, %v6061
    %v6074 = vmul.f32 %v6014, %v6066
    %v6075 = vmul.f32 %v6015, %v6066
    %6076 = vrot.lane.b32.xlu0 %v5516, 16
    %v6077 = vpop.permute.xlu0 %6076
    %6078 = vrot.lane.b32.xlu0 %v5518, 16
    %v6079 = vpop.permute.xlu0 %6078
    %6080 = vrot.lane.b32.xlu0 %v5520, 16
    %v6081 = vpop.permute.xlu0 %6080
    %6082 = vrot.lane.b32.xlu0 %v5522, 16
    %v6083 = vpop.permute.xlu0 %6082
    %6084 = vrot.lane.b32.xlu0 %v5517, 16
    %v6085 = vpop.permute.xlu0 %6084
    %6086 = vrot.lane.b32.xlu0 %v5519, 16
    %v6087 = vpop.permute.xlu0 %6086
    %6088 = vrot.lane.b32.xlu0 %v5521, 16
    %v6089 = vpop.permute.xlu0 %6088
    %6090 = vrot.lane.b32.xlu0 %v5523, 16
    %v6091 = vpop.permute.xlu0 %6090
    %v6092 = vsel %vm318, %v6077, %v6085
    %v6093 = vsel %vm318, %v6079, %v6087
    %v6094 = vsel %vm318, %v6081, %v6089
    %v6095 = vsel %vm318, %v6083, %v6091
    %v6096 = vsel %vm318, %v6085, %v6077
    %v6097 = vsel %vm318, %v6087, %v6079
    %v6098 = vsel %vm318, %v6089, %v6081
    %v6099 = vsel %vm318, %v6091, %v6083
    %v6100 = vmul.f32 %v6096, %v4345
    %v6101 = vmul.f32 %v6092, %v4349
    %v6102 = vmul.f32 %v6097, %v4345
    %v6103 = vmul.f32 %v6093, %v4349
    %v6104 = vmul.f32 %v6098, %v4345
    %v6105 = vmul.f32 %v6094, %v4349
    %v6106 = vmul.f32 %v6099, %v4345
    %v6107 = vmul.f32 %v6095, %v4349
    %6108 = vset.pattern.permute.xlu0 7
    %6109 = vperm.xlu0 %6108, %v5528
    %v6110 = vpop.permute.xlu0 %6109
    %6112 = vset.pattern.permute.xlu0 7
    %6113 = vperm.xlu0 %6112, %v5529
    %v6114 = vpop.permute.xlu0 %6113
    %6116 = vset.pattern.permute.xlu0 7
    %6117 = vperm.xlu0 %6116, %v5530
    %v6118 = vpop.permute.xlu0 %6117
    %6120 = vset.pattern.permute.xlu0 7
    %6121 = vperm.xlu0 %6120, %v5531
    %v6122 = vpop.permute.xlu0 %6121
    %v6124 = vmul.f32 %v6100, %v6110
    %v6125 = vmul.f32 %v6101, %v6110
    %v6126 = vmul.f32 %v6102, %v6114
    %v6127 = vmul.f32 %v6103, %v6114
    %v6128 = vmul.f32 %v6104, %v6118
    %v6129 = vmul.f32 %v6105, %v6118
    %v6130 = vmul.f32 %v6106, %v6122
    %v6131 = vmul.f32 %v6107, %v6122
    %v6132 = vadd.f32 %v6040, %v6124
    %v6133 = vadd.f32 %v6041, %v6125
    %v6134 = vadd.f32 %v6042, %v6126
    %v6135 = vadd.f32 %v6043, %v6127
    %v6136 = vadd.f32 %v6044, %v6128
    %v6137 = vadd.f32 %v6045, %v6129
    %v6138 = vadd.f32 %v6046, %v6130
    %v6139 = vadd.f32 %v6047, %v6131
    %6140 = vset.pattern.permute.xlu0 1
    %6141 = vperm.xlu0 %6140, %v5524
    %v6142 = vpop.permute.xlu0 %6141
    %6144 = vset.pattern.permute.xlu0 1
    %6145 = vperm.xlu0 %6144, %v5525
    %v6146 = vpop.permute.xlu0 %6145
    %6148 = vset.pattern.permute.xlu0 1
    %6149 = vperm.xlu0 %6148, %v5526
    %v6150 = vpop.permute.xlu0 %6149
    %6152 = vset.pattern.permute.xlu0 1
    %6153 = vperm.xlu0 %6152, %v5527
    %v6154 = vpop.permute.xlu0 %6153
    %v6156 = vmul.f32 %v6100, %v6142
    %v6157 = vmul.f32 %v6101, %v6142
    %v6158 = vmul.f32 %v6102, %v6146
    %v6159 = vmul.f32 %v6103, %v6146
    %v6160 = vmul.f32 %v6104, %v6150
    %v6161 = vmul.f32 %v6105, %v6150
    %v6162 = vmul.f32 %v6106, %v6154
    %v6163 = vmul.f32 %v6107, %v6154
    %v6164 = vadd.f32 %v6068, %v6156
    %v6165 = vadd.f32 %v6069, %v6157
    %v6166 = vadd.f32 %v6070, %v6158
    %v6167 = vadd.f32 %v6071, %v6159
    %v6168 = vadd.f32 %v6072, %v6160
    %v6169 = vadd.f32 %v6073, %v6161
    %v6170 = vadd.f32 %v6074, %v6162
    %v6171 = vadd.f32 %v6075, %v6163
    %6172 = vrot.lane.b32.xlu0 %v5516, 15
    %v6173 = vpop.permute.xlu0 %6172
    %6174 = vrot.lane.b32.xlu0 %v5518, 15
    %v6175 = vpop.permute.xlu0 %6174
    %6176 = vrot.lane.b32.xlu0 %v5520, 15
    %v6177 = vpop.permute.xlu0 %6176
    %6178 = vrot.lane.b32.xlu0 %v5522, 15
    %v6179 = vpop.permute.xlu0 %6178
    %6180 = vrot.lane.b32.xlu0 %v5517, 15
    %v6181 = vpop.permute.xlu0 %6180
    %6182 = vrot.lane.b32.xlu0 %v5519, 15
    %v6183 = vpop.permute.xlu0 %6182
    %6184 = vrot.lane.b32.xlu0 %v5521, 15
    %v6185 = vpop.permute.xlu0 %6184
    %6186 = vrot.lane.b32.xlu0 %v5523, 15
    %v6187 = vpop.permute.xlu0 %6186
    %v6188 = vsel %vm478, %v6173, %v6181
    %v6189 = vsel %vm478, %v6175, %v6183
    %v6190 = vsel %vm478, %v6177, %v6185
    %v6191 = vsel %vm478, %v6179, %v6187
    %v6192 = vsel %vm478, %v6181, %v6173
    %v6193 = vsel %vm478, %v6183, %v6175
    %v6194 = vsel %vm478, %v6185, %v6177
    %v6195 = vsel %vm478, %v6187, %v6179
    %v6196 = vmul.f32 %v6192, %v4502
    %v6197 = vmul.f32 %v6188, %v4506
    %v6198 = vmul.f32 %v6193, %v4502
    %v6199 = vmul.f32 %v6189, %v4506
    %v6200 = vmul.f32 %v6194, %v4502
    %v6201 = vmul.f32 %v6190, %v4506
    %v6202 = vmul.f32 %v6195, %v4502
    %v6203 = vmul.f32 %v6191, %v4506
    %6204 = vset.pattern.permute.xlu0 8
    %6205 = vperm.xlu0 %6204, %v5528
    %v6206 = vpop.permute.xlu0 %6205
    %6208 = vset.pattern.permute.xlu0 8
    %6209 = vperm.xlu0 %6208, %v5529
    %v6210 = vpop.permute.xlu0 %6209
    %6212 = vset.pattern.permute.xlu0 8
    %6213 = vperm.xlu0 %6212, %v5530
    %v6214 = vpop.permute.xlu0 %6213
    %6216 = vset.pattern.permute.xlu0 8
    %6217 = vperm.xlu0 %6216, %v5531
    %v6218 = vpop.permute.xlu0 %6217
    %v6220 = vmul.f32 %v6196, %v6206
    %v6221 = vmul.f32 %v6197, %v6206
    %v6222 = vmul.f32 %v6198, %v6210
    %v6223 = vmul.f32 %v6199, %v6210
    %v6224 = vmul.f32 %v6200, %v6214
    %v6225 = vmul.f32 %v6201, %v6214
    %v6226 = vmul.f32 %v6202, %v6218
    %v6227 = vmul.f32 %v6203, %v6218
    %v6228 = vadd.f32 %v6132, %v6220
    %v6229 = vadd.f32 %v6133, %v6221
    %v6230 = vadd.f32 %v6134, %v6222
    %v6231 = vadd.f32 %v6135, %v6223
    %v6232 = vadd.f32 %v6136, %v6224
    %v6233 = vadd.f32 %v6137, %v6225
    %v6234 = vadd.f32 %v6138, %v6226
    %v6235 = vadd.f32 %v6139, %v6227
    %6236 = vset.pattern.permute.xlu0 2
    %6237 = vperm.xlu0 %6236, %v5524
    %v6238 = vpop.permute.xlu0 %6237
    %6240 = vset.pattern.permute.xlu0 2
    %6241 = vperm.xlu0 %6240, %v5525
    %v6242 = vpop.permute.xlu0 %6241
    %6244 = vset.pattern.permute.xlu0 2
    %6245 = vperm.xlu0 %6244, %v5526
    %v6246 = vpop.permute.xlu0 %6245
    %6248 = vset.pattern.permute.xlu0 2
    %6249 = vperm.xlu0 %6248, %v5527
    %v6250 = vpop.permute.xlu0 %6249
    %v6252 = vmul.f32 %v6196, %v6238
    %v6253 = vmul.f32 %v6197, %v6238
    %v6254 = vmul.f32 %v6198, %v6242
    %v6255 = vmul.f32 %v6199, %v6242
    %v6256 = vmul.f32 %v6200, %v6246
    %v6257 = vmul.f32 %v6201, %v6246
    %v6258 = vmul.f32 %v6202, %v6250
    %v6259 = vmul.f32 %v6203, %v6250
    %v6260 = vadd.f32 %v6164, %v6252
    %v6261 = vadd.f32 %v6165, %v6253
    %v6262 = vadd.f32 %v6166, %v6254
    %v6263 = vadd.f32 %v6167, %v6255
    %v6264 = vadd.f32 %v6168, %v6256
    %v6265 = vadd.f32 %v6169, %v6257
    %v6266 = vadd.f32 %v6170, %v6258
    %v6267 = vadd.f32 %v6171, %v6259
    %6268 = vrot.lane.b32.xlu0 %v5516, 14
    %v6269 = vpop.permute.xlu0 %6268
    %6270 = vrot.lane.b32.xlu0 %v5518, 14
    %v6271 = vpop.permute.xlu0 %6270
    %6272 = vrot.lane.b32.xlu0 %v5520, 14
    %v6273 = vpop.permute.xlu0 %6272
    %6274 = vrot.lane.b32.xlu0 %v5522, 14
    %v6275 = vpop.permute.xlu0 %6274
    %6276 = vrot.lane.b32.xlu0 %v5517, 14
    %v6277 = vpop.permute.xlu0 %6276
    %6278 = vrot.lane.b32.xlu0 %v5519, 14
    %v6279 = vpop.permute.xlu0 %6278
    %6280 = vrot.lane.b32.xlu0 %v5521, 14
    %v6281 = vpop.permute.xlu0 %6280
    %6282 = vrot.lane.b32.xlu0 %v5523, 14
    %v6283 = vpop.permute.xlu0 %6282
    %v6284 = vsel %vm2302, %v6269, %v6277
    %v6285 = vsel %vm2302, %v6271, %v6279
    %v6286 = vsel %vm2302, %v6273, %v6281
    %v6287 = vsel %vm2302, %v6275, %v6283
    %v6288 = vsel %vm2302, %v6277, %v6269
    %v6289 = vsel %vm2302, %v6279, %v6271
    %v6290 = vsel %vm2302, %v6281, %v6273
    %v6291 = vsel %vm2302, %v6283, %v6275
    %v6292 = vld [vmem:[%s2311] ss:$8 sm:$0x3]
    %v6294 = vlaneseq
    %v6295 = vshrl.u32 %v6294, 7
    %v6296 = vsub.s32 0, %v6295
    %v6297 = vrot.slane %v6292, %v6296
    %v6298 = vlaneseq
    %v6299 = vshrl.u32 %v6298, 7
    %v6300 = vsub.s32 1, %v6299
    %v6301 = vrot.slane %v6292, %v6300
    %v6304 = vmul.f32 %v6288, %v6297
    %v6305 = vmul.f32 %v6284, %v6301
    %v6306 = vmul.f32 %v6289, %v6297
    %v6307 = vmul.f32 %v6285, %v6301
    %v6308 = vmul.f32 %v6290, %v6297
    %v6309 = vmul.f32 %v6286, %v6301
    %v6310 = vmul.f32 %v6291, %v6297
    %v6311 = vmul.f32 %v6287, %v6301
    %6312 = vset.pattern.permute.xlu0 9
    %6313 = vperm.xlu0 %6312, %v5528
    %v6314 = vpop.permute.xlu0 %6313
    %6316 = vset.pattern.permute.xlu0 9
    %6317 = vperm.xlu0 %6316, %v5529
    %v6318 = vpop.permute.xlu0 %6317
    %6320 = vset.pattern.permute.xlu0 9
    %6321 = vperm.xlu0 %6320, %v5530
    %v6322 = vpop.permute.xlu0 %6321
    %6324 = vset.pattern.permute.xlu0 9
    %6325 = vperm.xlu0 %6324, %v5531
    %v6326 = vpop.permute.xlu0 %6325
    %v6328 = vmul.f32 %v6304, %v6314
    %v6329 = vmul.f32 %v6305, %v6314
    %v6330 = vmul.f32 %v6306, %v6318
    %v6331 = vmul.f32 %v6307, %v6318
    %v6332 = vmul.f32 %v6308, %v6322
    %v6333 = vmul.f32 %v6309, %v6322
    %v6334 = vmul.f32 %v6310, %v6326
    %v6335 = vmul.f32 %v6311, %v6326
    %v6336 = vadd.f32 %v6228, %v6328
    %v6337 = vadd.f32 %v6229, %v6329
    %v6338 = vadd.f32 %v6230, %v6330
    %v6339 = vadd.f32 %v6231, %v6331
    %v6340 = vadd.f32 %v6232, %v6332
    %v6341 = vadd.f32 %v6233, %v6333
    %v6342 = vadd.f32 %v6234, %v6334
    %v6343 = vadd.f32 %v6235, %v6335
    %6344 = vrot.lane.b32.xlu0 %v5516, 2
    %v6345 = vpop.permute.xlu0 %6344
    %6346 = vrot.lane.b32.xlu0 %v5518, 2
    %v6347 = vpop.permute.xlu0 %6346
    %6348 = vrot.lane.b32.xlu0 %v5520, 2
    %v6349 = vpop.permute.xlu0 %6348
    %6350 = vrot.lane.b32.xlu0 %v5522, 2
    %v6351 = vpop.permute.xlu0 %6350
    %6352 = vrot.lane.b32.xlu0 %v5517, 2
    %v6353 = vpop.permute.xlu0 %6352
    %6354 = vrot.lane.b32.xlu0 %v5519, 2
    %v6355 = vpop.permute.xlu0 %6354
    %6356 = vrot.lane.b32.xlu0 %v5521, 2
    %v6357 = vpop.permute.xlu0 %6356
    %6358 = vrot.lane.b32.xlu0 %v5523, 2
    %v6359 = vpop.permute.xlu0 %6358
    %v6360 = vsel %vm2380, %v6345, %v6353
    %v6361 = vsel %vm2380, %v6347, %v6355
    %v6362 = vsel %vm2380, %v6349, %v6357
    %v6363 = vsel %vm2380, %v6351, %v6359
    %v6364 = vsel %vm2380, %v6353, %v6345
    %v6365 = vsel %vm2380, %v6355, %v6347
    %v6366 = vsel %vm2380, %v6357, %v6349
    %v6367 = vsel %vm2380, %v6359, %v6351
    %v6368 = vld [vmem:[%s2389] ss:$8 sm:$0x3]
    %v6370 = vlaneseq
    %v6371 = vshrl.u32 %v6370, 7
    %v6372 = vsub.s32 0, %v6371
    %v6373 = vrot.slane %v6368, %v6372
    %v6374 = vlaneseq
    %v6375 = vshrl.u32 %v6374, 7
    %v6376 = vsub.s32 1, %v6375
    %v6377 = vrot.slane %v6368, %v6376
    %v6380 = vmul.f32 %v6364, %v6373
    %v6381 = vmul.f32 %v6360, %v6377
    %v6382 = vmul.f32 %v6365, %v6373
    %v6383 = vmul.f32 %v6361, %v6377
    %v6384 = vmul.f32 %v6366, %v6373
    %v6385 = vmul.f32 %v6362, %v6377
    %v6386 = vmul.f32 %v6367, %v6373
    %v6387 = vmul.f32 %v6363, %v6377
    %6388 = vset.pattern.permute.xlu0 10
    %6389 = vperm.xlu0 %6388, %v5528
    %v6390 = vpop.permute.xlu0 %6389
    %6392 = vset.pattern.permute.xlu0 10
    %6393 = vperm.xlu0 %6392, %v5529
    %v6394 = vpop.permute.xlu0 %6393
    %6396 = vset.pattern.permute.xlu0 10
    %6397 = vperm.xlu0 %6396, %v5530
    %v6398 = vpop.permute.xlu0 %6397
    %6400 = vset.pattern.permute.xlu0 10
    %6401 = vperm.xlu0 %6400, %v5531
    %v6402 = vpop.permute.xlu0 %6401
    %v6404 = vmul.f32 %v6380, %v6390
    %v6405 = vmul.f32 %v6381, %v6390
    %v6406 = vmul.f32 %v6382, %v6394
    %v6407 = vmul.f32 %v6383, %v6394
    %v6408 = vmul.f32 %v6384, %v6398
    %v6409 = vmul.f32 %v6385, %v6398
    %v6410 = vmul.f32 %v6386, %v6402
    %v6411 = vmul.f32 %v6387, %v6402
    %v6412 = vadd.f32 %v6336, %v6404
    %v6413 = vadd.f32 %v6337, %v6405
    %v6414 = vadd.f32 %v6338, %v6406
    %v6415 = vadd.f32 %v6339, %v6407
    %v6416 = vadd.f32 %v6340, %v6408
    %v6417 = vadd.f32 %v6341, %v6409
    %v6418 = vadd.f32 %v6342, %v6410
    %v6419 = vadd.f32 %v6343, %v6411
    %6420 = vrot.lane.b32.xlu0 %v5516, 1
    %v6421 = vpop.permute.xlu0 %6420
    %6422 = vrot.lane.b32.xlu0 %v5518, 1
    %v6423 = vpop.permute.xlu0 %6422
    %6424 = vrot.lane.b32.xlu0 %v5520, 1
    %v6425 = vpop.permute.xlu0 %6424
    %6426 = vrot.lane.b32.xlu0 %v5522, 1
    %v6427 = vpop.permute.xlu0 %6426
    %6428 = vrot.lane.b32.xlu0 %v5517, 1
    %v6429 = vpop.permute.xlu0 %6428
    %6430 = vrot.lane.b32.xlu0 %v5519, 1
    %v6431 = vpop.permute.xlu0 %6430
    %6432 = vrot.lane.b32.xlu0 %v5521, 1
    %v6433 = vpop.permute.xlu0 %6432
    %6434 = vrot.lane.b32.xlu0 %v5523, 1
    %v6435 = vpop.permute.xlu0 %6434
    %v6436 = vsel %vm638, %v6421, %v6429
    %v6437 = vsel %vm638, %v6423, %v6431
    %v6438 = vsel %vm638, %v6425, %v6433
    %v6439 = vsel %vm638, %v6427, %v6435
    %v6440 = vsel %vm638, %v6429, %v6421
    %v6441 = vsel %vm638, %v6431, %v6423
    %v6442 = vsel %vm638, %v6433, %v6425
    %v6443 = vsel %vm638, %v6435, %v6427
    %v6444 = vmul.f32 %v6440, %v4659
    %v6445 = vmul.f32 %v6436, %v4663
    %v6446 = vmul.f32 %v6441, %v4659
    %v6447 = vmul.f32 %v6437, %v4663
    %v6448 = vmul.f32 %v6442, %v4659
    %v6449 = vmul.f32 %v6438, %v4663
    %v6450 = vmul.f32 %v6443, %v4659
    %v6451 = vmul.f32 %v6439, %v4663
    %6452 = vset.pattern.permute.xlu0 11
    %6453 = vperm.xlu0 %6452, %v5528
    %v6454 = vpop.permute.xlu0 %6453
    %6456 = vset.pattern.permute.xlu0 11
    %6457 = vperm.xlu0 %6456, %v5529
    %v6458 = vpop.permute.xlu0 %6457
    %6460 = vset.pattern.permute.xlu0 11
    %6461 = vperm.xlu0 %6460, %v5530
    %v6462 = vpop.permute.xlu0 %6461
    %6464 = vset.pattern.permute.xlu0 11
    %6465 = vperm.xlu0 %6464, %v5531
    %v6466 = vpop.permute.xlu0 %6465
    %v6468 = vmul.f32 %v6444, %v6454
    %v6469 = vmul.f32 %v6445, %v6454
    %v6470 = vmul.f32 %v6446, %v6458
    %v6471 = vmul.f32 %v6447, %v6458
    %v6472 = vmul.f32 %v6448, %v6462
    %v6473 = vmul.f32 %v6449, %v6462
    %v6474 = vmul.f32 %v6450, %v6466
    %v6475 = vmul.f32 %v6451, %v6466
    %v6476 = vadd.f32 %v6412, %v6468
    %v6477 = vadd.f32 %v6413, %v6469
    %v6478 = vadd.f32 %v6414, %v6470
    %v6479 = vadd.f32 %v6415, %v6471
    %v6480 = vadd.f32 %v6416, %v6472
    %v6481 = vadd.f32 %v6417, %v6473
    %v6482 = vadd.f32 %v6418, %v6474
    %v6483 = vadd.f32 %v6419, %v6475
    %6484 = vset.pattern.permute.xlu0 3
    %6485 = vperm.xlu0 %6484, %v5524
    %v6486 = vpop.permute.xlu0 %6485
    %6488 = vset.pattern.permute.xlu0 3
    %6489 = vperm.xlu0 %6488, %v5525
    %v6490 = vpop.permute.xlu0 %6489
    %6492 = vset.pattern.permute.xlu0 3
    %6493 = vperm.xlu0 %6492, %v5526
    %v6494 = vpop.permute.xlu0 %6493
    %6496 = vset.pattern.permute.xlu0 3
    %6497 = vperm.xlu0 %6496, %v5527
    %v6498 = vpop.permute.xlu0 %6497
    %v6500 = vmul.f32 %v6444, %v6486
    %v6501 = vmul.f32 %v6445, %v6486
    %v6502 = vmul.f32 %v6446, %v6490
    %v6503 = vmul.f32 %v6447, %v6490
    %v6504 = vmul.f32 %v6448, %v6494
    %v6505 = vmul.f32 %v6449, %v6494
    %v6506 = vmul.f32 %v6450, %v6498
    %v6507 = vmul.f32 %v6451, %v6498
    %v6508 = vadd.f32 %v6260, %v6500
    %v6509 = vadd.f32 %v6261, %v6501
    %v6510 = vadd.f32 %v6262, %v6502
    %v6511 = vadd.f32 %v6263, %v6503
    %v6512 = vadd.f32 %v6264, %v6504
    %v6513 = vadd.f32 %v6265, %v6505
    %v6514 = vadd.f32 %v6266, %v6506
    %v6515 = vadd.f32 %v6267, %v6507
    %6516 = vset.pattern.permute.xlu0 12
    %6517 = vperm.xlu0 %6516, %v5528
    %v6518 = vpop.permute.xlu0 %6517
    %6520 = vset.pattern.permute.xlu0 12
    %6521 = vperm.xlu0 %6520, %v5529
    %v6522 = vpop.permute.xlu0 %6521
    %6524 = vset.pattern.permute.xlu0 12
    %6525 = vperm.xlu0 %6524, %v5530
    %v6526 = vpop.permute.xlu0 %6525
    %6528 = vset.pattern.permute.xlu0 12
    %6529 = vperm.xlu0 %6528, %v5531
    %v6530 = vpop.permute.xlu0 %6529
    %v6532 = vmul.f32 %v5516, %v6518
    %v6533 = vmul.f32 %v5517, %v6518
    %v6534 = vmul.f32 %v5518, %v6522
    %v6535 = vmul.f32 %v5519, %v6522
    %v6536 = vmul.f32 %v5520, %v6526
    %v6537 = vmul.f32 %v5521, %v6526
    %v6538 = vmul.f32 %v5522, %v6530
    %v6539 = vmul.f32 %v5523, %v6530
    %v6540 = vadd.f32 %v6476, %v6532
    %v6541 = vadd.f32 %v6477, %v6533
    %v6542 = vadd.f32 %v6478, %v6534
    %v6543 = vadd.f32 %v6479, %v6535
    %v6544 = vadd.f32 %v6480, %v6536
    %v6545 = vadd.f32 %v6481, %v6537
    %v6546 = vadd.f32 %v6482, %v6538
    %v6547 = vadd.f32 %v6483, %v6539
    %6548 = vset.pattern.permute.xlu0 4
    %6549 = vperm.xlu0 %6548, %v5524
    %v6550 = vpop.permute.xlu0 %6549
    %6552 = vset.pattern.permute.xlu0 4
    %6553 = vperm.xlu0 %6552, %v5525
    %v6554 = vpop.permute.xlu0 %6553
    %6556 = vset.pattern.permute.xlu0 4
    %6557 = vperm.xlu0 %6556, %v5526
    %v6558 = vpop.permute.xlu0 %6557
    %6560 = vset.pattern.permute.xlu0 4
    %6561 = vperm.xlu0 %6560, %v5527
    %v6562 = vpop.permute.xlu0 %6561
    %v6564 = vmul.f32 %v5516, %v6550
    %v6565 = vmul.f32 %v5517, %v6550
    %v6566 = vmul.f32 %v5518, %v6554
    %v6567 = vmul.f32 %v5519, %v6554
    %v6568 = vmul.f32 %v5520, %v6558
    %v6569 = vmul.f32 %v5521, %v6558
    %v6570 = vmul.f32 %v5522, %v6562
    %v6571 = vmul.f32 %v5523, %v6562
    %v6572 = vadd.f32 %v6508, %v6564
    %v6573 = vadd.f32 %v6509, %v6565
    %v6574 = vadd.f32 %v6510, %v6566
    %v6575 = vadd.f32 %v6511, %v6567
    %v6576 = vadd.f32 %v6512, %v6568
    %v6577 = vadd.f32 %v6513, %v6569
    %v6578 = vadd.f32 %v6514, %v6570
    %v6579 = vadd.f32 %v6515, %v6571
    %6580 = vrot.lane.b32.xlu0 %v5516, 127
    %v6581 = vpop.permute.xlu0 %6580
    %6582 = vrot.lane.b32.xlu0 %v5518, 127
    %v6583 = vpop.permute.xlu0 %6582
    %6584 = vrot.lane.b32.xlu0 %v5520, 127
    %v6585 = vpop.permute.xlu0 %6584
    %6586 = vrot.lane.b32.xlu0 %v5522, 127
    %v6587 = vpop.permute.xlu0 %6586
    %6588 = vrot.lane.b32.xlu0 %v5517, 127
    %v6589 = vpop.permute.xlu0 %6588
    %6590 = vrot.lane.b32.xlu0 %v5519, 127
    %v6591 = vpop.permute.xlu0 %6590
    %6592 = vrot.lane.b32.xlu0 %v5521, 127
    %v6593 = vpop.permute.xlu0 %6592
    %6594 = vrot.lane.b32.xlu0 %v5523, 127
    %v6595 = vpop.permute.xlu0 %6594
    %v6596 = vsel %vm912, %v6581, %v6589
    %v6597 = vsel %vm912, %v6583, %v6591
    %v6598 = vsel %vm912, %v6585, %v6593
    %v6599 = vsel %vm912, %v6587, %v6595
    %v6600 = vsel %vm912, %v6589, %v6581
    %v6601 = vsel %vm912, %v6591, %v6583
    %v6602 = vsel %vm912, %v6593, %v6585
    %v6603 = vsel %vm912, %v6595, %v6587
    %v6604 = vmul.f32 %v6596, %v4929
    %v6605 = vmul.f32 %v6600, %v4933
    %v6606 = vmul.f32 %v6597, %v4929
    %v6607 = vmul.f32 %v6601, %v4933
    %v6608 = vmul.f32 %v6598, %v4929
    %v6609 = vmul.f32 %v6602, %v4933
    %v6610 = vmul.f32 %v6599, %v4929
    %v6611 = vmul.f32 %v6603, %v4933
    %6612 = vset.pattern.permute.xlu0 13
    %6613 = vperm.xlu0 %6612, %v5528
    %v6614 = vpop.permute.xlu0 %6613
    %6616 = vset.pattern.permute.xlu0 13
    %6617 = vperm.xlu0 %6616, %v5529
    %v6618 = vpop.permute.xlu0 %6617
    %6620 = vset.pattern.permute.xlu0 13
    %6621 = vperm.xlu0 %6620, %v5530
    %v6622 = vpop.permute.xlu0 %6621
    %6624 = vset.pattern.permute.xlu0 13
    %6625 = vperm.xlu0 %6624, %v5531
    %v6626 = vpop.permute.xlu0 %6625
    %v6628 = vmul.f32 %v6604, %v6614
    %v6629 = vmul.f32 %v6605, %v6614
    %v6630 = vmul.f32 %v6606, %v6618
    %v6631 = vmul.f32 %v6607, %v6618
    %v6632 = vmul.f32 %v6608, %v6622
    %v6633 = vmul.f32 %v6609, %v6622
    %v6634 = vmul.f32 %v6610, %v6626
    %v6635 = vmul.f32 %v6611, %v6626
    %v6636 = vadd.f32 %v6540, %v6628
    %v6637 = vadd.f32 %v6541, %v6629
    %v6638 = vadd.f32 %v6542, %v6630
    %v6639 = vadd.f32 %v6543, %v6631
    %v6640 = vadd.f32 %v6544, %v6632
    %v6641 = vadd.f32 %v6545, %v6633
    %v6642 = vadd.f32 %v6546, %v6634
    %v6643 = vadd.f32 %v6547, %v6635
    %6644 = vset.pattern.permute.xlu0 5
    %6645 = vperm.xlu0 %6644, %v5524
    %v6646 = vpop.permute.xlu0 %6645
    %6648 = vset.pattern.permute.xlu0 5
    %6649 = vperm.xlu0 %6648, %v5525
    %v6650 = vpop.permute.xlu0 %6649
    %6652 = vset.pattern.permute.xlu0 5
    %6653 = vperm.xlu0 %6652, %v5526
    %v6654 = vpop.permute.xlu0 %6653
    %6656 = vset.pattern.permute.xlu0 5
    %6657 = vperm.xlu0 %6656, %v5527
    %v6658 = vpop.permute.xlu0 %6657
    %v6660 = vmul.f32 %v6604, %v6646
    %v6661 = vmul.f32 %v6605, %v6646
    %v6662 = vmul.f32 %v6606, %v6650
    %v6663 = vmul.f32 %v6607, %v6650
    %v6664 = vmul.f32 %v6608, %v6654
    %v6665 = vmul.f32 %v6609, %v6654
    %v6666 = vmul.f32 %v6610, %v6658
    %v6667 = vmul.f32 %v6611, %v6658
    %v6668 = vadd.f32 %v6572, %v6660
    %v6669 = vadd.f32 %v6573, %v6661
    %v6670 = vadd.f32 %v6574, %v6662
    %v6671 = vadd.f32 %v6575, %v6663
    %v6672 = vadd.f32 %v6576, %v6664
    %v6673 = vadd.f32 %v6577, %v6665
    %v6674 = vadd.f32 %v6578, %v6666
    %v6675 = vadd.f32 %v6579, %v6667
    %6676 = vrot.lane.b32.xlu0 %v5516, 126
    %v6677 = vpop.permute.xlu0 %6676
    %6678 = vrot.lane.b32.xlu0 %v5518, 126
    %v6679 = vpop.permute.xlu0 %6678
    %6680 = vrot.lane.b32.xlu0 %v5520, 126
    %v6681 = vpop.permute.xlu0 %6680
    %6682 = vrot.lane.b32.xlu0 %v5522, 126
    %v6683 = vpop.permute.xlu0 %6682
    %6684 = vrot.lane.b32.xlu0 %v5517, 126
    %v6685 = vpop.permute.xlu0 %6684
    %6686 = vrot.lane.b32.xlu0 %v5519, 126
    %v6687 = vpop.permute.xlu0 %6686
    %6688 = vrot.lane.b32.xlu0 %v5521, 126
    %v6689 = vpop.permute.xlu0 %6688
    %6690 = vrot.lane.b32.xlu0 %v5523, 126
    %v6691 = vpop.permute.xlu0 %6690
    %v6692 = vsel %vm2714, %v6677, %v6685
    %v6693 = vsel %vm2714, %v6679, %v6687
    %v6694 = vsel %vm2714, %v6681, %v6689
    %v6695 = vsel %vm2714, %v6683, %v6691
    %v6696 = vsel %vm2714, %v6685, %v6677
    %v6697 = vsel %vm2714, %v6687, %v6679
    %v6698 = vsel %vm2714, %v6689, %v6681
    %v6699 = vsel %vm2714, %v6691, %v6683
    %v6700 = vld [vmem:[%s2723] ss:$8 sm:$0x3]
    %v6702 = vlaneseq
    %v6703 = vshrl.u32 %v6702, 7
    %v6704 = vsub.s32 0, %v6703
    %v6705 = vrot.slane %v6700, %v6704
    %v6706 = vlaneseq
    %v6707 = vshrl.u32 %v6706, 7
    %v6708 = vsub.s32 1, %v6707
    %v6709 = vrot.slane %v6700, %v6708
    %v6712 = vmul.f32 %v6692, %v6705
    %v6713 = vmul.f32 %v6696, %v6709
    %v6714 = vmul.f32 %v6693, %v6705
    %v6715 = vmul.f32 %v6697, %v6709
    %v6716 = vmul.f32 %v6694, %v6705
    %v6717 = vmul.f32 %v6698, %v6709
    %v6718 = vmul.f32 %v6695, %v6705
    %v6719 = vmul.f32 %v6699, %v6709
    %6720 = vset.pattern.permute.xlu0 14
    %6721 = vperm.xlu0 %6720, %v5528
    %v6722 = vpop.permute.xlu0 %6721
    %6724 = vset.pattern.permute.xlu0 14
    %6725 = vperm.xlu0 %6724, %v5529
    %v6726 = vpop.permute.xlu0 %6725
    %6728 = vset.pattern.permute.xlu0 14
    %6729 = vperm.xlu0 %6728, %v5530
    %v6730 = vpop.permute.xlu0 %6729
    %6732 = vset.pattern.permute.xlu0 14
    %6733 = vperm.xlu0 %6732, %v5531
    %v6734 = vpop.permute.xlu0 %6733
    %v6736 = vmul.f32 %v6712, %v6722
    %v6737 = vmul.f32 %v6713, %v6722
    %v6738 = vmul.f32 %v6714, %v6726
    %v6739 = vmul.f32 %v6715, %v6726
    %v6740 = vmul.f32 %v6716, %v6730
    %v6741 = vmul.f32 %v6717, %v6730
    %v6742 = vmul.f32 %v6718, %v6734
    %v6743 = vmul.f32 %v6719, %v6734
    %v6744 = vadd.f32 %v6636, %v6736
    %v6745 = vadd.f32 %v6637, %v6737
    %v6746 = vadd.f32 %v6638, %v6738
    %v6747 = vadd.f32 %v6639, %v6739
    %v6748 = vadd.f32 %v6640, %v6740
    %v6749 = vadd.f32 %v6641, %v6741
    %v6750 = vadd.f32 %v6642, %v6742
    %v6751 = vadd.f32 %v6643, %v6743
    %6752 = vrot.lane.b32.xlu0 %v5516, 114
    %v6753 = vpop.permute.xlu0 %6752
    %6754 = vrot.lane.b32.xlu0 %v5518, 114
    %v6755 = vpop.permute.xlu0 %6754
    %6756 = vrot.lane.b32.xlu0 %v5520, 114
    %v6757 = vpop.permute.xlu0 %6756
    %6758 = vrot.lane.b32.xlu0 %v5522, 114
    %v6759 = vpop.permute.xlu0 %6758
    %6760 = vrot.lane.b32.xlu0 %v5517, 114
    %v6761 = vpop.permute.xlu0 %6760
    %6762 = vrot.lane.b32.xlu0 %v5519, 114
    %v6763 = vpop.permute.xlu0 %6762
    %6764 = vrot.lane.b32.xlu0 %v5521, 114
    %v6765 = vpop.permute.xlu0 %6764
    %6766 = vrot.lane.b32.xlu0 %v5523, 114
    %v6767 = vpop.permute.xlu0 %6766
    %v6768 = vsel %vm2792, %v6753, %v6761
    %v6769 = vsel %vm2792, %v6755, %v6763
    %v6770 = vsel %vm2792, %v6757, %v6765
    %v6771 = vsel %vm2792, %v6759, %v6767
    %v6772 = vsel %vm2792, %v6761, %v6753
    %v6773 = vsel %vm2792, %v6763, %v6755
    %v6774 = vsel %vm2792, %v6765, %v6757
    %v6775 = vsel %vm2792, %v6767, %v6759
    %v6776 = vld [vmem:[%s2801] ss:$8 sm:$0x3]
    %v6778 = vlaneseq
    %v6779 = vshrl.u32 %v6778, 7
    %v6780 = vsub.s32 0, %v6779
    %v6781 = vrot.slane %v6776, %v6780
    %v6782 = vlaneseq
    %v6783 = vshrl.u32 %v6782, 7
    %v6784 = vsub.s32 1, %v6783
    %v6785 = vrot.slane %v6776, %v6784
    %v6788 = vmul.f32 %v6768, %v6781
    %v6789 = vmul.f32 %v6772, %v6785
    %v6790 = vmul.f32 %v6769, %v6781
    %v6791 = vmul.f32 %v6773, %v6785
    %v6792 = vmul.f32 %v6770, %v6781
    %v6793 = vmul.f32 %v6774, %v6785
    %v6794 = vmul.f32 %v6771, %v6781
    %v6795 = vmul.f32 %v6775, %v6785
    %6796 = vset.pattern.permute.xlu0 15
    %6797 = vperm.xlu0 %6796, %v5528
    %v6798 = vpop.permute.xlu0 %6797
    %6800 = vset.pattern.permute.xlu0 15
    %6801 = vperm.xlu0 %6800, %v5529
    %v6802 = vpop.permute.xlu0 %6801
    %6804 = vset.pattern.permute.xlu0 15
    %6805 = vperm.xlu0 %6804, %v5530
    %v6806 = vpop.permute.xlu0 %6805
    %6808 = vset.pattern.permute.xlu0 15
    %6809 = vperm.xlu0 %6808, %v5531
    %v6810 = vpop.permute.xlu0 %6809
    %v6812 = vmul.f32 %v6788, %v6798
    %v6813 = vmul.f32 %v6789, %v6798
    %v6814 = vmul.f32 %v6790, %v6802
    %v6815 = vmul.f32 %v6791, %v6802
    %v6816 = vmul.f32 %v6792, %v6806
    %v6817 = vmul.f32 %v6793, %v6806
    %v6818 = vmul.f32 %v6794, %v6810
    %v6819 = vmul.f32 %v6795, %v6810
    %v6820 = vadd.f32 %v6744, %v6812
    %v6821 = vadd.f32 %v6745, %v6813
    %v6822 = vadd.f32 %v6746, %v6814
    %v6823 = vadd.f32 %v6747, %v6815
    %v6824 = vadd.f32 %v6748, %v6816
    %v6825 = vadd.f32 %v6749, %v6817
    %v6826 = vadd.f32 %v6750, %v6818
    %v6827 = vadd.f32 %v6751, %v6819
    %6828 = vrot.lane.b32.xlu0 %v5516, 113
    %v6829 = vpop.permute.xlu0 %6828
    %6830 = vrot.lane.b32.xlu0 %v5518, 113
    %v6831 = vpop.permute.xlu0 %6830
    %6832 = vrot.lane.b32.xlu0 %v5520, 113
    %v6833 = vpop.permute.xlu0 %6832
    %6834 = vrot.lane.b32.xlu0 %v5522, 113
    %v6835 = vpop.permute.xlu0 %6834
    %6836 = vrot.lane.b32.xlu0 %v5517, 113
    %v6837 = vpop.permute.xlu0 %6836
    %6838 = vrot.lane.b32.xlu0 %v5519, 113
    %v6839 = vpop.permute.xlu0 %6838
    %6840 = vrot.lane.b32.xlu0 %v5521, 113
    %v6841 = vpop.permute.xlu0 %6840
    %6842 = vrot.lane.b32.xlu0 %v5523, 113
    %v6843 = vpop.permute.xlu0 %6842
    %v6844 = vsel %vm1072, %v6829, %v6837
    %v6845 = vsel %vm1072, %v6831, %v6839
    %v6846 = vsel %vm1072, %v6833, %v6841
    %v6847 = vsel %vm1072, %v6835, %v6843
    %v6848 = vsel %vm1072, %v6837, %v6829
    %v6849 = vsel %vm1072, %v6839, %v6831
    %v6850 = vsel %vm1072, %v6841, %v6833
    %v6851 = vsel %vm1072, %v6843, %v6835
    %v6852 = vmul.f32 %v6844, %v5086
    %v6853 = vmul.f32 %v6848, %v5090
    %v6854 = vmul.f32 %v6845, %v5086
    %v6855 = vmul.f32 %v6849, %v5090
    %v6856 = vmul.f32 %v6846, %v5086
    %v6857 = vmul.f32 %v6850, %v5090
    %v6858 = vmul.f32 %v6847, %v5086
    %v6859 = vmul.f32 %v6851, %v5090
    %6860 = vset.pattern.permute.xlu0 16
    %6861 = vperm.xlu0 %6860, %v5528
    %v6862 = vpop.permute.xlu0 %6861
    %6864 = vset.pattern.permute.xlu0 16
    %6865 = vperm.xlu0 %6864, %v5529
    %v6866 = vpop.permute.xlu0 %6865
    %6868 = vset.pattern.permute.xlu0 16
    %6869 = vperm.xlu0 %6868, %v5530
    %v6870 = vpop.permute.xlu0 %6869
    %6872 = vset.pattern.permute.xlu0 16
    %6873 = vperm.xlu0 %6872, %v5531
    %v6874 = vpop.permute.xlu0 %6873
    %v6876 = vmul.f32 %v6852, %v6862
    %v6877 = vmul.f32 %v6853, %v6862
    %v6878 = vmul.f32 %v6854, %v6866
    %v6879 = vmul.f32 %v6855, %v6866
    %v6880 = vmul.f32 %v6856, %v6870
    %v6881 = vmul.f32 %v6857, %v6870
    %v6882 = vmul.f32 %v6858, %v6874
    %v6883 = vmul.f32 %v6859, %v6874
    %v6884 = vadd.f32 %v6820, %v6876
    %v6885 = vadd.f32 %v6821, %v6877
    %v6886 = vadd.f32 %v6822, %v6878
    %v6887 = vadd.f32 %v6823, %v6879
    %v6888 = vadd.f32 %v6824, %v6880
    %v6889 = vadd.f32 %v6825, %v6881
    %v6890 = vadd.f32 %v6826, %v6882
    %v6891 = vadd.f32 %v6827, %v6883
    %6892 = vset.pattern.permute.xlu0 6
    %6893 = vperm.xlu0 %6892, %v5524
    %v6894 = vpop.permute.xlu0 %6893
    %6896 = vset.pattern.permute.xlu0 6
    %6897 = vperm.xlu0 %6896, %v5525
    %v6898 = vpop.permute.xlu0 %6897
    %6900 = vset.pattern.permute.xlu0 6
    %6901 = vperm.xlu0 %6900, %v5526
    %v6902 = vpop.permute.xlu0 %6901
    %6904 = vset.pattern.permute.xlu0 6
    %6905 = vperm.xlu0 %6904, %v5527
    %v6906 = vpop.permute.xlu0 %6905
    %v6908 = vmul.f32 %v6852, %v6894
    %v6909 = vmul.f32 %v6853, %v6894
    %v6910 = vmul.f32 %v6854, %v6898
    %v6911 = vmul.f32 %v6855, %v6898
    %v6912 = vmul.f32 %v6856, %v6902
    %v6913 = vmul.f32 %v6857, %v6902
    %v6914 = vmul.f32 %v6858, %v6906
    %v6915 = vmul.f32 %v6859, %v6906
    %v6916 = vadd.f32 %v6668, %v6908
    %v6917 = vadd.f32 %v6669, %v6909
    %v6918 = vadd.f32 %v6670, %v6910
    %v6919 = vadd.f32 %v6671, %v6911
    %v6920 = vadd.f32 %v6672, %v6912
    %v6921 = vadd.f32 %v6673, %v6913
    %v6922 = vadd.f32 %v6674, %v6914
    %v6923 = vadd.f32 %v6675, %v6915
    %6924 = vrot.lane.b32.xlu0 %v5516, 112
    %v6925 = vpop.permute.xlu0 %6924
    %6926 = vrot.lane.b32.xlu0 %v5518, 112
    %v6927 = vpop.permute.xlu0 %6926
    %6928 = vrot.lane.b32.xlu0 %v5520, 112
    %v6929 = vpop.permute.xlu0 %6928
    %6930 = vrot.lane.b32.xlu0 %v5522, 112
    %v6931 = vpop.permute.xlu0 %6930
    %6932 = vrot.lane.b32.xlu0 %v5517, 112
    %v6933 = vpop.permute.xlu0 %6932
    %6934 = vrot.lane.b32.xlu0 %v5519, 112
    %v6935 = vpop.permute.xlu0 %6934
    %6936 = vrot.lane.b32.xlu0 %v5521, 112
    %v6937 = vpop.permute.xlu0 %6936
    %6938 = vrot.lane.b32.xlu0 %v5523, 112
    %v6939 = vpop.permute.xlu0 %6938
    %v6940 = vsel %vm1232, %v6925, %v6933
    %v6941 = vsel %vm1232, %v6927, %v6935
    %v6942 = vsel %vm1232, %v6929, %v6937
    %v6943 = vsel %vm1232, %v6931, %v6939
    %v6944 = vsel %vm1232, %v6933, %v6925
    %v6945 = vsel %vm1232, %v6935, %v6927
    %v6946 = vsel %vm1232, %v6937, %v6929
    %v6947 = vsel %vm1232, %v6939, %v6931
    %v6948 = vmul.f32 %v6940, %v5243
    %v6949 = vmul.f32 %v6944, %v5247
    %v6950 = vmul.f32 %v6941, %v5243
    %v6951 = vmul.f32 %v6945, %v5247
    %v6952 = vmul.f32 %v6942, %v5243
    %v6953 = vmul.f32 %v6946, %v5247
    %v6954 = vmul.f32 %v6943, %v5243
    %v6955 = vmul.f32 %v6947, %v5247
    %6956 = vset.pattern.permute.xlu0 17
    %6957 = vperm.xlu0 %6956, %v5528
    %v6958 = vpop.permute.xlu0 %6957
    %6960 = vset.pattern.permute.xlu0 17
    %6961 = vperm.xlu0 %6960, %v5529
    %v6962 = vpop.permute.xlu0 %6961
    %6964 = vset.pattern.permute.xlu0 17
    %6965 = vperm.xlu0 %6964, %v5530
    %v6966 = vpop.permute.xlu0 %6965
    %6968 = vset.pattern.permute.xlu0 17
    %6969 = vperm.xlu0 %6968, %v5531
    %v6970 = vpop.permute.xlu0 %6969
    %v6972 = vmul.f32 %v6948, %v6958
    %v6973 = vmul.f32 %v6949, %v6958
    %v6974 = vmul.f32 %v6950, %v6962
    %v6975 = vmul.f32 %v6951, %v6962
    %v6976 = vmul.f32 %v6952, %v6966
    %v6977 = vmul.f32 %v6953, %v6966
    %v6978 = vmul.f32 %v6954, %v6970
    %v6979 = vmul.f32 %v6955, %v6970
    %v6980 = vadd.f32 %v6884, %v6972
    %v6981 = vadd.f32 %v6885, %v6973
    %v6982 = vadd.f32 %v6886, %v6974
    %v6983 = vadd.f32 %v6887, %v6975
    %v6984 = vadd.f32 %v6888, %v6976
    %v6985 = vadd.f32 %v6889, %v6977
    %v6986 = vadd.f32 %v6890, %v6978
    %v6987 = vadd.f32 %v6891, %v6979
    %6988 = vset.pattern.permute.xlu0 7
    %6989 = vperm.xlu0 %6988, %v5524
    %v6990 = vpop.permute.xlu0 %6989
    %6992 = vset.pattern.permute.xlu0 7
    %6993 = vperm.xlu0 %6992, %v5525
    %v6994 = vpop.permute.xlu0 %6993
    %6996 = vset.pattern.permute.xlu0 7
    %6997 = vperm.xlu0 %6996, %v5526
    %v6998 = vpop.permute.xlu0 %6997
    %7000 = vset.pattern.permute.xlu0 7
    %7001 = vperm.xlu0 %7000, %v5527
    %v7002 = vpop.permute.xlu0 %7001
    %v7004 = vmul.f32 %v6948, %v6990
    %v7005 = vmul.f32 %v6949, %v6990
    %v7006 = vmul.f32 %v6950, %v6994
    %v7007 = vmul.f32 %v6951, %v6994
    %v7008 = vmul.f32 %v6952, %v6998
    %v7009 = vmul.f32 %v6953, %v6998
    %v7010 = vmul.f32 %v6954, %v7002
    %v7011 = vmul.f32 %v6955, %v7002
    %v7012 = vadd.f32 %v6916, %v7004
    %v7013 = vadd.f32 %v6917, %v7005
    %v7014 = vadd.f32 %v6918, %v7006
    %v7015 = vadd.f32 %v6919, %v7007
    %v7016 = vadd.f32 %v6920, %v7008
    %v7017 = vadd.f32 %v6921, %v7009
    %v7018 = vadd.f32 %v6922, %v7010
    %v7019 = vadd.f32 %v6923, %v7011
    %7020 = vrot.lane.b32.xlu0 %v5516, 111
    %v7021 = vpop.permute.xlu0 %7020
    %7022 = vrot.lane.b32.xlu0 %v5518, 111
    %v7023 = vpop.permute.xlu0 %7022
    %7024 = vrot.lane.b32.xlu0 %v5520, 111
    %v7025 = vpop.permute.xlu0 %7024
    %7026 = vrot.lane.b32.xlu0 %v5522, 111
    %v7027 = vpop.permute.xlu0 %7026
    %7028 = vrot.lane.b32.xlu0 %v5517, 111
    %v7029 = vpop.permute.xlu0 %7028
    %7030 = vrot.lane.b32.xlu0 %v5519, 111
    %v7031 = vpop.permute.xlu0 %7030
    %7032 = vrot.lane.b32.xlu0 %v5521, 111
    %v7033 = vpop.permute.xlu0 %7032
    %7034 = vrot.lane.b32.xlu0 %v5523, 111
    %v7035 = vpop.permute.xlu0 %7034
    %v7036 = vsel %vm1392, %v7021, %v7029
    %v7037 = vsel %vm1392, %v7023, %v7031
    %v7038 = vsel %vm1392, %v7025, %v7033
    %v7039 = vsel %vm1392, %v7027, %v7035
    %v7040 = vsel %vm1392, %v7029, %v7021
    %v7041 = vsel %vm1392, %v7031, %v7023
    %v7042 = vsel %vm1392, %v7033, %v7025
    %v7043 = vsel %vm1392, %v7035, %v7027
    %v7044 = vmul.f32 %v7036, %v5400
    %v7045 = vmul.f32 %v7040, %v5404
    %v7046 = vmul.f32 %v7037, %v5400
    %v7047 = vmul.f32 %v7041, %v5404
    %v7048 = vmul.f32 %v7038, %v5400
    %v7049 = vmul.f32 %v7042, %v5404
    %v7050 = vmul.f32 %v7039, %v5400
    %v7051 = vmul.f32 %v7043, %v5404
    %7052 = vset.pattern.permute.xlu0 18
    %7053 = vperm.xlu0 %7052, %v5528
    %v7054 = vpop.permute.xlu0 %7053
    %7056 = vset.pattern.permute.xlu0 18
    %7057 = vperm.xlu0 %7056, %v5529
    %v7058 = vpop.permute.xlu0 %7057
    %7060 = vset.pattern.permute.xlu0 18
    %7061 = vperm.xlu0 %7060, %v5530
    %v7062 = vpop.permute.xlu0 %7061
    %7064 = vset.pattern.permute.xlu0 18
    %7065 = vperm.xlu0 %7064, %v5531
    %v7066 = vpop.permute.xlu0 %7065
    %v7068 = vmul.f32 %v7044, %v7054
    %v7069 = vmul.f32 %v7045, %v7054
    %v7070 = vmul.f32 %v7046, %v7058
    %v7071 = vmul.f32 %v7047, %v7058
    %v7072 = vmul.f32 %v7048, %v7062
    %v7073 = vmul.f32 %v7049, %v7062
    %v7074 = vmul.f32 %v7050, %v7066
    %v7075 = vmul.f32 %v7051, %v7066
    %v7076 = vadd.f32 %v6980, %v7068
    %v7077 = vadd.f32 %v6981, %v7069
    %v7078 = vadd.f32 %v6982, %v7070
    %v7079 = vadd.f32 %v6983, %v7071
    %v7080 = vadd.f32 %v6984, %v7072
    %v7081 = vadd.f32 %v6985, %v7073
    %v7082 = vadd.f32 %v6986, %v7074
    %v7083 = vadd.f32 %v6987, %v7075
    %7084 = vset.pattern.permute.xlu0 8
    %7085 = vperm.xlu0 %7084, %v5524
    %v7086 = vpop.permute.xlu0 %7085
    %7088 = vset.pattern.permute.xlu0 8
    %7089 = vperm.xlu0 %7088, %v5525
    %v7090 = vpop.permute.xlu0 %7089
    %7092 = vset.pattern.permute.xlu0 8
    %7093 = vperm.xlu0 %7092, %v5526
    %v7094 = vpop.permute.xlu0 %7093
    %7096 = vset.pattern.permute.xlu0 8
    %7097 = vperm.xlu0 %7096, %v5527
    %v7098 = vpop.permute.xlu0 %7097
    %v7100 = vmul.f32 %v7044, %v7086
    %v7101 = vmul.f32 %v7045, %v7086
    %v7102 = vmul.f32 %v7046, %v7090
    %v7103 = vmul.f32 %v7047, %v7090
    %v7104 = vmul.f32 %v7048, %v7094
    %v7105 = vmul.f32 %v7049, %v7094
    %v7106 = vmul.f32 %v7050, %v7098
    %v7107 = vmul.f32 %v7051, %v7098
    %v7108 = vadd.f32 %v7012, %v7100
    %v7109 = vadd.f32 %v7013, %v7101
    %v7110 = vadd.f32 %v7014, %v7102
    %v7111 = vadd.f32 %v7015, %v7103
    %v7112 = vadd.f32 %v7016, %v7104
    %v7113 = vadd.f32 %v7017, %v7105
    %v7114 = vadd.f32 %v7018, %v7106
    %v7115 = vadd.f32 %v7019, %v7107
    %7116 = vrot.lane.b32.xlu0 %v5516, 110
    %v7117 = vpop.permute.xlu0 %7116
    %7118 = vrot.lane.b32.xlu0 %v5518, 110
    %v7119 = vpop.permute.xlu0 %7118
    %7120 = vrot.lane.b32.xlu0 %v5520, 110
    %v7121 = vpop.permute.xlu0 %7120
    %7122 = vrot.lane.b32.xlu0 %v5522, 110
    %v7123 = vpop.permute.xlu0 %7122
    %7124 = vrot.lane.b32.xlu0 %v5517, 110
    %v7125 = vpop.permute.xlu0 %7124
    %7126 = vrot.lane.b32.xlu0 %v5519, 110
    %v7127 = vpop.permute.xlu0 %7126
    %7128 = vrot.lane.b32.xlu0 %v5521, 110
    %v7129 = vpop.permute.xlu0 %7128
    %7130 = vrot.lane.b32.xlu0 %v5523, 110
    %v7131 = vpop.permute.xlu0 %7130
    %v7132 = vsel %vm3158, %v7117, %v7125
    %v7133 = vsel %vm3158, %v7119, %v7127
    %v7134 = vsel %vm3158, %v7121, %v7129
    %v7135 = vsel %vm3158, %v7123, %v7131
    %v7136 = vsel %vm3158, %v7125, %v7117
    %v7137 = vsel %vm3158, %v7127, %v7119
    %v7138 = vsel %vm3158, %v7129, %v7121
    %v7139 = vsel %vm3158, %v7131, %v7123
    %v7140 = vld [vmem:[%s3167] ss:$8 sm:$0x3]
    %v7142 = vlaneseq
    %v7143 = vshrl.u32 %v7142, 7
    %v7144 = vsub.s32 0, %v7143
    %v7145 = vrot.slane %v7140, %v7144
    %v7146 = vlaneseq
    %v7147 = vshrl.u32 %v7146, 7
    %v7148 = vsub.s32 1, %v7147
    %v7149 = vrot.slane %v7140, %v7148
    %v7152 = vmul.f32 %v7132, %v7145
    %v7153 = vmul.f32 %v7136, %v7149
    %v7154 = vmul.f32 %v7133, %v7145
    %v7155 = vmul.f32 %v7137, %v7149
    %v7156 = vmul.f32 %v7134, %v7145
    %v7157 = vmul.f32 %v7138, %v7149
    %v7158 = vmul.f32 %v7135, %v7145
    %v7159 = vmul.f32 %v7139, %v7149
    %7160 = vset.pattern.permute.xlu0 19
    %7161 = vperm.xlu0 %7160, %v5528
    %v7162 = vpop.permute.xlu0 %7161
    %7164 = vset.pattern.permute.xlu0 19
    %7165 = vperm.xlu0 %7164, %v5529
    %v7166 = vpop.permute.xlu0 %7165
    %7168 = vset.pattern.permute.xlu0 19
    %7169 = vperm.xlu0 %7168, %v5530
    %v7170 = vpop.permute.xlu0 %7169
    %7172 = vset.pattern.permute.xlu0 19
    %7173 = vperm.xlu0 %7172, %v5531
    %v7174 = vpop.permute.xlu0 %7173
    %v7176 = vmul.f32 %v7152, %v7162
    %v7177 = vmul.f32 %v7153, %v7162
    %v7178 = vmul.f32 %v7154, %v7166
    %v7179 = vmul.f32 %v7155, %v7166
    %v7180 = vmul.f32 %v7156, %v7170
    %v7181 = vmul.f32 %v7157, %v7170
    %v7182 = vmul.f32 %v7158, %v7174
    %v7183 = vmul.f32 %v7159, %v7174
    %v7184 = vadd.f32 %v7076, %v7176
    %v7185 = vadd.f32 %v7077, %v7177
    %v7186 = vadd.f32 %v7078, %v7178
    %v7187 = vadd.f32 %v7079, %v7179
    %v7188 = vadd.f32 %v7080, %v7180
    %v7189 = vadd.f32 %v7081, %v7181
    %v7190 = vadd.f32 %v7082, %v7182
    %v7191 = vadd.f32 %v7083, %v7183
    %7192 = vrot.lane.b32.xlu0 %v5516, 98
    %v7193 = vpop.permute.xlu0 %7192
    %7194 = vrot.lane.b32.xlu0 %v5518, 98
    %v7195 = vpop.permute.xlu0 %7194
    %7196 = vrot.lane.b32.xlu0 %v5520, 98
    %v7197 = vpop.permute.xlu0 %7196
    %7198 = vrot.lane.b32.xlu0 %v5522, 98
    %v7199 = vpop.permute.xlu0 %7198
    %7200 = vrot.lane.b32.xlu0 %v5517, 98
    %v7201 = vpop.permute.xlu0 %7200
    %7202 = vrot.lane.b32.xlu0 %v5519, 98
    %v7203 = vpop.permute.xlu0 %7202
    %7204 = vrot.lane.b32.xlu0 %v5521, 98
    %v7205 = vpop.permute.xlu0 %7204
    %7206 = vrot.lane.b32.xlu0 %v5523, 98
    %v7207 = vpop.permute.xlu0 %7206
    %v7208 = vsel %vm3236, %v7193, %v7201
    %v7209 = vsel %vm3236, %v7195, %v7203
    %v7210 = vsel %vm3236, %v7197, %v7205
    %v7211 = vsel %vm3236, %v7199, %v7207
    %v7212 = vsel %vm3236, %v7201, %v7193
    %v7213 = vsel %vm3236, %v7203, %v7195
    %v7214 = vsel %vm3236, %v7205, %v7197
    %v7215 = vsel %vm3236, %v7207, %v7199
    %v7216 = vld [vmem:[%s3245] ss:$8 sm:$0x3]
    %v7218 = vlaneseq
    %v7219 = vshrl.u32 %v7218, 7
    %v7220 = vsub.s32 0, %v7219
    %v7221 = vrot.slane %v7216, %v7220
    %v7222 = vlaneseq
    %v7223 = vshrl.u32 %v7222, 7
    %v7224 = vsub.s32 1, %v7223
    %v7225 = vrot.slane %v7216, %v7224
    %v7228 = vmul.f32 %v7208, %v7221
    %v7229 = vmul.f32 %v7212, %v7225
    %v7230 = vmul.f32 %v7209, %v7221
    %v7231 = vmul.f32 %v7213, %v7225
    %v7232 = vmul.f32 %v7210, %v7221
    %v7233 = vmul.f32 %v7214, %v7225
    %v7234 = vmul.f32 %v7211, %v7221
    %v7235 = vmul.f32 %v7215, %v7225
    %7236 = vset.pattern.permute.xlu0 20
    %7237 = vperm.xlu0 %7236, %v5528
    %v7238 = vpop.permute.xlu0 %7237
    %7240 = vset.pattern.permute.xlu0 20
    %7241 = vperm.xlu0 %7240, %v5529
    %v7242 = vpop.permute.xlu0 %7241
    %7244 = vset.pattern.permute.xlu0 20
    %7245 = vperm.xlu0 %7244, %v5530
    %v7246 = vpop.permute.xlu0 %7245
    %7248 = vset.pattern.permute.xlu0 20
    %7249 = vperm.xlu0 %7248, %v5531
    %v7250 = vpop.permute.xlu0 %7249
    %v7252 = vmul.f32 %v7228, %v7238
    %v7253 = vmul.f32 %v7229, %v7238
    %v7254 = vmul.f32 %v7230, %v7242
    %v7255 = vmul.f32 %v7231, %v7242
    %v7256 = vmul.f32 %v7232, %v7246
    %v7257 = vmul.f32 %v7233, %v7246
    %v7258 = vmul.f32 %v7234, %v7250
    %v7259 = vmul.f32 %v7235, %v7250
    %v7260 = vadd.f32 %v7184, %v7252
    %v7261 = vadd.f32 %v7185, %v7253
    %v7262 = vadd.f32 %v7186, %v7254
    %v7263 = vadd.f32 %v7187, %v7255
    %v7264 = vadd.f32 %v7188, %v7256
    %v7265 = vadd.f32 %v7189, %v7257
    %v7266 = vadd.f32 %v7190, %v7258
    %v7267 = vadd.f32 %v7191, %v7259
    %7268 = vrot.lane.b32.xlu0 %v5516, 97
    %v7269 = vpop.permute.xlu0 %7268
    %7270 = vrot.lane.b32.xlu0 %v5518, 97
    %v7271 = vpop.permute.xlu0 %7270
    %7272 = vrot.lane.b32.xlu0 %v5520, 97
    %v7273 = vpop.permute.xlu0 %7272
    %7274 = vrot.lane.b32.xlu0 %v5522, 97
    %v7275 = vpop.permute.xlu0 %7274
    %7276 = vrot.lane.b32.xlu0 %v5517, 97
    %v7277 = vpop.permute.xlu0 %7276
    %7278 = vrot.lane.b32.xlu0 %v5519, 97
    %v7279 = vpop.permute.xlu0 %7278
    %7280 = vrot.lane.b32.xlu0 %v5521, 97
    %v7281 = vpop.permute.xlu0 %7280
    %7282 = vrot.lane.b32.xlu0 %v5523, 97
    %v7283 = vpop.permute.xlu0 %7282
    %v7284 = vsel %vm3314, %v7269, %v7277
    %v7285 = vsel %vm3314, %v7271, %v7279
    %v7286 = vsel %vm3314, %v7273, %v7281
    %v7287 = vsel %vm3314, %v7275, %v7283
    %v7288 = vsel %vm3314, %v7277, %v7269
    %v7289 = vsel %vm3314, %v7279, %v7271
    %v7290 = vsel %vm3314, %v7281, %v7273
    %v7291 = vsel %vm3314, %v7283, %v7275
    %v7292 = vld [vmem:[%s3323] ss:$8 sm:$0x3]
    %v7294 = vlaneseq
    %v7295 = vshrl.u32 %v7294, 7
    %v7296 = vsub.s32 0, %v7295
    %v7297 = vrot.slane %v7292, %v7296
    %v7298 = vlaneseq
    %v7299 = vshrl.u32 %v7298, 7
    %v7300 = vsub.s32 1, %v7299
    %v7301 = vrot.slane %v7292, %v7300
    %v7304 = vmul.f32 %v7284, %v7297
    %v7305 = vmul.f32 %v7288, %v7301
    %v7306 = vmul.f32 %v7285, %v7297
    %v7307 = vmul.f32 %v7289, %v7301
    %v7308 = vmul.f32 %v7286, %v7297
    %v7309 = vmul.f32 %v7290, %v7301
    %v7310 = vmul.f32 %v7287, %v7297
    %v7311 = vmul.f32 %v7291, %v7301
    %7312 = vset.pattern.permute.xlu0 21
    %7313 = vperm.xlu0 %7312, %v5528
    %v7314 = vpop.permute.xlu0 %7313
    %7316 = vset.pattern.permute.xlu0 21
    %7317 = vperm.xlu0 %7316, %v5529
    %v7318 = vpop.permute.xlu0 %7317
    %7320 = vset.pattern.permute.xlu0 21
    %7321 = vperm.xlu0 %7320, %v5530
    %v7322 = vpop.permute.xlu0 %7321
    %7324 = vset.pattern.permute.xlu0 21
    %7325 = vperm.xlu0 %7324, %v5531
    %v7326 = vpop.permute.xlu0 %7325
    %v7328 = vmul.f32 %v7304, %v7314
    %v7329 = vmul.f32 %v7305, %v7314
    %v7330 = vmul.f32 %v7306, %v7318
    %v7331 = vmul.f32 %v7307, %v7318
    %v7332 = vmul.f32 %v7308, %v7322
    %v7333 = vmul.f32 %v7309, %v7322
    %v7334 = vmul.f32 %v7310, %v7326
    %v7335 = vmul.f32 %v7311, %v7326
    %v7336 = vadd.f32 %v7260, %v7328
    %v7337 = vadd.f32 %v7261, %v7329
    %v7338 = vadd.f32 %v7262, %v7330
    %v7339 = vadd.f32 %v7263, %v7331
    %v7340 = vadd.f32 %v7264, %v7332
    %v7341 = vadd.f32 %v7265, %v7333
    %v7342 = vadd.f32 %v7266, %v7334
    %v7343 = vadd.f32 %v7267, %v7335
    %7344 = vrot.lane.b32.xlu0 %v5516, 96
    %v7345 = vpop.permute.xlu0 %7344
    %7346 = vrot.lane.b32.xlu0 %v5518, 96
    %v7347 = vpop.permute.xlu0 %7346
    %7348 = vrot.lane.b32.xlu0 %v5520, 96
    %v7349 = vpop.permute.xlu0 %7348
    %7350 = vrot.lane.b32.xlu0 %v5522, 96
    %v7351 = vpop.permute.xlu0 %7350
    %7352 = vrot.lane.b32.xlu0 %v5517, 96
    %v7353 = vpop.permute.xlu0 %7352
    %7354 = vrot.lane.b32.xlu0 %v5519, 96
    %v7355 = vpop.permute.xlu0 %7354
    %7356 = vrot.lane.b32.xlu0 %v5521, 96
    %v7357 = vpop.permute.xlu0 %7356
    %7358 = vrot.lane.b32.xlu0 %v5523, 96
    %v7359 = vpop.permute.xlu0 %7358
    %v7360 = vsel %vm3392, %v7345, %v7353
    %v7361 = vsel %vm3392, %v7347, %v7355
    %v7362 = vsel %vm3392, %v7349, %v7357
    %v7363 = vsel %vm3392, %v7351, %v7359
    %v7364 = vsel %vm3392, %v7353, %v7345
    %v7365 = vsel %vm3392, %v7355, %v7347
    %v7366 = vsel %vm3392, %v7357, %v7349
    %v7367 = vsel %vm3392, %v7359, %v7351
    %v7368 = vld [vmem:[%s3401] ss:$8 sm:$0x3]
    %v7370 = vlaneseq
    %v7371 = vshrl.u32 %v7370, 7
    %v7372 = vsub.s32 0, %v7371
    %v7373 = vrot.slane %v7368, %v7372
    %v7374 = vlaneseq
    %v7375 = vshrl.u32 %v7374, 7
    %v7376 = vsub.s32 1, %v7375
    %v7377 = vrot.slane %v7368, %v7376
    %v7380 = vmul.f32 %v7360, %v7373
    %v7381 = vmul.f32 %v7364, %v7377
    %v7382 = vmul.f32 %v7361, %v7373
    %v7383 = vmul.f32 %v7365, %v7377
    %v7384 = vmul.f32 %v7362, %v7373
    %v7385 = vmul.f32 %v7366, %v7377
    %v7386 = vmul.f32 %v7363, %v7373
    %v7387 = vmul.f32 %v7367, %v7377
    %7388 = vset.pattern.permute.xlu0 22
    %7389 = vperm.xlu0 %7388, %v5528
    %v7390 = vpop.permute.xlu0 %7389
    %7392 = vset.pattern.permute.xlu0 22
    %7393 = vperm.xlu0 %7392, %v5529
    %v7394 = vpop.permute.xlu0 %7393
    %7396 = vset.pattern.permute.xlu0 22
    %7397 = vperm.xlu0 %7396, %v5530
    %v7398 = vpop.permute.xlu0 %7397
    %7400 = vset.pattern.permute.xlu0 22
    %7401 = vperm.xlu0 %7400, %v5531
    %v7402 = vpop.permute.xlu0 %7401
    %v7404 = vmul.f32 %v7380, %v7390
    %v7405 = vmul.f32 %v7381, %v7390
    %v7406 = vmul.f32 %v7382, %v7394
    %v7407 = vmul.f32 %v7383, %v7394
    %v7408 = vmul.f32 %v7384, %v7398
    %v7409 = vmul.f32 %v7385, %v7398
    %v7410 = vmul.f32 %v7386, %v7402
    %v7411 = vmul.f32 %v7387, %v7402
    %v7412 = vadd.f32 %v7336, %v7404
    %v7413 = vadd.f32 %v7337, %v7405
    %v7414 = vadd.f32 %v7338, %v7406
    %v7415 = vadd.f32 %v7339, %v7407
    %v7416 = vadd.f32 %v7340, %v7408
    %v7417 = vadd.f32 %v7341, %v7409
    %v7418 = vadd.f32 %v7342, %v7410
    %v7419 = vadd.f32 %v7343, %v7411
    %7420 = vrot.lane.b32.xlu0 %v5516, 95
    %v7421 = vpop.permute.xlu0 %7420
    %7422 = vrot.lane.b32.xlu0 %v5518, 95
    %v7423 = vpop.permute.xlu0 %7422
    %7424 = vrot.lane.b32.xlu0 %v5520, 95
    %v7425 = vpop.permute.xlu0 %7424
    %7426 = vrot.lane.b32.xlu0 %v5522, 95
    %v7427 = vpop.permute.xlu0 %7426
    %7428 = vrot.lane.b32.xlu0 %v5517, 95
    %v7429 = vpop.permute.xlu0 %7428
    %7430 = vrot.lane.b32.xlu0 %v5519, 95
    %v7431 = vpop.permute.xlu0 %7430
    %7432 = vrot.lane.b32.xlu0 %v5521, 95
    %v7433 = vpop.permute.xlu0 %7432
    %7434 = vrot.lane.b32.xlu0 %v5523, 95
    %v7435 = vpop.permute.xlu0 %7434
    %v7436 = vsel %vm3470, %v7421, %v7429
    %v7437 = vsel %vm3470, %v7423, %v7431
    %v7438 = vsel %vm3470, %v7425, %v7433
    %v7439 = vsel %vm3470, %v7427, %v7435
    %v7440 = vsel %vm3470, %v7429, %v7421
    %v7441 = vsel %vm3470, %v7431, %v7423
    %v7442 = vsel %vm3470, %v7433, %v7425
    %v7443 = vsel %vm3470, %v7435, %v7427
    %v7444 = vld [vmem:[%s3479] ss:$8 sm:$0x3]
    %v7446 = vlaneseq
    %v7447 = vshrl.u32 %v7446, 7
    %v7448 = vsub.s32 0, %v7447
    %v7449 = vrot.slane %v7444, %v7448
    %v7450 = vlaneseq
    %v7451 = vshrl.u32 %v7450, 7
    %v7452 = vsub.s32 1, %v7451
    %v7453 = vrot.slane %v7444, %v7452
    %v7456 = vmul.f32 %v7436, %v7449
    %v7457 = vmul.f32 %v7440, %v7453
    %v7458 = vmul.f32 %v7437, %v7449
    %v7459 = vmul.f32 %v7441, %v7453
    %v7460 = vmul.f32 %v7438, %v7449
    %v7461 = vmul.f32 %v7442, %v7453
    %v7462 = vmul.f32 %v7439, %v7449
    %v7463 = vmul.f32 %v7443, %v7453
    %7464 = vset.pattern.permute.xlu0 23
    %7465 = vperm.xlu0 %7464, %v5528
    %v7466 = vpop.permute.xlu0 %7465
    %7468 = vset.pattern.permute.xlu0 23
    %7469 = vperm.xlu0 %7468, %v5529
    %v7470 = vpop.permute.xlu0 %7469
    %7472 = vset.pattern.permute.xlu0 23
    %7473 = vperm.xlu0 %7472, %v5530
    %v7474 = vpop.permute.xlu0 %7473
    %7476 = vset.pattern.permute.xlu0 23
    %7477 = vperm.xlu0 %7476, %v5531
    %v7478 = vpop.permute.xlu0 %7477
    %v7480 = vmul.f32 %v7456, %v7466
    %v7481 = vmul.f32 %v7457, %v7466
    %v7482 = vmul.f32 %v7458, %v7470
    %v7483 = vmul.f32 %v7459, %v7470
    %v7484 = vmul.f32 %v7460, %v7474
    %v7485 = vmul.f32 %v7461, %v7474
    %v7486 = vmul.f32 %v7462, %v7478
    %v7487 = vmul.f32 %v7463, %v7478
    %v7488 = vadd.f32 %v7412, %v7480
    %v7489 = vadd.f32 %v7413, %v7481
    %v7490 = vadd.f32 %v7414, %v7482
    %v7491 = vadd.f32 %v7415, %v7483
    %v7492 = vadd.f32 %v7416, %v7484
    %v7493 = vadd.f32 %v7417, %v7485
    %v7494 = vadd.f32 %v7418, %v7486
    %v7495 = vadd.f32 %v7419, %v7487
    %7496 = vrot.lane.b32.xlu0 %v5516, 94
    %v7497 = vpop.permute.xlu0 %7496
    %7498 = vrot.lane.b32.xlu0 %v5518, 94
    %v7499 = vpop.permute.xlu0 %7498
    %7500 = vrot.lane.b32.xlu0 %v5520, 94
    %v7501 = vpop.permute.xlu0 %7500
    %7502 = vrot.lane.b32.xlu0 %v5522, 94
    %v7503 = vpop.permute.xlu0 %7502
    %7504 = vrot.lane.b32.xlu0 %v5517, 94
    %v7505 = vpop.permute.xlu0 %7504
    %7506 = vrot.lane.b32.xlu0 %v5519, 94
    %v7507 = vpop.permute.xlu0 %7506
    %7508 = vrot.lane.b32.xlu0 %v5521, 94
    %v7509 = vpop.permute.xlu0 %7508
    %7510 = vrot.lane.b32.xlu0 %v5523, 94
    %v7511 = vpop.permute.xlu0 %7510
    %v7512 = vsel %vm3548, %v7497, %v7505
    %v7513 = vsel %vm3548, %v7499, %v7507
    %v7514 = vsel %vm3548, %v7501, %v7509
    %v7515 = vsel %vm3548, %v7503, %v7511
    %v7516 = vsel %vm3548, %v7505, %v7497
    %v7517 = vsel %vm3548, %v7507, %v7499
    %v7518 = vsel %vm3548, %v7509, %v7501
    %v7519 = vsel %vm3548, %v7511, %v7503
    %v7520 = vld [vmem:[%s3557] ss:$8 sm:$0x3]
    %v7522 = vlaneseq
    %v7523 = vshrl.u32 %v7522, 7
    %v7524 = vsub.s32 0, %v7523
    %v7525 = vrot.slane %v7520, %v7524
    %v7526 = vlaneseq
    %v7527 = vshrl.u32 %v7526, 7
    %v7528 = vsub.s32 1, %v7527
    %v7529 = vrot.slane %v7520, %v7528
    %v7532 = vmul.f32 %v7512, %v7525
    %v7533 = vmul.f32 %v7516, %v7529
    %v7534 = vmul.f32 %v7513, %v7525
    %v7535 = vmul.f32 %v7517, %v7529
    %v7536 = vmul.f32 %v7514, %v7525
    %v7537 = vmul.f32 %v7518, %v7529
    %v7538 = vmul.f32 %v7515, %v7525
    %v7539 = vmul.f32 %v7519, %v7529
    %7540 = vset.pattern.permute.xlu0 24
    %7541 = vperm.xlu0 %7540, %v5528
    %v7542 = vpop.permute.xlu0 %7541
    %7544 = vset.pattern.permute.xlu0 24
    %7545 = vperm.xlu0 %7544, %v5529
    %v7546 = vpop.permute.xlu0 %7545
    %7548 = vset.pattern.permute.xlu0 24
    %7549 = vperm.xlu0 %7548, %v5530
    %v7550 = vpop.permute.xlu0 %7549
    %7552 = vset.pattern.permute.xlu0 24
    %7553 = vperm.xlu0 %7552, %v5531
    %v7554 = vpop.permute.xlu0 %7553
    %v7556 = vmul.f32 %v7532, %v7542
    %v7557 = vmul.f32 %v7533, %v7542
    %v7558 = vmul.f32 %v7534, %v7546
    %v7559 = vmul.f32 %v7535, %v7546
    %v7560 = vmul.f32 %v7536, %v7550
    %v7561 = vmul.f32 %v7537, %v7550
    %v7562 = vmul.f32 %v7538, %v7554
    %v7563 = vmul.f32 %v7539, %v7554
    %v7564 = vadd.f32 %v7488, %v7556
    %v7565 = vadd.f32 %v7489, %v7557
    %v7566 = vadd.f32 %v7490, %v7558
    %v7567 = vadd.f32 %v7491, %v7559
    %v7568 = vadd.f32 %v7492, %v7560
    %v7569 = vadd.f32 %v7493, %v7561
    %v7570 = vadd.f32 %v7494, %v7562
    %v7571 = vadd.f32 %v7495, %v7563
    %v7572 = vld [vmem:[#allocation8] sm:$0xff]
    %v7573 = vld [vmem:[#allocation8 + $0x8] sm:$0xff]
    %v7574 = vld [vmem:[#allocation8 + $0x10] sm:$0xff]
    %v7575 = vld [vmem:[#allocation8 + $0x18] sm:$0xff]
    %v7576 = vld [vmem:[%s3614] sm:$0xff]
    %v7577 = vld [vmem:[%s3614 + $0x8] sm:$0xff]
    %v7578 = vld [vmem:[%s3614 + $0x10] sm:$0xff]
    %v7579 = vld [vmem:[%s3614 + $0x18] sm:$0xff]
    %v7581 = vsel %vm167, %v7576, 0
    %v7584 = vsel %vm167, %v7577, 0
    %v7587 = vsel %vm167, %v7578, 0
    %v7590 = vsel %vm167, %v7579, 0
    %7592 = vmatprep.subr.mxu0 %v7565
    %7593 = vmatpush1.msra.mxu0 %v7564
    %7594 = vmatprep.subr.mxu0 %v7567
    %7595 = vmatpush1.msra.mxu0 %v7566
    %7596 = vmatprep.subr.mxu0 %v7569
    %7597 = vmatpush1.msra.mxu0 %v7568
    %7598 = vmatprep.subr.mxu0 %v7571
    %7599 = vmatpush1.msra.mxu0 %v7570
    %7600 = vmatprep.subr.mxu0 0.0
    %7601 = vmatpush1.msra.mxu0 0.0
    %7602 = vmatprep.subr.mxu0 0.0
    %7603 = vmatpush1.msra.mxu0 0.0
    %7604 = vmatprep.subr.mxu0 0.0
    %7605 = vmatpush1.msra.mxu0 0.0
    %7606 = vmatprep.subr.mxu0 0.0
    %7607 = vmatpush1.msra.mxu0 0.0
    %7608 = vmatprep.subr.mxu0 0.0
    %7609 = vmatpush1.msra.mxu0 0.0
    %7610 = vmatprep.subr.mxu0 0.0
    %7611 = vmatpush1.msra.mxu0 0.0
    %7612 = vmatprep.subr.mxu0 0.0
    %7613 = vmatpush1.msra.mxu0 0.0
    %7614 = vmatprep.subr.mxu0 0.0
    %7615 = vmatpush1.msra.mxu0 0.0
    %7616 = vmatprep.subr.mxu0 0.0
    %7617 = vmatpush1.msra.mxu0 0.0
    %7618 = vmatprep.subr.mxu0 0.0
    %7619 = vmatpush1.msra.mxu0 0.0
    %7620 = vmatprep.subr.mxu0 0.0
    %7621 = vmatpush1.msra.mxu0 0.0
    %7622 = vmatprep.subr.mxu0 0.0
    %7623 = vmatpush1.msra.mxu0 0.0
    %7624 = vmatprep.subr.mxu0 0.0
    %7625 = vmatpush1.msra.mxu0 0.0
    %7626 = vmatprep.subr.mxu0 0.0
    %7627 = vmatpush1.msra.mxu0 0.0
    %7628 = vmatprep.subr.mxu0 0.0
    %7629 = vmatpush1.msra.mxu0 0.0
    %7630 = vmatprep.subr.mxu0 0.0
    %7631 = vmatpush1.msra.mxu0 0.0
    %7632 = vmatprep.subr.mxu0 0.0
    %7633 = vmatpush1.msra.mxu0 0.0
    %7634 = vmatprep.subr.mxu0 0.0
    %7635 = vmatpush1.msra.mxu0 0.0
    %7636 = vmatprep.subr.mxu0 0.0
    %7637 = vmatpush1.msra.mxu0 0.0
    %7638 = vmatprep.subr.mxu0 0.0
    %7639 = vmatpush1.msra.mxu0 0.0
    %7640 = vmatprep.subr.mxu0 0.0
    %7641 = vmatpush1.msra.mxu0 0.0
    %7642 = vmatprep.subr.mxu0 0.0
    %7643 = vmatpush1.msra.mxu0 0.0
    %7644 = vmatprep.subr.mxu0 0.0
    %7645 = vmatpush1.msra.mxu0 0.0
    %7646 = vmatprep.subr.mxu0 0.0
    %7647 = vmatpush1.msra.mxu0 0.0
    %7648 = vmatprep.subr.mxu0 0.0
    %7649 = vmatpush1.msra.mxu0 0.0
    %7650 = vmatprep.subr.mxu0 0.0
    %7651 = vmatpush1.msra.mxu0 0.0
    %7652 = vmatprep.subr.mxu0 0.0
    %7653 = vmatpush1.msra.mxu0 0.0
    %7654 = vmatprep.subr.mxu0 0.0
    %7655 = vmatpush1.msra.mxu0 0.0
    %7656 = vmatprep.mubr.f32.mxu0 0.0
    %7657 = vmatmul.mubr.f32.gmra.mrb[0].mxu0 %v7581
    %v7658 = vpop.f32.mrb[0].mxu0
    %v7659 = vadd.f32 0.0, %v7658
    %v7660 = vpop.f32.mrb[0].mxu0
    %v7661 = vadd.f32 0.0, %v7660
    %7662 = vmatprep.mubr.f32.mxu0 0.0
    %7663 = vmatmul.mubr.f32.gmra.mrb[0].mxu0 %v7584
    %v7664 = vpop.f32.mrb[0].mxu0
    %v7665 = vadd.f32 0.0, %v7664
    %v7666 = vpop.f32.mrb[0].mxu0
    %v7667 = vadd.f32 0.0, %v7666
    %7668 = vmatprep.mubr.f32.mxu0 0.0
    %7669 = vmatmul.mubr.f32.gmra.mrb[0].mxu0 %v7587
    %v7670 = vpop.f32.mrb[0].mxu0
    %v7671 = vadd.f32 0.0, %v7670
    %v7672 = vpop.f32.mrb[0].mxu0
    %v7673 = vadd.f32 0.0, %v7672
    %7674 = vmatprep.mubr.f32.mxu0 0.0
    %7675 = vmatmul.mubr.f32.gmra.mrb[0].mxu0 %v7590
    %v7676 = vpop.f32.mrb[0].mxu0
    %v7677 = vadd.f32 0.0, %v7676
    %v7678 = vpop.f32.mrb[0].mxu0
    %v7679 = vadd.f32 0.0, %v7678
    %7680 = vdwg.mxu0
    %v7682 = vsel %vm167, %v7572, 0
    %v7685 = vsel %vm167, %v7573, 0
    %v7688 = vsel %vm167, %v7574, 0
    %v7691 = vsel %vm167, %v7575, 0
    %7693 = vmatprep.subr.mxu0 %v7109
    %7694 = vmatpush1.msra.mxu0 %v7108
    %7695 = vmatprep.subr.mxu0 %v7111
    %7696 = vmatpush1.msra.mxu0 %v7110
    %7697 = vmatprep.subr.mxu0 %v7113
    %7698 = vmatpush1.msra.mxu0 %v7112
    %7699 = vmatprep.subr.mxu0 %v7115
    %7700 = vmatpush1.msra.mxu0 %v7114
    %7701 = vmatprep.subr.mxu0 0.0
    %7702 = vmatpush1.msra.mxu0 0.0
    %7703 = vmatprep.subr.mxu0 0.0
    %7704 = vmatpush1.msra.mxu0 0.0
    %7705 = vmatprep.subr.mxu0 0.0
    %7706 = vmatpush1.msra.mxu0 0.0
    %7707 = vmatprep.subr.mxu0 0.0
    %7708 = vmatpush1.msra.mxu0 0.0
    %7709 = vmatprep.subr.mxu0 0.0
    %7710 = vmatpush1.msra.mxu0 0.0
    %7711 = vmatprep.subr.mxu0 0.0
    %7712 = vmatpush1.msra.mxu0 0.0
    %7713 = vmatprep.subr.mxu0 0.0
    %7714 = vmatpush1.msra.mxu0 0.0
    %7715 = vmatprep.subr.mxu0 0.0
    %7716 = vmatpush1.msra.mxu0 0.0
    %7717 = vmatprep.subr.mxu0 0.0
    %7718 = vmatpush1.msra.mxu0 0.0
    %7719 = vmatprep.subr.mxu0 0.0
    %7720 = vmatpush1.msra.mxu0 0.0
    %7721 = vmatprep.subr.mxu0 0.0
    %7722 = vmatpush1.msra.mxu0 0.0
    %7723 = vmatprep.subr.mxu0 0.0
    %7724 = vmatpush1.msra.mxu0 0.0
    %7725 = vmatprep.subr.mxu0 0.0
    %7726 = vmatpush1.msra.mxu0 0.0
    %7727 = vmatprep.subr.mxu0 0.0
    %7728 = vmatpush1.msra.mxu0 0.0
    %7729 = vmatprep.subr.mxu0 0.0
    %7730 = vmatpush1.msra.mxu0 0.0
    %7731 = vmatprep.subr.mxu0 0.0
    %7732 = vmatpush1.msra.mxu0 0.0
    %7733 = vmatprep.subr.mxu0 0.0
    %7734 = vmatpush1.msra.mxu0 0.0
    %7735 = vmatprep.subr.mxu0 0.0
    %7736 = vmatpush1.msra.mxu0 0.0
    %7737 = vmatprep.subr.mxu0 0.0
    %7738 = vmatpush1.msra.mxu0 0.0
    %7739 = vmatprep.subr.mxu0 0.0
    %7740 = vmatpush1.msra.mxu0 0.0
    %7741 = vmatprep.subr.mxu0 0.0
    %7742 = vmatpush1.msra.mxu0 0.0
    %7743 = vmatprep.subr.mxu0 0.0
    %7744 = vmatpush1.msra.mxu0 0.0
    %7745 = vmatprep.subr.mxu0 0.0
    %7746 = vmatpush1.msra.mxu0 0.0
    %7747 = vmatprep.subr.mxu0 0.0
    %7748 = vmatpush1.msra.mxu0 0.0
    %7749 = vmatprep.subr.mxu0 0.0
    %7750 = vmatpush1.msra.mxu0 0.0
    %7751 = vmatprep.subr.mxu0 0.0
    %7752 = vmatpush1.msra.mxu0 0.0
    %7753 = vmatprep.subr.mxu0 0.0
    %7754 = vmatpush1.msra.mxu0 0.0
    %7755 = vmatprep.subr.mxu0 0.0
    %7756 = vmatpush1.msra.mxu0 0.0
    %7757 = vmatprep.mubr.f32.mxu0 0.0
    %7758 = vmatmul.mubr.f32.gmra.mrb[0].mxu0 %v7682
    %v7759 = vpop.f32.mrb[0].mxu0
    %v7760 = vadd.f32 %v7659, %v7759
    %v7761 = vpop.f32.mrb[0].mxu0
    %v7762 = vadd.f32 %v7661, %v7761
    %7763 = vmatprep.mubr.f32.mxu0 0.0
    %7764 = vmatmul.mubr.f32.gmra.mrb[0].mxu0 %v7685
    %v7765 = vpop.f32.mrb[0].mxu0
    %v7766 = vadd.f32 %v7665, %v7765
    %v7767 = vpop.f32.mrb[0].mxu0
    %v7768 = vadd.f32 %v7667, %v7767
    %7769 = vmatprep.mubr.f32.mxu0 0.0
    %7770 = vmatmul.mubr.f32.gmra.mrb[0].mxu0 %v7688
    %v7771 = vpop.f32.mrb[0].mxu0
    %v7772 = vadd.f32 %v7671, %v7771
    %v7773 = vpop.f32.mrb[0].mxu0
    %v7774 = vadd.f32 %v7673, %v7773
    %7775 = vmatprep.mubr.f32.mxu0 0.0
    %7776 = vmatmul.mubr.f32.gmra.mrb[0].mxu0 %v7691
    %v7777 = vpop.f32.mrb[0].mxu0
    %v7778 = vadd.f32 %v7677, %v7777
    %v7779 = vpop.f32.mrb[0].mxu0
    %v7780 = vadd.f32 %v7679, %v7779
    %7781 = vdwg.mxu0
    %v7782 = vld [vmem:[%s7] sm:$0xff]
    %v7783 = vld [vmem:[%s7 + $0x8] sm:$0xff]
    %v7784 = vld [vmem:[%s7 + $0x10] sm:$0xff]
    %v7785 = vld [vmem:[%s7 + $0x18] sm:$0xff]
    %7787 = vset.pattern.permute.xlu0 0
    %7788 = vperm.xlu0 %7787, %v7782
    %v7789 = vpop.permute.xlu0 %7788
    %7792 = vset.pattern.permute.xlu0 0
    %7793 = vperm.xlu0 %7792, %v7783
    %v7794 = vpop.permute.xlu0 %7793
    %7797 = vset.pattern.permute.xlu0 0
    %7798 = vperm.xlu0 %7797, %v7784
    %v7799 = vpop.permute.xlu0 %7798
    %7802 = vset.pattern.permute.xlu0 0
    %7803 = vperm.xlu0 %7802, %v7785
    %v7804 = vpop.permute.xlu0 %7803
    %v7806 = vadd.f32 %v7760, %v7789
    %v7807 = vadd.f32 %v7762, %v7789
    %v7808 = vadd.f32 %v7766, %v7794
    %v7809 = vadd.f32 %v7768, %v7794
    %v7810 = vadd.f32 %v7772, %v7799
    %v7811 = vadd.f32 %v7774, %v7799
    %v7812 = vadd.f32 %v7778, %v7804
    %v7813 = vadd.f32 %v7780, %v7804
    %v7814 = vadd.f32 %v7806, %v7807
    %7815 = vadd.xlane.f32.xlu0 %v7814
    %v7816 = vpop.xlane.xlu0 %7815
    %v7817 = vadd.f32 %v7808, %v7809
    %7818 = vadd.xlane.f32.xlu0 %v7817
    %v7819 = vpop.xlane.xlu0 %7818
    %v7820 = vadd.f32 %v7810, %v7811
    %7821 = vadd.xlane.f32.xlu0 %v7820
    %v7822 = vpop.xlane.xlu0 %7821
    %v7823 = vadd.f32 %v7812, %v7813
    %7824 = vadd.xlane.f32.xlu0 %v7823
    %v7825 = vpop.xlane.xlu0 %7824
    %v7826 = vmul.f32 %v7816, 0.00390625
    %v7827 = vmul.f32 %v7819, 0.00390625
    %v7828 = vmul.f32 %v7822, 0.00390625
    %v7829 = vmul.f32 %v7825, 0.00390625
    %v7830 = vld [vmem:[%s8] sm:$0xff]
    %v7831 = vld [vmem:[%s8 + $0x8] sm:$0xff]
    %v7832 = vld [vmem:[%s8 + $0x10] sm:$0xff]
    %v7833 = vld [vmem:[%s8 + $0x18] sm:$0xff]
    %v7834 = vmul.f32 %v7830, %v7826
    %v7835 = vmul.f32 %v7831, %v7827
    %v7836 = vmul.f32 %v7832, %v7828
    %v7837 = vmul.f32 %v7833, %v7829
    %v7838 = vsel %vm3877, %v7834, 0.0
    %v7839 = vsel %vm3877, %v7835, 0.0
    %v7840 = vadd.f32 %v7838, %v7839
    %v7841 = vsel %vm3877, %v7836, 0.0
    %v7842 = vadd.f32 %v7840, %v7841
    %v7843 = vsel %vm3877, %v7837, 0.0
    %v7844 = vadd.f32 %v7842, %v7843
    %v7845 = vrot.slane %v7844, 4
    %v7846 = vadd.f32 %v7844, %v7845
    %v7847 = vrot.slane %v7846, 2
    %v7848 = vadd.f32 %v7846, %v7847
    %v7849 = vrot.slane %v7848, 1
    %v7850 = vadd.f32 %v7848, %v7849
    %v7851 = vld [vmem:[%s9] sm:$0x1]
    %v7852 = vadd.f32 %v7850, %v7851
    %v7853 = vmax.f32 %v7852, 0.0
    %v7854 = vld [vmem:[%s10] sm:$0xff]
    %v7855 = vld [vmem:[%s10 + $0x8] sm:$0xff]
    %v7856 = vld [vmem:[%s10 + $0x10] sm:$0xff]
    %v7857 = vld [vmem:[%s10 + $0x18] sm:$0xff]
    %v7858 = vlaneseq
    %v7859 = vshrl.u32 %v7858, 7
    %v7860 = vsub.s32 0, %v7859
    %v7861 = vrot.slane %v7853, %v7860
    %v7862 = vmul.f32 %v7854, %v7861
    %v7863 = vmul.f32 %v7855, %v7861
    %v7864 = vmul.f32 %v7856, %v7861
    %v7865 = vmul.f32 %v7857, %v7861
    %v7866 = vsel %vm3877, %v7862, 0.0
    %7867 = vadd.xlane.f32.xlu0 %v7866
    %v7868 = vpop.xlane.xlu0 %7867
    %v7869 = vsel %vm3877, %v7863, 0.0
    %7870 = vadd.xlane.f32.xlu0 %v7869
    %v7871 = vpop.xlane.xlu0 %7870
    %v7872 = vsel %vm3877, %v7864, 0.0
    %7873 = vadd.xlane.f32.xlu0 %v7872
    %v7874 = vpop.xlane.xlu0 %7873
    %v7875 = vsel %vm3877, %v7865, 0.0
    %7876 = vadd.xlane.f32.xlu0 %v7875
    %v7877 = vpop.xlane.xlu0 %7876
    %v7878 = vld [vmem:[%s11] sm:$0xff]
    %v7879 = vld [vmem:[%s11 + $0x8] sm:$0xff]
    %v7880 = vld [vmem:[%s11 + $0x10] sm:$0xff]
    %v7881 = vld [vmem:[%s11 + $0x18] sm:$0xff]
    %v7882 = vadd.f32 %v7868, %v7878
    %v7883 = vadd.f32 %v7871, %v7879
    %v7884 = vadd.f32 %v7874, %v7880
    %v7885 = vadd.f32 %v7877, %v7881
    %v7886 = vxor.u32 %v7882, 2147483648
    %v7887 = vxor.u32 %v7883, 2147483648
    %v7888 = vxor.u32 %v7884, 2147483648
    %v7889 = vxor.u32 %v7885, 2147483648
    %v7890 = vmul.f32 %v7886, 1.442695
    %v7891 = vpow.pop %v7890
    %v7892 = vmul.f32 %v7887, 1.442695
    %v7893 = vpow.pop %v7892
    %v7894 = vmul.f32 %v7888, 1.442695
    %v7895 = vpow.pop %v7894
    %v7896 = vmul.f32 %v7889, 1.442695
    %v7897 = vpow.pop %v7896
    %v7898 = vadd.f32 %v7891, 1.0
    %v7899 = vadd.f32 %v7893, 1.0
    %v7900 = vadd.f32 %v7895, 1.0
    %v7901 = vadd.f32 %v7897, 1.0
    %v7902 = vrcp.pop %v7898
    %v7903 = vmul.f32 1.0, %v7902
    %v7904 = vrcp.pop %v7899
    %v7905 = vmul.f32 1.0, %v7904
    %v7906 = vrcp.pop %v7900
    %v7907 = vmul.f32 1.0, %v7906
    %v7908 = vrcp.pop %v7901
    %v7909 = vmul.f32 1.0, %v7908
    %7911 = vset.pattern.permute.xlu0 0
    %7912 = vperm.xlu0 %7911, %v7903
    %v7913 = vpop.permute.xlu0 %7912
    %7916 = vset.pattern.permute.xlu0 0
    %7917 = vperm.xlu0 %7916, %v7905
    %v7918 = vpop.permute.xlu0 %7917
    %7921 = vset.pattern.permute.xlu0 0
    %7922 = vperm.xlu0 %7921, %v7907
    %v7923 = vpop.permute.xlu0 %7922
    %7926 = vset.pattern.permute.xlu0 0
    %7927 = vperm.xlu0 %7926, %v7909
    %v7928 = vpop.permute.xlu0 %7927
    %v7930 = vmul.f32 %v7806, %v7913
    %v7931 = vmul.f32 %v7807, %v7913
    %v7932 = vmul.f32 %v7808, %v7918
    %v7933 = vmul.f32 %v7809, %v7918
    %v7934 = vmul.f32 %v7810, %v7923
    %v7935 = vmul.f32 %v7811, %v7923
    %v7936 = vmul.f32 %v7812, %v7928
    %v7937 = vmul.f32 %v7813, %v7928
    %v7938 = vmul.f32 %v7930, %v7930
    %v7939 = vmul.f32 %v7931, %v7931
    %v7940 = vmul.f32 %v7932, %v7932
    %v7941 = vmul.f32 %v7933, %v7933
    %v7942 = vmul.f32 %v7934, %v7934
    %v7943 = vmul.f32 %v7935, %v7935
    %v7944 = vmul.f32 %v7936, %v7936
    %v7945 = vmul.f32 %v7937, %v7937
    %v7946 = vmul.f32 %v7938, %v7930
    %v7947 = vmul.f32 %v7939, %v7931
    %v7948 = vmul.f32 %v7940, %v7932
    %v7949 = vmul.f32 %v7941, %v7933
    %v7950 = vmul.f32 %v7942, %v7934
    %v7951 = vmul.f32 %v7943, %v7935
    %v7952 = vmul.f32 %v7944, %v7936
    %v7953 = vmul.f32 %v7945, %v7937
    %v7954 = vmul.f32 %v7946, 0.044715
    %v7955 = vmul.f32 %v7947, 0.044715
    %v7956 = vmul.f32 %v7948, 0.044715
    %v7957 = vmul.f32 %v7949, 0.044715
    %v7958 = vmul.f32 %v7950, 0.044715
    %v7959 = vmul.f32 %v7951, 0.044715
    %v7960 = vmul.f32 %v7952, 0.044715
    %v7961 = vmul.f32 %v7953, 0.044715
    %v7962 = vadd.f32 %v7930, %v7954
    %v7963 = vadd.f32 %v7931, %v7955
    %v7964 = vadd.f32 %v7932, %v7956
    %v7965 = vadd.f32 %v7933, %v7957
    %v7966 = vadd.f32 %v7934, %v7958
    %v7967 = vadd.f32 %v7935, %v7959
    %v7968 = vadd.f32 %v7936, %v7960
    %v7969 = vadd.f32 %v7937, %v7961
    %v7970 = vmul.f32 %v7962, 0.7978846
    %v7971 = vmul.f32 %v7963, 0.7978846
    %v7972 = vmul.f32 %v7964, 0.7978846
    %v7973 = vmul.f32 %v7965, 0.7978846
    %v7974 = vmul.f32 %v7966, 0.7978846
    %v7975 = vmul.f32 %v7967, 0.7978846
    %v7976 = vmul.f32 %v7968, 0.7978846
    %v7977 = vmul.f32 %v7969, 0.7978846
    %v7978 = vtanh.pop %v7970
    %v7979 = vtanh.pop %v7971
    %v7980 = vtanh.pop %v7972
    %v7981 = vtanh.pop %v7973
    %v7982 = vtanh.pop %v7974
    %v7983 = vtanh.pop %v7975
    %v7984 = vtanh.pop %v7976
    %v7985 = vtanh.pop %v7977
    %v7986 = vadd.f32 %v7978, 1.0
    %v7987 = vadd.f32 %v7979, 1.0
    %v7988 = vadd.f32 %v7980, 1.0
    %v7989 = vadd.f32 %v7981, 1.0
    %v7990 = vadd.f32 %v7982, 1.0
    %v7991 = vadd.f32 %v7983, 1.0
    %v7992 = vadd.f32 %v7984, 1.0
    %v7993 = vadd.f32 %v7985, 1.0
    %v7994 = vmul.f32 %v7930, %v7986
    %v7995 = vmul.f32 %v7931, %v7987
    %v7996 = vmul.f32 %v7932, %v7988
    %v7997 = vmul.f32 %v7933, %v7989
    %v7998 = vmul.f32 %v7934, %v7990
    %v7999 = vmul.f32 %v7935, %v7991
    %v8000 = vmul.f32 %v7936, %v7992
    %v8001 = vmul.f32 %v7937, %v7993
    %v8002 = vld [vmem:[%s12] sm:$0xff]
    %v8003 = vld [vmem:[%s12 + $0x8] sm:$0xff]
    %v8004 = vld [vmem:[%s12 + $0x10] sm:$0xff]
    %v8005 = vld [vmem:[%s12 + $0x18] sm:$0xff]
    %8007 = vset.pattern.permute.xlu0 0
    %8008 = vperm.xlu0 %8007, %v8002
    %v8009 = vpop.permute.xlu0 %8008
    %8012 = vset.pattern.permute.xlu0 0
    %8013 = vperm.xlu0 %8012, %v8003
    %v8014 = vpop.permute.xlu0 %8013
    %8017 = vset.pattern.permute.xlu0 0
    %8018 = vperm.xlu0 %8017, %v8004
    %v8019 = vpop.permute.xlu0 %8018
    %8022 = vset.pattern.permute.xlu0 0
    %8023 = vperm.xlu0 %8022, %v8005
    %v8024 = vpop.permute.xlu0 %8023
    %v8026 = vmul.f32 %v7994, %v8009
    %v8027 = vmul.f32 %v7995, %v8009
    %v8028 = vmul.f32 %v7996, %v8014
    %v8029 = vmul.f32 %v7997, %v8014
    %v8030 = vmul.f32 %v7998, %v8019
    %v8031 = vmul.f32 %v7999, %v8019
    %v8032 = vmul.f32 %v8000, %v8024
    %v8033 = vmul.f32 %v8001, %v8024
    %v8034 = vld [vmem:[%s13] sm:$0xff]
    %v8035 = vld [vmem:[%s13 + $0x8] sm:$0xff]
    %v8036 = vld [vmem:[%s13 + $0x10] sm:$0xff]
    %v8037 = vld [vmem:[%s13 + $0x18] sm:$0xff]
    %8039 = vset.pattern.permute.xlu0 0
    %8040 = vperm.xlu0 %8039, %v8034
    %v8041 = vpop.permute.xlu0 %8040
    %8044 = vset.pattern.permute.xlu0 0
    %8045 = vperm.xlu0 %8044, %v8035
    %v8046 = vpop.permute.xlu0 %8045
    %8049 = vset.pattern.permute.xlu0 0
    %8050 = vperm.xlu0 %8049, %v8036
    %v8051 = vpop.permute.xlu0 %8050
    %8054 = vset.pattern.permute.xlu0 0
    %8055 = vperm.xlu0 %8054, %v8037
    %v8056 = vpop.permute.xlu0 %8055
    %v8058 = vadd.f32 %v8026, %v8041
    %v8059 = vadd.f32 %v8027, %v8041
    %v8060 = vadd.f32 %v8028, %v8046
    %v8061 = vadd.f32 %v8029, %v8046
    %v8062 = vadd.f32 %v8030, %v8051
    %v8063 = vadd.f32 %v8031, %v8051
    %v8064 = vadd.f32 %v8032, %v8056
    %v8065 = vadd.f32 %v8033, %v8056
    %v8066 = vadd.f32 %v8058, %v4123
    %v8067 = vadd.f32 %v8059, %v4124
    %v8068 = vadd.f32 %v8060, %v4125
    %v8069 = vadd.f32 %v8061, %v4126
    %v8070 = vadd.f32 %v8062, %v4127
    %v8071 = vadd.f32 %v8063, %v4128
    %v8072 = vadd.f32 %v8064, %v4129
    %v8073 = vadd.f32 %v8065, %v4130
    %s8074 = scalar_lea.vmem [#allocation10], 64
    %8075 = vst [vmem:[%s8074] sm:$0xff] %v8066
    %8076 = vst [vmem:[%s8074 + $0x8] sm:$0xff] %v8067
    %8077 = vst [vmem:[%s8074 + $0x10] sm:$0xff] %v8068
    %8078 = vst [vmem:[%s8074 + $0x18] sm:$0xff] %v8069
    %8079 = vst [vmem:[%s8074 + $0x20] sm:$0xff] %v8070
    %8080 = vst [vmem:[%s8074 + $0x28] sm:$0xff] %v8071
    %8081 = vst [vmem:[%s8074 + $0x30] sm:$0xff] %v8072
    %8082 = vst [vmem:[%s8074 + $0x38] sm:$0xff] %v8073
    // Predicated region
    $region74: #{tpu_custom_call.1} parent=1 // pred_check
      _
    $region75: #{tpu_custom_call.1} parent=1 // pred_check_branch
      %8084 = sbr.rel (0) target = $region77
    $region76: #{tpu_custom_call.1} parent=1 // pred_region
      %s8086 = ssub.s32 2048, 2048
      %8087 = vsyncadd [#allocation4], %s8086
      %s8088 = sshll.u32 [#allocation10], 4
      %s8089 = int_to_ptr.vmem [resolvable:$true] %s8088
      %8094 = dma.vmem_to_hbm [thread:$0]  %s8089, 2048, %s14, [#allocation4], 256, 256, 16
    $region77: #{tpu_custom_call.1} parent=1 // pred_fallthru
      _
    // Predicated region
    $region78: #{tpu_custom_call.1} parent=1 // pred_check
      _
    $region79: #{tpu_custom_call.1} parent=1 // pred_check_branch
      %8096 = sbr.rel (0) target = $region81
    $region80: #{tpu_custom_call.1} parent=1 // pred_region
      %8097 = dma.done [#allocation4], 2048
    $region81: #{tpu_custom_call.1} parent=1 // pred_fallthru
      _
    %8098 = vsyncpa [#allocation3], 1
    %8099 = vsyncpa [#allocation6], 1
    %8100 = vsyncpa [#allocation9], 1
    %8101 = vsyncpa [#allocation4], 1

</llo_original>
